<compile_context>
chip_gen: v6e
topology: v6e:2x2x1
jax: 0.10.0
libtpu: 0.0.40
codegen_flags: <defaults>
</compile_context>

<pallas_src>
import jax
import jax.numpy as jnp
from jax.experimental import pallas as pl
from jax.experimental.pallas import tpu as pltpu

BN_EPS = 1e-5
LEAKY_SLOPE = 0.01  # PyTorch LeakyReLU default negative_slope


def _sum_all(a):
    # Full reduce of a 2-D tile to a (1, 1) value: lane reduce then sublane reduce.
    return jnp.sum(jnp.sum(a, axis=-1, keepdims=True), axis=-2, keepdims=True)


def convz_fused_kernel(x_ref, wtab_ref, gamma_ref, beta_ref, o_ref, t_ref, y_ref):
    # x_ref    : (N, Cin, H, W)             raw input (no pre-padding), VMEM
    # wtab_ref : (Cin*9, Cout*(W+2))        per-tap weight rows, VMEM
    # gamma_ref: (Cout,)                    BN weight, SMEM scalars
    # beta_ref : (Cout,)                    BN bias,   SMEM scalars
    # o_ref    : (N, Cout, H, W)            final output (NCHW), VMEM
    # t_ref    : (Cin, H+2, Cout*(W+2)+2)   zero-haloed, Cout-tiled input, VMEM scratch
    # y_ref    : (N, H, Cout*(W+2))         conv output (pre-BN, lane-dense), VMEM scratch
    N, Cin, H, W = x_ref.shape
    Cout = o_ref.shape[1]
    Wp = W + 2                     # per-output-channel lane-group stride (with halo cols)
    TW = Cout * Wp                 # lane-dense accumulator width (144 here)

    # Zero once: provides the zero halo rows/cols of every group and the two
    # tail lanes that the kw = 1, 2 shifted reads touch.
    t_ref[...] = jnp.zeros_like(t_ref)

    inv_count = 1.0 / (N * H * W)  # static Python constant -> folded

    # ---- Phase A: conv for every image into the lane-dense VMEM scratch ----
    for n in range(N):
        # Build the Cout-tiled, zero-haloed planes for this image:
        #   t[ci, 1+h, g*Wp + 1 + w] = x[n, ci, h, w]   for every output group g.
        for ci in range(Cin):
            xv = x_ref[n, ci]                                   # (H, W)
            for g in range(Cout):
                t_ref[ci, 1:1 + H, g * Wp + 1:g * Wp + 1 + W] = xv

        acc = jnp.zeros((H, TW), jnp.float32)
        for ci in range(Cin):
            for kh in range(3):
                # One row-set load per (ci, kh); kw shifts are lane slices of the
                # loaded value (the small sublane offset here is a one-off per
                # (ci, kh), not per tap — pltpu.roll would be an equivalent-cost
                # XLU alternative).
                rows = t_ref[ci, kh:kh + H, :]                  # (H, TW + 2)
                for kw in range(3):
                    tap = (ci * 3 + kh) * 3 + kw
                    wrow = wtab_ref[tap:tap + 1, :]             # (1, TW), per-group weight
                    acc = acc + wrow * rows[:, kw:kw + TW]      # full-width VPU FMA
        y_ref[n] = acc

    # ---- Phase B/C: per-channel two-pass BN stats, then scale/shift + LeakyReLU ----
    for co in range(Cout):
        # Valid columns only (the 2 halo columns of each lane group are skipped).
        blks = [y_ref[n, :, co * Wp:co * Wp + W] for n in range(N)]   # N x (H, W)

        s = jnp.zeros((1, 1), jnp.float32)
        for b in blks:
            s = s + _sum_all(b)
        mean = s * inv_count

        ssd = jnp.zeros((1, 1), jnp.float32)
        for b in blks:
            d = b - mean
            ssd = ssd + _sum_all(d * d)
        var = ssd * inv_count                                   # biased batch variance

        scale = gamma_ref[co] * jax.lax.rsqrt(var + BN_EPS)     # (1, 1)
        shift = beta_ref[co] - mean * scale                     # (1, 1)

        for n in range(N):
            v = blks[n] * scale + shift
            o_ref[n, co] = jnp.where(v >= 0, v, LEAKY_SLOPE * v)


def convz_forward(x_nchw, w_oihw, b, gamma, beta):
    """x: (N, Cin, H, W) f32 -> (N, Cout, H, W) f32. One fused Pallas kernel."""
    del b  # conv bias is cancelled (mod f32 rounding) by train-mode BN mean subtraction
    N, Cin, H, W = x_nchw.shape
    Cout = w_oihw.shape[0]
    Wp = W + 2
    TW = Cout * Wp

    # Per-tap weight rows: wtab[(ci*3 + kh)*3 + kw, g*Wp + c] = W[g, ci, kh, kw].
    wtab = jnp.repeat(
        jnp.transpose(w_oihw, (1, 2, 3, 0)).reshape(Cin * 9, Cout).astype(jnp.float32),
        Wp, axis=1)                                             # (Cin*9, Cout*Wp)

    return pl.pallas_call(
        convz_fused_kernel,
        out_shape=jax.ShapeDtypeStruct((N, Cout, H, W), jnp.float32),
        in_specs=[
            pl.BlockSpec(memory_space=pltpu.MemorySpace.VMEM),   # x (whole array)
            pl.BlockSpec(memory_space=pltpu.MemorySpace.VMEM),   # wtab
            pl.BlockSpec(memory_space=pltpu.MemorySpace.SMEM),   # gamma (scalars)
            pl.BlockSpec(memory_space=pltpu.MemorySpace.SMEM),   # beta  (scalars)
        ],
        out_specs=pl.BlockSpec(memory_space=pltpu.MemorySpace.VMEM),
        scratch_shapes=[
            pltpu.VMEM((Cin, H + 2, TW + 2), jnp.float32),       # haloed, Cout-tiled input
            pltpu.VMEM((N, H, TW), jnp.float32),                 # conv output (pre-BN)
        ],
        compiler_params=pltpu.CompilerParams(
            vmem_limit_bytes=32 * 1024 * 1024,                   # tiny blocks; fits v5e..v7x
        ),
    )(x_nchw.astype(jnp.float32), wtab,
      gamma.astype(jnp.float32), beta.astype(jnp.float32))


if __name__ == "__main__":
    # Small shapes consistent with convZ(in_channels=4, out_channels=8)
    N, Cin, Cout, H, W = 2, 4, 8, 16, 16

    key = jax.random.PRNGKey(0)
    kx, kw_, kb = jax.random.split(key, 3)

    x = jax.random.normal(kx, (N, Cin, H, W), dtype=jnp.float32)
    w = 0.1 * jax.random.normal(kw_, (Cout, Cin, 3, 3), dtype=jnp.float32)
    b = 0.1 * jax.random.normal(kb, (Cout,), dtype=jnp.float32)
    gamma = jnp.ones((Cout,), dtype=jnp.float32)   # BatchNorm2d default weight
    beta = jnp.zeros((Cout,), dtype=jnp.float32)   # BatchNorm2d default bias

    convz = jax.jit(convz_forward)
    out = jax.block_until_ready(convz(x, w, b, gamma, beta))
    assert out.shape == (N, Cout, H, W)

    # Pure-JAX reference (includes the conv bias; train-mode BN cancels it).
    y = jax.lax.conv_general_dilated(
        x, w, window_strides=(1, 1), padding=((1, 1), (1, 1)),
        dimension_numbers=("NCHW", "OIHW", "NCHW"))
    y = y + b.reshape(1, Cout, 1, 1)
    mu = jnp.mean(y, axis=(0, 2, 3), keepdims=True)
    var = jnp.mean((y - mu) ** 2, axis=(0, 2, 3), keepdims=True)
    ref = (y - mu) * jax.lax.rsqrt(var + BN_EPS)
    ref = ref * gamma.reshape(1, Cout, 1, 1) + beta.reshape(1, Cout, 1, 1)
    ref = jnp.where(ref >= 0, ref, LEAKY_SLOPE * ref)

    max_err = float(jnp.max(jnp.abs(out - ref)))
    assert max_err < 1e-3, f"max abs error vs reference: {max_err}"
    print("KERNEL_OK")
</pallas_src>

<mosaic_0001>
module attributes {stable_mosaic.version = 11 : i64} {
  func.func @convz_fused_kernel(%arg0: memref<2x4x16x16xf32, #tpu.memory_space<vmem>>, %arg1: memref<36x144xf32, #tpu.memory_space<vmem>>, %arg2: memref<8xf32, #tpu.memory_space<smem>>, %arg3: memref<8xf32, #tpu.memory_space<smem>>, %arg4: memref<2x8x16x16xf32, #tpu.memory_space<vmem>>, %arg5: memref<4x18x146xf32, #tpu.memory_space<vmem>>, %arg6: memref<2x16x144xf32, #tpu.memory_space<vmem>>) attributes {dimension_semantics = [], scalar_prefetch = 0 : i64, scratch_operands = 2 : i64, tpu.core_type = #tpu.core_type<tc>} {
    %cst = arith.constant 0.000000e+00 : f32
    %0 = vector.broadcast %cst : f32 to vector<4x18x146xf32>
    %c0 = arith.constant 0 : index
    %c0_0 = arith.constant 0 : index
    %c0_1 = arith.constant 0 : index
    %1 = vector.load %arg5[%c0, %c0_0, %c0_1] : memref<4x18x146xf32, #tpu.memory_space<vmem>>, vector<4x18x146xf32>
    tpu.vector_store %arg5[%c0, %c0_0, %c0_1], %0 {strides = array<i32>} : memref<4x18x146xf32, #tpu.memory_space<vmem>>, vector<4x18x146xf32>,
    %c0_2 = arith.constant 0 : index
    %c0_3 = arith.constant 0 : index
    %c0_4 = arith.constant 0 : index
    %c0_5 = arith.constant 0 : index
    %2 = vector.load %arg0[%c0_2, %c0_3, %c0_4, %c0_5] : memref<2x4x16x16xf32, #tpu.memory_space<vmem>>, vector<1x1x16x16xf32>
    %3 = vector.shape_cast %2 : vector<1x1x16x16xf32> to vector<16x16xf32>
    %c0_6 = arith.constant 0 : index
    %c1 = arith.constant 1 : index
    %c1_7 = arith.constant 1 : index
    %4 = vector.load %arg5[%c0_6, %c1, %c1_7] : memref<4x18x146xf32, #tpu.memory_space<vmem>>, vector<1x16x16xf32>
    %5 = vector.shape_cast %4 : vector<1x16x16xf32> to vector<16x16xf32>
    %6 = vector.shape_cast %3 : vector<16x16xf32> to vector<1x16x16xf32>
    tpu.vector_store %arg5[%c0_6, %c1, %c1_7], %6 {strides = array<i32>} : memref<4x18x146xf32, #tpu.memory_space<vmem>>, vector<1x16x16xf32>,
    %c0_8 = arith.constant 0 : index
    %c1_9 = arith.constant 1 : index
    %c19 = arith.constant 19 : index
    %7 = vector.load %arg5[%c0_8, %c1_9, %c19] : memref<4x18x146xf32, #tpu.memory_space<vmem>>, vector<1x16x16xf32>
    %8 = vector.shape_cast %7 : vector<1x16x16xf32> to vector<16x16xf32>
    %9 = vector.shape_cast %3 : vector<16x16xf32> to vector<1x16x16xf32>
    tpu.vector_store %arg5[%c0_8, %c1_9, %c19], %9 {strides = array<i32>} : memref<4x18x146xf32, #tpu.memory_space<vmem>>, vector<1x16x16xf32>,
    %c0_10 = arith.constant 0 : index
    %c1_11 = arith.constant 1 : index
    %c37 = arith.constant 37 : index
    %10 = vector.load %arg5[%c0_10, %c1_11, %c37] : memref<4x18x146xf32, #tpu.memory_space<vmem>>, vector<1x16x16xf32>
    %11 = vector.shape_cast %10 : vector<1x16x16xf32> to vector<16x16xf32>
    %12 = vector.shape_cast %3 : vector<16x16xf32> to vector<1x16x16xf32>
    tpu.vector_store %arg5[%c0_10, %c1_11, %c37], %12 {strides = array<i32>} : memref<4x18x146xf32, #tpu.memory_space<vmem>>, vector<1x16x16xf32>,
    %c0_12 = arith.constant 0 : index
    %c1_13 = arith.constant 1 : index
    %c55 = arith.constant 55 : index
    %13 = vector.load %arg5[%c0_12, %c1_13, %c55] : memref<4x18x146xf32, #tpu.memory_space<vmem>>, vector<1x16x16xf32>
    %14 = vector.shape_cast %13 : vector<1x16x16xf32> to vector<16x16xf32>
    %15 = vector.shape_cast %3 : vector<16x16xf32> to vector<1x16x16xf32>
    tpu.vector_store %arg5[%c0_12, %c1_13, %c55], %15 {strides = array<i32>} : memref<4x18x146xf32, #tpu.memory_space<vmem>>, vector<1x16x16xf32>,
    %c0_14 = arith.constant 0 : index
    %c1_15 = arith.constant 1 : index
    %c73 = arith.constant 73 : index
    %16 = vector.load %arg5[%c0_14, %c1_15, %c73] : memref<4x18x146xf32, #tpu.memory_space<vmem>>, vector<1x16x16xf32>
    %17 = vector.shape_cast %16 : vector<1x16x16xf32> to vector<16x16xf32>
    %18 = vector.shape_cast %3 : vector<16x16xf32> to vector<1x16x16xf32>
    tpu.vector_store %arg5[%c0_14, %c1_15, %c73], %18 {strides = array<i32>} : memref<4x18x146xf32, #tpu.memory_space<vmem>>, vector<1x16x16xf32>,
    %c0_16 = arith.constant 0 : index
    %c1_17 = arith.constant 1 : index
    %c91 = arith.constant 91 : index
    %19 = vector.load %arg5[%c0_16, %c1_17, %c91] : memref<4x18x146xf32, #tpu.memory_space<vmem>>, vector<1x16x16xf32>
    %20 = vector.shape_cast %19 : vector<1x16x16xf32> to vector<16x16xf32>
    %21 = vector.shape_cast %3 : vector<16x16xf32> to vector<1x16x16xf32>
    tpu.vector_store %arg5[%c0_16, %c1_17, %c91], %21 {strides = array<i32>} : memref<4x18x146xf32, #tpu.memory_space<vmem>>, vector<1x16x16xf32>,
    %c0_18 = arith.constant 0 : index
    %c1_19 = arith.constant 1 : index
    %c109 = arith.constant 109 : index
    %22 = vector.load %arg5[%c0_18, %c1_19, %c109] : memref<4x18x146xf32, #tpu.memory_space<vmem>>, vector<1x16x16xf32>
    %23 = vector.shape_cast %22 : vector<1x16x16xf32> to vector<16x16xf32>
    %24 = vector.shape_cast %3 : vector<16x16xf32> to vector<1x16x16xf32>
    tpu.vector_store %arg5[%c0_18, %c1_19, %c109], %24 {strides = array<i32>} : memref<4x18x146xf32, #tpu.memory_space<vmem>>, vector<1x16x16xf32>,
    %c0_20 = arith.constant 0 : index
    %c1_21 = arith.constant 1 : index
    %c127 = arith.constant 127 : index
    %25 = vector.load %arg5[%c0_20, %c1_21, %c127] : memref<4x18x146xf32, #tpu.memory_space<vmem>>, vector<1x16x16xf32>
    %26 = vector.shape_cast %25 : vector<1x16x16xf32> to vector<16x16xf32>
    %27 = vector.shape_cast %3 : vector<16x16xf32> to vector<1x16x16xf32>
    tpu.vector_store %arg5[%c0_20, %c1_21, %c127], %27 {strides = array<i32>} : memref<4x18x146xf32, #tpu.memory_space<vmem>>, vector<1x16x16xf32>,
    %c0_22 = arith.constant 0 : index
    %c1_23 = arith.constant 1 : index
    %c0_24 = arith.constant 0 : index
    %c0_25 = arith.constant 0 : index
    %28 = vector.load %arg0[%c0_22, %c1_23, %c0_24, %c0_25] : memref<2x4x16x16xf32, #tpu.memory_space<vmem>>, vector<1x1x16x16xf32>
    %29 = vector.shape_cast %28 : vector<1x1x16x16xf32> to vector<16x16xf32>
    %c1_26 = arith.constant 1 : index
    %c1_27 = arith.constant 1 : index
    %c1_28 = arith.constant 1 : index
    %30 = vector.load %arg5[%c1_26, %c1_27, %c1_28] : memref<4x18x146xf32, #tpu.memory_space<vmem>>, vector<1x16x16xf32>
    %31 = vector.shape_cast %30 : vector<1x16x16xf32> to vector<16x16xf32>
    %32 = vector.shape_cast %29 : vector<16x16xf32> to vector<1x16x16xf32>
    tpu.vector_store %arg5[%c1_26, %c1_27, %c1_28], %32 {strides = array<i32>} : memref<4x18x146xf32, #tpu.memory_space<vmem>>, vector<1x16x16xf32>,
    %c1_29 = arith.constant 1 : index
    %c1_30 = arith.constant 1 : index
    %c19_31 = arith.constant 19 : index
    %33 = vector.load %arg5[%c1_29, %c1_30, %c19_31] : memref<4x18x146xf32, #tpu.memory_space<vmem>>, vector<1x16x16xf32>
    %34 = vector.shape_cast %33 : vector<1x16x16xf32> to vector<16x16xf32>
    %35 = vector.shape_cast %29 : vector<16x16xf32> to vector<1x16x16xf32>
    tpu.vector_store %arg5[%c1_29, %c1_30, %c19_31], %35 {strides = array<i32>} : memref<4x18x146xf32, #tpu.memory_space<vmem>>, vector<1x16x16xf32>,
    %c1_32 = arith.constant 1 : index
    %c1_33 = arith.constant 1 : index
    %c37_34 = arith.constant 37 : index
    %36 = vector.load %arg5[%c1_32, %c1_33, %c37_34] : memref<4x18x146xf32, #tpu.memory_space<vmem>>, vector<1x16x16xf32>
    %37 = vector.shape_cast %36 : vector<1x16x16xf32> to vector<16x16xf32>
    %38 = vector.shape_cast %29 : vector<16x16xf32> to vector<1x16x16xf32>
    tpu.vector_store %arg5[%c1_32, %c1_33, %c37_34], %38 {strides = array<i32>} : memref<4x18x146xf32, #tpu.memory_space<vmem>>, vector<1x16x16xf32>,
    %c1_35 = arith.constant 1 : index
    %c1_36 = arith.constant 1 : index
    %c55_37 = arith.constant 55 : index
    %39 = vector.load %arg5[%c1_35, %c1_36, %c55_37] : memref<4x18x146xf32, #tpu.memory_space<vmem>>, vector<1x16x16xf32>
    %40 = vector.shape_cast %39 : vector<1x16x16xf32> to vector<16x16xf32>
    %41 = vector.shape_cast %29 : vector<16x16xf32> to vector<1x16x16xf32>
    tpu.vector_store %arg5[%c1_35, %c1_36, %c55_37], %41 {strides = array<i32>} : memref<4x18x146xf32, #tpu.memory_space<vmem>>, vector<1x16x16xf32>,
    %c1_38 = arith.constant 1 : index
    %c1_39 = arith.constant 1 : index
    %c73_40 = arith.constant 73 : index
    %42 = vector.load %arg5[%c1_38, %c1_39, %c73_40] : memref<4x18x146xf32, #tpu.memory_space<vmem>>, vector<1x16x16xf32>
    %43 = vector.shape_cast %42 : vector<1x16x16xf32> to vector<16x16xf32>
    %44 = vector.shape_cast %29 : vector<16x16xf32> to vector<1x16x16xf32>
    tpu.vector_store %arg5[%c1_38, %c1_39, %c73_40], %44 {strides = array<i32>} : memref<4x18x146xf32, #tpu.memory_space<vmem>>, vector<1x16x16xf32>,
    %c1_41 = arith.constant 1 : index
    %c1_42 = arith.constant 1 : index
    %c91_43 = arith.constant 91 : index
    %45 = vector.load %arg5[%c1_41, %c1_42, %c91_43] : memref<4x18x146xf32, #tpu.memory_space<vmem>>, vector<1x16x16xf32>
    %46 = vector.shape_cast %45 : vector<1x16x16xf32> to vector<16x16xf32>
    %47 = vector.shape_cast %29 : vector<16x16xf32> to vector<1x16x16xf32>
    tpu.vector_store %arg5[%c1_41, %c1_42, %c91_43], %47 {strides = array<i32>} : memref<4x18x146xf32, #tpu.memory_space<vmem>>, vector<1x16x16xf32>,
    %c1_44 = arith.constant 1 : index
    %c1_45 = arith.constant 1 : index
    %c109_46 = arith.constant 109 : index
    %48 = vector.load %arg5[%c1_44, %c1_45, %c109_46] : memref<4x18x146xf32, #tpu.memory_space<vmem>>, vector<1x16x16xf32>
    %49 = vector.shape_cast %48 : vector<1x16x16xf32> to vector<16x16xf32>
    %50 = vector.shape_cast %29 : vector<16x16xf32> to vector<1x16x16xf32>
    tpu.vector_store %arg5[%c1_44, %c1_45, %c109_46], %50 {strides = array<i32>} : memref<4x18x146xf32, #tpu.memory_space<vmem>>, vector<1x16x16xf32>,
    %c1_47 = arith.constant 1 : index
    %c1_48 = arith.constant 1 : index
    %c127_49 = arith.constant 127 : index
    %51 = vector.load %arg5[%c1_47, %c1_48, %c127_49] : memref<4x18x146xf32, #tpu.memory_space<vmem>>, vector<1x16x16xf32>
    %52 = vector.shape_cast %51 : vector<1x16x16xf32> to vector<16x16xf32>
    %53 = vector.shape_cast %29 : vector<16x16xf32> to vector<1x16x16xf32>
    tpu.vector_store %arg5[%c1_47, %c1_48, %c127_49], %53 {strides = array<i32>} : memref<4x18x146xf32, #tpu.memory_space<vmem>>, vector<1x16x16xf32>,
    %c0_50 = arith.constant 0 : index
    %c2 = arith.constant 2 : index
    %c0_51 = arith.constant 0 : index
    %c0_52 = arith.constant 0 : index
    %54 = vector.load %arg0[%c0_50, %c2, %c0_51, %c0_52] : memref<2x4x16x16xf32, #tpu.memory_space<vmem>>, vector<1x1x16x16xf32>
    %55 = vector.shape_cast %54 : vector<1x1x16x16xf32> to vector<16x16xf32>
    %c2_53 = arith.constant 2 : index
    %c1_54 = arith.constant 1 : index
    %c1_55 = arith.constant 1 : index
    %56 = vector.load %arg5[%c2_53, %c1_54, %c1_55] : memref<4x18x146xf32, #tpu.memory_space<vmem>>, vector<1x16x16xf32>
    %57 = vector.shape_cast %56 : vector<1x16x16xf32> to vector<16x16xf32>
    %58 = vector.shape_cast %55 : vector<16x16xf32> to vector<1x16x16xf32>
    tpu.vector_store %arg5[%c2_53, %c1_54, %c1_55], %58 {strides = array<i32>} : memref<4x18x146xf32, #tpu.memory_space<vmem>>, vector<1x16x16xf32>,
    %c2_56 = arith.constant 2 : index
    %c1_57 = arith.constant 1 : index
    %c19_58 = arith.constant 19 : index
    %59 = vector.load %arg5[%c2_56, %c1_57, %c19_58] : memref<4x18x146xf32, #tpu.memory_space<vmem>>, vector<1x16x16xf32>
    %60 = vector.shape_cast %59 : vector<1x16x16xf32> to vector<16x16xf32>
    %61 = vector.shape_cast %55 : vector<16x16xf32> to vector<1x16x16xf32>
    tpu.vector_store %arg5[%c2_56, %c1_57, %c19_58], %61 {strides = array<i32>} : memref<4x18x146xf32, #tpu.memory_space<vmem>>, vector<1x16x16xf32>,
    %c2_59 = arith.constant 2 : index
    %c1_60 = arith.constant 1 : index
    %c37_61 = arith.constant 37 : index
    %62 = vector.load %arg5[%c2_59, %c1_60, %c37_61] : memref<4x18x146xf32, #tpu.memory_space<vmem>>, vector<1x16x16xf32>
    %63 = vector.shape_cast %62 : vector<1x16x16xf32> to vector<16x16xf32>
    %64 = vector.shape_cast %55 : vector<16x16xf32> to vector<1x16x16xf32>
    tpu.vector_store %arg5[%c2_59, %c1_60, %c37_61], %64 {strides = array<i32>} : memref<4x18x146xf32, #tpu.memory_space<vmem>>, vector<1x16x16xf32>,
    %c2_62 = arith.constant 2 : index
    %c1_63 = arith.constant 1 : index
    %c55_64 = arith.constant 55 : index
    %65 = vector.load %arg5[%c2_62, %c1_63, %c55_64] : memref<4x18x146xf32, #tpu.memory_space<vmem>>, vector<1x16x16xf32>
    %66 = vector.shape_cast %65 : vector<1x16x16xf32> to vector<16x16xf32>
    %67 = vector.shape_cast %55 : vector<16x16xf32> to vector<1x16x16xf32>
    tpu.vector_store %arg5[%c2_62, %c1_63, %c55_64], %67 {strides = array<i32>} : memref<4x18x146xf32, #tpu.memory_space<vmem>>, vector<1x16x16xf32>,
    %c2_65 = arith.constant 2 : index
    %c1_66 = arith.constant 1 : index
    %c73_67 = arith.constant 73 : index
    %68 = vector.load %arg5[%c2_65, %c1_66, %c73_67] : memref<4x18x146xf32, #tpu.memory_space<vmem>>, vector<1x16x16xf32>
    %69 = vector.shape_cast %68 : vector<1x16x16xf32> to vector<16x16xf32>
    %70 = vector.shape_cast %55 : vector<16x16xf32> to vector<1x16x16xf32>
    tpu.vector_store %arg5[%c2_65, %c1_66, %c73_67], %70 {strides = array<i32>} : memref<4x18x146xf32, #tpu.memory_space<vmem>>, vector<1x16x16xf32>,
    %c2_68 = arith.constant 2 : index
    %c1_69 = arith.constant 1 : index
    %c91_70 = arith.constant 91 : index
    %71 = vector.load %arg5[%c2_68, %c1_69, %c91_70] : memref<4x18x146xf32, #tpu.memory_space<vmem>>, vector<1x16x16xf32>
    %72 = vector.shape_cast %71 : vector<1x16x16xf32> to vector<16x16xf32>
    %73 = vector.shape_cast %55 : vector<16x16xf32> to vector<1x16x16xf32>
    tpu.vector_store %arg5[%c2_68, %c1_69, %c91_70], %73 {strides = array<i32>} : memref<4x18x146xf32, #tpu.memory_space<vmem>>, vector<1x16x16xf32>,
    %c2_71 = arith.constant 2 : index
    %c1_72 = arith.constant 1 : index
    %c109_73 = arith.constant 109 : index
    %74 = vector.load %arg5[%c2_71, %c1_72, %c109_73] : memref<4x18x146xf32, #tpu.memory_space<vmem>>, vector<1x16x16xf32>
    %75 = vector.shape_cast %74 : vector<1x16x16xf32> to vector<16x16xf32>
    %76 = vector.shape_cast %55 : vector<16x16xf32> to vector<1x16x16xf32>
    tpu.vector_store %arg5[%c2_71, %c1_72, %c109_73], %76 {strides = array<i32>} : memref<4x18x146xf32, #tpu.memory_space<vmem>>, vector<1x16x16xf32>,
    %c2_74 = arith.constant 2 : index
    %c1_75 = arith.constant 1 : index
    %c127_76 = arith.constant 127 : index
    %77 = vector.load %arg5[%c2_74, %c1_75, %c127_76] : memref<4x18x146xf32, #tpu.memory_space<vmem>>, vector<1x16x16xf32>
    %78 = vector.shape_cast %77 : vector<1x16x16xf32> to vector<16x16xf32>
    %79 = vector.shape_cast %55 : vector<16x16xf32> to vector<1x16x16xf32>
    tpu.vector_store %arg5[%c2_74, %c1_75, %c127_76], %79 {strides = array<i32>} : memref<4x18x146xf32, #tpu.memory_space<vmem>>, vector<1x16x16xf32>,
    %c0_77 = arith.constant 0 : index
    %c3 = arith.constant 3 : index
    %c0_78 = arith.constant 0 : index
    %c0_79 = arith.constant 0 : index
    %80 = vector.load %arg0[%c0_77, %c3, %c0_78, %c0_79] : memref<2x4x16x16xf32, #tpu.memory_space<vmem>>, vector<1x1x16x16xf32>
    %81 = vector.shape_cast %80 : vector<1x1x16x16xf32> to vector<16x16xf32>
    %c3_80 = arith.constant 3 : index
    %c1_81 = arith.constant 1 : index
    %c1_82 = arith.constant 1 : index
    %82 = vector.load %arg5[%c3_80, %c1_81, %c1_82] : memref<4x18x146xf32, #tpu.memory_space<vmem>>, vector<1x16x16xf32>
    %83 = vector.shape_cast %82 : vector<1x16x16xf32> to vector<16x16xf32>
    %84 = vector.shape_cast %81 : vector<16x16xf32> to vector<1x16x16xf32>
    tpu.vector_store %arg5[%c3_80, %c1_81, %c1_82], %84 {strides = array<i32>} : memref<4x18x146xf32, #tpu.memory_space<vmem>>, vector<1x16x16xf32>,
    %c3_83 = arith.constant 3 : index
    %c1_84 = arith.constant 1 : index
    %c19_85 = arith.constant 19 : index
    %85 = vector.load %arg5[%c3_83, %c1_84, %c19_85] : memref<4x18x146xf32, #tpu.memory_space<vmem>>, vector<1x16x16xf32>
    %86 = vector.shape_cast %85 : vector<1x16x16xf32> to vector<16x16xf32>
    %87 = vector.shape_cast %81 : vector<16x16xf32> to vector<1x16x16xf32>
    tpu.vector_store %arg5[%c3_83, %c1_84, %c19_85], %87 {strides = array<i32>} : memref<4x18x146xf32, #tpu.memory_space<vmem>>, vector<1x16x16xf32>,
    %c3_86 = arith.constant 3 : index
    %c1_87 = arith.constant 1 : index
    %c37_88 = arith.constant 37 : index
    %88 = vector.load %arg5[%c3_86, %c1_87, %c37_88] : memref<4x18x146xf32, #tpu.memory_space<vmem>>, vector<1x16x16xf32>
    %89 = vector.shape_cast %88 : vector<1x16x16xf32> to vector<16x16xf32>
    %90 = vector.shape_cast %81 : vector<16x16xf32> to vector<1x16x16xf32>
    tpu.vector_store %arg5[%c3_86, %c1_87, %c37_88], %90 {strides = array<i32>} : memref<4x18x146xf32, #tpu.memory_space<vmem>>, vector<1x16x16xf32>,
    %c3_89 = arith.constant 3 : index
    %c1_90 = arith.constant 1 : index
    %c55_91 = arith.constant 55 : index
    %91 = vector.load %arg5[%c3_89, %c1_90, %c55_91] : memref<4x18x146xf32, #tpu.memory_space<vmem>>, vector<1x16x16xf32>
    %92 = vector.shape_cast %91 : vector<1x16x16xf32> to vector<16x16xf32>
    %93 = vector.shape_cast %81 : vector<16x16xf32> to vector<1x16x16xf32>
    tpu.vector_store %arg5[%c3_89, %c1_90, %c55_91], %93 {strides = array<i32>} : memref<4x18x146xf32, #tpu.memory_space<vmem>>, vector<1x16x16xf32>,
    %c3_92 = arith.constant 3 : index
    %c1_93 = arith.constant 1 : index
    %c73_94 = arith.constant 73 : index
    %94 = vector.load %arg5[%c3_92, %c1_93, %c73_94] : memref<4x18x146xf32, #tpu.memory_space<vmem>>, vector<1x16x16xf32>
    %95 = vector.shape_cast %94 : vector<1x16x16xf32> to vector<16x16xf32>
    %96 = vector.shape_cast %81 : vector<16x16xf32> to vector<1x16x16xf32>
    tpu.vector_store %arg5[%c3_92, %c1_93, %c73_94], %96 {strides = array<i32>} : memref<4x18x146xf32, #tpu.memory_space<vmem>>, vector<1x16x16xf32>,
    %c3_95 = arith.constant 3 : index
    %c1_96 = arith.constant 1 : index
    %c91_97 = arith.constant 91 : index
    %97 = vector.load %arg5[%c3_95, %c1_96, %c91_97] : memref<4x18x146xf32, #tpu.memory_space<vmem>>, vector<1x16x16xf32>
    %98 = vector.shape_cast %97 : vector<1x16x16xf32> to vector<16x16xf32>
    %99 = vector.shape_cast %81 : vector<16x16xf32> to vector<1x16x16xf32>
    tpu.vector_store %arg5[%c3_95, %c1_96, %c91_97], %99 {strides = array<i32>} : memref<4x18x146xf32, #tpu.memory_space<vmem>>, vector<1x16x16xf32>,
    %c3_98 = arith.constant 3 : index
    %c1_99 = arith.constant 1 : index
    %c109_100 = arith.constant 109 : index
    %100 = vector.load %arg5[%c3_98, %c1_99, %c109_100] : memref<4x18x146xf32, #tpu.memory_space<vmem>>, vector<1x16x16xf32>
    %101 = vector.shape_cast %100 : vector<1x16x16xf32> to vector<16x16xf32>
    %102 = vector.shape_cast %81 : vector<16x16xf32> to vector<1x16x16xf32>
    tpu.vector_store %arg5[%c3_98, %c1_99, %c109_100], %102 {strides = array<i32>} : memref<4x18x146xf32, #tpu.memory_space<vmem>>, vector<1x16x16xf32>,
    %c3_101 = arith.constant 3 : index
    %c1_102 = arith.constant 1 : index
    %c127_103 = arith.constant 127 : index
    %103 = vector.load %arg5[%c3_101, %c1_102, %c127_103] : memref<4x18x146xf32, #tpu.memory_space<vmem>>, vector<1x16x16xf32>
    %104 = vector.shape_cast %103 : vector<1x16x16xf32> to vector<16x16xf32>
    %105 = vector.shape_cast %81 : vector<16x16xf32> to vector<1x16x16xf32>
    tpu.vector_store %arg5[%c3_101, %c1_102, %c127_103], %105 {strides = array<i32>} : memref<4x18x146xf32, #tpu.memory_space<vmem>>, vector<1x16x16xf32>,
    %cst_104 = arith.constant 0.000000e+00 : f32
    %106 = vector.broadcast %cst_104 : f32 to vector<16x144xf32>
    %c0_105 = arith.constant 0 : index
    %c0_106 = arith.constant 0 : index
    %c0_107 = arith.constant 0 : index
    %107 = vector.load %arg5[%c0_105, %c0_106, %c0_107] : memref<4x18x146xf32, #tpu.memory_space<vmem>>, vector<1x16x146xf32>
    %108 = vector.shape_cast %107 : vector<1x16x146xf32> to vector<16x146xf32>
    %c0_108 = arith.constant 0 : index
    %c0_109 = arith.constant 0 : index
    %109 = vector.load %arg1[%c0_108, %c0_109] : memref<36x144xf32, #tpu.memory_space<vmem>>, vector<1x144xf32>
    %110 = vector.extract_strided_slice %108 {offsets = [0, 0], sizes = [16, 144], strides = [1, 1]} : vector<16x146xf32> to vector<16x144xf32>
    %111 = vector.broadcast %109 : vector<1x144xf32> to vector<16x144xf32>
    %112 = arith.mulf %111, %110 : vector<16x144xf32>
    %113 = arith.addf %106, %112 : vector<16x144xf32>
    %c1_110 = arith.constant 1 : index
    %c0_111 = arith.constant 0 : index
    %114 = vector.load %arg1[%c1_110, %c0_111] : memref<36x144xf32, #tpu.memory_space<vmem>>, vector<1x144xf32>
    %115 = vector.extract_strided_slice %108 {offsets = [0, 1], sizes = [16, 144], strides = [1, 1]} : vector<16x146xf32> to vector<16x144xf32>
    %116 = vector.broadcast %114 : vector<1x144xf32> to vector<16x144xf32>
    %117 = arith.mulf %116, %115 : vector<16x144xf32>
    %118 = arith.addf %113, %117 : vector<16x144xf32>
    %c2_112 = arith.constant 2 : index
    %c0_113 = arith.constant 0 : index
    %119 = vector.load %arg1[%c2_112, %c0_113] : memref<36x144xf32, #tpu.memory_space<vmem>>, vector<1x144xf32>
    %120 = vector.extract_strided_slice %108 {offsets = [0, 2], sizes = [16, 144], strides = [1, 1]} : vector<16x146xf32> to vector<16x144xf32>
    %121 = vector.broadcast %119 : vector<1x144xf32> to vector<16x144xf32>
    %122 = arith.mulf %121, %120 : vector<16x144xf32>
    %123 = arith.addf %118, %122 : vector<16x144xf32>
    %c0_114 = arith.constant 0 : index
    %c1_115 = arith.constant 1 : index
    %c0_116 = arith.constant 0 : index
    %124 = vector.load %arg5[%c0_114, %c1_115, %c0_116] : memref<4x18x146xf32, #tpu.memory_space<vmem>>, vector<1x16x146xf32>
    %125 = vector.shape_cast %124 : vector<1x16x146xf32> to vector<16x146xf32>
    %c3_117 = arith.constant 3 : index
    %c0_118 = arith.constant 0 : index
    %126 = vector.load %arg1[%c3_117, %c0_118] : memref<36x144xf32, #tpu.memory_space<vmem>>, vector<1x144xf32>
    %127 = vector.extract_strided_slice %125 {offsets = [0, 0], sizes = [16, 144], strides = [1, 1]} : vector<16x146xf32> to vector<16x144xf32>
    %128 = vector.broadcast %126 : vector<1x144xf32> to vector<16x144xf32>
    %129 = arith.mulf %128, %127 : vector<16x144xf32>
    %130 = arith.addf %123, %129 : vector<16x144xf32>
    %c4 = arith.constant 4 : index
    %c0_119 = arith.constant 0 : index
    %131 = vector.load %arg1[%c4, %c0_119] : memref<36x144xf32, #tpu.memory_space<vmem>>, vector<1x144xf32>
    %132 = vector.extract_strided_slice %125 {offsets = [0, 1], sizes = [16, 144], strides = [1, 1]} : vector<16x146xf32> to vector<16x144xf32>
    %133 = vector.broadcast %131 : vector<1x144xf32> to vector<16x144xf32>
    %134 = arith.mulf %133, %132 : vector<16x144xf32>
    %135 = arith.addf %130, %134 : vector<16x144xf32>
    %c5 = arith.constant 5 : index
    %c0_120 = arith.constant 0 : index
    %136 = vector.load %arg1[%c5, %c0_120] : memref<36x144xf32, #tpu.memory_space<vmem>>, vector<1x144xf32>
    %137 = vector.extract_strided_slice %125 {offsets = [0, 2], sizes = [16, 144], strides = [1, 1]} : vector<16x146xf32> to vector<16x144xf32>
    %138 = vector.broadcast %136 : vector<1x144xf32> to vector<16x144xf32>
    %139 = arith.mulf %138, %137 : vector<16x144xf32>
    %140 = arith.addf %135, %139 : vector<16x144xf32>
    %c0_121 = arith.constant 0 : index
    %c2_122 = arith.constant 2 : index
    %c0_123 = arith.constant 0 : index
    %141 = vector.load %arg5[%c0_121, %c2_122, %c0_123] : memref<4x18x146xf32, #tpu.memory_space<vmem>>, vector<1x16x146xf32>
    %142 = vector.shape_cast %141 : vector<1x16x146xf32> to vector<16x146xf32>
    %c6 = arith.constant 6 : index
    %c0_124 = arith.constant 0 : index
    %143 = vector.load %arg1[%c6, %c0_124] : memref<36x144xf32, #tpu.memory_space<vmem>>, vector<1x144xf32>
    %144 = vector.extract_strided_slice %142 {offsets = [0, 0], sizes = [16, 144], strides = [1, 1]} : vector<16x146xf32> to vector<16x144xf32>
    %145 = vector.broadcast %143 : vector<1x144xf32> to vector<16x144xf32>
    %146 = arith.mulf %145, %144 : vector<16x144xf32>
    %147 = arith.addf %140, %146 : vector<16x144xf32>
    %c7 = arith.constant 7 : index
    %c0_125 = arith.constant 0 : index
    %148 = vector.load %arg1[%c7, %c0_125] : memref<36x144xf32, #tpu.memory_space<vmem>>, vector<1x144xf32>
    %149 = vector.extract_strided_slice %142 {offsets = [0, 1], sizes = [16, 144], strides = [1, 1]} : vector<16x146xf32> to vector<16x144xf32>
    %150 = vector.broadcast %148 : vector<1x144xf32> to vector<16x144xf32>
    %151 = arith.mulf %150, %149 : vector<16x144xf32>
    %152 = arith.addf %147, %151 : vector<16x144xf32>
    %c8 = arith.constant 8 : index
    %c0_126 = arith.constant 0 : index
    %153 = vector.load %arg1[%c8, %c0_126] : memref<36x144xf32, #tpu.memory_space<vmem>>, vector<1x144xf32>
    %154 = vector.extract_strided_slice %142 {offsets = [0, 2], sizes = [16, 144], strides = [1, 1]} : vector<16x146xf32> to vector<16x144xf32>
    %155 = vector.broadcast %153 : vector<1x144xf32> to vector<16x144xf32>
    %156 = arith.mulf %155, %154 : vector<16x144xf32>
    %157 = arith.addf %152, %156 : vector<16x144xf32>
    %c1_127 = arith.constant 1 : index
    %c0_128 = arith.constant 0 : index
    %c0_129 = arith.constant 0 : index
    %158 = vector.load %arg5[%c1_127, %c0_128, %c0_129] : memref<4x18x146xf32, #tpu.memory_space<vmem>>, vector<1x16x146xf32>
    %159 = vector.shape_cast %158 : vector<1x16x146xf32> to vector<16x146xf32>
    %c9 = arith.constant 9 : index
    %c0_130 = arith.constant 0 : index
    %160 = vector.load %arg1[%c9, %c0_130] : memref<36x144xf32, #tpu.memory_space<vmem>>, vector<1x144xf32>
    %161 = vector.extract_strided_slice %159 {offsets = [0, 0], sizes = [16, 144], strides = [1, 1]} : vector<16x146xf32> to vector<16x144xf32>
    %162 = vector.broadcast %160 : vector<1x144xf32> to vector<16x144xf32>
    %163 = arith.mulf %162, %161 : vector<16x144xf32>
    %164 = arith.addf %157, %163 : vector<16x144xf32>
    %c10 = arith.constant 10 : index
    %c0_131 = arith.constant 0 : index
    %165 = vector.load %arg1[%c10, %c0_131] : memref<36x144xf32, #tpu.memory_space<vmem>>, vector<1x144xf32>
    %166 = vector.extract_strided_slice %159 {offsets = [0, 1], sizes = [16, 144], strides = [1, 1]} : vector<16x146xf32> to vector<16x144xf32>
    %167 = vector.broadcast %165 : vector<1x144xf32> to vector<16x144xf32>
    %168 = arith.mulf %167, %166 : vector<16x144xf32>
    %169 = arith.addf %164, %168 : vector<16x144xf32>
    %c11 = arith.constant 11 : index
    %c0_132 = arith.constant 0 : index
    %170 = vector.load %arg1[%c11, %c0_132] : memref<36x144xf32, #tpu.memory_space<vmem>>, vector<1x144xf32>
    %171 = vector.extract_strided_slice %159 {offsets = [0, 2], sizes = [16, 144], strides = [1, 1]} : vector<16x146xf32> to vector<16x144xf32>
    %172 = vector.broadcast %170 : vector<1x144xf32> to vector<16x144xf32>
    %173 = arith.mulf %172, %171 : vector<16x144xf32>
    %174 = arith.addf %169, %173 : vector<16x144xf32>
    %c1_133 = arith.constant 1 : index
    %c1_134 = arith.constant 1 : index
    %c0_135 = arith.constant 0 : index
    %175 = vector.load %arg5[%c1_133, %c1_134, %c0_135] : memref<4x18x146xf32, #tpu.memory_space<vmem>>, vector<1x16x146xf32>
    %176 = vector.shape_cast %175 : vector<1x16x146xf32> to vector<16x146xf32>
    %c12 = arith.constant 12 : index
    %c0_136 = arith.constant 0 : index
    %177 = vector.load %arg1[%c12, %c0_136] : memref<36x144xf32, #tpu.memory_space<vmem>>, vector<1x144xf32>
    %178 = vector.extract_strided_slice %176 {offsets = [0, 0], sizes = [16, 144], strides = [1, 1]} : vector<16x146xf32> to vector<16x144xf32>
    %179 = vector.broadcast %177 : vector<1x144xf32> to vector<16x144xf32>
    %180 = arith.mulf %179, %178 : vector<16x144xf32>
    %181 = arith.addf %174, %180 : vector<16x144xf32>
    %c13 = arith.constant 13 : index
    %c0_137 = arith.constant 0 : index
    %182 = vector.load %arg1[%c13, %c0_137] : memref<36x144xf32, #tpu.memory_space<vmem>>, vector<1x144xf32>
    %183 = vector.extract_strided_slice %176 {offsets = [0, 1], sizes = [16, 144], strides = [1, 1]} : vector<16x146xf32> to vector<16x144xf32>
    %184 = vector.broadcast %182 : vector<1x144xf32> to vector<16x144xf32>
    %185 = arith.mulf %184, %183 : vector<16x144xf32>
    %186 = arith.addf %181, %185 : vector<16x144xf32>
    %c14 = arith.constant 14 : index
    %c0_138 = arith.constant 0 : index
    %187 = vector.load %arg1[%c14, %c0_138] : memref<36x144xf32, #tpu.memory_space<vmem>>, vector<1x144xf32>
    %188 = vector.extract_strided_slice %176 {offsets = [0, 2], sizes = [16, 144], strides = [1, 1]} : vector<16x146xf32> to vector<16x144xf32>
    %189 = vector.broadcast %187 : vector<1x144xf32> to vector<16x144xf32>
    %190 = arith.mulf %189, %188 : vector<16x144xf32>
    %191 = arith.addf %186, %190 : vector<16x144xf32>
    %c1_139 = arith.constant 1 : index
    %c2_140 = arith.constant 2 : index
    %c0_141 = arith.constant 0 : index
    %192 = vector.load %arg5[%c1_139, %c2_140, %c0_141] : memref<4x18x146xf32, #tpu.memory_space<vmem>>, vector<1x16x146xf32>
    %193 = vector.shape_cast %192 : vector<1x16x146xf32> to vector<16x146xf32>
    %c15 = arith.constant 15 : index
    %c0_142 = arith.constant 0 : index
    %194 = vector.load %arg1[%c15, %c0_142] : memref<36x144xf32, #tpu.memory_space<vmem>>, vector<1x144xf32>
    %195 = vector.extract_strided_slice %193 {offsets = [0, 0], sizes = [16, 144], strides = [1, 1]} : vector<16x146xf32> to vector<16x144xf32>
    %196 = vector.broadcast %194 : vector<1x144xf32> to vector<16x144xf32>
    %197 = arith.mulf %196, %195 : vector<16x144xf32>
    %198 = arith.addf %191, %197 : vector<16x144xf32>
    %c16 = arith.constant 16 : index
    %c0_143 = arith.constant 0 : index
    %199 = vector.load %arg1[%c16, %c0_143] : memref<36x144xf32, #tpu.memory_space<vmem>>, vector<1x144xf32>
    %200 = vector.extract_strided_slice %193 {offsets = [0, 1], sizes = [16, 144], strides = [1, 1]} : vector<16x146xf32> to vector<16x144xf32>
    %201 = vector.broadcast %199 : vector<1x144xf32> to vector<16x144xf32>
    %202 = arith.mulf %201, %200 : vector<16x144xf32>
    %203 = arith.addf %198, %202 : vector<16x144xf32>
    %c17 = arith.constant 17 : index
    %c0_144 = arith.constant 0 : index
    %204 = vector.load %arg1[%c17, %c0_144] : memref<36x144xf32, #tpu.memory_space<vmem>>, vector<1x144xf32>
    %205 = vector.extract_strided_slice %193 {offsets = [0, 2], sizes = [16, 144], strides = [1, 1]} : vector<16x146xf32> to vector<16x144xf32>
    %206 = vector.broadcast %204 : vector<1x144xf32> to vector<16x144xf32>
    %207 = arith.mulf %206, %205 : vector<16x144xf32>
    %208 = arith.addf %203, %207 : vector<16x144xf32>
    %c2_145 = arith.constant 2 : index
    %c0_146 = arith.constant 0 : index
    %c0_147 = arith.constant 0 : index
    %209 = vector.load %arg5[%c2_145, %c0_146, %c0_147] : memref<4x18x146xf32, #tpu.memory_space<vmem>>, vector<1x16x146xf32>
    %210 = vector.shape_cast %209 : vector<1x16x146xf32> to vector<16x146xf32>
    %c18 = arith.constant 18 : index
    %c0_148 = arith.constant 0 : index
    %211 = vector.load %arg1[%c18, %c0_148] : memref<36x144xf32, #tpu.memory_space<vmem>>, vector<1x144xf32>
    %212 = vector.extract_strided_slice %210 {offsets = [0, 0], sizes = [16, 144], strides = [1, 1]} : vector<16x146xf32> to vector<16x144xf32>
    %213 = vector.broadcast %211 : vector<1x144xf32> to vector<16x144xf32>
    %214 = arith.mulf %213, %212 : vector<16x144xf32>
    %215 = arith.addf %208, %214 : vector<16x144xf32>
    %c19_149 = arith.constant 19 : index
    %c0_150 = arith.constant 0 : index
    %216 = vector.load %arg1[%c19_149, %c0_150] : memref<36x144xf32, #tpu.memory_space<vmem>>, vector<1x144xf32>
    %217 = vector.extract_strided_slice %210 {offsets = [0, 1], sizes = [16, 144], strides = [1, 1]} : vector<16x146xf32> to vector<16x144xf32>
    %218 = vector.broadcast %216 : vector<1x144xf32> to vector<16x144xf32>
    %219 = arith.mulf %218, %217 : vector<16x144xf32>
    %220 = arith.addf %215, %219 : vector<16x144xf32>
    %c20 = arith.constant 20 : index
    %c0_151 = arith.constant 0 : index
    %221 = vector.load %arg1[%c20, %c0_151] : memref<36x144xf32, #tpu.memory_space<vmem>>, vector<1x144xf32>
    %222 = vector.extract_strided_slice %210 {offsets = [0, 2], sizes = [16, 144], strides = [1, 1]} : vector<16x146xf32> to vector<16x144xf32>
    %223 = vector.broadcast %221 : vector<1x144xf32> to vector<16x144xf32>
    %224 = arith.mulf %223, %222 : vector<16x144xf32>
    %225 = arith.addf %220, %224 : vector<16x144xf32>
    %c2_152 = arith.constant 2 : index
    %c1_153 = arith.constant 1 : index
    %c0_154 = arith.constant 0 : index
    %226 = vector.load %arg5[%c2_152, %c1_153, %c0_154] : memref<4x18x146xf32, #tpu.memory_space<vmem>>, vector<1x16x146xf32>
    %227 = vector.shape_cast %226 : vector<1x16x146xf32> to vector<16x146xf32>
    %c21 = arith.constant 21 : index
    %c0_155 = arith.constant 0 : index
    %228 = vector.load %arg1[%c21, %c0_155] : memref<36x144xf32, #tpu.memory_space<vmem>>, vector<1x144xf32>
    %229 = vector.extract_strided_slice %227 {offsets = [0, 0], sizes = [16, 144], strides = [1, 1]} : vector<16x146xf32> to vector<16x144xf32>
    %230 = vector.broadcast %228 : vector<1x144xf32> to vector<16x144xf32>
    %231 = arith.mulf %230, %229 : vector<16x144xf32>
    %232 = arith.addf %225, %231 : vector<16x144xf32>
    %c22 = arith.constant 22 : index
    %c0_156 = arith.constant 0 : index
    %233 = vector.load %arg1[%c22, %c0_156] : memref<36x144xf32, #tpu.memory_space<vmem>>, vector<1x144xf32>
    %234 = vector.extract_strided_slice %227 {offsets = [0, 1], sizes = [16, 144], strides = [1, 1]} : vector<16x146xf32> to vector<16x144xf32>
    %235 = vector.broadcast %233 : vector<1x144xf32> to vector<16x144xf32>
    %236 = arith.mulf %235, %234 : vector<16x144xf32>
    %237 = arith.addf %232, %236 : vector<16x144xf32>
    %c23 = arith.constant 23 : index
    %c0_157 = arith.constant 0 : index
    %238 = vector.load %arg1[%c23, %c0_157] : memref<36x144xf32, #tpu.memory_space<vmem>>, vector<1x144xf32>
    %239 = vector.extract_strided_slice %227 {offsets = [0, 2], sizes = [16, 144], strides = [1, 1]} : vector<16x146xf32> to vector<16x144xf32>
    %240 = vector.broadcast %238 : vector<1x144xf32> to vector<16x144xf32>
    %241 = arith.mulf %240, %239 : vector<16x144xf32>
    %242 = arith.addf %237, %241 : vector<16x144xf32>
    %c2_158 = arith.constant 2 : index
    %c2_159 = arith.constant 2 : index
    %c0_160 = arith.constant 0 : index
    %243 = vector.load %arg5[%c2_158, %c2_159, %c0_160] : memref<4x18x146xf32, #tpu.memory_space<vmem>>, vector<1x16x146xf32>
    %244 = vector.shape_cast %243 : vector<1x16x146xf32> to vector<16x146xf32>
    %c24 = arith.constant 24 : index
    %c0_161 = arith.constant 0 : index
    %245 = vector.load %arg1[%c24, %c0_161] : memref<36x144xf32, #tpu.memory_space<vmem>>, vector<1x144xf32>
    %246 = vector.extract_strided_slice %244 {offsets = [0, 0], sizes = [16, 144], strides = [1, 1]} : vector<16x146xf32> to vector<16x144xf32>
    %247 = vector.broadcast %245 : vector<1x144xf32> to vector<16x144xf32>
    %248 = arith.mulf %247, %246 : vector<16x144xf32>
    %249 = arith.addf %242, %248 : vector<16x144xf32>
    %c25 = arith.constant 25 : index
    %c0_162 = arith.constant 0 : index
    %250 = vector.load %arg1[%c25, %c0_162] : memref<36x144xf32, #tpu.memory_space<vmem>>, vector<1x144xf32>
    %251 = vector.extract_strided_slice %244 {offsets = [0, 1], sizes = [16, 144], strides = [1, 1]} : vector<16x146xf32> to vector<16x144xf32>
    %252 = vector.broadcast %250 : vector<1x144xf32> to vector<16x144xf32>
    %253 = arith.mulf %252, %251 : vector<16x144xf32>
    %254 = arith.addf %249, %253 : vector<16x144xf32>
    %c26 = arith.constant 26 : index
    %c0_163 = arith.constant 0 : index
    %255 = vector.load %arg1[%c26, %c0_163] : memref<36x144xf32, #tpu.memory_space<vmem>>, vector<1x144xf32>
    %256 = vector.extract_strided_slice %244 {offsets = [0, 2], sizes = [16, 144], strides = [1, 1]} : vector<16x146xf32> to vector<16x144xf32>
    %257 = vector.broadcast %255 : vector<1x144xf32> to vector<16x144xf32>
    %258 = arith.mulf %257, %256 : vector<16x144xf32>
    %259 = arith.addf %254, %258 : vector<16x144xf32>
    %c3_164 = arith.constant 3 : index
    %c0_165 = arith.constant 0 : index
    %c0_166 = arith.constant 0 : index
    %260 = vector.load %arg5[%c3_164, %c0_165, %c0_166] : memref<4x18x146xf32, #tpu.memory_space<vmem>>, vector<1x16x146xf32>
    %261 = vector.shape_cast %260 : vector<1x16x146xf32> to vector<16x146xf32>
    %c27 = arith.constant 27 : index
    %c0_167 = arith.constant 0 : index
    %262 = vector.load %arg1[%c27, %c0_167] : memref<36x144xf32, #tpu.memory_space<vmem>>, vector<1x144xf32>
    %263 = vector.extract_strided_slice %261 {offsets = [0, 0], sizes = [16, 144], strides = [1, 1]} : vector<16x146xf32> to vector<16x144xf32>
    %264 = vector.broadcast %262 : vector<1x144xf32> to vector<16x144xf32>
    %265 = arith.mulf %264, %263 : vector<16x144xf32>
    %266 = arith.addf %259, %265 : vector<16x144xf32>
    %c28 = arith.constant 28 : index
    %c0_168 = arith.constant 0 : index
    %267 = vector.load %arg1[%c28, %c0_168] : memref<36x144xf32, #tpu.memory_space<vmem>>, vector<1x144xf32>
    %268 = vector.extract_strided_slice %261 {offsets = [0, 1], sizes = [16, 144], strides = [1, 1]} : vector<16x146xf32> to vector<16x144xf32>
    %269 = vector.broadcast %267 : vector<1x144xf32> to vector<16x144xf32>
    %270 = arith.mulf %269, %268 : vector<16x144xf32>
    %271 = arith.addf %266, %270 : vector<16x144xf32>
    %c29 = arith.constant 29 : index
    %c0_169 = arith.constant 0 : index
    %272 = vector.load %arg1[%c29, %c0_169] : memref<36x144xf32, #tpu.memory_space<vmem>>, vector<1x144xf32>
    %273 = vector.extract_strided_slice %261 {offsets = [0, 2], sizes = [16, 144], strides = [1, 1]} : vector<16x146xf32> to vector<16x144xf32>
    %274 = vector.broadcast %272 : vector<1x144xf32> to vector<16x144xf32>
    %275 = arith.mulf %274, %273 : vector<16x144xf32>
    %276 = arith.addf %271, %275 : vector<16x144xf32>
    %c3_170 = arith.constant 3 : index
    %c1_171 = arith.constant 1 : index
    %c0_172 = arith.constant 0 : index
    %277 = vector.load %arg5[%c3_170, %c1_171, %c0_172] : memref<4x18x146xf32, #tpu.memory_space<vmem>>, vector<1x16x146xf32>
    %278 = vector.shape_cast %277 : vector<1x16x146xf32> to vector<16x146xf32>
    %c30 = arith.constant 30 : index
    %c0_173 = arith.constant 0 : index
    %279 = vector.load %arg1[%c30, %c0_173] : memref<36x144xf32, #tpu.memory_space<vmem>>, vector<1x144xf32>
    %280 = vector.extract_strided_slice %278 {offsets = [0, 0], sizes = [16, 144], strides = [1, 1]} : vector<16x146xf32> to vector<16x144xf32>
    %281 = vector.broadcast %279 : vector<1x144xf32> to vector<16x144xf32>
    %282 = arith.mulf %281, %280 : vector<16x144xf32>
    %283 = arith.addf %276, %282 : vector<16x144xf32>
    %c31 = arith.constant 31 : index
    %c0_174 = arith.constant 0 : index
    %284 = vector.load %arg1[%c31, %c0_174] : memref<36x144xf32, #tpu.memory_space<vmem>>, vector<1x144xf32>
    %285 = vector.extract_strided_slice %278 {offsets = [0, 1], sizes = [16, 144], strides = [1, 1]} : vector<16x146xf32> to vector<16x144xf32>
    %286 = vector.broadcast %284 : vector<1x144xf32> to vector<16x144xf32>
    %287 = arith.mulf %286, %285 : vector<16x144xf32>
    %288 = arith.addf %283, %287 : vector<16x144xf32>
    %c32 = arith.constant 32 : index
    %c0_175 = arith.constant 0 : index
    %289 = vector.load %arg1[%c32, %c0_175] : memref<36x144xf32, #tpu.memory_space<vmem>>, vector<1x144xf32>
    %290 = vector.extract_strided_slice %278 {offsets = [0, 2], sizes = [16, 144], strides = [1, 1]} : vector<16x146xf32> to vector<16x144xf32>
    %291 = vector.broadcast %289 : vector<1x144xf32> to vector<16x144xf32>
    %292 = arith.mulf %291, %290 : vector<16x144xf32>
    %293 = arith.addf %288, %292 : vector<16x144xf32>
    %c3_176 = arith.constant 3 : index
    %c2_177 = arith.constant 2 : index
    %c0_178 = arith.constant 0 : index
    %294 = vector.load %arg5[%c3_176, %c2_177, %c0_178] : memref<4x18x146xf32, #tpu.memory_space<vmem>>, vector<1x16x146xf32>
    %295 = vector.shape_cast %294 : vector<1x16x146xf32> to vector<16x146xf32>
    %c33 = arith.constant 33 : index
    %c0_179 = arith.constant 0 : index
    %296 = vector.load %arg1[%c33, %c0_179] : memref<36x144xf32, #tpu.memory_space<vmem>>, vector<1x144xf32>
    %297 = vector.extract_strided_slice %295 {offsets = [0, 0], sizes = [16, 144], strides = [1, 1]} : vector<16x146xf32> to vector<16x144xf32>
    %298 = vector.broadcast %296 : vector<1x144xf32> to vector<16x144xf32>
    %299 = arith.mulf %298, %297 : vector<16x144xf32>
    %300 = arith.addf %293, %299 : vector<16x144xf32>
    %c34 = arith.constant 34 : index
    %c0_180 = arith.constant 0 : index
    %301 = vector.load %arg1[%c34, %c0_180] : memref<36x144xf32, #tpu.memory_space<vmem>>, vector<1x144xf32>
    %302 = vector.extract_strided_slice %295 {offsets = [0, 1], sizes = [16, 144], strides = [1, 1]} : vector<16x146xf32> to vector<16x144xf32>
    %303 = vector.broadcast %301 : vector<1x144xf32> to vector<16x144xf32>
    %304 = arith.mulf %303, %302 : vector<16x144xf32>
    %305 = arith.addf %300, %304 : vector<16x144xf32>
    %c35 = arith.constant 35 : index
    %c0_181 = arith.constant 0 : index
    %306 = vector.load %arg1[%c35, %c0_181] : memref<36x144xf32, #tpu.memory_space<vmem>>, vector<1x144xf32>
    %307 = vector.extract_strided_slice %295 {offsets = [0, 2], sizes = [16, 144], strides = [1, 1]} : vector<16x146xf32> to vector<16x144xf32>
    %308 = vector.broadcast %306 : vector<1x144xf32> to vector<16x144xf32>
    %309 = arith.mulf %308, %307 : vector<16x144xf32>
    %310 = arith.addf %305, %309 : vector<16x144xf32>
    %c0_182 = arith.constant 0 : index
    %c0_183 = arith.constant 0 : index
    %c0_184 = arith.constant 0 : index
    %311 = vector.load %arg6[%c0_182, %c0_183, %c0_184] : memref<2x16x144xf32, #tpu.memory_space<vmem>>, vector<1x16x144xf32>
    %312 = vector.shape_cast %311 : vector<1x16x144xf32> to vector<16x144xf32>
    %313 = vector.shape_cast %310 : vector<16x144xf32> to vector<1x16x144xf32>
    tpu.vector_store %arg6[%c0_182, %c0_183, %c0_184], %313 {strides = array<i32>} : memref<2x16x144xf32, #tpu.memory_space<vmem>>, vector<1x16x144xf32>,
    %c1_185 = arith.constant 1 : index
    %c0_186 = arith.constant 0 : index
    %c0_187 = arith.constant 0 : index
    %c0_188 = arith.constant 0 : index
    %314 = vector.load %arg0[%c1_185, %c0_186, %c0_187, %c0_188] : memref<2x4x16x16xf32, #tpu.memory_space<vmem>>, vector<1x1x16x16xf32>
    %315 = vector.shape_cast %314 : vector<1x1x16x16xf32> to vector<16x16xf32>
    %c0_189 = arith.constant 0 : index
    %c1_190 = arith.constant 1 : index
    %c1_191 = arith.constant 1 : index
    %316 = vector.load %arg5[%c0_189, %c1_190, %c1_191] : memref<4x18x146xf32, #tpu.memory_space<vmem>>, vector<1x16x16xf32>
    %317 = vector.shape_cast %316 : vector<1x16x16xf32> to vector<16x16xf32>
    %318 = vector.shape_cast %315 : vector<16x16xf32> to vector<1x16x16xf32>
    tpu.vector_store %arg5[%c0_189, %c1_190, %c1_191], %318 {strides = array<i32>} : memref<4x18x146xf32, #tpu.memory_space<vmem>>, vector<1x16x16xf32>,
    %c0_192 = arith.constant 0 : index
    %c1_193 = arith.constant 1 : index
    %c19_194 = arith.constant 19 : index
    %319 = vector.load %arg5[%c0_192, %c1_193, %c19_194] : memref<4x18x146xf32, #tpu.memory_space<vmem>>, vector<1x16x16xf32>
    %320 = vector.shape_cast %319 : vector<1x16x16xf32> to vector<16x16xf32>
    %321 = vector.shape_cast %315 : vector<16x16xf32> to vector<1x16x16xf32>
    tpu.vector_store %arg5[%c0_192, %c1_193, %c19_194], %321 {strides = array<i32>} : memref<4x18x146xf32, #tpu.memory_space<vmem>>, vector<1x16x16xf32>,
    %c0_195 = arith.constant 0 : index
    %c1_196 = arith.constant 1 : index
    %c37_197 = arith.constant 37 : index
    %322 = vector.load %arg5[%c0_195, %c1_196, %c37_197] : memref<4x18x146xf32, #tpu.memory_space<vmem>>, vector<1x16x16xf32>
    %323 = vector.shape_cast %322 : vector<1x16x16xf32> to vector<16x16xf32>
    %324 = vector.shape_cast %315 : vector<16x16xf32> to vector<1x16x16xf32>
    tpu.vector_store %arg5[%c0_195, %c1_196, %c37_197], %324 {strides = array<i32>} : memref<4x18x146xf32, #tpu.memory_space<vmem>>, vector<1x16x16xf32>,
    %c0_198 = arith.constant 0 : index
    %c1_199 = arith.constant 1 : index
    %c55_200 = arith.constant 55 : index
    %325 = vector.load %arg5[%c0_198, %c1_199, %c55_200] : memref<4x18x146xf32, #tpu.memory_space<vmem>>, vector<1x16x16xf32>
    %326 = vector.shape_cast %325 : vector<1x16x16xf32> to vector<16x16xf32>
    %327 = vector.shape_cast %315 : vector<16x16xf32> to vector<1x16x16xf32>
    tpu.vector_store %arg5[%c0_198, %c1_199, %c55_200], %327 {strides = array<i32>} : memref<4x18x146xf32, #tpu.memory_space<vmem>>, vector<1x16x16xf32>,
    %c0_201 = arith.constant 0 : index
    %c1_202 = arith.constant 1 : index
    %c73_203 = arith.constant 73 : index
    %328 = vector.load %arg5[%c0_201, %c1_202, %c73_203] : memref<4x18x146xf32, #tpu.memory_space<vmem>>, vector<1x16x16xf32>
    %329 = vector.shape_cast %328 : vector<1x16x16xf32> to vector<16x16xf32>
    %330 = vector.shape_cast %315 : vector<16x16xf32> to vector<1x16x16xf32>
    tpu.vector_store %arg5[%c0_201, %c1_202, %c73_203], %330 {strides = array<i32>} : memref<4x18x146xf32, #tpu.memory_space<vmem>>, vector<1x16x16xf32>,
    %c0_204 = arith.constant 0 : index
    %c1_205 = arith.constant 1 : index
    %c91_206 = arith.constant 91 : index
    %331 = vector.load %arg5[%c0_204, %c1_205, %c91_206] : memref<4x18x146xf32, #tpu.memory_space<vmem>>, vector<1x16x16xf32>
    %332 = vector.shape_cast %331 : vector<1x16x16xf32> to vector<16x16xf32>
    %333 = vector.shape_cast %315 : vector<16x16xf32> to vector<1x16x16xf32>
    tpu.vector_store %arg5[%c0_204, %c1_205, %c91_206], %333 {strides = array<i32>} : memref<4x18x146xf32, #tpu.memory_space<vmem>>, vector<1x16x16xf32>,
    %c0_207 = arith.constant 0 : index
    %c1_208 = arith.constant 1 : index
    %c109_209 = arith.constant 109 : index
    %334 = vector.load %arg5[%c0_207, %c1_208, %c109_209] : memref<4x18x146xf32, #tpu.memory_space<vmem>>, vector<1x16x16xf32>
    %335 = vector.shape_cast %334 : vector<1x16x16xf32> to vector<16x16xf32>
    %336 = vector.shape_cast %315 : vector<16x16xf32> to vector<1x16x16xf32>
    tpu.vector_store %arg5[%c0_207, %c1_208, %c109_209], %336 {strides = array<i32>} : memref<4x18x146xf32, #tpu.memory_space<vmem>>, vector<1x16x16xf32>,
    %c0_210 = arith.constant 0 : index
    %c1_211 = arith.constant 1 : index
    %c127_212 = arith.constant 127 : index
    %337 = vector.load %arg5[%c0_210, %c1_211, %c127_212] : memref<4x18x146xf32, #tpu.memory_space<vmem>>, vector<1x16x16xf32>
    %338 = vector.shape_cast %337 : vector<1x16x16xf32> to vector<16x16xf32>
    %339 = vector.shape_cast %315 : vector<16x16xf32> to vector<1x16x16xf32>
    tpu.vector_store %arg5[%c0_210, %c1_211, %c127_212], %339 {strides = array<i32>} : memref<4x18x146xf32, #tpu.memory_space<vmem>>, vector<1x16x16xf32>,
    %c1_213 = arith.constant 1 : index
    %c1_214 = arith.constant 1 : index
    %c0_215 = arith.constant 0 : index
    %c0_216 = arith.constant 0 : index
    %340 = vector.load %arg0[%c1_213, %c1_214, %c0_215, %c0_216] : memref<2x4x16x16xf32, #tpu.memory_space<vmem>>, vector<1x1x16x16xf32>
    %341 = vector.shape_cast %340 : vector<1x1x16x16xf32> to vector<16x16xf32>
    %c1_217 = arith.constant 1 : index
    %c1_218 = arith.constant 1 : index
    %c1_219 = arith.constant 1 : index
    %342 = vector.load %arg5[%c1_217, %c1_218, %c1_219] : memref<4x18x146xf32, #tpu.memory_space<vmem>>, vector<1x16x16xf32>
    %343 = vector.shape_cast %342 : vector<1x16x16xf32> to vector<16x16xf32>
    %344 = vector.shape_cast %341 : vector<16x16xf32> to vector<1x16x16xf32>
    tpu.vector_store %arg5[%c1_217, %c1_218, %c1_219], %344 {strides = array<i32>} : memref<4x18x146xf32, #tpu.memory_space<vmem>>, vector<1x16x16xf32>,
    %c1_220 = arith.constant 1 : index
    %c1_221 = arith.constant 1 : index
    %c19_222 = arith.constant 19 : index
    %345 = vector.load %arg5[%c1_220, %c1_221, %c19_222] : memref<4x18x146xf32, #tpu.memory_space<vmem>>, vector<1x16x16xf32>
    %346 = vector.shape_cast %345 : vector<1x16x16xf32> to vector<16x16xf32>
    %347 = vector.shape_cast %341 : vector<16x16xf32> to vector<1x16x16xf32>
    tpu.vector_store %arg5[%c1_220, %c1_221, %c19_222], %347 {strides = array<i32>} : memref<4x18x146xf32, #tpu.memory_space<vmem>>, vector<1x16x16xf32>,
    %c1_223 = arith.constant 1 : index
    %c1_224 = arith.constant 1 : index
    %c37_225 = arith.constant 37 : index
    %348 = vector.load %arg5[%c1_223, %c1_224, %c37_225] : memref<4x18x146xf32, #tpu.memory_space<vmem>>, vector<1x16x16xf32>
    %349 = vector.shape_cast %348 : vector<1x16x16xf32> to vector<16x16xf32>
    %350 = vector.shape_cast %341 : vector<16x16xf32> to vector<1x16x16xf32>
    tpu.vector_store %arg5[%c1_223, %c1_224, %c37_225], %350 {strides = array<i32>} : memref<4x18x146xf32, #tpu.memory_space<vmem>>, vector<1x16x16xf32>,
    %c1_226 = arith.constant 1 : index
    %c1_227 = arith.constant 1 : index
    %c55_228 = arith.constant 55 : index
    %351 = vector.load %arg5[%c1_226, %c1_227, %c55_228] : memref<4x18x146xf32, #tpu.memory_space<vmem>>, vector<1x16x16xf32>
    %352 = vector.shape_cast %351 : vector<1x16x16xf32> to vector<16x16xf32>
    %353 = vector.shape_cast %341 : vector<16x16xf32> to vector<1x16x16xf32>
    tpu.vector_store %arg5[%c1_226, %c1_227, %c55_228], %353 {strides = array<i32>} : memref<4x18x146xf32, #tpu.memory_space<vmem>>, vector<1x16x16xf32>,
    %c1_229 = arith.constant 1 : index
    %c1_230 = arith.constant 1 : index
    %c73_231 = arith.constant 73 : index
    %354 = vector.load %arg5[%c1_229, %c1_230, %c73_231] : memref<4x18x146xf32, #tpu.memory_space<vmem>>, vector<1x16x16xf32>
    %355 = vector.shape_cast %354 : vector<1x16x16xf32> to vector<16x16xf32>
    %356 = vector.shape_cast %341 : vector<16x16xf32> to vector<1x16x16xf32>
    tpu.vector_store %arg5[%c1_229, %c1_230, %c73_231], %356 {strides = array<i32>} : memref<4x18x146xf32, #tpu.memory_space<vmem>>, vector<1x16x16xf32>,
    %c1_232 = arith.constant 1 : index
    %c1_233 = arith.constant 1 : index
    %c91_234 = arith.constant 91 : index
    %357 = vector.load %arg5[%c1_232, %c1_233, %c91_234] : memref<4x18x146xf32, #tpu.memory_space<vmem>>, vector<1x16x16xf32>
    %358 = vector.shape_cast %357 : vector<1x16x16xf32> to vector<16x16xf32>
    %359 = vector.shape_cast %341 : vector<16x16xf32> to vector<1x16x16xf32>
    tpu.vector_store %arg5[%c1_232, %c1_233, %c91_234], %359 {strides = array<i32>} : memref<4x18x146xf32, #tpu.memory_space<vmem>>, vector<1x16x16xf32>,
    %c1_235 = arith.constant 1 : index
    %c1_236 = arith.constant 1 : index
    %c109_237 = arith.constant 109 : index
    %360 = vector.load %arg5[%c1_235, %c1_236, %c109_237] : memref<4x18x146xf32, #tpu.memory_space<vmem>>, vector<1x16x16xf32>
    %361 = vector.shape_cast %360 : vector<1x16x16xf32> to vector<16x16xf32>
    %362 = vector.shape_cast %341 : vector<16x16xf32> to vector<1x16x16xf32>
    tpu.vector_store %arg5[%c1_235, %c1_236, %c109_237], %362 {strides = array<i32>} : memref<4x18x146xf32, #tpu.memory_space<vmem>>, vector<1x16x16xf32>,
    %c1_238 = arith.constant 1 : index
    %c1_239 = arith.constant 1 : index
    %c127_240 = arith.constant 127 : index
    %363 = vector.load %arg5[%c1_238, %c1_239, %c127_240] : memref<4x18x146xf32, #tpu.memory_space<vmem>>, vector<1x16x16xf32>
    %364 = vector.shape_cast %363 : vector<1x16x16xf32> to vector<16x16xf32>
    %365 = vector.shape_cast %341 : vector<16x16xf32> to vector<1x16x16xf32>
    tpu.vector_store %arg5[%c1_238, %c1_239, %c127_240], %365 {strides = array<i32>} : memref<4x18x146xf32, #tpu.memory_space<vmem>>, vector<1x16x16xf32>,
    %c1_241 = arith.constant 1 : index
    %c2_242 = arith.constant 2 : index
    %c0_243 = arith.constant 0 : index
    %c0_244 = arith.constant 0 : index
    %366 = vector.load %arg0[%c1_241, %c2_242, %c0_243, %c0_244] : memref<2x4x16x16xf32, #tpu.memory_space<vmem>>, vector<1x1x16x16xf32>
    %367 = vector.shape_cast %366 : vector<1x1x16x16xf32> to vector<16x16xf32>
    %c2_245 = arith.constant 2 : index
    %c1_246 = arith.constant 1 : index
    %c1_247 = arith.constant 1 : index
    %368 = vector.load %arg5[%c2_245, %c1_246, %c1_247] : memref<4x18x146xf32, #tpu.memory_space<vmem>>, vector<1x16x16xf32>
    %369 = vector.shape_cast %368 : vector<1x16x16xf32> to vector<16x16xf32>
    %370 = vector.shape_cast %367 : vector<16x16xf32> to vector<1x16x16xf32>
    tpu.vector_store %arg5[%c2_245, %c1_246, %c1_247], %370 {strides = array<i32>} : memref<4x18x146xf32, #tpu.memory_space<vmem>>, vector<1x16x16xf32>,
    %c2_248 = arith.constant 2 : index
    %c1_249 = arith.constant 1 : index
    %c19_250 = arith.constant 19 : index
    %371 = vector.load %arg5[%c2_248, %c1_249, %c19_250] : memref<4x18x146xf32, #tpu.memory_space<vmem>>, vector<1x16x16xf32>
    %372 = vector.shape_cast %371 : vector<1x16x16xf32> to vector<16x16xf32>
    %373 = vector.shape_cast %367 : vector<16x16xf32> to vector<1x16x16xf32>
    tpu.vector_store %arg5[%c2_248, %c1_249, %c19_250], %373 {strides = array<i32>} : memref<4x18x146xf32, #tpu.memory_space<vmem>>, vector<1x16x16xf32>,
    %c2_251 = arith.constant 2 : index
    %c1_252 = arith.constant 1 : index
    %c37_253 = arith.constant 37 : index
    %374 = vector.load %arg5[%c2_251, %c1_252, %c37_253] : memref<4x18x146xf32, #tpu.memory_space<vmem>>, vector<1x16x16xf32>
    %375 = vector.shape_cast %374 : vector<1x16x16xf32> to vector<16x16xf32>
    %376 = vector.shape_cast %367 : vector<16x16xf32> to vector<1x16x16xf32>
    tpu.vector_store %arg5[%c2_251, %c1_252, %c37_253], %376 {strides = array<i32>} : memref<4x18x146xf32, #tpu.memory_space<vmem>>, vector<1x16x16xf32>,
    %c2_254 = arith.constant 2 : index
    %c1_255 = arith.constant 1 : index
    %c55_256 = arith.constant 55 : index
    %377 = vector.load %arg5[%c2_254, %c1_255, %c55_256] : memref<4x18x146xf32, #tpu.memory_space<vmem>>, vector<1x16x16xf32>
    %378 = vector.shape_cast %377 : vector<1x16x16xf32> to vector<16x16xf32>
    %379 = vector.shape_cast %367 : vector<16x16xf32> to vector<1x16x16xf32>
    tpu.vector_store %arg5[%c2_254, %c1_255, %c55_256], %379 {strides = array<i32>} : memref<4x18x146xf32, #tpu.memory_space<vmem>>, vector<1x16x16xf32>,
    %c2_257 = arith.constant 2 : index
    %c1_258 = arith.constant 1 : index
    %c73_259 = arith.constant 73 : index
    %380 = vector.load %arg5[%c2_257, %c1_258, %c73_259] : memref<4x18x146xf32, #tpu.memory_space<vmem>>, vector<1x16x16xf32>
    %381 = vector.shape_cast %380 : vector<1x16x16xf32> to vector<16x16xf32>
    %382 = vector.shape_cast %367 : vector<16x16xf32> to vector<1x16x16xf32>
    tpu.vector_store %arg5[%c2_257, %c1_258, %c73_259], %382 {strides = array<i32>} : memref<4x18x146xf32, #tpu.memory_space<vmem>>, vector<1x16x16xf32>,
    %c2_260 = arith.constant 2 : index
    %c1_261 = arith.constant 1 : index
    %c91_262 = arith.constant 91 : index
    %383 = vector.load %arg5[%c2_260, %c1_261, %c91_262] : memref<4x18x146xf32, #tpu.memory_space<vmem>>, vector<1x16x16xf32>
    %384 = vector.shape_cast %383 : vector<1x16x16xf32> to vector<16x16xf32>
    %385 = vector.shape_cast %367 : vector<16x16xf32> to vector<1x16x16xf32>
    tpu.vector_store %arg5[%c2_260, %c1_261, %c91_262], %385 {strides = array<i32>} : memref<4x18x146xf32, #tpu.memory_space<vmem>>, vector<1x16x16xf32>,
    %c2_263 = arith.constant 2 : index
    %c1_264 = arith.constant 1 : index
    %c109_265 = arith.constant 109 : index
    %386 = vector.load %arg5[%c2_263, %c1_264, %c109_265] : memref<4x18x146xf32, #tpu.memory_space<vmem>>, vector<1x16x16xf32>
    %387 = vector.shape_cast %386 : vector<1x16x16xf32> to vector<16x16xf32>
    %388 = vector.shape_cast %367 : vector<16x16xf32> to vector<1x16x16xf32>
    tpu.vector_store %arg5[%c2_263, %c1_264, %c109_265], %388 {strides = array<i32>} : memref<4x18x146xf32, #tpu.memory_space<vmem>>, vector<1x16x16xf32>,
    %c2_266 = arith.constant 2 : index
    %c1_267 = arith.constant 1 : index
    %c127_268 = arith.constant 127 : index
    %389 = vector.load %arg5[%c2_266, %c1_267, %c127_268] : memref<4x18x146xf32, #tpu.memory_space<vmem>>, vector<1x16x16xf32>
    %390 = vector.shape_cast %389 : vector<1x16x16xf32> to vector<16x16xf32>
    %391 = vector.shape_cast %367 : vector<16x16xf32> to vector<1x16x16xf32>
    tpu.vector_store %arg5[%c2_266, %c1_267, %c127_268], %391 {strides = array<i32>} : memref<4x18x146xf32, #tpu.memory_space<vmem>>, vector<1x16x16xf32>,
    %c1_269 = arith.constant 1 : index
    %c3_270 = arith.constant 3 : index
    %c0_271 = arith.constant 0 : index
    %c0_272 = arith.constant 0 : index
    %392 = vector.load %arg0[%c1_269, %c3_270, %c0_271, %c0_272] : memref<2x4x16x16xf32, #tpu.memory_space<vmem>>, vector<1x1x16x16xf32>
    %393 = vector.shape_cast %392 : vector<1x1x16x16xf32> to vector<16x16xf32>
    %c3_273 = arith.constant 3 : index
    %c1_274 = arith.constant 1 : index
    %c1_275 = arith.constant 1 : index
    %394 = vector.load %arg5[%c3_273, %c1_274, %c1_275] : memref<4x18x146xf32, #tpu.memory_space<vmem>>, vector<1x16x16xf32>
    %395 = vector.shape_cast %394 : vector<1x16x16xf32> to vector<16x16xf32>
    %396 = vector.shape_cast %393 : vector<16x16xf32> to vector<1x16x16xf32>
    tpu.vector_store %arg5[%c3_273, %c1_274, %c1_275], %396 {strides = array<i32>} : memref<4x18x146xf32, #tpu.memory_space<vmem>>, vector<1x16x16xf32>,
    %c3_276 = arith.constant 3 : index
    %c1_277 = arith.constant 1 : index
    %c19_278 = arith.constant 19 : index
    %397 = vector.load %arg5[%c3_276, %c1_277, %c19_278] : memref<4x18x146xf32, #tpu.memory_space<vmem>>, vector<1x16x16xf32>
    %398 = vector.shape_cast %397 : vector<1x16x16xf32> to vector<16x16xf32>
    %399 = vector.shape_cast %393 : vector<16x16xf32> to vector<1x16x16xf32>
    tpu.vector_store %arg5[%c3_276, %c1_277, %c19_278], %399 {strides = array<i32>} : memref<4x18x146xf32, #tpu.memory_space<vmem>>, vector<1x16x16xf32>,
    %c3_279 = arith.constant 3 : index
    %c1_280 = arith.constant 1 : index
    %c37_281 = arith.constant 37 : index
    %400 = vector.load %arg5[%c3_279, %c1_280, %c37_281] : memref<4x18x146xf32, #tpu.memory_space<vmem>>, vector<1x16x16xf32>
    %401 = vector.shape_cast %400 : vector<1x16x16xf32> to vector<16x16xf32>
    %402 = vector.shape_cast %393 : vector<16x16xf32> to vector<1x16x16xf32>
    tpu.vector_store %arg5[%c3_279, %c1_280, %c37_281], %402 {strides = array<i32>} : memref<4x18x146xf32, #tpu.memory_space<vmem>>, vector<1x16x16xf32>,
    %c3_282 = arith.constant 3 : index
    %c1_283 = arith.constant 1 : index
    %c55_284 = arith.constant 55 : index
    %403 = vector.load %arg5[%c3_282, %c1_283, %c55_284] : memref<4x18x146xf32, #tpu.memory_space<vmem>>, vector<1x16x16xf32>
    %404 = vector.shape_cast %403 : vector<1x16x16xf32> to vector<16x16xf32>
    %405 = vector.shape_cast %393 : vector<16x16xf32> to vector<1x16x16xf32>
    tpu.vector_store %arg5[%c3_282, %c1_283, %c55_284], %405 {strides = array<i32>} : memref<4x18x146xf32, #tpu.memory_space<vmem>>, vector<1x16x16xf32>,
    %c3_285 = arith.constant 3 : index
    %c1_286 = arith.constant 1 : index
    %c73_287 = arith.constant 73 : index
    %406 = vector.load %arg5[%c3_285, %c1_286, %c73_287] : memref<4x18x146xf32, #tpu.memory_space<vmem>>, vector<1x16x16xf32>
    %407 = vector.shape_cast %406 : vector<1x16x16xf32> to vector<16x16xf32>
    %408 = vector.shape_cast %393 : vector<16x16xf32> to vector<1x16x16xf32>
    tpu.vector_store %arg5[%c3_285, %c1_286, %c73_287], %408 {strides = array<i32>} : memref<4x18x146xf32, #tpu.memory_space<vmem>>, vector<1x16x16xf32>,
    %c3_288 = arith.constant 3 : index
    %c1_289 = arith.constant 1 : index
    %c91_290 = arith.constant 91 : index
    %409 = vector.load %arg5[%c3_288, %c1_289, %c91_290] : memref<4x18x146xf32, #tpu.memory_space<vmem>>, vector<1x16x16xf32>
    %410 = vector.shape_cast %409 : vector<1x16x16xf32> to vector<16x16xf32>
    %411 = vector.shape_cast %393 : vector<16x16xf32> to vector<1x16x16xf32>
    tpu.vector_store %arg5[%c3_288, %c1_289, %c91_290], %411 {strides = array<i32>} : memref<4x18x146xf32, #tpu.memory_space<vmem>>, vector<1x16x16xf32>,
    %c3_291 = arith.constant 3 : index
    %c1_292 = arith.constant 1 : index
    %c109_293 = arith.constant 109 : index
    %412 = vector.load %arg5[%c3_291, %c1_292, %c109_293] : memref<4x18x146xf32, #tpu.memory_space<vmem>>, vector<1x16x16xf32>
    %413 = vector.shape_cast %412 : vector<1x16x16xf32> to vector<16x16xf32>
    %414 = vector.shape_cast %393 : vector<16x16xf32> to vector<1x16x16xf32>
    tpu.vector_store %arg5[%c3_291, %c1_292, %c109_293], %414 {strides = array<i32>} : memref<4x18x146xf32, #tpu.memory_space<vmem>>, vector<1x16x16xf32>,
    %c3_294 = arith.constant 3 : index
    %c1_295 = arith.constant 1 : index
    %c127_296 = arith.constant 127 : index
    %415 = vector.load %arg5[%c3_294, %c1_295, %c127_296] : memref<4x18x146xf32, #tpu.memory_space<vmem>>, vector<1x16x16xf32>
    %416 = vector.shape_cast %415 : vector<1x16x16xf32> to vector<16x16xf32>
    %417 = vector.shape_cast %393 : vector<16x16xf32> to vector<1x16x16xf32>
    tpu.vector_store %arg5[%c3_294, %c1_295, %c127_296], %417 {strides = array<i32>} : memref<4x18x146xf32, #tpu.memory_space<vmem>>, vector<1x16x16xf32>,
    %cst_297 = arith.constant 0.000000e+00 : f32
    %418 = vector.broadcast %cst_297 : f32 to vector<16x144xf32>
    %c0_298 = arith.constant 0 : index
    %c0_299 = arith.constant 0 : index
    %c0_300 = arith.constant 0 : index
    %419 = vector.load %arg5[%c0_298, %c0_299, %c0_300] : memref<4x18x146xf32, #tpu.memory_space<vmem>>, vector<1x16x146xf32>
    %420 = vector.shape_cast %419 : vector<1x16x146xf32> to vector<16x146xf32>
    %c0_301 = arith.constant 0 : index
    %c0_302 = arith.constant 0 : index
    %421 = vector.load %arg1[%c0_301, %c0_302] : memref<36x144xf32, #tpu.memory_space<vmem>>, vector<1x144xf32>
    %422 = vector.extract_strided_slice %420 {offsets = [0, 0], sizes = [16, 144], strides = [1, 1]} : vector<16x146xf32> to vector<16x144xf32>
    %423 = vector.broadcast %421 : vector<1x144xf32> to vector<16x144xf32>
    %424 = arith.mulf %423, %422 : vector<16x144xf32>
    %425 = arith.addf %418, %424 : vector<16x144xf32>
    %c1_303 = arith.constant 1 : index
    %c0_304 = arith.constant 0 : index
    %426 = vector.load %arg1[%c1_303, %c0_304] : memref<36x144xf32, #tpu.memory_space<vmem>>, vector<1x144xf32>
    %427 = vector.extract_strided_slice %420 {offsets = [0, 1], sizes = [16, 144], strides = [1, 1]} : vector<16x146xf32> to vector<16x144xf32>
    %428 = vector.broadcast %426 : vector<1x144xf32> to vector<16x144xf32>
    %429 = arith.mulf %428, %427 : vector<16x144xf32>
    %430 = arith.addf %425, %429 : vector<16x144xf32>
    %c2_305 = arith.constant 2 : index
    %c0_306 = arith.constant 0 : index
    %431 = vector.load %arg1[%c2_305, %c0_306] : memref<36x144xf32, #tpu.memory_space<vmem>>, vector<1x144xf32>
    %432 = vector.extract_strided_slice %420 {offsets = [0, 2], sizes = [16, 144], strides = [1, 1]} : vector<16x146xf32> to vector<16x144xf32>
    %433 = vector.broadcast %431 : vector<1x144xf32> to vector<16x144xf32>
    %434 = arith.mulf %433, %432 : vector<16x144xf32>
    %435 = arith.addf %430, %434 : vector<16x144xf32>
    %c0_307 = arith.constant 0 : index
    %c1_308 = arith.constant 1 : index
    %c0_309 = arith.constant 0 : index
    %436 = vector.load %arg5[%c0_307, %c1_308, %c0_309] : memref<4x18x146xf32, #tpu.memory_space<vmem>>, vector<1x16x146xf32>
    %437 = vector.shape_cast %436 : vector<1x16x146xf32> to vector<16x146xf32>
    %c3_310 = arith.constant 3 : index
    %c0_311 = arith.constant 0 : index
    %438 = vector.load %arg1[%c3_310, %c0_311] : memref<36x144xf32, #tpu.memory_space<vmem>>, vector<1x144xf32>
    %439 = vector.extract_strided_slice %437 {offsets = [0, 0], sizes = [16, 144], strides = [1, 1]} : vector<16x146xf32> to vector<16x144xf32>
    %440 = vector.broadcast %438 : vector<1x144xf32> to vector<16x144xf32>
    %441 = arith.mulf %440, %439 : vector<16x144xf32>
    %442 = arith.addf %435, %441 : vector<16x144xf32>
    %c4_312 = arith.constant 4 : index
    %c0_313 = arith.constant 0 : index
    %443 = vector.load %arg1[%c4_312, %c0_313] : memref<36x144xf32, #tpu.memory_space<vmem>>, vector<1x144xf32>
    %444 = vector.extract_strided_slice %437 {offsets = [0, 1], sizes = [16, 144], strides = [1, 1]} : vector<16x146xf32> to vector<16x144xf32>
    %445 = vector.broadcast %443 : vector<1x144xf32> to vector<16x144xf32>
    %446 = arith.mulf %445, %444 : vector<16x144xf32>
    %447 = arith.addf %442, %446 : vector<16x144xf32>
    %c5_314 = arith.constant 5 : index
    %c0_315 = arith.constant 0 : index
    %448 = vector.load %arg1[%c5_314, %c0_315] : memref<36x144xf32, #tpu.memory_space<vmem>>, vector<1x144xf32>
    %449 = vector.extract_strided_slice %437 {offsets = [0, 2], sizes = [16, 144], strides = [1, 1]} : vector<16x146xf32> to vector<16x144xf32>
    %450 = vector.broadcast %448 : vector<1x144xf32> to vector<16x144xf32>
    %451 = arith.mulf %450, %449 : vector<16x144xf32>
    %452 = arith.addf %447, %451 : vector<16x144xf32>
    %c0_316 = arith.constant 0 : index
    %c2_317 = arith.constant 2 : index
    %c0_318 = arith.constant 0 : index
    %453 = vector.load %arg5[%c0_316, %c2_317, %c0_318] : memref<4x18x146xf32, #tpu.memory_space<vmem>>, vector<1x16x146xf32>
    %454 = vector.shape_cast %453 : vector<1x16x146xf32> to vector<16x146xf32>
    %c6_319 = arith.constant 6 : index
    %c0_320 = arith.constant 0 : index
    %455 = vector.load %arg1[%c6_319, %c0_320] : memref<36x144xf32, #tpu.memory_space<vmem>>, vector<1x144xf32>
    %456 = vector.extract_strided_slice %454 {offsets = [0, 0], sizes = [16, 144], strides = [1, 1]} : vector<16x146xf32> to vector<16x144xf32>
    %457 = vector.broadcast %455 : vector<1x144xf32> to vector<16x144xf32>
    %458 = arith.mulf %457, %456 : vector<16x144xf32>
    %459 = arith.addf %452, %458 : vector<16x144xf32>
    %c7_321 = arith.constant 7 : index
    %c0_322 = arith.constant 0 : index
    %460 = vector.load %arg1[%c7_321, %c0_322] : memref<36x144xf32, #tpu.memory_space<vmem>>, vector<1x144xf32>
    %461 = vector.extract_strided_slice %454 {offsets = [0, 1], sizes = [16, 144], strides = [1, 1]} : vector<16x146xf32> to vector<16x144xf32>
    %462 = vector.broadcast %460 : vector<1x144xf32> to vector<16x144xf32>
    %463 = arith.mulf %462, %461 : vector<16x144xf32>
    %464 = arith.addf %459, %463 : vector<16x144xf32>
    %c8_323 = arith.constant 8 : index
    %c0_324 = arith.constant 0 : index
    %465 = vector.load %arg1[%c8_323, %c0_324] : memref<36x144xf32, #tpu.memory_space<vmem>>, vector<1x144xf32>
    %466 = vector.extract_strided_slice %454 {offsets = [0, 2], sizes = [16, 144], strides = [1, 1]} : vector<16x146xf32> to vector<16x144xf32>
    %467 = vector.broadcast %465 : vector<1x144xf32> to vector<16x144xf32>
    %468 = arith.mulf %467, %466 : vector<16x144xf32>
    %469 = arith.addf %464, %468 : vector<16x144xf32>
    %c1_325 = arith.constant 1 : index
    %c0_326 = arith.constant 0 : index
    %c0_327 = arith.constant 0 : index
    %470 = vector.load %arg5[%c1_325, %c0_326, %c0_327] : memref<4x18x146xf32, #tpu.memory_space<vmem>>, vector<1x16x146xf32>
    %471 = vector.shape_cast %470 : vector<1x16x146xf32> to vector<16x146xf32>
    %c9_328 = arith.constant 9 : index
    %c0_329 = arith.constant 0 : index
    %472 = vector.load %arg1[%c9_328, %c0_329] : memref<36x144xf32, #tpu.memory_space<vmem>>, vector<1x144xf32>
    %473 = vector.extract_strided_slice %471 {offsets = [0, 0], sizes = [16, 144], strides = [1, 1]} : vector<16x146xf32> to vector<16x144xf32>
    %474 = vector.broadcast %472 : vector<1x144xf32> to vector<16x144xf32>
    %475 = arith.mulf %474, %473 : vector<16x144xf32>
    %476 = arith.addf %469, %475 : vector<16x144xf32>
    %c10_330 = arith.constant 10 : index
    %c0_331 = arith.constant 0 : index
    %477 = vector.load %arg1[%c10_330, %c0_331] : memref<36x144xf32, #tpu.memory_space<vmem>>, vector<1x144xf32>
    %478 = vector.extract_strided_slice %471 {offsets = [0, 1], sizes = [16, 144], strides = [1, 1]} : vector<16x146xf32> to vector<16x144xf32>
    %479 = vector.broadcast %477 : vector<1x144xf32> to vector<16x144xf32>
    %480 = arith.mulf %479, %478 : vector<16x144xf32>
    %481 = arith.addf %476, %480 : vector<16x144xf32>
    %c11_332 = arith.constant 11 : index
    %c0_333 = arith.constant 0 : index
    %482 = vector.load %arg1[%c11_332, %c0_333] : memref<36x144xf32, #tpu.memory_space<vmem>>, vector<1x144xf32>
    %483 = vector.extract_strided_slice %471 {offsets = [0, 2], sizes = [16, 144], strides = [1, 1]} : vector<16x146xf32> to vector<16x144xf32>
    %484 = vector.broadcast %482 : vector<1x144xf32> to vector<16x144xf32>
    %485 = arith.mulf %484, %483 : vector<16x144xf32>
    %486 = arith.addf %481, %485 : vector<16x144xf32>
    %c1_334 = arith.constant 1 : index
    %c1_335 = arith.constant 1 : index
    %c0_336 = arith.constant 0 : index
    %487 = vector.load %arg5[%c1_334, %c1_335, %c0_336] : memref<4x18x146xf32, #tpu.memory_space<vmem>>, vector<1x16x146xf32>
    %488 = vector.shape_cast %487 : vector<1x16x146xf32> to vector<16x146xf32>
    %c12_337 = arith.constant 12 : index
    %c0_338 = arith.constant 0 : index
    %489 = vector.load %arg1[%c12_337, %c0_338] : memref<36x144xf32, #tpu.memory_space<vmem>>, vector<1x144xf32>
    %490 = vector.extract_strided_slice %488 {offsets = [0, 0], sizes = [16, 144], strides = [1, 1]} : vector<16x146xf32> to vector<16x144xf32>
    %491 = vector.broadcast %489 : vector<1x144xf32> to vector<16x144xf32>
    %492 = arith.mulf %491, %490 : vector<16x144xf32>
    %493 = arith.addf %486, %492 : vector<16x144xf32>
    %c13_339 = arith.constant 13 : index
    %c0_340 = arith.constant 0 : index
    %494 = vector.load %arg1[%c13_339, %c0_340] : memref<36x144xf32, #tpu.memory_space<vmem>>, vector<1x144xf32>
    %495 = vector.extract_strided_slice %488 {offsets = [0, 1], sizes = [16, 144], strides = [1, 1]} : vector<16x146xf32> to vector<16x144xf32>
    %496 = vector.broadcast %494 : vector<1x144xf32> to vector<16x144xf32>
    %497 = arith.mulf %496, %495 : vector<16x144xf32>
    %498 = arith.addf %493, %497 : vector<16x144xf32>
    %c14_341 = arith.constant 14 : index
    %c0_342 = arith.constant 0 : index
    %499 = vector.load %arg1[%c14_341, %c0_342] : memref<36x144xf32, #tpu.memory_space<vmem>>, vector<1x144xf32>
    %500 = vector.extract_strided_slice %488 {offsets = [0, 2], sizes = [16, 144], strides = [1, 1]} : vector<16x146xf32> to vector<16x144xf32>
    %501 = vector.broadcast %499 : vector<1x144xf32> to vector<16x144xf32>
    %502 = arith.mulf %501, %500 : vector<16x144xf32>
    %503 = arith.addf %498, %502 : vector<16x144xf32>
    %c1_343 = arith.constant 1 : index
    %c2_344 = arith.constant 2 : index
    %c0_345 = arith.constant 0 : index
    %504 = vector.load %arg5[%c1_343, %c2_344, %c0_345] : memref<4x18x146xf32, #tpu.memory_space<vmem>>, vector<1x16x146xf32>
    %505 = vector.shape_cast %504 : vector<1x16x146xf32> to vector<16x146xf32>
    %c15_346 = arith.constant 15 : index
    %c0_347 = arith.constant 0 : index
    %506 = vector.load %arg1[%c15_346, %c0_347] : memref<36x144xf32, #tpu.memory_space<vmem>>, vector<1x144xf32>
    %507 = vector.extract_strided_slice %505 {offsets = [0, 0], sizes = [16, 144], strides = [1, 1]} : vector<16x146xf32> to vector<16x144xf32>
    %508 = vector.broadcast %506 : vector<1x144xf32> to vector<16x144xf32>
    %509 = arith.mulf %508, %507 : vector<16x144xf32>
    %510 = arith.addf %503, %509 : vector<16x144xf32>
    %c16_348 = arith.constant 16 : index
    %c0_349 = arith.constant 0 : index
    %511 = vector.load %arg1[%c16_348, %c0_349] : memref<36x144xf32, #tpu.memory_space<vmem>>, vector<1x144xf32>
    %512 = vector.extract_strided_slice %505 {offsets = [0, 1], sizes = [16, 144], strides = [1, 1]} : vector<16x146xf32> to vector<16x144xf32>
    %513 = vector.broadcast %511 : vector<1x144xf32> to vector<16x144xf32>
    %514 = arith.mulf %513, %512 : vector<16x144xf32>
    %515 = arith.addf %510, %514 : vector<16x144xf32>
    %c17_350 = arith.constant 17 : index
    %c0_351 = arith.constant 0 : index
    %516 = vector.load %arg1[%c17_350, %c0_351] : memref<36x144xf32, #tpu.memory_space<vmem>>, vector<1x144xf32>
    %517 = vector.extract_strided_slice %505 {offsets = [0, 2], sizes = [16, 144], strides = [1, 1]} : vector<16x146xf32> to vector<16x144xf32>
    %518 = vector.broadcast %516 : vector<1x144xf32> to vector<16x144xf32>
    %519 = arith.mulf %518, %517 : vector<16x144xf32>
    %520 = arith.addf %515, %519 : vector<16x144xf32>
    %c2_352 = arith.constant 2 : index
    %c0_353 = arith.constant 0 : index
    %c0_354 = arith.constant 0 : index
    %521 = vector.load %arg5[%c2_352, %c0_353, %c0_354] : memref<4x18x146xf32, #tpu.memory_space<vmem>>, vector<1x16x146xf32>
    %522 = vector.shape_cast %521 : vector<1x16x146xf32> to vector<16x146xf32>
    %c18_355 = arith.constant 18 : index
    %c0_356 = arith.constant 0 : index
    %523 = vector.load %arg1[%c18_355, %c0_356] : memref<36x144xf32, #tpu.memory_space<vmem>>, vector<1x144xf32>
    %524 = vector.extract_strided_slice %522 {offsets = [0, 0], sizes = [16, 144], strides = [1, 1]} : vector<16x146xf32> to vector<16x144xf32>
    %525 = vector.broadcast %523 : vector<1x144xf32> to vector<16x144xf32>
    %526 = arith.mulf %525, %524 : vector<16x144xf32>
    %527 = arith.addf %520, %526 : vector<16x144xf32>
    %c19_357 = arith.constant 19 : index
    %c0_358 = arith.constant 0 : index
    %528 = vector.load %arg1[%c19_357, %c0_358] : memref<36x144xf32, #tpu.memory_space<vmem>>, vector<1x144xf32>
    %529 = vector.extract_strided_slice %522 {offsets = [0, 1], sizes = [16, 144], strides = [1, 1]} : vector<16x146xf32> to vector<16x144xf32>
    %530 = vector.broadcast %528 : vector<1x144xf32> to vector<16x144xf32>
    %531 = arith.mulf %530, %529 : vector<16x144xf32>
    %532 = arith.addf %527, %531 : vector<16x144xf32>
    %c20_359 = arith.constant 20 : index
    %c0_360 = arith.constant 0 : index
    %533 = vector.load %arg1[%c20_359, %c0_360] : memref<36x144xf32, #tpu.memory_space<vmem>>, vector<1x144xf32>
    %534 = vector.extract_strided_slice %522 {offsets = [0, 2], sizes = [16, 144], strides = [1, 1]} : vector<16x146xf32> to vector<16x144xf32>
    %535 = vector.broadcast %533 : vector<1x144xf32> to vector<16x144xf32>
    %536 = arith.mulf %535, %534 : vector<16x144xf32>
    %537 = arith.addf %532, %536 : vector<16x144xf32>
    %c2_361 = arith.constant 2 : index
    %c1_362 = arith.constant 1 : index
    %c0_363 = arith.constant 0 : index
    %538 = vector.load %arg5[%c2_361, %c1_362, %c0_363] : memref<4x18x146xf32, #tpu.memory_space<vmem>>, vector<1x16x146xf32>
    %539 = vector.shape_cast %538 : vector<1x16x146xf32> to vector<16x146xf32>
    %c21_364 = arith.constant 21 : index
    %c0_365 = arith.constant 0 : index
    %540 = vector.load %arg1[%c21_364, %c0_365] : memref<36x144xf32, #tpu.memory_space<vmem>>, vector<1x144xf32>
    %541 = vector.extract_strided_slice %539 {offsets = [0, 0], sizes = [16, 144], strides = [1, 1]} : vector<16x146xf32> to vector<16x144xf32>
    %542 = vector.broadcast %540 : vector<1x144xf32> to vector<16x144xf32>
    %543 = arith.mulf %542, %541 : vector<16x144xf32>
    %544 = arith.addf %537, %543 : vector<16x144xf32>
    %c22_366 = arith.constant 22 : index
    %c0_367 = arith.constant 0 : index
    %545 = vector.load %arg1[%c22_366, %c0_367] : memref<36x144xf32, #tpu.memory_space<vmem>>, vector<1x144xf32>
    %546 = vector.extract_strided_slice %539 {offsets = [0, 1], sizes = [16, 144], strides = [1, 1]} : vector<16x146xf32> to vector<16x144xf32>
    %547 = vector.broadcast %545 : vector<1x144xf32> to vector<16x144xf32>
    %548 = arith.mulf %547, %546 : vector<16x144xf32>
    %549 = arith.addf %544, %548 : vector<16x144xf32>
    %c23_368 = arith.constant 23 : index
    %c0_369 = arith.constant 0 : index
    %550 = vector.load %arg1[%c23_368, %c0_369] : memref<36x144xf32, #tpu.memory_space<vmem>>, vector<1x144xf32>
    %551 = vector.extract_strided_slice %539 {offsets = [0, 2], sizes = [16, 144], strides = [1, 1]} : vector<16x146xf32> to vector<16x144xf32>
    %552 = vector.broadcast %550 : vector<1x144xf32> to vector<16x144xf32>
    %553 = arith.mulf %552, %551 : vector<16x144xf32>
    %554 = arith.addf %549, %553 : vector<16x144xf32>
    %c2_370 = arith.constant 2 : index
    %c2_371 = arith.constant 2 : index
    %c0_372 = arith.constant 0 : index
    %555 = vector.load %arg5[%c2_370, %c2_371, %c0_372] : memref<4x18x146xf32, #tpu.memory_space<vmem>>, vector<1x16x146xf32>
    %556 = vector.shape_cast %555 : vector<1x16x146xf32> to vector<16x146xf32>
    %c24_373 = arith.constant 24 : index
    %c0_374 = arith.constant 0 : index
    %557 = vector.load %arg1[%c24_373, %c0_374] : memref<36x144xf32, #tpu.memory_space<vmem>>, vector<1x144xf32>
    %558 = vector.extract_strided_slice %556 {offsets = [0, 0], sizes = [16, 144], strides = [1, 1]} : vector<16x146xf32> to vector<16x144xf32>
    %559 = vector.broadcast %557 : vector<1x144xf32> to vector<16x144xf32>
    %560 = arith.mulf %559, %558 : vector<16x144xf32>
    %561 = arith.addf %554, %560 : vector<16x144xf32>
    %c25_375 = arith.constant 25 : index
    %c0_376 = arith.constant 0 : index
    %562 = vector.load %arg1[%c25_375, %c0_376] : memref<36x144xf32, #tpu.memory_space<vmem>>, vector<1x144xf32>
    %563 = vector.extract_strided_slice %556 {offsets = [0, 1], sizes = [16, 144], strides = [1, 1]} : vector<16x146xf32> to vector<16x144xf32>
    %564 = vector.broadcast %562 : vector<1x144xf32> to vector<16x144xf32>
    %565 = arith.mulf %564, %563 : vector<16x144xf32>
    %566 = arith.addf %561, %565 : vector<16x144xf32>
    %c26_377 = arith.constant 26 : index
    %c0_378 = arith.constant 0 : index
    %567 = vector.load %arg1[%c26_377, %c0_378] : memref<36x144xf32, #tpu.memory_space<vmem>>, vector<1x144xf32>
    %568 = vector.extract_strided_slice %556 {offsets = [0, 2], sizes = [16, 144], strides = [1, 1]} : vector<16x146xf32> to vector<16x144xf32>
    %569 = vector.broadcast %567 : vector<1x144xf32> to vector<16x144xf32>
    %570 = arith.mulf %569, %568 : vector<16x144xf32>
    %571 = arith.addf %566, %570 : vector<16x144xf32>
    %c3_379 = arith.constant 3 : index
    %c0_380 = arith.constant 0 : index
    %c0_381 = arith.constant 0 : index
    %572 = vector.load %arg5[%c3_379, %c0_380, %c0_381] : memref<4x18x146xf32, #tpu.memory_space<vmem>>, vector<1x16x146xf32>
    %573 = vector.shape_cast %572 : vector<1x16x146xf32> to vector<16x146xf32>
    %c27_382 = arith.constant 27 : index
    %c0_383 = arith.constant 0 : index
    %574 = vector.load %arg1[%c27_382, %c0_383] : memref<36x144xf32, #tpu.memory_space<vmem>>, vector<1x144xf32>
    %575 = vector.extract_strided_slice %573 {offsets = [0, 0], sizes = [16, 144], strides = [1, 1]} : vector<16x146xf32> to vector<16x144xf32>
    %576 = vector.broadcast %574 : vector<1x144xf32> to vector<16x144xf32>
    %577 = arith.mulf %576, %575 : vector<16x144xf32>
    %578 = arith.addf %571, %577 : vector<16x144xf32>
    %c28_384 = arith.constant 28 : index
    %c0_385 = arith.constant 0 : index
    %579 = vector.load %arg1[%c28_384, %c0_385] : memref<36x144xf32, #tpu.memory_space<vmem>>, vector<1x144xf32>
    %580 = vector.extract_strided_slice %573 {offsets = [0, 1], sizes = [16, 144], strides = [1, 1]} : vector<16x146xf32> to vector<16x144xf32>
    %581 = vector.broadcast %579 : vector<1x144xf32> to vector<16x144xf32>
    %582 = arith.mulf %581, %580 : vector<16x144xf32>
    %583 = arith.addf %578, %582 : vector<16x144xf32>
    %c29_386 = arith.constant 29 : index
    %c0_387 = arith.constant 0 : index
    %584 = vector.load %arg1[%c29_386, %c0_387] : memref<36x144xf32, #tpu.memory_space<vmem>>, vector<1x144xf32>
    %585 = vector.extract_strided_slice %573 {offsets = [0, 2], sizes = [16, 144], strides = [1, 1]} : vector<16x146xf32> to vector<16x144xf32>
    %586 = vector.broadcast %584 : vector<1x144xf32> to vector<16x144xf32>
    %587 = arith.mulf %586, %585 : vector<16x144xf32>
    %588 = arith.addf %583, %587 : vector<16x144xf32>
    %c3_388 = arith.constant 3 : index
    %c1_389 = arith.constant 1 : index
    %c0_390 = arith.constant 0 : index
    %589 = vector.load %arg5[%c3_388, %c1_389, %c0_390] : memref<4x18x146xf32, #tpu.memory_space<vmem>>, vector<1x16x146xf32>
    %590 = vector.shape_cast %589 : vector<1x16x146xf32> to vector<16x146xf32>
    %c30_391 = arith.constant 30 : index
    %c0_392 = arith.constant 0 : index
    %591 = vector.load %arg1[%c30_391, %c0_392] : memref<36x144xf32, #tpu.memory_space<vmem>>, vector<1x144xf32>
    %592 = vector.extract_strided_slice %590 {offsets = [0, 0], sizes = [16, 144], strides = [1, 1]} : vector<16x146xf32> to vector<16x144xf32>
    %593 = vector.broadcast %591 : vector<1x144xf32> to vector<16x144xf32>
    %594 = arith.mulf %593, %592 : vector<16x144xf32>
    %595 = arith.addf %588, %594 : vector<16x144xf32>
    %c31_393 = arith.constant 31 : index
    %c0_394 = arith.constant 0 : index
    %596 = vector.load %arg1[%c31_393, %c0_394] : memref<36x144xf32, #tpu.memory_space<vmem>>, vector<1x144xf32>
    %597 = vector.extract_strided_slice %590 {offsets = [0, 1], sizes = [16, 144], strides = [1, 1]} : vector<16x146xf32> to vector<16x144xf32>
    %598 = vector.broadcast %596 : vector<1x144xf32> to vector<16x144xf32>
    %599 = arith.mulf %598, %597 : vector<16x144xf32>
    %600 = arith.addf %595, %599 : vector<16x144xf32>
    %c32_395 = arith.constant 32 : index
    %c0_396 = arith.constant 0 : index
    %601 = vector.load %arg1[%c32_395, %c0_396] : memref<36x144xf32, #tpu.memory_space<vmem>>, vector<1x144xf32>
    %602 = vector.extract_strided_slice %590 {offsets = [0, 2], sizes = [16, 144], strides = [1, 1]} : vector<16x146xf32> to vector<16x144xf32>
    %603 = vector.broadcast %601 : vector<1x144xf32> to vector<16x144xf32>
    %604 = arith.mulf %603, %602 : vector<16x144xf32>
    %605 = arith.addf %600, %604 : vector<16x144xf32>
    %c3_397 = arith.constant 3 : index
    %c2_398 = arith.constant 2 : index
    %c0_399 = arith.constant 0 : index
    %606 = vector.load %arg5[%c3_397, %c2_398, %c0_399] : memref<4x18x146xf32, #tpu.memory_space<vmem>>, vector<1x16x146xf32>
    %607 = vector.shape_cast %606 : vector<1x16x146xf32> to vector<16x146xf32>
    %c33_400 = arith.constant 33 : index
    %c0_401 = arith.constant 0 : index
    %608 = vector.load %arg1[%c33_400, %c0_401] : memref<36x144xf32, #tpu.memory_space<vmem>>, vector<1x144xf32>
    %609 = vector.extract_strided_slice %607 {offsets = [0, 0], sizes = [16, 144], strides = [1, 1]} : vector<16x146xf32> to vector<16x144xf32>
    %610 = vector.broadcast %608 : vector<1x144xf32> to vector<16x144xf32>
    %611 = arith.mulf %610, %609 : vector<16x144xf32>
    %612 = arith.addf %605, %611 : vector<16x144xf32>
    %c34_402 = arith.constant 34 : index
    %c0_403 = arith.constant 0 : index
    %613 = vector.load %arg1[%c34_402, %c0_403] : memref<36x144xf32, #tpu.memory_space<vmem>>, vector<1x144xf32>
    %614 = vector.extract_strided_slice %607 {offsets = [0, 1], sizes = [16, 144], strides = [1, 1]} : vector<16x146xf32> to vector<16x144xf32>
    %615 = vector.broadcast %613 : vector<1x144xf32> to vector<16x144xf32>
    %616 = arith.mulf %615, %614 : vector<16x144xf32>
    %617 = arith.addf %612, %616 : vector<16x144xf32>
    %c35_404 = arith.constant 35 : index
    %c0_405 = arith.constant 0 : index
    %618 = vector.load %arg1[%c35_404, %c0_405] : memref<36x144xf32, #tpu.memory_space<vmem>>, vector<1x144xf32>
    %619 = vector.extract_strided_slice %607 {offsets = [0, 2], sizes = [16, 144], strides = [1, 1]} : vector<16x146xf32> to vector<16x144xf32>
    %620 = vector.broadcast %618 : vector<1x144xf32> to vector<16x144xf32>
    %621 = arith.mulf %620, %619 : vector<16x144xf32>
    %622 = arith.addf %617, %621 : vector<16x144xf32>
    %c1_406 = arith.constant 1 : index
    %c0_407 = arith.constant 0 : index
    %c0_408 = arith.constant 0 : index
    %623 = vector.load %arg6[%c1_406, %c0_407, %c0_408] : memref<2x16x144xf32, #tpu.memory_space<vmem>>, vector<1x16x144xf32>
    %624 = vector.shape_cast %623 : vector<1x16x144xf32> to vector<16x144xf32>
    %625 = vector.shape_cast %622 : vector<16x144xf32> to vector<1x16x144xf32>
    tpu.vector_store %arg6[%c1_406, %c0_407, %c0_408], %625 {strides = array<i32>} : memref<2x16x144xf32, #tpu.memory_space<vmem>>, vector<1x16x144xf32>,
    %c0_409 = arith.constant 0 : index
    %c0_410 = arith.constant 0 : index
    %c0_411 = arith.constant 0 : index
    %626 = vector.load %arg6[%c0_409, %c0_410, %c0_411] : memref<2x16x144xf32, #tpu.memory_space<vmem>>, vector<1x16x16xf32>
    %627 = vector.shape_cast %626 : vector<1x16x16xf32> to vector<16x16xf32>
    %c1_412 = arith.constant 1 : index
    %c0_413 = arith.constant 0 : index
    %c0_414 = arith.constant 0 : index
    %628 = vector.load %arg6[%c1_412, %c0_413, %c0_414] : memref<2x16x144xf32, #tpu.memory_space<vmem>>, vector<1x16x16xf32>
    %629 = vector.shape_cast %628 : vector<1x16x16xf32> to vector<16x16xf32>
    %cst_415 = arith.constant 0.000000e+00 : f32
    %630 = vector.broadcast %cst_415 : f32 to vector<1x1xf32>
    %cst_416 = arith.constant dense<0.000000e+00> : vector<16xf32>
    %631 = vector.multi_reduction <add>, %627, %cst_416 [1] : vector<16x16xf32> to vector<16xf32>
    %632 = vector.shape_cast %631 : vector<16xf32> to vector<16x1xf32>
    %cst_417 = arith.constant dense<0.000000e+00> : vector<1xf32>
    %633 = vector.multi_reduction <add>, %632, %cst_417 [0] : vector<16x1xf32> to vector<1xf32>
    %634 = vector.shape_cast %633 : vector<1xf32> to vector<1x1xf32>
    %635 = arith.addf %630, %634 : vector<1x1xf32>
    %cst_418 = arith.constant dense<0.000000e+00> : vector<16xf32>
    %636 = vector.multi_reduction <add>, %629, %cst_418 [1] : vector<16x16xf32> to vector<16xf32>
    %637 = vector.shape_cast %636 : vector<16xf32> to vector<16x1xf32>
    %cst_419 = arith.constant dense<0.000000e+00> : vector<1xf32>
    %638 = vector.multi_reduction <add>, %637, %cst_419 [0] : vector<16x1xf32> to vector<1xf32>
    %639 = vector.shape_cast %638 : vector<1xf32> to vector<1x1xf32>
    %640 = arith.addf %635, %639 : vector<1x1xf32>
    %cst_420 = arith.constant 0.001953125 : f32
    %641 = vector.broadcast %cst_420 : f32 to vector<1x1xf32>
    %642 = arith.mulf %640, %641 : vector<1x1xf32>
    %cst_421 = arith.constant 0.000000e+00 : f32
    %643 = vector.broadcast %cst_421 : f32 to vector<1x1xf32>
    %644 = vector.broadcast %642 : vector<1x1xf32> to vector<16x16xf32>
    %645 = arith.subf %627, %644 : vector<16x16xf32>
    %646 = arith.mulf %645, %645 : vector<16x16xf32>
    %cst_422 = arith.constant dense<0.000000e+00> : vector<16xf32>
    %647 = vector.multi_reduction <add>, %646, %cst_422 [1] : vector<16x16xf32> to vector<16xf32>
    %648 = vector.shape_cast %647 : vector<16xf32> to vector<16x1xf32>
    %cst_423 = arith.constant dense<0.000000e+00> : vector<1xf32>
    %649 = vector.multi_reduction <add>, %648, %cst_423 [0] : vector<16x1xf32> to vector<1xf32>
    %650 = vector.shape_cast %649 : vector<1xf32> to vector<1x1xf32>
    %651 = arith.addf %643, %650 : vector<1x1xf32>
    %652 = vector.broadcast %642 : vector<1x1xf32> to vector<16x16xf32>
    %653 = arith.subf %629, %652 : vector<16x16xf32>
    %654 = arith.mulf %653, %653 : vector<16x16xf32>
    %cst_424 = arith.constant dense<0.000000e+00> : vector<16xf32>
    %655 = vector.multi_reduction <add>, %654, %cst_424 [1] : vector<16x16xf32> to vector<16xf32>
    %656 = vector.shape_cast %655 : vector<16xf32> to vector<16x1xf32>
    %cst_425 = arith.constant dense<0.000000e+00> : vector<1xf32>
    %657 = vector.multi_reduction <add>, %656, %cst_425 [0] : vector<16x1xf32> to vector<1xf32>
    %658 = vector.shape_cast %657 : vector<1xf32> to vector<1x1xf32>
    %659 = arith.addf %651, %658 : vector<1x1xf32>
    %cst_426 = arith.constant 0.001953125 : f32
    %660 = vector.broadcast %cst_426 : f32 to vector<1x1xf32>
    %661 = arith.mulf %659, %660 : vector<1x1xf32>
    %c0_427 = arith.constant 0 : index
    %662 = memref.load %arg2[%c0_427] : memref<8xf32, #tpu.memory_space<smem>>
    %cst_428 = arith.constant 9.99999974E-6 : f32
    %663 = vector.broadcast %cst_428 : f32 to vector<1x1xf32>
    %664 = arith.addf %661, %663 : vector<1x1xf32>
    %665 = math.rsqrt %664 : vector<1x1xf32>
    %666 = vector.broadcast %662 : f32 to vector<1x1xf32>
    %667 = arith.mulf %666, %665 : vector<1x1xf32>
    %c0_429 = arith.constant 0 : index
    %668 = memref.load %arg3[%c0_429] : memref<8xf32, #tpu.memory_space<smem>>
    %669 = arith.mulf %642, %667 : vector<1x1xf32>
    %670 = vector.broadcast %668 : f32 to vector<1x1xf32>
    %671 = arith.subf %670, %669 : vector<1x1xf32>
    %672 = vector.broadcast %667 : vector<1x1xf32> to vector<16x16xf32>
    %673 = arith.mulf %627, %672 : vector<16x16xf32>
    %674 = vector.broadcast %671 : vector<1x1xf32> to vector<16x16xf32>
    %675 = arith.addf %673, %674 : vector<16x16xf32>
    %cst_430 = arith.constant 0.000000e+00 : f32
    %676 = vector.broadcast %cst_430 : f32 to vector<16x16xf32>
    %677 = arith.cmpf oge, %675, %676 : vector<16x16xf32>
    %cst_431 = arith.constant 0.00999999977 : f32
    %678 = vector.broadcast %cst_431 : f32 to vector<16x16xf32>
    %679 = arith.mulf %678, %675 : vector<16x16xf32>
    %680 = arith.select %677, %675, %679 : vector<16x16xi1>, vector<16x16xf32>
    %c0_432 = arith.constant 0 : index
    %c0_433 = arith.constant 0 : index
    %c0_434 = arith.constant 0 : index
    %c0_435 = arith.constant 0 : index
    %681 = vector.load %arg4[%c0_432, %c0_433, %c0_434, %c0_435] : memref<2x8x16x16xf32, #tpu.memory_space<vmem>>, vector<1x1x16x16xf32>
    %682 = vector.shape_cast %681 : vector<1x1x16x16xf32> to vector<16x16xf32>
    %683 = vector.shape_cast %680 : vector<16x16xf32> to vector<1x1x16x16xf32>
    tpu.vector_store %arg4[%c0_432, %c0_433, %c0_434, %c0_435], %683 {strides = array<i32>} : memref<2x8x16x16xf32, #tpu.memory_space<vmem>>, vector<1x1x16x16xf32>,
    %684 = vector.broadcast %667 : vector<1x1xf32> to vector<16x16xf32>
    %685 = arith.mulf %629, %684 : vector<16x16xf32>
    %686 = vector.broadcast %671 : vector<1x1xf32> to vector<16x16xf32>
    %687 = arith.addf %685, %686 : vector<16x16xf32>
    %cst_436 = arith.constant 0.000000e+00 : f32
    %688 = vector.broadcast %cst_436 : f32 to vector<16x16xf32>
    %689 = arith.cmpf oge, %687, %688 : vector<16x16xf32>
    %cst_437 = arith.constant 0.00999999977 : f32
    %690 = vector.broadcast %cst_437 : f32 to vector<16x16xf32>
    %691 = arith.mulf %690, %687 : vector<16x16xf32>
    %692 = arith.select %689, %687, %691 : vector<16x16xi1>, vector<16x16xf32>
    %c1_438 = arith.constant 1 : index
    %c0_439 = arith.constant 0 : index
    %c0_440 = arith.constant 0 : index
    %c0_441 = arith.constant 0 : index
    %693 = vector.load %arg4[%c1_438, %c0_439, %c0_440, %c0_441] : memref<2x8x16x16xf32, #tpu.memory_space<vmem>>, vector<1x1x16x16xf32>
    %694 = vector.shape_cast %693 : vector<1x1x16x16xf32> to vector<16x16xf32>
    %695 = vector.shape_cast %692 : vector<16x16xf32> to vector<1x1x16x16xf32>
    tpu.vector_store %arg4[%c1_438, %c0_439, %c0_440, %c0_441], %695 {strides = array<i32>} : memref<2x8x16x16xf32, #tpu.memory_space<vmem>>, vector<1x1x16x16xf32>,
    %c0_442 = arith.constant 0 : index
    %c0_443 = arith.constant 0 : index
    %c18_444 = arith.constant 18 : index
    %696 = vector.load %arg6[%c0_442, %c0_443, %c18_444] : memref<2x16x144xf32, #tpu.memory_space<vmem>>, vector<1x16x16xf32>
    %697 = vector.shape_cast %696 : vector<1x16x16xf32> to vector<16x16xf32>
    %c1_445 = arith.constant 1 : index
    %c0_446 = arith.constant 0 : index
    %c18_447 = arith.constant 18 : index
    %698 = vector.load %arg6[%c1_445, %c0_446, %c18_447] : memref<2x16x144xf32, #tpu.memory_space<vmem>>, vector<1x16x16xf32>
    %699 = vector.shape_cast %698 : vector<1x16x16xf32> to vector<16x16xf32>
    %cst_448 = arith.constant 0.000000e+00 : f32
    %700 = vector.broadcast %cst_448 : f32 to vector<1x1xf32>
    %cst_449 = arith.constant dense<0.000000e+00> : vector<16xf32>
    %701 = vector.multi_reduction <add>, %697, %cst_449 [1] : vector<16x16xf32> to vector<16xf32>
    %702 = vector.shape_cast %701 : vector<16xf32> to vector<16x1xf32>
    %cst_450 = arith.constant dense<0.000000e+00> : vector<1xf32>
    %703 = vector.multi_reduction <add>, %702, %cst_450 [0] : vector<16x1xf32> to vector<1xf32>
    %704 = vector.shape_cast %703 : vector<1xf32> to vector<1x1xf32>
    %705 = arith.addf %700, %704 : vector<1x1xf32>
    %cst_451 = arith.constant dense<0.000000e+00> : vector<16xf32>
    %706 = vector.multi_reduction <add>, %699, %cst_451 [1] : vector<16x16xf32> to vector<16xf32>
    %707 = vector.shape_cast %706 : vector<16xf32> to vector<16x1xf32>
    %cst_452 = arith.constant dense<0.000000e+00> : vector<1xf32>
    %708 = vector.multi_reduction <add>, %707, %cst_452 [0] : vector<16x1xf32> to vector<1xf32>
    %709 = vector.shape_cast %708 : vector<1xf32> to vector<1x1xf32>
    %710 = arith.addf %705, %709 : vector<1x1xf32>
    %cst_453 = arith.constant 0.001953125 : f32
    %711 = vector.broadcast %cst_453 : f32 to vector<1x1xf32>
    %712 = arith.mulf %710, %711 : vector<1x1xf32>
    %cst_454 = arith.constant 0.000000e+00 : f32
    %713 = vector.broadcast %cst_454 : f32 to vector<1x1xf32>
    %714 = vector.broadcast %712 : vector<1x1xf32> to vector<16x16xf32>
    %715 = arith.subf %697, %714 : vector<16x16xf32>
    %716 = arith.mulf %715, %715 : vector<16x16xf32>
    %cst_455 = arith.constant dense<0.000000e+00> : vector<16xf32>
    %717 = vector.multi_reduction <add>, %716, %cst_455 [1] : vector<16x16xf32> to vector<16xf32>
    %718 = vector.shape_cast %717 : vector<16xf32> to vector<16x1xf32>
    %cst_456 = arith.constant dense<0.000000e+00> : vector<1xf32>
    %719 = vector.multi_reduction <add>, %718, %cst_456 [0] : vector<16x1xf32> to vector<1xf32>
    %720 = vector.shape_cast %719 : vector<1xf32> to vector<1x1xf32>
    %721 = arith.addf %713, %720 : vector<1x1xf32>
    %722 = vector.broadcast %712 : vector<1x1xf32> to vector<16x16xf32>
    %723 = arith.subf %699, %722 : vector<16x16xf32>
    %724 = arith.mulf %723, %723 : vector<16x16xf32>
    %cst_457 = arith.constant dense<0.000000e+00> : vector<16xf32>
    %725 = vector.multi_reduction <add>, %724, %cst_457 [1] : vector<16x16xf32> to vector<16xf32>
    %726 = vector.shape_cast %725 : vector<16xf32> to vector<16x1xf32>
    %cst_458 = arith.constant dense<0.000000e+00> : vector<1xf32>
    %727 = vector.multi_reduction <add>, %726, %cst_458 [0] : vector<16x1xf32> to vector<1xf32>
    %728 = vector.shape_cast %727 : vector<1xf32> to vector<1x1xf32>
    %729 = arith.addf %721, %728 : vector<1x1xf32>
    %cst_459 = arith.constant 0.001953125 : f32
    %730 = vector.broadcast %cst_459 : f32 to vector<1x1xf32>
    %731 = arith.mulf %729, %730 : vector<1x1xf32>
    %c1_460 = arith.constant 1 : index
    %732 = memref.load %arg2[%c1_460] : memref<8xf32, #tpu.memory_space<smem>>
    %cst_461 = arith.constant 9.99999974E-6 : f32
    %733 = vector.broadcast %cst_461 : f32 to vector<1x1xf32>
    %734 = arith.addf %731, %733 : vector<1x1xf32>
    %735 = math.rsqrt %734 : vector<1x1xf32>
    %736 = vector.broadcast %732 : f32 to vector<1x1xf32>
    %737 = arith.mulf %736, %735 : vector<1x1xf32>
    %c1_462 = arith.constant 1 : index
    %738 = memref.load %arg3[%c1_462] : memref<8xf32, #tpu.memory_space<smem>>
    %739 = arith.mulf %712, %737 : vector<1x1xf32>
    %740 = vector.broadcast %738 : f32 to vector<1x1xf32>
    %741 = arith.subf %740, %739 : vector<1x1xf32>
    %742 = vector.broadcast %737 : vector<1x1xf32> to vector<16x16xf32>
    %743 = arith.mulf %697, %742 : vector<16x16xf32>
    %744 = vector.broadcast %741 : vector<1x1xf32> to vector<16x16xf32>
    %745 = arith.addf %743, %744 : vector<16x16xf32>
    %cst_463 = arith.constant 0.000000e+00 : f32
    %746 = vector.broadcast %cst_463 : f32 to vector<16x16xf32>
    %747 = arith.cmpf oge, %745, %746 : vector<16x16xf32>
    %cst_464 = arith.constant 0.00999999977 : f32
    %748 = vector.broadcast %cst_464 : f32 to vector<16x16xf32>
    %749 = arith.mulf %748, %745 : vector<16x16xf32>
    %750 = arith.select %747, %745, %749 : vector<16x16xi1>, vector<16x16xf32>
    %c0_465 = arith.constant 0 : index
    %c1_466 = arith.constant 1 : index
    %c0_467 = arith.constant 0 : index
    %c0_468 = arith.constant 0 : index
    %751 = vector.load %arg4[%c0_465, %c1_466, %c0_467, %c0_468] : memref<2x8x16x16xf32, #tpu.memory_space<vmem>>, vector<1x1x16x16xf32>
    %752 = vector.shape_cast %751 : vector<1x1x16x16xf32> to vector<16x16xf32>
    %753 = vector.shape_cast %750 : vector<16x16xf32> to vector<1x1x16x16xf32>
    tpu.vector_store %arg4[%c0_465, %c1_466, %c0_467, %c0_468], %753 {strides = array<i32>} : memref<2x8x16x16xf32, #tpu.memory_space<vmem>>, vector<1x1x16x16xf32>,
    %754 = vector.broadcast %737 : vector<1x1xf32> to vector<16x16xf32>
    %755 = arith.mulf %699, %754 : vector<16x16xf32>
    %756 = vector.broadcast %741 : vector<1x1xf32> to vector<16x16xf32>
    %757 = arith.addf %755, %756 : vector<16x16xf32>
    %cst_469 = arith.constant 0.000000e+00 : f32
    %758 = vector.broadcast %cst_469 : f32 to vector<16x16xf32>
    %759 = arith.cmpf oge, %757, %758 : vector<16x16xf32>
    %cst_470 = arith.constant 0.00999999977 : f32
    %760 = vector.broadcast %cst_470 : f32 to vector<16x16xf32>
    %761 = arith.mulf %760, %757 : vector<16x16xf32>
    %762 = arith.select %759, %757, %761 : vector<16x16xi1>, vector<16x16xf32>
    %c1_471 = arith.constant 1 : index
    %c1_472 = arith.constant 1 : index
    %c0_473 = arith.constant 0 : index
    %c0_474 = arith.constant 0 : index
    %763 = vector.load %arg4[%c1_471, %c1_472, %c0_473, %c0_474] : memref<2x8x16x16xf32, #tpu.memory_space<vmem>>, vector<1x1x16x16xf32>
    %764 = vector.shape_cast %763 : vector<1x1x16x16xf32> to vector<16x16xf32>
    %765 = vector.shape_cast %762 : vector<16x16xf32> to vector<1x1x16x16xf32>
    tpu.vector_store %arg4[%c1_471, %c1_472, %c0_473, %c0_474], %765 {strides = array<i32>} : memref<2x8x16x16xf32, #tpu.memory_space<vmem>>, vector<1x1x16x16xf32>,
    %c0_475 = arith.constant 0 : index
    %c0_476 = arith.constant 0 : index
    %c36 = arith.constant 36 : index
    %766 = vector.load %arg6[%c0_475, %c0_476, %c36] : memref<2x16x144xf32, #tpu.memory_space<vmem>>, vector<1x16x16xf32>
    %767 = vector.shape_cast %766 : vector<1x16x16xf32> to vector<16x16xf32>
    %c1_477 = arith.constant 1 : index
    %c0_478 = arith.constant 0 : index
    %c36_479 = arith.constant 36 : index
    %768 = vector.load %arg6[%c1_477, %c0_478, %c36_479] : memref<2x16x144xf32, #tpu.memory_space<vmem>>, vector<1x16x16xf32>
    %769 = vector.shape_cast %768 : vector<1x16x16xf32> to vector<16x16xf32>
    %cst_480 = arith.constant 0.000000e+00 : f32
    %770 = vector.broadcast %cst_480 : f32 to vector<1x1xf32>
    %cst_481 = arith.constant dense<0.000000e+00> : vector<16xf32>
    %771 = vector.multi_reduction <add>, %767, %cst_481 [1] : vector<16x16xf32> to vector<16xf32>
    %772 = vector.shape_cast %771 : vector<16xf32> to vector<16x1xf32>
    %cst_482 = arith.constant dense<0.000000e+00> : vector<1xf32>
    %773 = vector.multi_reduction <add>, %772, %cst_482 [0] : vector<16x1xf32> to vector<1xf32>
    %774 = vector.shape_cast %773 : vector<1xf32> to vector<1x1xf32>
    %775 = arith.addf %770, %774 : vector<1x1xf32>
    %cst_483 = arith.constant dense<0.000000e+00> : vector<16xf32>
    %776 = vector.multi_reduction <add>, %769, %cst_483 [1] : vector<16x16xf32> to vector<16xf32>
    %777 = vector.shape_cast %776 : vector<16xf32> to vector<16x1xf32>
    %cst_484 = arith.constant dense<0.000000e+00> : vector<1xf32>
    %778 = vector.multi_reduction <add>, %777, %cst_484 [0] : vector<16x1xf32> to vector<1xf32>
    %779 = vector.shape_cast %778 : vector<1xf32> to vector<1x1xf32>
    %780 = arith.addf %775, %779 : vector<1x1xf32>
    %cst_485 = arith.constant 0.001953125 : f32
    %781 = vector.broadcast %cst_485 : f32 to vector<1x1xf32>
    %782 = arith.mulf %780, %781 : vector<1x1xf32>
    %cst_486 = arith.constant 0.000000e+00 : f32
    %783 = vector.broadcast %cst_486 : f32 to vector<1x1xf32>
    %784 = vector.broadcast %782 : vector<1x1xf32> to vector<16x16xf32>
    %785 = arith.subf %767, %784 : vector<16x16xf32>
    %786 = arith.mulf %785, %785 : vector<16x16xf32>
    %cst_487 = arith.constant dense<0.000000e+00> : vector<16xf32>
    %787 = vector.multi_reduction <add>, %786, %cst_487 [1] : vector<16x16xf32> to vector<16xf32>
    %788 = vector.shape_cast %787 : vector<16xf32> to vector<16x1xf32>
    %cst_488 = arith.constant dense<0.000000e+00> : vector<1xf32>
    %789 = vector.multi_reduction <add>, %788, %cst_488 [0] : vector<16x1xf32> to vector<1xf32>
    %790 = vector.shape_cast %789 : vector<1xf32> to vector<1x1xf32>
    %791 = arith.addf %783, %790 : vector<1x1xf32>
    %792 = vector.broadcast %782 : vector<1x1xf32> to vector<16x16xf32>
    %793 = arith.subf %769, %792 : vector<16x16xf32>
    %794 = arith.mulf %793, %793 : vector<16x16xf32>
    %cst_489 = arith.constant dense<0.000000e+00> : vector<16xf32>
    %795 = vector.multi_reduction <add>, %794, %cst_489 [1] : vector<16x16xf32> to vector<16xf32>
    %796 = vector.shape_cast %795 : vector<16xf32> to vector<16x1xf32>
    %cst_490 = arith.constant dense<0.000000e+00> : vector<1xf32>
    %797 = vector.multi_reduction <add>, %796, %cst_490 [0] : vector<16x1xf32> to vector<1xf32>
    %798 = vector.shape_cast %797 : vector<1xf32> to vector<1x1xf32>
    %799 = arith.addf %791, %798 : vector<1x1xf32>
    %cst_491 = arith.constant 0.001953125 : f32
    %800 = vector.broadcast %cst_491 : f32 to vector<1x1xf32>
    %801 = arith.mulf %799, %800 : vector<1x1xf32>
    %c2_492 = arith.constant 2 : index
    %802 = memref.load %arg2[%c2_492] : memref<8xf32, #tpu.memory_space<smem>>
    %cst_493 = arith.constant 9.99999974E-6 : f32
    %803 = vector.broadcast %cst_493 : f32 to vector<1x1xf32>
    %804 = arith.addf %801, %803 : vector<1x1xf32>
    %805 = math.rsqrt %804 : vector<1x1xf32>
    %806 = vector.broadcast %802 : f32 to vector<1x1xf32>
    %807 = arith.mulf %806, %805 : vector<1x1xf32>
    %c2_494 = arith.constant 2 : index
    %808 = memref.load %arg3[%c2_494] : memref<8xf32, #tpu.memory_space<smem>>
    %809 = arith.mulf %782, %807 : vector<1x1xf32>
    %810 = vector.broadcast %808 : f32 to vector<1x1xf32>
    %811 = arith.subf %810, %809 : vector<1x1xf32>
    %812 = vector.broadcast %807 : vector<1x1xf32> to vector<16x16xf32>
    %813 = arith.mulf %767, %812 : vector<16x16xf32>
    %814 = vector.broadcast %811 : vector<1x1xf32> to vector<16x16xf32>
    %815 = arith.addf %813, %814 : vector<16x16xf32>
    %cst_495 = arith.constant 0.000000e+00 : f32
    %816 = vector.broadcast %cst_495 : f32 to vector<16x16xf32>
    %817 = arith.cmpf oge, %815, %816 : vector<16x16xf32>
    %cst_496 = arith.constant 0.00999999977 : f32
    %818 = vector.broadcast %cst_496 : f32 to vector<16x16xf32>
    %819 = arith.mulf %818, %815 : vector<16x16xf32>
    %820 = arith.select %817, %815, %819 : vector<16x16xi1>, vector<16x16xf32>
    %c0_497 = arith.constant 0 : index
    %c2_498 = arith.constant 2 : index
    %c0_499 = arith.constant 0 : index
    %c0_500 = arith.constant 0 : index
    %821 = vector.load %arg4[%c0_497, %c2_498, %c0_499, %c0_500] : memref<2x8x16x16xf32, #tpu.memory_space<vmem>>, vector<1x1x16x16xf32>
    %822 = vector.shape_cast %821 : vector<1x1x16x16xf32> to vector<16x16xf32>
    %823 = vector.shape_cast %820 : vector<16x16xf32> to vector<1x1x16x16xf32>
    tpu.vector_store %arg4[%c0_497, %c2_498, %c0_499, %c0_500], %823 {strides = array<i32>} : memref<2x8x16x16xf32, #tpu.memory_space<vmem>>, vector<1x1x16x16xf32>,
    %824 = vector.broadcast %807 : vector<1x1xf32> to vector<16x16xf32>
    %825 = arith.mulf %769, %824 : vector<16x16xf32>
    %826 = vector.broadcast %811 : vector<1x1xf32> to vector<16x16xf32>
    %827 = arith.addf %825, %826 : vector<16x16xf32>
    %cst_501 = arith.constant 0.000000e+00 : f32
    %828 = vector.broadcast %cst_501 : f32 to vector<16x16xf32>
    %829 = arith.cmpf oge, %827, %828 : vector<16x16xf32>
    %cst_502 = arith.constant 0.00999999977 : f32
    %830 = vector.broadcast %cst_502 : f32 to vector<16x16xf32>
    %831 = arith.mulf %830, %827 : vector<16x16xf32>
    %832 = arith.select %829, %827, %831 : vector<16x16xi1>, vector<16x16xf32>
    %c1_503 = arith.constant 1 : index
    %c2_504 = arith.constant 2 : index
    %c0_505 = arith.constant 0 : index
    %c0_506 = arith.constant 0 : index
    %833 = vector.load %arg4[%c1_503, %c2_504, %c0_505, %c0_506] : memref<2x8x16x16xf32, #tpu.memory_space<vmem>>, vector<1x1x16x16xf32>
    %834 = vector.shape_cast %833 : vector<1x1x16x16xf32> to vector<16x16xf32>
    %835 = vector.shape_cast %832 : vector<16x16xf32> to vector<1x1x16x16xf32>
    tpu.vector_store %arg4[%c1_503, %c2_504, %c0_505, %c0_506], %835 {strides = array<i32>} : memref<2x8x16x16xf32, #tpu.memory_space<vmem>>, vector<1x1x16x16xf32>,
    %c0_507 = arith.constant 0 : index
    %c0_508 = arith.constant 0 : index
    %c54 = arith.constant 54 : index
    %836 = vector.load %arg6[%c0_507, %c0_508, %c54] : memref<2x16x144xf32, #tpu.memory_space<vmem>>, vector<1x16x16xf32>
    %837 = vector.shape_cast %836 : vector<1x16x16xf32> to vector<16x16xf32>
    %c1_509 = arith.constant 1 : index
    %c0_510 = arith.constant 0 : index
    %c54_511 = arith.constant 54 : index
    %838 = vector.load %arg6[%c1_509, %c0_510, %c54_511] : memref<2x16x144xf32, #tpu.memory_space<vmem>>, vector<1x16x16xf32>
    %839 = vector.shape_cast %838 : vector<1x16x16xf32> to vector<16x16xf32>
    %cst_512 = arith.constant 0.000000e+00 : f32
    %840 = vector.broadcast %cst_512 : f32 to vector<1x1xf32>
    %cst_513 = arith.constant dense<0.000000e+00> : vector<16xf32>
    %841 = vector.multi_reduction <add>, %837, %cst_513 [1] : vector<16x16xf32> to vector<16xf32>
    %842 = vector.shape_cast %841 : vector<16xf32> to vector<16x1xf32>
    %cst_514 = arith.constant dense<0.000000e+00> : vector<1xf32>
    %843 = vector.multi_reduction <add>, %842, %cst_514 [0] : vector<16x1xf32> to vector<1xf32>
    %844 = vector.shape_cast %843 : vector<1xf32> to vector<1x1xf32>
    %845 = arith.addf %840, %844 : vector<1x1xf32>
    %cst_515 = arith.constant dense<0.000000e+00> : vector<16xf32>
    %846 = vector.multi_reduction <add>, %839, %cst_515 [1] : vector<16x16xf32> to vector<16xf32>
    %847 = vector.shape_cast %846 : vector<16xf32> to vector<16x1xf32>
    %cst_516 = arith.constant dense<0.000000e+00> : vector<1xf32>
    %848 = vector.multi_reduction <add>, %847, %cst_516 [0] : vector<16x1xf32> to vector<1xf32>
    %849 = vector.shape_cast %848 : vector<1xf32> to vector<1x1xf32>
    %850 = arith.addf %845, %849 : vector<1x1xf32>
    %cst_517 = arith.constant 0.001953125 : f32
    %851 = vector.broadcast %cst_517 : f32 to vector<1x1xf32>
    %852 = arith.mulf %850, %851 : vector<1x1xf32>
    %cst_518 = arith.constant 0.000000e+00 : f32
    %853 = vector.broadcast %cst_518 : f32 to vector<1x1xf32>
    %854 = vector.broadcast %852 : vector<1x1xf32> to vector<16x16xf32>
    %855 = arith.subf %837, %854 : vector<16x16xf32>
    %856 = arith.mulf %855, %855 : vector<16x16xf32>
    %cst_519 = arith.constant dense<0.000000e+00> : vector<16xf32>
    %857 = vector.multi_reduction <add>, %856, %cst_519 [1] : vector<16x16xf32> to vector<16xf32>
    %858 = vector.shape_cast %857 : vector<16xf32> to vector<16x1xf32>
    %cst_520 = arith.constant dense<0.000000e+00> : vector<1xf32>
    %859 = vector.multi_reduction <add>, %858, %cst_520 [0] : vector<16x1xf32> to vector<1xf32>
    %860 = vector.shape_cast %859 : vector<1xf32> to vector<1x1xf32>
    %861 = arith.addf %853, %860 : vector<1x1xf32>
    %862 = vector.broadcast %852 : vector<1x1xf32> to vector<16x16xf32>
    %863 = arith.subf %839, %862 : vector<16x16xf32>
    %864 = arith.mulf %863, %863 : vector<16x16xf32>
    %cst_521 = arith.constant dense<0.000000e+00> : vector<16xf32>
    %865 = vector.multi_reduction <add>, %864, %cst_521 [1] : vector<16x16xf32> to vector<16xf32>
    %866 = vector.shape_cast %865 : vector<16xf32> to vector<16x1xf32>
    %cst_522 = arith.constant dense<0.000000e+00> : vector<1xf32>
    %867 = vector.multi_reduction <add>, %866, %cst_522 [0] : vector<16x1xf32> to vector<1xf32>
    %868 = vector.shape_cast %867 : vector<1xf32> to vector<1x1xf32>
    %869 = arith.addf %861, %868 : vector<1x1xf32>
    %cst_523 = arith.constant 0.001953125 : f32
    %870 = vector.broadcast %cst_523 : f32 to vector<1x1xf32>
    %871 = arith.mulf %869, %870 : vector<1x1xf32>
    %c3_524 = arith.constant 3 : index
    %872 = memref.load %arg2[%c3_524] : memref<8xf32, #tpu.memory_space<smem>>
    %cst_525 = arith.constant 9.99999974E-6 : f32
    %873 = vector.broadcast %cst_525 : f32 to vector<1x1xf32>
    %874 = arith.addf %871, %873 : vector<1x1xf32>
    %875 = math.rsqrt %874 : vector<1x1xf32>
    %876 = vector.broadcast %872 : f32 to vector<1x1xf32>
    %877 = arith.mulf %876, %875 : vector<1x1xf32>
    %c3_526 = arith.constant 3 : index
    %878 = memref.load %arg3[%c3_526] : memref<8xf32, #tpu.memory_space<smem>>
    %879 = arith.mulf %852, %877 : vector<1x1xf32>
    %880 = vector.broadcast %878 : f32 to vector<1x1xf32>
    %881 = arith.subf %880, %879 : vector<1x1xf32>
    %882 = vector.broadcast %877 : vector<1x1xf32> to vector<16x16xf32>
    %883 = arith.mulf %837, %882 : vector<16x16xf32>
    %884 = vector.broadcast %881 : vector<1x1xf32> to vector<16x16xf32>
    %885 = arith.addf %883, %884 : vector<16x16xf32>
    %cst_527 = arith.constant 0.000000e+00 : f32
    %886 = vector.broadcast %cst_527 : f32 to vector<16x16xf32>
    %887 = arith.cmpf oge, %885, %886 : vector<16x16xf32>
    %cst_528 = arith.constant 0.00999999977 : f32
    %888 = vector.broadcast %cst_528 : f32 to vector<16x16xf32>
    %889 = arith.mulf %888, %885 : vector<16x16xf32>
    %890 = arith.select %887, %885, %889 : vector<16x16xi1>, vector<16x16xf32>
    %c0_529 = arith.constant 0 : index
    %c3_530 = arith.constant 3 : index
    %c0_531 = arith.constant 0 : index
    %c0_532 = arith.constant 0 : index
    %891 = vector.load %arg4[%c0_529, %c3_530, %c0_531, %c0_532] : memref<2x8x16x16xf32, #tpu.memory_space<vmem>>, vector<1x1x16x16xf32>
    %892 = vector.shape_cast %891 : vector<1x1x16x16xf32> to vector<16x16xf32>
    %893 = vector.shape_cast %890 : vector<16x16xf32> to vector<1x1x16x16xf32>
    tpu.vector_store %arg4[%c0_529, %c3_530, %c0_531, %c0_532], %893 {strides = array<i32>} : memref<2x8x16x16xf32, #tpu.memory_space<vmem>>, vector<1x1x16x16xf32>,
    %894 = vector.broadcast %877 : vector<1x1xf32> to vector<16x16xf32>
    %895 = arith.mulf %839, %894 : vector<16x16xf32>
    %896 = vector.broadcast %881 : vector<1x1xf32> to vector<16x16xf32>
    %897 = arith.addf %895, %896 : vector<16x16xf32>
    %cst_533 = arith.constant 0.000000e+00 : f32
    %898 = vector.broadcast %cst_533 : f32 to vector<16x16xf32>
    %899 = arith.cmpf oge, %897, %898 : vector<16x16xf32>
    %cst_534 = arith.constant 0.00999999977 : f32
    %900 = vector.broadcast %cst_534 : f32 to vector<16x16xf32>
    %901 = arith.mulf %900, %897 : vector<16x16xf32>
    %902 = arith.select %899, %897, %901 : vector<16x16xi1>, vector<16x16xf32>
    %c1_535 = arith.constant 1 : index
    %c3_536 = arith.constant 3 : index
    %c0_537 = arith.constant 0 : index
    %c0_538 = arith.constant 0 : index
    %903 = vector.load %arg4[%c1_535, %c3_536, %c0_537, %c0_538] : memref<2x8x16x16xf32, #tpu.memory_space<vmem>>, vector<1x1x16x16xf32>
    %904 = vector.shape_cast %903 : vector<1x1x16x16xf32> to vector<16x16xf32>
    %905 = vector.shape_cast %902 : vector<16x16xf32> to vector<1x1x16x16xf32>
    tpu.vector_store %arg4[%c1_535, %c3_536, %c0_537, %c0_538], %905 {strides = array<i32>} : memref<2x8x16x16xf32, #tpu.memory_space<vmem>>, vector<1x1x16x16xf32>,
    %c0_539 = arith.constant 0 : index
    %c0_540 = arith.constant 0 : index
    %c72 = arith.constant 72 : index
    %906 = vector.load %arg6[%c0_539, %c0_540, %c72] : memref<2x16x144xf32, #tpu.memory_space<vmem>>, vector<1x16x16xf32>
    %907 = vector.shape_cast %906 : vector<1x16x16xf32> to vector<16x16xf32>
    %c1_541 = arith.constant 1 : index
    %c0_542 = arith.constant 0 : index
    %c72_543 = arith.constant 72 : index
    %908 = vector.load %arg6[%c1_541, %c0_542, %c72_543] : memref<2x16x144xf32, #tpu.memory_space<vmem>>, vector<1x16x16xf32>
    %909 = vector.shape_cast %908 : vector<1x16x16xf32> to vector<16x16xf32>
    %cst_544 = arith.constant 0.000000e+00 : f32
    %910 = vector.broadcast %cst_544 : f32 to vector<1x1xf32>
    %cst_545 = arith.constant dense<0.000000e+00> : vector<16xf32>
    %911 = vector.multi_reduction <add>, %907, %cst_545 [1] : vector<16x16xf32> to vector<16xf32>
    %912 = vector.shape_cast %911 : vector<16xf32> to vector<16x1xf32>
    %cst_546 = arith.constant dense<0.000000e+00> : vector<1xf32>
    %913 = vector.multi_reduction <add>, %912, %cst_546 [0] : vector<16x1xf32> to vector<1xf32>
    %914 = vector.shape_cast %913 : vector<1xf32> to vector<1x1xf32>
    %915 = arith.addf %910, %914 : vector<1x1xf32>
    %cst_547 = arith.constant dense<0.000000e+00> : vector<16xf32>
    %916 = vector.multi_reduction <add>, %909, %cst_547 [1] : vector<16x16xf32> to vector<16xf32>
    %917 = vector.shape_cast %916 : vector<16xf32> to vector<16x1xf32>
    %cst_548 = arith.constant dense<0.000000e+00> : vector<1xf32>
    %918 = vector.multi_reduction <add>, %917, %cst_548 [0] : vector<16x1xf32> to vector<1xf32>
    %919 = vector.shape_cast %918 : vector<1xf32> to vector<1x1xf32>
    %920 = arith.addf %915, %919 : vector<1x1xf32>
    %cst_549 = arith.constant 0.001953125 : f32
    %921 = vector.broadcast %cst_549 : f32 to vector<1x1xf32>
    %922 = arith.mulf %920, %921 : vector<1x1xf32>
    %cst_550 = arith.constant 0.000000e+00 : f32
    %923 = vector.broadcast %cst_550 : f32 to vector<1x1xf32>
    %924 = vector.broadcast %922 : vector<1x1xf32> to vector<16x16xf32>
    %925 = arith.subf %907, %924 : vector<16x16xf32>
    %926 = arith.mulf %925, %925 : vector<16x16xf32>
    %cst_551 = arith.constant dense<0.000000e+00> : vector<16xf32>
    %927 = vector.multi_reduction <add>, %926, %cst_551 [1] : vector<16x16xf32> to vector<16xf32>
    %928 = vector.shape_cast %927 : vector<16xf32> to vector<16x1xf32>
    %cst_552 = arith.constant dense<0.000000e+00> : vector<1xf32>
    %929 = vector.multi_reduction <add>, %928, %cst_552 [0] : vector<16x1xf32> to vector<1xf32>
    %930 = vector.shape_cast %929 : vector<1xf32> to vector<1x1xf32>
    %931 = arith.addf %923, %930 : vector<1x1xf32>
    %932 = vector.broadcast %922 : vector<1x1xf32> to vector<16x16xf32>
    %933 = arith.subf %909, %932 : vector<16x16xf32>
    %934 = arith.mulf %933, %933 : vector<16x16xf32>
    %cst_553 = arith.constant dense<0.000000e+00> : vector<16xf32>
    %935 = vector.multi_reduction <add>, %934, %cst_553 [1] : vector<16x16xf32> to vector<16xf32>
    %936 = vector.shape_cast %935 : vector<16xf32> to vector<16x1xf32>
    %cst_554 = arith.constant dense<0.000000e+00> : vector<1xf32>
    %937 = vector.multi_reduction <add>, %936, %cst_554 [0] : vector<16x1xf32> to vector<1xf32>
    %938 = vector.shape_cast %937 : vector<1xf32> to vector<1x1xf32>
    %939 = arith.addf %931, %938 : vector<1x1xf32>
    %cst_555 = arith.constant 0.001953125 : f32
    %940 = vector.broadcast %cst_555 : f32 to vector<1x1xf32>
    %941 = arith.mulf %939, %940 : vector<1x1xf32>
    %c4_556 = arith.constant 4 : index
    %942 = memref.load %arg2[%c4_556] : memref<8xf32, #tpu.memory_space<smem>>
    %cst_557 = arith.constant 9.99999974E-6 : f32
    %943 = vector.broadcast %cst_557 : f32 to vector<1x1xf32>
    %944 = arith.addf %941, %943 : vector<1x1xf32>
    %945 = math.rsqrt %944 : vector<1x1xf32>
    %946 = vector.broadcast %942 : f32 to vector<1x1xf32>
    %947 = arith.mulf %946, %945 : vector<1x1xf32>
    %c4_558 = arith.constant 4 : index
    %948 = memref.load %arg3[%c4_558] : memref<8xf32, #tpu.memory_space<smem>>
    %949 = arith.mulf %922, %947 : vector<1x1xf32>
    %950 = vector.broadcast %948 : f32 to vector<1x1xf32>
    %951 = arith.subf %950, %949 : vector<1x1xf32>
    %952 = vector.broadcast %947 : vector<1x1xf32> to vector<16x16xf32>
    %953 = arith.mulf %907, %952 : vector<16x16xf32>
    %954 = vector.broadcast %951 : vector<1x1xf32> to vector<16x16xf32>
    %955 = arith.addf %953, %954 : vector<16x16xf32>
    %cst_559 = arith.constant 0.000000e+00 : f32
    %956 = vector.broadcast %cst_559 : f32 to vector<16x16xf32>
    %957 = arith.cmpf oge, %955, %956 : vector<16x16xf32>
    %cst_560 = arith.constant 0.00999999977 : f32
    %958 = vector.broadcast %cst_560 : f32 to vector<16x16xf32>
    %959 = arith.mulf %958, %955 : vector<16x16xf32>
    %960 = arith.select %957, %955, %959 : vector<16x16xi1>, vector<16x16xf32>
    %c0_561 = arith.constant 0 : index
    %c4_562 = arith.constant 4 : index
    %c0_563 = arith.constant 0 : index
    %c0_564 = arith.constant 0 : index
    %961 = vector.load %arg4[%c0_561, %c4_562, %c0_563, %c0_564] : memref<2x8x16x16xf32, #tpu.memory_space<vmem>>, vector<1x1x16x16xf32>
    %962 = vector.shape_cast %961 : vector<1x1x16x16xf32> to vector<16x16xf32>
    %963 = vector.shape_cast %960 : vector<16x16xf32> to vector<1x1x16x16xf32>
    tpu.vector_store %arg4[%c0_561, %c4_562, %c0_563, %c0_564], %963 {strides = array<i32>} : memref<2x8x16x16xf32, #tpu.memory_space<vmem>>, vector<1x1x16x16xf32>,
    %964 = vector.broadcast %947 : vector<1x1xf32> to vector<16x16xf32>
    %965 = arith.mulf %909, %964 : vector<16x16xf32>
    %966 = vector.broadcast %951 : vector<1x1xf32> to vector<16x16xf32>
    %967 = arith.addf %965, %966 : vector<16x16xf32>
    %cst_565 = arith.constant 0.000000e+00 : f32
    %968 = vector.broadcast %cst_565 : f32 to vector<16x16xf32>
    %969 = arith.cmpf oge, %967, %968 : vector<16x16xf32>
    %cst_566 = arith.constant 0.00999999977 : f32
    %970 = vector.broadcast %cst_566 : f32 to vector<16x16xf32>
    %971 = arith.mulf %970, %967 : vector<16x16xf32>
    %972 = arith.select %969, %967, %971 : vector<16x16xi1>, vector<16x16xf32>
    %c1_567 = arith.constant 1 : index
    %c4_568 = arith.constant 4 : index
    %c0_569 = arith.constant 0 : index
    %c0_570 = arith.constant 0 : index
    %973 = vector.load %arg4[%c1_567, %c4_568, %c0_569, %c0_570] : memref<2x8x16x16xf32, #tpu.memory_space<vmem>>, vector<1x1x16x16xf32>
    %974 = vector.shape_cast %973 : vector<1x1x16x16xf32> to vector<16x16xf32>
    %975 = vector.shape_cast %972 : vector<16x16xf32> to vector<1x1x16x16xf32>
    tpu.vector_store %arg4[%c1_567, %c4_568, %c0_569, %c0_570], %975 {strides = array<i32>} : memref<2x8x16x16xf32, #tpu.memory_space<vmem>>, vector<1x1x16x16xf32>,
    %c0_571 = arith.constant 0 : index
    %c0_572 = arith.constant 0 : index
    %c90 = arith.constant 90 : index
    %976 = vector.load %arg6[%c0_571, %c0_572, %c90] : memref<2x16x144xf32, #tpu.memory_space<vmem>>, vector<1x16x16xf32>
    %977 = vector.shape_cast %976 : vector<1x16x16xf32> to vector<16x16xf32>
    %c1_573 = arith.constant 1 : index
    %c0_574 = arith.constant 0 : index
    %c90_575 = arith.constant 90 : index
    %978 = vector.load %arg6[%c1_573, %c0_574, %c90_575] : memref<2x16x144xf32, #tpu.memory_space<vmem>>, vector<1x16x16xf32>
    %979 = vector.shape_cast %978 : vector<1x16x16xf32> to vector<16x16xf32>
    %cst_576 = arith.constant 0.000000e+00 : f32
    %980 = vector.broadcast %cst_576 : f32 to vector<1x1xf32>
    %cst_577 = arith.constant dense<0.000000e+00> : vector<16xf32>
    %981 = vector.multi_reduction <add>, %977, %cst_577 [1] : vector<16x16xf32> to vector<16xf32>
    %982 = vector.shape_cast %981 : vector<16xf32> to vector<16x1xf32>
    %cst_578 = arith.constant dense<0.000000e+00> : vector<1xf32>
    %983 = vector.multi_reduction <add>, %982, %cst_578 [0] : vector<16x1xf32> to vector<1xf32>
    %984 = vector.shape_cast %983 : vector<1xf32> to vector<1x1xf32>
    %985 = arith.addf %980, %984 : vector<1x1xf32>
    %cst_579 = arith.constant dense<0.000000e+00> : vector<16xf32>
    %986 = vector.multi_reduction <add>, %979, %cst_579 [1] : vector<16x16xf32> to vector<16xf32>
    %987 = vector.shape_cast %986 : vector<16xf32> to vector<16x1xf32>
    %cst_580 = arith.constant dense<0.000000e+00> : vector<1xf32>
    %988 = vector.multi_reduction <add>, %987, %cst_580 [0] : vector<16x1xf32> to vector<1xf32>
    %989 = vector.shape_cast %988 : vector<1xf32> to vector<1x1xf32>
    %990 = arith.addf %985, %989 : vector<1x1xf32>
    %cst_581 = arith.constant 0.001953125 : f32
    %991 = vector.broadcast %cst_581 : f32 to vector<1x1xf32>
    %992 = arith.mulf %990, %991 : vector<1x1xf32>
    %cst_582 = arith.constant 0.000000e+00 : f32
    %993 = vector.broadcast %cst_582 : f32 to vector<1x1xf32>
    %994 = vector.broadcast %992 : vector<1x1xf32> to vector<16x16xf32>
    %995 = arith.subf %977, %994 : vector<16x16xf32>
    %996 = arith.mulf %995, %995 : vector<16x16xf32>
    %cst_583 = arith.constant dense<0.000000e+00> : vector<16xf32>
    %997 = vector.multi_reduction <add>, %996, %cst_583 [1] : vector<16x16xf32> to vector<16xf32>
    %998 = vector.shape_cast %997 : vector<16xf32> to vector<16x1xf32>
    %cst_584 = arith.constant dense<0.000000e+00> : vector<1xf32>
    %999 = vector.multi_reduction <add>, %998, %cst_584 [0] : vector<16x1xf32> to vector<1xf32>
    %1000 = vector.shape_cast %999 : vector<1xf32> to vector<1x1xf32>
    %1001 = arith.addf %993, %1000 : vector<1x1xf32>
    %1002 = vector.broadcast %992 : vector<1x1xf32> to vector<16x16xf32>
    %1003 = arith.subf %979, %1002 : vector<16x16xf32>
    %1004 = arith.mulf %1003, %1003 : vector<16x16xf32>
    %cst_585 = arith.constant dense<0.000000e+00> : vector<16xf32>
    %1005 = vector.multi_reduction <add>, %1004, %cst_585 [1] : vector<16x16xf32> to vector<16xf32>
    %1006 = vector.shape_cast %1005 : vector<16xf32> to vector<16x1xf32>
    %cst_586 = arith.constant dense<0.000000e+00> : vector<1xf32>
    %1007 = vector.multi_reduction <add>, %1006, %cst_586 [0] : vector<16x1xf32> to vector<1xf32>
    %1008 = vector.shape_cast %1007 : vector<1xf32> to vector<1x1xf32>
    %1009 = arith.addf %1001, %1008 : vector<1x1xf32>
    %cst_587 = arith.constant 0.001953125 : f32
    %1010 = vector.broadcast %cst_587 : f32 to vector<1x1xf32>
    %1011 = arith.mulf %1009, %1010 : vector<1x1xf32>
    %c5_588 = arith.constant 5 : index
    %1012 = memref.load %arg2[%c5_588] : memref<8xf32, #tpu.memory_space<smem>>
    %cst_589 = arith.constant 9.99999974E-6 : f32
    %1013 = vector.broadcast %cst_589 : f32 to vector<1x1xf32>
    %1014 = arith.addf %1011, %1013 : vector<1x1xf32>
    %1015 = math.rsqrt %1014 : vector<1x1xf32>
    %1016 = vector.broadcast %1012 : f32 to vector<1x1xf32>
    %1017 = arith.mulf %1016, %1015 : vector<1x1xf32>
    %c5_590 = arith.constant 5 : index
    %1018 = memref.load %arg3[%c5_590] : memref<8xf32, #tpu.memory_space<smem>>
    %1019 = arith.mulf %992, %1017 : vector<1x1xf32>
    %1020 = vector.broadcast %1018 : f32 to vector<1x1xf32>
    %1021 = arith.subf %1020, %1019 : vector<1x1xf32>
    %1022 = vector.broadcast %1017 : vector<1x1xf32> to vector<16x16xf32>
    %1023 = arith.mulf %977, %1022 : vector<16x16xf32>
    %1024 = vector.broadcast %1021 : vector<1x1xf32> to vector<16x16xf32>
    %1025 = arith.addf %1023, %1024 : vector<16x16xf32>
    %cst_591 = arith.constant 0.000000e+00 : f32
    %1026 = vector.broadcast %cst_591 : f32 to vector<16x16xf32>
    %1027 = arith.cmpf oge, %1025, %1026 : vector<16x16xf32>
    %cst_592 = arith.constant 0.00999999977 : f32
    %1028 = vector.broadcast %cst_592 : f32 to vector<16x16xf32>
    %1029 = arith.mulf %1028, %1025 : vector<16x16xf32>
    %1030 = arith.select %1027, %1025, %1029 : vector<16x16xi1>, vector<16x16xf32>
    %c0_593 = arith.constant 0 : index
    %c5_594 = arith.constant 5 : index
    %c0_595 = arith.constant 0 : index
    %c0_596 = arith.constant 0 : index
    %1031 = vector.load %arg4[%c0_593, %c5_594, %c0_595, %c0_596] : memref<2x8x16x16xf32, #tpu.memory_space<vmem>>, vector<1x1x16x16xf32>
    %1032 = vector.shape_cast %1031 : vector<1x1x16x16xf32> to vector<16x16xf32>
    %1033 = vector.shape_cast %1030 : vector<16x16xf32> to vector<1x1x16x16xf32>
    tpu.vector_store %arg4[%c0_593, %c5_594, %c0_595, %c0_596], %1033 {strides = array<i32>} : memref<2x8x16x16xf32, #tpu.memory_space<vmem>>, vector<1x1x16x16xf32>,
    %1034 = vector.broadcast %1017 : vector<1x1xf32> to vector<16x16xf32>
    %1035 = arith.mulf %979, %1034 : vector<16x16xf32>
    %1036 = vector.broadcast %1021 : vector<1x1xf32> to vector<16x16xf32>
    %1037 = arith.addf %1035, %1036 : vector<16x16xf32>
    %cst_597 = arith.constant 0.000000e+00 : f32
    %1038 = vector.broadcast %cst_597 : f32 to vector<16x16xf32>
    %1039 = arith.cmpf oge, %1037, %1038 : vector<16x16xf32>
    %cst_598 = arith.constant 0.00999999977 : f32
    %1040 = vector.broadcast %cst_598 : f32 to vector<16x16xf32>
    %1041 = arith.mulf %1040, %1037 : vector<16x16xf32>
    %1042 = arith.select %1039, %1037, %1041 : vector<16x16xi1>, vector<16x16xf32>
    %c1_599 = arith.constant 1 : index
    %c5_600 = arith.constant 5 : index
    %c0_601 = arith.constant 0 : index
    %c0_602 = arith.constant 0 : index
    %1043 = vector.load %arg4[%c1_599, %c5_600, %c0_601, %c0_602] : memref<2x8x16x16xf32, #tpu.memory_space<vmem>>, vector<1x1x16x16xf32>
    %1044 = vector.shape_cast %1043 : vector<1x1x16x16xf32> to vector<16x16xf32>
    %1045 = vector.shape_cast %1042 : vector<16x16xf32> to vector<1x1x16x16xf32>
    tpu.vector_store %arg4[%c1_599, %c5_600, %c0_601, %c0_602], %1045 {strides = array<i32>} : memref<2x8x16x16xf32, #tpu.memory_space<vmem>>, vector<1x1x16x16xf32>,
    %c0_603 = arith.constant 0 : index
    %c0_604 = arith.constant 0 : index
    %c108 = arith.constant 108 : index
    %1046 = vector.load %arg6[%c0_603, %c0_604, %c108] : memref<2x16x144xf32, #tpu.memory_space<vmem>>, vector<1x16x16xf32>
    %1047 = vector.shape_cast %1046 : vector<1x16x16xf32> to vector<16x16xf32>
    %c1_605 = arith.constant 1 : index
    %c0_606 = arith.constant 0 : index
    %c108_607 = arith.constant 108 : index
    %1048 = vector.load %arg6[%c1_605, %c0_606, %c108_607] : memref<2x16x144xf32, #tpu.memory_space<vmem>>, vector<1x16x16xf32>
    %1049 = vector.shape_cast %1048 : vector<1x16x16xf32> to vector<16x16xf32>
    %cst_608 = arith.constant 0.000000e+00 : f32
    %1050 = vector.broadcast %cst_608 : f32 to vector<1x1xf32>
    %cst_609 = arith.constant dense<0.000000e+00> : vector<16xf32>
    %1051 = vector.multi_reduction <add>, %1047, %cst_609 [1] : vector<16x16xf32> to vector<16xf32>
    %1052 = vector.shape_cast %1051 : vector<16xf32> to vector<16x1xf32>
    %cst_610 = arith.constant dense<0.000000e+00> : vector<1xf32>
    %1053 = vector.multi_reduction <add>, %1052, %cst_610 [0] : vector<16x1xf32> to vector<1xf32>
    %1054 = vector.shape_cast %1053 : vector<1xf32> to vector<1x1xf32>
    %1055 = arith.addf %1050, %1054 : vector<1x1xf32>
    %cst_611 = arith.constant dense<0.000000e+00> : vector<16xf32>
    %1056 = vector.multi_reduction <add>, %1049, %cst_611 [1] : vector<16x16xf32> to vector<16xf32>
    %1057 = vector.shape_cast %1056 : vector<16xf32> to vector<16x1xf32>
    %cst_612 = arith.constant dense<0.000000e+00> : vector<1xf32>
    %1058 = vector.multi_reduction <add>, %1057, %cst_612 [0] : vector<16x1xf32> to vector<1xf32>
    %1059 = vector.shape_cast %1058 : vector<1xf32> to vector<1x1xf32>
    %1060 = arith.addf %1055, %1059 : vector<1x1xf32>
    %cst_613 = arith.constant 0.001953125 : f32
    %1061 = vector.broadcast %cst_613 : f32 to vector<1x1xf32>
    %1062 = arith.mulf %1060, %1061 : vector<1x1xf32>
    %cst_614 = arith.constant 0.000000e+00 : f32
    %1063 = vector.broadcast %cst_614 : f32 to vector<1x1xf32>
    %1064 = vector.broadcast %1062 : vector<1x1xf32> to vector<16x16xf32>
    %1065 = arith.subf %1047, %1064 : vector<16x16xf32>
    %1066 = arith.mulf %1065, %1065 : vector<16x16xf32>
    %cst_615 = arith.constant dense<0.000000e+00> : vector<16xf32>
    %1067 = vector.multi_reduction <add>, %1066, %cst_615 [1] : vector<16x16xf32> to vector<16xf32>
    %1068 = vector.shape_cast %1067 : vector<16xf32> to vector<16x1xf32>
    %cst_616 = arith.constant dense<0.000000e+00> : vector<1xf32>
    %1069 = vector.multi_reduction <add>, %1068, %cst_616 [0] : vector<16x1xf32> to vector<1xf32>
    %1070 = vector.shape_cast %1069 : vector<1xf32> to vector<1x1xf32>
    %1071 = arith.addf %1063, %1070 : vector<1x1xf32>
    %1072 = vector.broadcast %1062 : vector<1x1xf32> to vector<16x16xf32>
    %1073 = arith.subf %1049, %1072 : vector<16x16xf32>
    %1074 = arith.mulf %1073, %1073 : vector<16x16xf32>
    %cst_617 = arith.constant dense<0.000000e+00> : vector<16xf32>
    %1075 = vector.multi_reduction <add>, %1074, %cst_617 [1] : vector<16x16xf32> to vector<16xf32>
    %1076 = vector.shape_cast %1075 : vector<16xf32> to vector<16x1xf32>
    %cst_618 = arith.constant dense<0.000000e+00> : vector<1xf32>
    %1077 = vector.multi_reduction <add>, %1076, %cst_618 [0] : vector<16x1xf32> to vector<1xf32>
    %1078 = vector.shape_cast %1077 : vector<1xf32> to vector<1x1xf32>
    %1079 = arith.addf %1071, %1078 : vector<1x1xf32>
    %cst_619 = arith.constant 0.001953125 : f32
    %1080 = vector.broadcast %cst_619 : f32 to vector<1x1xf32>
    %1081 = arith.mulf %1079, %1080 : vector<1x1xf32>
    %c6_620 = arith.constant 6 : index
    %1082 = memref.load %arg2[%c6_620] : memref<8xf32, #tpu.memory_space<smem>>
    %cst_621 = arith.constant 9.99999974E-6 : f32
    %1083 = vector.broadcast %cst_621 : f32 to vector<1x1xf32>
    %1084 = arith.addf %1081, %1083 : vector<1x1xf32>
    %1085 = math.rsqrt %1084 : vector<1x1xf32>
    %1086 = vector.broadcast %1082 : f32 to vector<1x1xf32>
    %1087 = arith.mulf %1086, %1085 : vector<1x1xf32>
    %c6_622 = arith.constant 6 : index
    %1088 = memref.load %arg3[%c6_622] : memref<8xf32, #tpu.memory_space<smem>>
    %1089 = arith.mulf %1062, %1087 : vector<1x1xf32>
    %1090 = vector.broadcast %1088 : f32 to vector<1x1xf32>
    %1091 = arith.subf %1090, %1089 : vector<1x1xf32>
    %1092 = vector.broadcast %1087 : vector<1x1xf32> to vector<16x16xf32>
    %1093 = arith.mulf %1047, %1092 : vector<16x16xf32>
    %1094 = vector.broadcast %1091 : vector<1x1xf32> to vector<16x16xf32>
    %1095 = arith.addf %1093, %1094 : vector<16x16xf32>
    %cst_623 = arith.constant 0.000000e+00 : f32
    %1096 = vector.broadcast %cst_623 : f32 to vector<16x16xf32>
    %1097 = arith.cmpf oge, %1095, %1096 : vector<16x16xf32>
    %cst_624 = arith.constant 0.00999999977 : f32
    %1098 = vector.broadcast %cst_624 : f32 to vector<16x16xf32>
    %1099 = arith.mulf %1098, %1095 : vector<16x16xf32>
    %1100 = arith.select %1097, %1095, %1099 : vector<16x16xi1>, vector<16x16xf32>
    %c0_625 = arith.constant 0 : index
    %c6_626 = arith.constant 6 : index
    %c0_627 = arith.constant 0 : index
    %c0_628 = arith.constant 0 : index
    %1101 = vector.load %arg4[%c0_625, %c6_626, %c0_627, %c0_628] : memref<2x8x16x16xf32, #tpu.memory_space<vmem>>, vector<1x1x16x16xf32>
    %1102 = vector.shape_cast %1101 : vector<1x1x16x16xf32> to vector<16x16xf32>
    %1103 = vector.shape_cast %1100 : vector<16x16xf32> to vector<1x1x16x16xf32>
    tpu.vector_store %arg4[%c0_625, %c6_626, %c0_627, %c0_628], %1103 {strides = array<i32>} : memref<2x8x16x16xf32, #tpu.memory_space<vmem>>, vector<1x1x16x16xf32>,
    %1104 = vector.broadcast %1087 : vector<1x1xf32> to vector<16x16xf32>
    %1105 = arith.mulf %1049, %1104 : vector<16x16xf32>
    %1106 = vector.broadcast %1091 : vector<1x1xf32> to vector<16x16xf32>
    %1107 = arith.addf %1105, %1106 : vector<16x16xf32>
    %cst_629 = arith.constant 0.000000e+00 : f32
    %1108 = vector.broadcast %cst_629 : f32 to vector<16x16xf32>
    %1109 = arith.cmpf oge, %1107, %1108 : vector<16x16xf32>
    %cst_630 = arith.constant 0.00999999977 : f32
    %1110 = vector.broadcast %cst_630 : f32 to vector<16x16xf32>
    %1111 = arith.mulf %1110, %1107 : vector<16x16xf32>
    %1112 = arith.select %1109, %1107, %1111 : vector<16x16xi1>, vector<16x16xf32>
    %c1_631 = arith.constant 1 : index
    %c6_632 = arith.constant 6 : index
    %c0_633 = arith.constant 0 : index
    %c0_634 = arith.constant 0 : index
    %1113 = vector.load %arg4[%c1_631, %c6_632, %c0_633, %c0_634] : memref<2x8x16x16xf32, #tpu.memory_space<vmem>>, vector<1x1x16x16xf32>
    %1114 = vector.shape_cast %1113 : vector<1x1x16x16xf32> to vector<16x16xf32>
    %1115 = vector.shape_cast %1112 : vector<16x16xf32> to vector<1x1x16x16xf32>
    tpu.vector_store %arg4[%c1_631, %c6_632, %c0_633, %c0_634], %1115 {strides = array<i32>} : memref<2x8x16x16xf32, #tpu.memory_space<vmem>>, vector<1x1x16x16xf32>,
    %c0_635 = arith.constant 0 : index
    %c0_636 = arith.constant 0 : index
    %c126 = arith.constant 126 : index
    %1116 = vector.load %arg6[%c0_635, %c0_636, %c126] : memref<2x16x144xf32, #tpu.memory_space<vmem>>, vector<1x16x16xf32>
    %1117 = vector.shape_cast %1116 : vector<1x16x16xf32> to vector<16x16xf32>
    %c1_637 = arith.constant 1 : index
    %c0_638 = arith.constant 0 : index
    %c126_639 = arith.constant 126 : index
    %1118 = vector.load %arg6[%c1_637, %c0_638, %c126_639] : memref<2x16x144xf32, #tpu.memory_space<vmem>>, vector<1x16x16xf32>
    %1119 = vector.shape_cast %1118 : vector<1x16x16xf32> to vector<16x16xf32>
    %cst_640 = arith.constant 0.000000e+00 : f32
    %1120 = vector.broadcast %cst_640 : f32 to vector<1x1xf32>
    %cst_641 = arith.constant dense<0.000000e+00> : vector<16xf32>
    %1121 = vector.multi_reduction <add>, %1117, %cst_641 [1] : vector<16x16xf32> to vector<16xf32>
    %1122 = vector.shape_cast %1121 : vector<16xf32> to vector<16x1xf32>
    %cst_642 = arith.constant dense<0.000000e+00> : vector<1xf32>
    %1123 = vector.multi_reduction <add>, %1122, %cst_642 [0] : vector<16x1xf32> to vector<1xf32>
    %1124 = vector.shape_cast %1123 : vector<1xf32> to vector<1x1xf32>
    %1125 = arith.addf %1120, %1124 : vector<1x1xf32>
    %cst_643 = arith.constant dense<0.000000e+00> : vector<16xf32>
    %1126 = vector.multi_reduction <add>, %1119, %cst_643 [1] : vector<16x16xf32> to vector<16xf32>
    %1127 = vector.shape_cast %1126 : vector<16xf32> to vector<16x1xf32>
    %cst_644 = arith.constant dense<0.000000e+00> : vector<1xf32>
    %1128 = vector.multi_reduction <add>, %1127, %cst_644 [0] : vector<16x1xf32> to vector<1xf32>
    %1129 = vector.shape_cast %1128 : vector<1xf32> to vector<1x1xf32>
    %1130 = arith.addf %1125, %1129 : vector<1x1xf32>
    %cst_645 = arith.constant 0.001953125 : f32
    %1131 = vector.broadcast %cst_645 : f32 to vector<1x1xf32>
    %1132 = arith.mulf %1130, %1131 : vector<1x1xf32>
    %cst_646 = arith.constant 0.000000e+00 : f32
    %1133 = vector.broadcast %cst_646 : f32 to vector<1x1xf32>
    %1134 = vector.broadcast %1132 : vector<1x1xf32> to vector<16x16xf32>
    %1135 = arith.subf %1117, %1134 : vector<16x16xf32>
    %1136 = arith.mulf %1135, %1135 : vector<16x16xf32>
    %cst_647 = arith.constant dense<0.000000e+00> : vector<16xf32>
    %1137 = vector.multi_reduction <add>, %1136, %cst_647 [1] : vector<16x16xf32> to vector<16xf32>
    %1138 = vector.shape_cast %1137 : vector<16xf32> to vector<16x1xf32>
    %cst_648 = arith.constant dense<0.000000e+00> : vector<1xf32>
    %1139 = vector.multi_reduction <add>, %1138, %cst_648 [0] : vector<16x1xf32> to vector<1xf32>
    %1140 = vector.shape_cast %1139 : vector<1xf32> to vector<1x1xf32>
    %1141 = arith.addf %1133, %1140 : vector<1x1xf32>
    %1142 = vector.broadcast %1132 : vector<1x1xf32> to vector<16x16xf32>
    %1143 = arith.subf %1119, %1142 : vector<16x16xf32>
    %1144 = arith.mulf %1143, %1143 : vector<16x16xf32>
    %cst_649 = arith.constant dense<0.000000e+00> : vector<16xf32>
    %1145 = vector.multi_reduction <add>, %1144, %cst_649 [1] : vector<16x16xf32> to vector<16xf32>
    %1146 = vector.shape_cast %1145 : vector<16xf32> to vector<16x1xf32>
    %cst_650 = arith.constant dense<0.000000e+00> : vector<1xf32>
    %1147 = vector.multi_reduction <add>, %1146, %cst_650 [0] : vector<16x1xf32> to vector<1xf32>
    %1148 = vector.shape_cast %1147 : vector<1xf32> to vector<1x1xf32>
    %1149 = arith.addf %1141, %1148 : vector<1x1xf32>
    %cst_651 = arith.constant 0.001953125 : f32
    %1150 = vector.broadcast %cst_651 : f32 to vector<1x1xf32>
    %1151 = arith.mulf %1149, %1150 : vector<1x1xf32>
    %c7_652 = arith.constant 7 : index
    %1152 = memref.load %arg2[%c7_652] : memref<8xf32, #tpu.memory_space<smem>>
    %cst_653 = arith.constant 9.99999974E-6 : f32
    %1153 = vector.broadcast %cst_653 : f32 to vector<1x1xf32>
    %1154 = arith.addf %1151, %1153 : vector<1x1xf32>
    %1155 = math.rsqrt %1154 : vector<1x1xf32>
    %1156 = vector.broadcast %1152 : f32 to vector<1x1xf32>
    %1157 = arith.mulf %1156, %1155 : vector<1x1xf32>
    %c7_654 = arith.constant 7 : index
    %1158 = memref.load %arg3[%c7_654] : memref<8xf32, #tpu.memory_space<smem>>
    %1159 = arith.mulf %1132, %1157 : vector<1x1xf32>
    %1160 = vector.broadcast %1158 : f32 to vector<1x1xf32>
    %1161 = arith.subf %1160, %1159 : vector<1x1xf32>
    %1162 = vector.broadcast %1157 : vector<1x1xf32> to vector<16x16xf32>
    %1163 = arith.mulf %1117, %1162 : vector<16x16xf32>
    %1164 = vector.broadcast %1161 : vector<1x1xf32> to vector<16x16xf32>
    %1165 = arith.addf %1163, %1164 : vector<16x16xf32>
    %cst_655 = arith.constant 0.000000e+00 : f32
    %1166 = vector.broadcast %cst_655 : f32 to vector<16x16xf32>
    %1167 = arith.cmpf oge, %1165, %1166 : vector<16x16xf32>
    %cst_656 = arith.constant 0.00999999977 : f32
    %1168 = vector.broadcast %cst_656 : f32 to vector<16x16xf32>
    %1169 = arith.mulf %1168, %1165 : vector<16x16xf32>
    %1170 = arith.select %1167, %1165, %1169 : vector<16x16xi1>, vector<16x16xf32>
    %c0_657 = arith.constant 0 : index
    %c7_658 = arith.constant 7 : index
    %c0_659 = arith.constant 0 : index
    %c0_660 = arith.constant 0 : index
    %1171 = vector.load %arg4[%c0_657, %c7_658, %c0_659, %c0_660] : memref<2x8x16x16xf32, #tpu.memory_space<vmem>>, vector<1x1x16x16xf32>
    %1172 = vector.shape_cast %1171 : vector<1x1x16x16xf32> to vector<16x16xf32>
    %1173 = vector.shape_cast %1170 : vector<16x16xf32> to vector<1x1x16x16xf32>
    tpu.vector_store %arg4[%c0_657, %c7_658, %c0_659, %c0_660], %1173 {strides = array<i32>} : memref<2x8x16x16xf32, #tpu.memory_space<vmem>>, vector<1x1x16x16xf32>,
    %1174 = vector.broadcast %1157 : vector<1x1xf32> to vector<16x16xf32>
    %1175 = arith.mulf %1119, %1174 : vector<16x16xf32>
    %1176 = vector.broadcast %1161 : vector<1x1xf32> to vector<16x16xf32>
    %1177 = arith.addf %1175, %1176 : vector<16x16xf32>
    %cst_661 = arith.constant 0.000000e+00 : f32
    %1178 = vector.broadcast %cst_661 : f32 to vector<16x16xf32>
    %1179 = arith.cmpf oge, %1177, %1178 : vector<16x16xf32>
    %cst_662 = arith.constant 0.00999999977 : f32
    %1180 = vector.broadcast %cst_662 : f32 to vector<16x16xf32>
    %1181 = arith.mulf %1180, %1177 : vector<16x16xf32>
    %1182 = arith.select %1179, %1177, %1181 : vector<16x16xi1>, vector<16x16xf32>
    %c1_663 = arith.constant 1 : index
    %c7_664 = arith.constant 7 : index
    %c0_665 = arith.constant 0 : index
    %c0_666 = arith.constant 0 : index
    %1183 = vector.load %arg4[%c1_663, %c7_664, %c0_665, %c0_666] : memref<2x8x16x16xf32, #tpu.memory_space<vmem>>, vector<1x1x16x16xf32>
    %1184 = vector.shape_cast %1183 : vector<1x1x16x16xf32> to vector<16x16xf32>
    %1185 = vector.shape_cast %1182 : vector<16x16xf32> to vector<1x1x16x16xf32>
    tpu.vector_store %arg4[%c1_663, %c7_664, %c0_665, %c0_666], %1185 {strides = array<i32>} : memref<2x8x16x16xf32, #tpu.memory_space<vmem>>, vector<1x1x16x16xf32>,
    return
  }
}

</mosaic_0001>

<llo_original>
// kernel: convz_forward.1
$region0: #{convz_forward.1}
  #allocation0 [shape = 'u32[]', space=smem, size = 0x4, offset = 0x4, fixed_abs, tag = 'smem constant byte address 0x4 - core index']
  #allocation1 [shape = 'u32[144,128]{1,0:T(1,128)}', space=vmem, size = 0x12000, scoped, tag = 'internal scratch']
  #allocation2 [shape = 'f32[4,18,146]{2,1,0:T(8,128)}', space=vmem, size = 0x18000, scoped, tag = 'scratch operand']
  #allocation3 [shape = 'f32[2,16,144]{2,1,0:T(8,128)}', space=vmem, size = 0x8000, scoped, tag = 'scratch operand']
  %s0 = inlined_call_operand.vmem [shape: f32[2,4,16,16], index: 0, kind: input, shape index: {}]
  %s1 = inlined_call_operand.vmem [shape: f32[36,144], index: 1, kind: input, shape index: {}]
  %s2 = inlined_call_operand.vmem [shape: f32[8], index: 2, kind: input, shape index: {}]
  %s3 = inlined_call_operand.vmem [shape: f32[8], index: 3, kind: input, shape index: {}]
  %s4 = inlined_call_operand.hbm [shape: f32[2,8,16,16], index: 4, kind: output, shape index: {}]
  %s5 = sld [smem:[#allocation0]]
  $region34: #{convz_forward.1} parent=0
    _
  %s7 = ssub.s32 1, %s5
  %s8 = scalar_select 0, %s7, %s5
  $region1: #{convz_forward.1} parent=0
    #allocation4 [shape = 'u8[512]{0}', space=smem, size = 0x200, scoped, tag = 'input window, operand 2, single buffered']
    #allocation5 [shape = 's32[1]{0}', space=sflag, size = 0x4, scoped, tag = 'scoped memory for convz_forward.1']
    #allocation6 [shape = 's32[1]{0}', space=sflag, size = 0x4, scoped, tag = 'scoped memory for convz_forward.1']
    #allocation7 [shape = 'u8[512]{0}', space=smem, size = 0x200, scoped, tag = 'input window, operand 3, single buffered']
    #allocation8 [shape = 's32[1]{0}', space=sflag, size = 0x4, scoped, tag = 'scoped memory for convz_forward.1']
    #allocation9 [shape = 'u8[131072]{0}', space=vmem, size = 0x20000, scoped, tag = 'output window, operand 0, single buffered']
    %9 = vsyncpa [#allocation6], 0
    %10 = vsyncpa [#allocation8], 0
    %11 = vsyncpa [#allocation5], 0
    // Predicated region
    $region2: #{convz_forward.1} parent=1 // pred_check
      _
    $region3: #{convz_forward.1} parent=1 // pred_check_branch
      %13 = sbr.rel (0) target = $region5
    $region4: #{convz_forward.1} parent=1 // pred_region
      _
    $region5: #{convz_forward.1} parent=1 // pred_fallthru
      _
    // Predicated region
    $region6: #{convz_forward.1} parent=1 // pred_check
      _
    $region7: #{convz_forward.1} parent=1 // pred_check_branch
      %15 = sbr.rel (0) target = $region9
    $region8: #{convz_forward.1} parent=1 // pred_region
      _
    $region9: #{convz_forward.1} parent=1 // pred_fallthru
      _
    // Predicated region
    $region10: #{convz_forward.1} parent=1 // pred_check
      _
    $region11: #{convz_forward.1} parent=1 // pred_check_branch
      %17 = sbr.rel (0) target = $region13
    $region12: #{convz_forward.1} parent=1 // pred_region
      %s19 = ssub.s32 16, 16
      %20 = vsyncadd [#allocation6], %s19
      %s22 = sshll.u32 %s2, 4
      %s23 = int_to_ptr.vmem [resolvable:$true] %s22
      %25 = dma.vmem_to_smem %s23, 16, [#allocation4], [#allocation6]
    $region13: #{convz_forward.1} parent=1 // pred_fallthru
      _
    // Predicated region
    $region14: #{convz_forward.1} parent=1 // pred_check
      _
    $region15: #{convz_forward.1} parent=1 // pred_check_branch
      %27 = sbr.rel (0) target = $region17
    $region16: #{convz_forward.1} parent=1 // pred_region
      %s29 = ssub.s32 16, 16
      %30 = vsyncadd [#allocation8], %s29
      %s32 = sshll.u32 %s3, 4
      %s33 = int_to_ptr.vmem [resolvable:$true] %s32
      %35 = dma.vmem_to_smem %s33, 16, [#allocation7], [#allocation8]
    $region17: #{convz_forward.1} parent=1 // pred_fallthru
      _
    // Predicated region
    $region18: #{convz_forward.1} parent=1 // pred_check
      _
    $region19: #{convz_forward.1} parent=1 // pred_check_branch
      %37 = sbr.rel (0) target = $region21
    $region20: #{convz_forward.1} parent=1 // pred_region
      %38 = dma.done [#allocation6], 16
    $region21: #{convz_forward.1} parent=1 // pred_fallthru
      _
    // Predicated region
    $region22: #{convz_forward.1} parent=1 // pred_check
      _
    $region23: #{convz_forward.1} parent=1 // pred_check_branch
      %40 = sbr.rel (0) target = $region25
    $region24: #{convz_forward.1} parent=1 // pred_region
      %41 = dma.done [#allocation8], 16
    $region25: #{convz_forward.1} parent=1 // pred_fallthru
      _
    %42 = sfence
    %43 = vst [vmem:[#allocation2] sm:$0xff] 0.0
    %vm44 = vcmask 146432
    %45 = vst.msk [vmem:[#allocation2 + $0x8] sm:$0xff] %vm44, 0.0
    %46 = vst [vmem:[#allocation2 + $0x10] sm:$0xff] 0.0
    %47 = vst.msk [vmem:[#allocation2 + $0x18] sm:$0xff] %vm44, 0.0
    %48 = vst [vmem:[#allocation2 + $0x20] sm:$0x3] 0.0
    %vm49 = vcmask 140288
    %50 = vst.msk [vmem:[#allocation2 + $0x28] sm:$0x3] %vm49, 0.0
    %51 = vst [vmem:[#allocation2 + $0x30] sm:$0xff] 0.0
    %52 = vst.msk [vmem:[#allocation2 + $0x38] sm:$0xff] %vm44, 0.0
    %53 = vst [vmem:[#allocation2 + $0x40] sm:$0xff] 0.0
    %54 = vst.msk [vmem:[#allocation2 + $0x48] sm:$0xff] %vm44, 0.0
    %55 = vst [vmem:[#allocation2 + $0x50] sm:$0x3] 0.0
    %56 = vst.msk [vmem:[#allocation2 + $0x58] sm:$0x3] %vm49, 0.0
    %57 = vst [vmem:[#allocation2 + $0x60] sm:$0xff] 0.0
    %58 = vst.msk [vmem:[#allocation2 + $0x68] sm:$0xff] %vm44, 0.0
    %59 = vst [vmem:[#allocation2 + $0x70] sm:$0xff] 0.0
    %60 = vst.msk [vmem:[#allocation2 + $0x78] sm:$0xff] %vm44, 0.0
    %61 = vst [vmem:[#allocation2 + $0x80] sm:$0x3] 0.0
    %62 = vst.msk [vmem:[#allocation2 + $0x88] sm:$0x3] %vm49, 0.0
    %63 = vst [vmem:[#allocation2 + $0x90] sm:$0xff] 0.0
    %64 = vst.msk [vmem:[#allocation2 + $0x98] sm:$0xff] %vm44, 0.0
    %65 = vst [vmem:[#allocation2 + $0xa0] sm:$0xff] 0.0
    %66 = vst.msk [vmem:[#allocation2 + $0xa8] sm:$0xff] %vm44, 0.0
    %67 = vst [vmem:[#allocation2 + $0xb0] sm:$0x3] 0.0
    %68 = vst.msk [vmem:[#allocation2 + $0xb8] sm:$0x3] %vm49, 0.0
    %v69 = vld [vmem:[%s0] sm:$0xff]
    %v70 = vld [vmem:[%s0 + $0x8] sm:$0xff]
    %vm73 = vcmask 1040384
    %v74 = vrot.slane %v69, 7
    %v75 = vrot.slane %v70, 7
    %v76 = vsel %vm73, %v74, %v75
    %77 = vrot.lane.b32.xlu0 %v74, 1
    %v78 = vpop.permute.xlu0 %77
    %79 = vrot.lane.b32.xlu0 %v76, 1
    %v80 = vpop.permute.xlu0 %79
    %81 = vrot.lane.b32.xlu0 %v75, 1
    %v82 = vpop.permute.xlu0 %81
    %vm86 = vcmask 138249
    %87 = vst.msk [vmem:[#allocation2] sm:$0xfe] %vm86, %v78
    %vm88 = vcmask 138248
    %89 = vst.msk [vmem:[#allocation2 + $0x10] sm:$0xff] %vm88, %v80
    %vm90 = vcmask 131080
    %91 = vst.msk [vmem:[#allocation2 + $0x20] sm:$0x1] %vm90, %v82
    %92 = vrot.lane.b32.xlu0 %v74, 19
    %v93 = vpop.permute.xlu0 %92
    %94 = vrot.lane.b32.xlu0 %v76, 19
    %v95 = vpop.permute.xlu0 %94
    %96 = vrot.lane.b32.xlu0 %v75, 19
    %v97 = vpop.permute.xlu0 %96
    %vm101 = vcmask 285849
    %102 = vst.msk [vmem:[#allocation2] sm:$0xfe] %vm101, %v93
    %vm103 = vcmask 285848
    %104 = vst.msk [vmem:[#allocation2 + $0x10] sm:$0xff] %vm103, %v95
    %vm105 = vcmask 278680
    %106 = vst.msk [vmem:[#allocation2 + $0x20] sm:$0x1] %vm105, %v97
    %107 = vrot.lane.b32.xlu0 %v74, 37
    %v108 = vpop.permute.xlu0 %107
    %109 = vrot.lane.b32.xlu0 %v76, 37
    %v110 = vpop.permute.xlu0 %109
    %111 = vrot.lane.b32.xlu0 %v75, 37
    %v112 = vpop.permute.xlu0 %111
    %vm116 = vcmask 433449
    %117 = vst.msk [vmem:[#allocation2] sm:$0xfe] %vm116, %v108
    %vm118 = vcmask 433448
    %119 = vst.msk [vmem:[#allocation2 + $0x10] sm:$0xff] %vm118, %v110
    %vm120 = vcmask 426280
    %121 = vst.msk [vmem:[#allocation2 + $0x20] sm:$0x1] %vm120, %v112
    %122 = vrot.lane.b32.xlu0 %v74, 55
    %v123 = vpop.permute.xlu0 %122
    %124 = vrot.lane.b32.xlu0 %v76, 55
    %v125 = vpop.permute.xlu0 %124
    %126 = vrot.lane.b32.xlu0 %v75, 55
    %v127 = vpop.permute.xlu0 %126
    %vm131 = vcmask 581049
    %132 = vst.msk [vmem:[#allocation2] sm:$0xfe] %vm131, %v123
    %vm133 = vcmask 581048
    %134 = vst.msk [vmem:[#allocation2 + $0x10] sm:$0xff] %vm133, %v125
    %vm135 = vcmask 573880
    %136 = vst.msk [vmem:[#allocation2 + $0x20] sm:$0x1] %vm135, %v127
    %137 = vrot.lane.b32.xlu0 %v74, 73
    %v138 = vpop.permute.xlu0 %137
    %139 = vrot.lane.b32.xlu0 %v76, 73
    %v140 = vpop.permute.xlu0 %139
    %141 = vrot.lane.b32.xlu0 %v75, 73
    %v142 = vpop.permute.xlu0 %141
    %vm146 = vcmask 728649
    %147 = vst.msk [vmem:[#allocation2] sm:$0xfe] %vm146, %v138
    %vm148 = vcmask 728648
    %149 = vst.msk [vmem:[#allocation2 + $0x10] sm:$0xff] %vm148, %v140
    %vm150 = vcmask 721480
    %151 = vst.msk [vmem:[#allocation2 + $0x20] sm:$0x1] %vm150, %v142
    %152 = vrot.lane.b32.xlu0 %v74, 91
    %v153 = vpop.permute.xlu0 %152
    %154 = vrot.lane.b32.xlu0 %v76, 91
    %v155 = vpop.permute.xlu0 %154
    %156 = vrot.lane.b32.xlu0 %v75, 91
    %v157 = vpop.permute.xlu0 %156
    %vm161 = vcmask 876249
    %162 = vst.msk [vmem:[#allocation2] sm:$0xfe] %vm161, %v153
    %vm163 = vcmask 876248
    %164 = vst.msk [vmem:[#allocation2 + $0x10] sm:$0xff] %vm163, %v155
    %vm165 = vcmask 869080
    %166 = vst.msk [vmem:[#allocation2 + $0x20] sm:$0x1] %vm165, %v157
    %167 = vrot.lane.b32.xlu0 %v74, 109
    %v168 = vpop.permute.xlu0 %167
    %169 = vrot.lane.b32.xlu0 %v76, 109
    %v170 = vpop.permute.xlu0 %169
    %171 = vrot.lane.b32.xlu0 %v75, 109
    %v172 = vpop.permute.xlu0 %171
    %vm176 = vcmask 1023849
    %177 = vst.msk [vmem:[#allocation2] sm:$0xfe] %vm176, %v168
    %vm178 = vcmask 1023848
    %179 = vst.msk [vmem:[#allocation2 + $0x10] sm:$0xff] %vm178, %v170
    %vm180 = vcmask 1016680
    %181 = vst.msk [vmem:[#allocation2 + $0x20] sm:$0x1] %vm180, %v172
    %182 = vrot.lane.b32.xlu0 %v74, 127
    %v183 = vpop.permute.xlu0 %182
    %184 = vrot.lane.b32.xlu0 %v76, 127
    %v185 = vpop.permute.xlu0 %184
    %186 = vrot.lane.b32.xlu0 %v75, 127
    %v187 = vpop.permute.xlu0 %186
    %vm191 = vcmask 1048569
    %192 = vst.msk [vmem:[#allocation2] sm:$0xfe] %vm191, %v183
    %vm193 = vcmask 121857
    %194 = vst.msk [vmem:[#allocation2 + $0x8] sm:$0xfe] %vm193, %v183
    %vm195 = vcmask 1048568
    %196 = vst.msk [vmem:[#allocation2 + $0x10] sm:$0xff] %vm195, %v185
    %vm197 = vcmask 121856
    %198 = vst.msk [vmem:[#allocation2 + $0x18] sm:$0xff] %vm197, %v185
    %vm199 = vcmask 1041400
    %200 = vst.msk [vmem:[#allocation2 + $0x20] sm:$0x1] %vm199, %v187
    %vm201 = vcmask 114688
    %202 = vst.msk [vmem:[#allocation2 + $0x28] sm:$0x1] %vm201, %v187
    %s203 = scalar_lea.vmem %s0, 16
    %v204 = vld [vmem:[%s203] sm:$0xff]
    %v205 = vld [vmem:[%s203 + $0x8] sm:$0xff]
    %v208 = vrot.slane %v204, 7
    %v209 = vrot.slane %v205, 7
    %v210 = vsel %vm73, %v208, %v209
    %211 = vrot.lane.b32.xlu0 %v208, 1
    %v212 = vpop.permute.xlu0 %211
    %213 = vrot.lane.b32.xlu0 %v210, 1
    %v214 = vpop.permute.xlu0 %213
    %215 = vrot.lane.b32.xlu0 %v209, 1
    %v216 = vpop.permute.xlu0 %215
    %s220 = scalar_lea.vmem [#allocation2], 48
    %221 = vst.msk [vmem:[%s220] sm:$0xfe] %vm86, %v212
    %222 = vst.msk [vmem:[%s220 + $0x10] sm:$0xff] %vm88, %v214
    %223 = vst.msk [vmem:[%s220 + $0x20] sm:$0x1] %vm90, %v216
    %224 = vrot.lane.b32.xlu0 %v208, 19
    %v225 = vpop.permute.xlu0 %224
    %226 = vrot.lane.b32.xlu0 %v210, 19
    %v227 = vpop.permute.xlu0 %226
    %228 = vrot.lane.b32.xlu0 %v209, 19
    %v229 = vpop.permute.xlu0 %228
    %233 = vst.msk [vmem:[%s220] sm:$0xfe] %vm101, %v225
    %234 = vst.msk [vmem:[%s220 + $0x10] sm:$0xff] %vm103, %v227
    %235 = vst.msk [vmem:[%s220 + $0x20] sm:$0x1] %vm105, %v229
    %236 = vrot.lane.b32.xlu0 %v208, 37
    %v237 = vpop.permute.xlu0 %236
    %238 = vrot.lane.b32.xlu0 %v210, 37
    %v239 = vpop.permute.xlu0 %238
    %240 = vrot.lane.b32.xlu0 %v209, 37
    %v241 = vpop.permute.xlu0 %240
    %245 = vst.msk [vmem:[%s220] sm:$0xfe] %vm116, %v237
    %246 = vst.msk [vmem:[%s220 + $0x10] sm:$0xff] %vm118, %v239
    %247 = vst.msk [vmem:[%s220 + $0x20] sm:$0x1] %vm120, %v241
    %248 = vrot.lane.b32.xlu0 %v208, 55
    %v249 = vpop.permute.xlu0 %248
    %250 = vrot.lane.b32.xlu0 %v210, 55
    %v251 = vpop.permute.xlu0 %250
    %252 = vrot.lane.b32.xlu0 %v209, 55
    %v253 = vpop.permute.xlu0 %252
    %257 = vst.msk [vmem:[%s220] sm:$0xfe] %vm131, %v249
    %258 = vst.msk [vmem:[%s220 + $0x10] sm:$0xff] %vm133, %v251
    %259 = vst.msk [vmem:[%s220 + $0x20] sm:$0x1] %vm135, %v253
    %260 = vrot.lane.b32.xlu0 %v208, 73
    %v261 = vpop.permute.xlu0 %260
    %262 = vrot.lane.b32.xlu0 %v210, 73
    %v263 = vpop.permute.xlu0 %262
    %264 = vrot.lane.b32.xlu0 %v209, 73
    %v265 = vpop.permute.xlu0 %264
    %269 = vst.msk [vmem:[%s220] sm:$0xfe] %vm146, %v261
    %270 = vst.msk [vmem:[%s220 + $0x10] sm:$0xff] %vm148, %v263
    %271 = vst.msk [vmem:[%s220 + $0x20] sm:$0x1] %vm150, %v265
    %272 = vrot.lane.b32.xlu0 %v208, 91
    %v273 = vpop.permute.xlu0 %272
    %274 = vrot.lane.b32.xlu0 %v210, 91
    %v275 = vpop.permute.xlu0 %274
    %276 = vrot.lane.b32.xlu0 %v209, 91
    %v277 = vpop.permute.xlu0 %276
    %281 = vst.msk [vmem:[%s220] sm:$0xfe] %vm161, %v273
    %282 = vst.msk [vmem:[%s220 + $0x10] sm:$0xff] %vm163, %v275
    %283 = vst.msk [vmem:[%s220 + $0x20] sm:$0x1] %vm165, %v277
    %284 = vrot.lane.b32.xlu0 %v208, 109
    %v285 = vpop.permute.xlu0 %284
    %286 = vrot.lane.b32.xlu0 %v210, 109
    %v287 = vpop.permute.xlu0 %286
    %288 = vrot.lane.b32.xlu0 %v209, 109
    %v289 = vpop.permute.xlu0 %288
    %293 = vst.msk [vmem:[%s220] sm:$0xfe] %vm176, %v285
    %294 = vst.msk [vmem:[%s220 + $0x10] sm:$0xff] %vm178, %v287
    %295 = vst.msk [vmem:[%s220 + $0x20] sm:$0x1] %vm180, %v289
    %296 = vrot.lane.b32.xlu0 %v208, 127
    %v297 = vpop.permute.xlu0 %296
    %298 = vrot.lane.b32.xlu0 %v210, 127
    %v299 = vpop.permute.xlu0 %298
    %300 = vrot.lane.b32.xlu0 %v209, 127
    %v301 = vpop.permute.xlu0 %300
    %305 = vst.msk [vmem:[%s220] sm:$0xfe] %vm191, %v297
    %306 = vst.msk [vmem:[%s220 + $0x8] sm:$0xfe] %vm193, %v297
    %307 = vst.msk [vmem:[%s220 + $0x10] sm:$0xff] %vm195, %v299
    %308 = vst.msk [vmem:[%s220 + $0x18] sm:$0xff] %vm197, %v299
    %309 = vst.msk [vmem:[%s220 + $0x20] sm:$0x1] %vm199, %v301
    %310 = vst.msk [vmem:[%s220 + $0x28] sm:$0x1] %vm201, %v301
    %s311 = scalar_lea.vmem %s0, 32
    %v312 = vld [vmem:[%s311] sm:$0xff]
    %v313 = vld [vmem:[%s311 + $0x8] sm:$0xff]
    %v316 = vrot.slane %v312, 7
    %v317 = vrot.slane %v313, 7
    %v318 = vsel %vm73, %v316, %v317
    %319 = vrot.lane.b32.xlu0 %v316, 1
    %v320 = vpop.permute.xlu0 %319
    %321 = vrot.lane.b32.xlu0 %v318, 1
    %v322 = vpop.permute.xlu0 %321
    %323 = vrot.lane.b32.xlu0 %v317, 1
    %v324 = vpop.permute.xlu0 %323
    %s328 = scalar_lea.vmem [#allocation2], 96
    %329 = vst.msk [vmem:[%s328] sm:$0xfe] %vm86, %v320
    %330 = vst.msk [vmem:[%s328 + $0x10] sm:$0xff] %vm88, %v322
    %331 = vst.msk [vmem:[%s328 + $0x20] sm:$0x1] %vm90, %v324
    %332 = vrot.lane.b32.xlu0 %v316, 19
    %v333 = vpop.permute.xlu0 %332
    %334 = vrot.lane.b32.xlu0 %v318, 19
    %v335 = vpop.permute.xlu0 %334
    %336 = vrot.lane.b32.xlu0 %v317, 19
    %v337 = vpop.permute.xlu0 %336
    %341 = vst.msk [vmem:[%s328] sm:$0xfe] %vm101, %v333
    %342 = vst.msk [vmem:[%s328 + $0x10] sm:$0xff] %vm103, %v335
    %343 = vst.msk [vmem:[%s328 + $0x20] sm:$0x1] %vm105, %v337
    %344 = vrot.lane.b32.xlu0 %v316, 37
    %v345 = vpop.permute.xlu0 %344
    %346 = vrot.lane.b32.xlu0 %v318, 37
    %v347 = vpop.permute.xlu0 %346
    %348 = vrot.lane.b32.xlu0 %v317, 37
    %v349 = vpop.permute.xlu0 %348
    %353 = vst.msk [vmem:[%s328] sm:$0xfe] %vm116, %v345
    %354 = vst.msk [vmem:[%s328 + $0x10] sm:$0xff] %vm118, %v347
    %355 = vst.msk [vmem:[%s328 + $0x20] sm:$0x1] %vm120, %v349
    %356 = vrot.lane.b32.xlu0 %v316, 55
    %v357 = vpop.permute.xlu0 %356
    %358 = vrot.lane.b32.xlu0 %v318, 55
    %v359 = vpop.permute.xlu0 %358
    %360 = vrot.lane.b32.xlu0 %v317, 55
    %v361 = vpop.permute.xlu0 %360
    %365 = vst.msk [vmem:[%s328] sm:$0xfe] %vm131, %v357
    %366 = vst.msk [vmem:[%s328 + $0x10] sm:$0xff] %vm133, %v359
    %367 = vst.msk [vmem:[%s328 + $0x20] sm:$0x1] %vm135, %v361
    %368 = vrot.lane.b32.xlu0 %v316, 73
    %v369 = vpop.permute.xlu0 %368
    %370 = vrot.lane.b32.xlu0 %v318, 73
    %v371 = vpop.permute.xlu0 %370
    %372 = vrot.lane.b32.xlu0 %v317, 73
    %v373 = vpop.permute.xlu0 %372
    %377 = vst.msk [vmem:[%s328] sm:$0xfe] %vm146, %v369
    %378 = vst.msk [vmem:[%s328 + $0x10] sm:$0xff] %vm148, %v371
    %379 = vst.msk [vmem:[%s328 + $0x20] sm:$0x1] %vm150, %v373
    %380 = vrot.lane.b32.xlu0 %v316, 91
    %v381 = vpop.permute.xlu0 %380
    %382 = vrot.lane.b32.xlu0 %v318, 91
    %v383 = vpop.permute.xlu0 %382
    %384 = vrot.lane.b32.xlu0 %v317, 91
    %v385 = vpop.permute.xlu0 %384
    %389 = vst.msk [vmem:[%s328] sm:$0xfe] %vm161, %v381
    %390 = vst.msk [vmem:[%s328 + $0x10] sm:$0xff] %vm163, %v383
    %391 = vst.msk [vmem:[%s328 + $0x20] sm:$0x1] %vm165, %v385
    %392 = vrot.lane.b32.xlu0 %v316, 109
    %v393 = vpop.permute.xlu0 %392
    %394 = vrot.lane.b32.xlu0 %v318, 109
    %v395 = vpop.permute.xlu0 %394
    %396 = vrot.lane.b32.xlu0 %v317, 109
    %v397 = vpop.permute.xlu0 %396
    %401 = vst.msk [vmem:[%s328] sm:$0xfe] %vm176, %v393
    %402 = vst.msk [vmem:[%s328 + $0x10] sm:$0xff] %vm178, %v395
    %403 = vst.msk [vmem:[%s328 + $0x20] sm:$0x1] %vm180, %v397
    %404 = vrot.lane.b32.xlu0 %v316, 127
    %v405 = vpop.permute.xlu0 %404
    %406 = vrot.lane.b32.xlu0 %v318, 127
    %v407 = vpop.permute.xlu0 %406
    %408 = vrot.lane.b32.xlu0 %v317, 127
    %v409 = vpop.permute.xlu0 %408
    %413 = vst.msk [vmem:[%s328] sm:$0xfe] %vm191, %v405
    %414 = vst.msk [vmem:[%s328 + $0x8] sm:$0xfe] %vm193, %v405
    %415 = vst.msk [vmem:[%s328 + $0x10] sm:$0xff] %vm195, %v407
    %416 = vst.msk [vmem:[%s328 + $0x18] sm:$0xff] %vm197, %v407
    %417 = vst.msk [vmem:[%s328 + $0x20] sm:$0x1] %vm199, %v409
    %418 = vst.msk [vmem:[%s328 + $0x28] sm:$0x1] %vm201, %v409
    %s419 = scalar_lea.vmem %s0, 48
    %v420 = vld [vmem:[%s419] sm:$0xff]
    %v421 = vld [vmem:[%s419 + $0x8] sm:$0xff]
    %v424 = vrot.slane %v420, 7
    %v425 = vrot.slane %v421, 7
    %v426 = vsel %vm73, %v424, %v425
    %427 = vrot.lane.b32.xlu0 %v424, 1
    %v428 = vpop.permute.xlu0 %427
    %429 = vrot.lane.b32.xlu0 %v426, 1
    %v430 = vpop.permute.xlu0 %429
    %431 = vrot.lane.b32.xlu0 %v425, 1
    %v432 = vpop.permute.xlu0 %431
    %s436 = scalar_lea.vmem [#allocation2], 144
    %437 = vst.msk [vmem:[%s436] sm:$0xfe] %vm86, %v428
    %438 = vst.msk [vmem:[%s436 + $0x10] sm:$0xff] %vm88, %v430
    %439 = vst.msk [vmem:[%s436 + $0x20] sm:$0x1] %vm90, %v432
    %440 = vrot.lane.b32.xlu0 %v424, 19
    %v441 = vpop.permute.xlu0 %440
    %442 = vrot.lane.b32.xlu0 %v426, 19
    %v443 = vpop.permute.xlu0 %442
    %444 = vrot.lane.b32.xlu0 %v425, 19
    %v445 = vpop.permute.xlu0 %444
    %449 = vst.msk [vmem:[%s436] sm:$0xfe] %vm101, %v441
    %450 = vst.msk [vmem:[%s436 + $0x10] sm:$0xff] %vm103, %v443
    %451 = vst.msk [vmem:[%s436 + $0x20] sm:$0x1] %vm105, %v445
    %452 = vrot.lane.b32.xlu0 %v424, 37
    %v453 = vpop.permute.xlu0 %452
    %454 = vrot.lane.b32.xlu0 %v426, 37
    %v455 = vpop.permute.xlu0 %454
    %456 = vrot.lane.b32.xlu0 %v425, 37
    %v457 = vpop.permute.xlu0 %456
    %461 = vst.msk [vmem:[%s436] sm:$0xfe] %vm116, %v453
    %462 = vst.msk [vmem:[%s436 + $0x10] sm:$0xff] %vm118, %v455
    %463 = vst.msk [vmem:[%s436 + $0x20] sm:$0x1] %vm120, %v457
    %464 = vrot.lane.b32.xlu0 %v424, 55
    %v465 = vpop.permute.xlu0 %464
    %466 = vrot.lane.b32.xlu0 %v426, 55
    %v467 = vpop.permute.xlu0 %466
    %468 = vrot.lane.b32.xlu0 %v425, 55
    %v469 = vpop.permute.xlu0 %468
    %473 = vst.msk [vmem:[%s436] sm:$0xfe] %vm131, %v465
    %474 = vst.msk [vmem:[%s436 + $0x10] sm:$0xff] %vm133, %v467
    %475 = vst.msk [vmem:[%s436 + $0x20] sm:$0x1] %vm135, %v469
    %476 = vrot.lane.b32.xlu0 %v424, 73
    %v477 = vpop.permute.xlu0 %476
    %478 = vrot.lane.b32.xlu0 %v426, 73
    %v479 = vpop.permute.xlu0 %478
    %480 = vrot.lane.b32.xlu0 %v425, 73
    %v481 = vpop.permute.xlu0 %480
    %485 = vst.msk [vmem:[%s436] sm:$0xfe] %vm146, %v477
    %486 = vst.msk [vmem:[%s436 + $0x10] sm:$0xff] %vm148, %v479
    %487 = vst.msk [vmem:[%s436 + $0x20] sm:$0x1] %vm150, %v481
    %488 = vrot.lane.b32.xlu0 %v424, 91
    %v489 = vpop.permute.xlu0 %488
    %490 = vrot.lane.b32.xlu0 %v426, 91
    %v491 = vpop.permute.xlu0 %490
    %492 = vrot.lane.b32.xlu0 %v425, 91
    %v493 = vpop.permute.xlu0 %492
    %497 = vst.msk [vmem:[%s436] sm:$0xfe] %vm161, %v489
    %498 = vst.msk [vmem:[%s436 + $0x10] sm:$0xff] %vm163, %v491
    %499 = vst.msk [vmem:[%s436 + $0x20] sm:$0x1] %vm165, %v493
    %500 = vrot.lane.b32.xlu0 %v424, 109
    %v501 = vpop.permute.xlu0 %500
    %502 = vrot.lane.b32.xlu0 %v426, 109
    %v503 = vpop.permute.xlu0 %502
    %504 = vrot.lane.b32.xlu0 %v425, 109
    %v505 = vpop.permute.xlu0 %504
    %509 = vst.msk [vmem:[%s436] sm:$0xfe] %vm176, %v501
    %510 = vst.msk [vmem:[%s436 + $0x10] sm:$0xff] %vm178, %v503
    %511 = vst.msk [vmem:[%s436 + $0x20] sm:$0x1] %vm180, %v505
    %512 = vrot.lane.b32.xlu0 %v424, 127
    %v513 = vpop.permute.xlu0 %512
    %514 = vrot.lane.b32.xlu0 %v426, 127
    %v515 = vpop.permute.xlu0 %514
    %516 = vrot.lane.b32.xlu0 %v425, 127
    %v517 = vpop.permute.xlu0 %516
    %521 = vst.msk [vmem:[%s436] sm:$0xfe] %vm191, %v513
    %522 = vst.msk [vmem:[%s436 + $0x8] sm:$0xfe] %vm193, %v513
    %523 = vst.msk [vmem:[%s436 + $0x10] sm:$0xff] %vm195, %v515
    %524 = vst.msk [vmem:[%s436 + $0x18] sm:$0xff] %vm197, %v515
    %525 = vst.msk [vmem:[%s436 + $0x20] sm:$0x1] %vm199, %v517
    %526 = vst.msk [vmem:[%s436 + $0x28] sm:$0x1] %vm201, %v517
    %v527 = vld [vmem:[#allocation2] sm:$0xff]
    %v528 = vld [vmem:[#allocation2 + $0x8] sm:$0xff]
    %v529 = vld [vmem:[#allocation2 + $0x10] sm:$0xff]
    %v530 = vld [vmem:[#allocation2 + $0x18] sm:$0xff]
    %v531 = vld [vmem:[%s1] ss:$8 sm:$0x3]
    %v533 = vlaneseq
    %v534 = vshrl.u32 %v533, 7
    %v535 = vsub.s32 0, %v534
    %v536 = vrot.slane %v531, %v535
    %v537 = vlaneseq
    %v538 = vshrl.u32 %v537, 7
    %v539 = vsub.s32 1, %v538
    %v540 = vrot.slane %v531, %v539
    %v543 = vmul.f32 %v536, %v527
    %v544 = vmul.f32 %v540, %v528
    %v545 = vmul.f32 %v536, %v529
    %v546 = vmul.f32 %v540, %v530
    %v547 = vadd.f32 %v543, 0.0
    %v548 = vadd.f32 %v544, 0.0
    %v549 = vadd.f32 %v545, 0.0
    %v550 = vadd.f32 %v546, 0.0
    %s551 = scalar_lea.vmem %s1, 1
    %v552 = vld [vmem:[%s551] ss:$8 sm:$0x3]
    %v554 = vlaneseq
    %v555 = vshrl.u32 %v554, 7
    %v556 = vsub.s32 0, %v555
    %v557 = vrot.slane %v552, %v556
    %v558 = vlaneseq
    %v559 = vshrl.u32 %v558, 7
    %v560 = vsub.s32 1, %v559
    %v561 = vrot.slane %v552, %v560
    %568 = vrot.lane.b32.xlu0 %v527, 127
    %v569 = vpop.permute.xlu0 %568
    %570 = vrot.lane.b32.xlu0 %v528, 127
    %v571 = vpop.permute.xlu0 %570
    %572 = vrot.lane.b32.xlu0 %v529, 127
    %v573 = vpop.permute.xlu0 %572
    %574 = vrot.lane.b32.xlu0 %v530, 127
    %v575 = vpop.permute.xlu0 %574
    %vm576 = vcmask 1039360
    %v577 = vsel %vm576, %v569, %v571
    %v578 = vsel %vm576, %v573, %v575
    %v583 = vmul.f32 %v557, %v577
    %v584 = vmul.f32 %v561, %v571
    %v585 = vmul.f32 %v557, %v578
    %v586 = vmul.f32 %v561, %v575
    %v587 = vadd.f32 %v547, %v583
    %v588 = vadd.f32 %v548, %v584
    %v589 = vadd.f32 %v549, %v585
    %v590 = vadd.f32 %v550, %v586
    %s591 = scalar_lea.vmem %s1, 2
    %v592 = vld [vmem:[%s591] ss:$8 sm:$0x3]
    %v594 = vlaneseq
    %v595 = vshrl.u32 %v594, 7
    %v596 = vsub.s32 0, %v595
    %v597 = vrot.slane %v592, %v596
    %v598 = vlaneseq
    %v599 = vshrl.u32 %v598, 7
    %v600 = vsub.s32 1, %v599
    %v601 = vrot.slane %v592, %v600
    %604 = vrot.lane.b32.xlu0 %v527, 126
    %v605 = vpop.permute.xlu0 %604
    %606 = vrot.lane.b32.xlu0 %v528, 126
    %v607 = vpop.permute.xlu0 %606
    %608 = vrot.lane.b32.xlu0 %v529, 126
    %v609 = vpop.permute.xlu0 %608
    %610 = vrot.lane.b32.xlu0 %v530, 126
    %v611 = vpop.permute.xlu0 %610
    %vm612 = vcmask 1031168
    %v613 = vsel %vm612, %v605, %v607
    %v614 = vsel %vm612, %v609, %v611
    %v619 = vmul.f32 %v597, %v613
    %v620 = vmul.f32 %v601, %v607
    %v621 = vmul.f32 %v597, %v614
    %v622 = vmul.f32 %v601, %v611
    %v623 = vadd.f32 %v587, %v619
    %v624 = vadd.f32 %v588, %v620
    %v625 = vadd.f32 %v589, %v621
    %v626 = vadd.f32 %v590, %v622
    %v627 = vld [vmem:[#allocation2] sm:$0xfe]
    %v628 = vld [vmem:[#allocation2 + $0x8] sm:$0xfe]
    %v629 = vld [vmem:[#allocation2 + $0x20] sm:$0x1]
    %v630 = vld [vmem:[#allocation2 + $0x28] sm:$0x1]
    %s631 = scalar_lea.vmem %s1, 3
    %v632 = vld [vmem:[%s631] ss:$8 sm:$0x3]
    %v634 = vlaneseq
    %v635 = vshrl.u32 %v634, 7
    %v636 = vsub.s32 0, %v635
    %v637 = vrot.slane %v632, %v636
    %v638 = vlaneseq
    %v639 = vshrl.u32 %v638, 7
    %v640 = vsub.s32 1, %v639
    %v641 = vrot.slane %v632, %v640
    %v644 = vmul.f32 %v637, %v627
    %v645 = vmul.f32 %v641, %v628
    %v646 = vmul.f32 %v637, %v529
    %v647 = vmul.f32 %v641, %v530
    %v648 = vmul.f32 %v637, %v629
    %v649 = vmul.f32 %v641, %v630
    %vm656 = vcmask 1046528
    %v657 = vrot.slane %v644, 1
    %v658 = vrot.slane %v646, 1
    %v659 = vsel %vm656, %v657, %v658
    %v660 = vrot.slane %v645, 1
    %v661 = vrot.slane %v647, 1
    %v662 = vsel %vm656, %v660, %v661
    %v663 = vrot.slane %v648, 1
    %v664 = vsel %vm656, %v658, %v663
    %v665 = vrot.slane %v649, 1
    %v666 = vsel %vm656, %v661, %v665
    %v671 = vadd.f32 %v623, %v659
    %v672 = vadd.f32 %v624, %v662
    %v673 = vadd.f32 %v625, %v664
    %v674 = vadd.f32 %v626, %v666
    %s675 = scalar_lea.vmem %s1, 4
    %v676 = vld [vmem:[%s675] ss:$8 sm:$0x3]
    %v678 = vlaneseq
    %v679 = vshrl.u32 %v678, 7
    %v680 = vsub.s32 0, %v679
    %v681 = vrot.slane %v676, %v680
    %v682 = vlaneseq
    %v683 = vshrl.u32 %v682, 7
    %v684 = vsub.s32 1, %v683
    %v685 = vrot.slane %v676, %v684
    %v692 = vrot.slane %v627, 1
    %v693 = vrot.slane %v529, 1
    %v694 = vsel %vm656, %v692, %v693
    %v695 = vrot.slane %v628, 1
    %v696 = vrot.slane %v530, 1
    %v697 = vsel %vm656, %v695, %v696
    %v698 = vrot.slane %v629, 1
    %v699 = vsel %vm656, %v693, %v698
    %v700 = vrot.slane %v630, 1
    %v701 = vsel %vm656, %v696, %v700
    %702 = vrot.lane.b32.xlu0 %v694, 127
    %v703 = vpop.permute.xlu0 %702
    %704 = vrot.lane.b32.xlu0 %v697, 127
    %v705 = vpop.permute.xlu0 %704
    %706 = vrot.lane.b32.xlu0 %v699, 127
    %v707 = vpop.permute.xlu0 %706
    %708 = vrot.lane.b32.xlu0 %v701, 127
    %v709 = vpop.permute.xlu0 %708
    %v710 = vsel %vm576, %v703, %v705
    %v711 = vsel %vm576, %v707, %v709
    %v716 = vmul.f32 %v681, %v710
    %v717 = vmul.f32 %v685, %v705
    %v718 = vmul.f32 %v681, %v711
    %v719 = vmul.f32 %v685, %v709
    %v720 = vadd.f32 %v671, %v716
    %v721 = vadd.f32 %v672, %v717
    %v722 = vadd.f32 %v673, %v718
    %v723 = vadd.f32 %v674, %v719
    %s724 = scalar_lea.vmem %s1, 5
    %v725 = vld [vmem:[%s724] ss:$8 sm:$0x3]
    %v727 = vlaneseq
    %v728 = vshrl.u32 %v727, 7
    %v729 = vsub.s32 0, %v728
    %v730 = vrot.slane %v725, %v729
    %v731 = vlaneseq
    %v732 = vshrl.u32 %v731, 7
    %v733 = vsub.s32 1, %v732
    %v734 = vrot.slane %v725, %v733
    %737 = vrot.lane.b32.xlu0 %v694, 126
    %v738 = vpop.permute.xlu0 %737
    %739 = vrot.lane.b32.xlu0 %v697, 126
    %v740 = vpop.permute.xlu0 %739
    %741 = vrot.lane.b32.xlu0 %v699, 126
    %v742 = vpop.permute.xlu0 %741
    %743 = vrot.lane.b32.xlu0 %v701, 126
    %v744 = vpop.permute.xlu0 %743
    %v745 = vsel %vm612, %v738, %v740
    %v746 = vsel %vm612, %v742, %v744
    %v751 = vmul.f32 %v730, %v745
    %v752 = vmul.f32 %v734, %v740
    %v753 = vmul.f32 %v730, %v746
    %v754 = vmul.f32 %v734, %v744
    %v755 = vadd.f32 %v720, %v751
    %v756 = vadd.f32 %v721, %v752
    %v757 = vadd.f32 %v722, %v753
    %v758 = vadd.f32 %v723, %v754
    %v759 = vld [vmem:[#allocation2] sm:$0xfc]
    %v760 = vld [vmem:[#allocation2 + $0x8] sm:$0xfc]
    %v761 = vld [vmem:[#allocation2 + $0x20] sm:$0x3]
    %v762 = vld [vmem:[#allocation2 + $0x28] sm:$0x3]
    %s763 = scalar_lea.vmem %s1, 6
    %v764 = vld [vmem:[%s763] ss:$8 sm:$0x3]
    %v766 = vlaneseq
    %v767 = vshrl.u32 %v766, 7
    %v768 = vsub.s32 0, %v767
    %v769 = vrot.slane %v764, %v768
    %v770 = vlaneseq
    %v771 = vshrl.u32 %v770, 7
    %v772 = vsub.s32 1, %v771
    %v773 = vrot.slane %v764, %v772
    %v776 = vmul.f32 %v769, %v759
    %v777 = vmul.f32 %v773, %v760
    %v778 = vmul.f32 %v769, %v529
    %v779 = vmul.f32 %v773, %v530
    %v780 = vmul.f32 %v769, %v761
    %v781 = vmul.f32 %v773, %v762
    %vm788 = vcmask 1045504
    %v789 = vrot.slane %v776, 2
    %v790 = vrot.slane %v778, 2
    %v791 = vsel %vm788, %v789, %v790
    %v792 = vrot.slane %v777, 2
    %v793 = vrot.slane %v779, 2
    %v794 = vsel %vm788, %v792, %v793
    %v795 = vrot.slane %v780, 2
    %v796 = vsel %vm788, %v790, %v795
    %v797 = vrot.slane %v781, 2
    %v798 = vsel %vm788, %v793, %v797
    %v803 = vadd.f32 %v755, %v791
    %v804 = vadd.f32 %v756, %v794
    %v805 = vadd.f32 %v757, %v796
    %v806 = vadd.f32 %v758, %v798
    %s807 = scalar_lea.vmem %s1, 7
    %v808 = vld [vmem:[%s807] ss:$8 sm:$0x3]
    %v810 = vlaneseq
    %v811 = vshrl.u32 %v810, 7
    %v812 = vsub.s32 0, %v811
    %v813 = vrot.slane %v808, %v812
    %v814 = vlaneseq
    %v815 = vshrl.u32 %v814, 7
    %v816 = vsub.s32 1, %v815
    %v817 = vrot.slane %v808, %v816
    %v824 = vrot.slane %v759, 2
    %v825 = vrot.slane %v529, 2
    %v826 = vsel %vm788, %v824, %v825
    %v827 = vrot.slane %v760, 2
    %v828 = vrot.slane %v530, 2
    %v829 = vsel %vm788, %v827, %v828
    %v830 = vrot.slane %v761, 2
    %v831 = vsel %vm788, %v825, %v830
    %v832 = vrot.slane %v762, 2
    %v833 = vsel %vm788, %v828, %v832
    %834 = vrot.lane.b32.xlu0 %v826, 127
    %v835 = vpop.permute.xlu0 %834
    %836 = vrot.lane.b32.xlu0 %v829, 127
    %v837 = vpop.permute.xlu0 %836
    %838 = vrot.lane.b32.xlu0 %v831, 127
    %v839 = vpop.permute.xlu0 %838
    %840 = vrot.lane.b32.xlu0 %v833, 127
    %v841 = vpop.permute.xlu0 %840
    %v842 = vsel %vm576, %v835, %v837
    %v843 = vsel %vm576, %v839, %v841
    %v848 = vmul.f32 %v813, %v842
    %v849 = vmul.f32 %v817, %v837
    %v850 = vmul.f32 %v813, %v843
    %v851 = vmul.f32 %v817, %v841
    %v852 = vadd.f32 %v803, %v848
    %v853 = vadd.f32 %v804, %v849
    %v854 = vadd.f32 %v805, %v850
    %v855 = vadd.f32 %v806, %v851
    %s856 = scalar_lea.vmem %s1, 16
    %v857 = vld [vmem:[%s856] ss:$8 sm:$0x3]
    %v859 = vlaneseq
    %v860 = vshrl.u32 %v859, 7
    %v861 = vsub.s32 0, %v860
    %v862 = vrot.slane %v857, %v861
    %v863 = vlaneseq
    %v864 = vshrl.u32 %v863, 7
    %v865 = vsub.s32 1, %v864
    %v866 = vrot.slane %v857, %v865
    %869 = vrot.lane.b32.xlu0 %v826, 126
    %v870 = vpop.permute.xlu0 %869
    %871 = vrot.lane.b32.xlu0 %v829, 126
    %v872 = vpop.permute.xlu0 %871
    %873 = vrot.lane.b32.xlu0 %v831, 126
    %v874 = vpop.permute.xlu0 %873
    %875 = vrot.lane.b32.xlu0 %v833, 126
    %v876 = vpop.permute.xlu0 %875
    %v877 = vsel %vm612, %v870, %v872
    %v878 = vsel %vm612, %v874, %v876
    %v883 = vmul.f32 %v862, %v877
    %v884 = vmul.f32 %v866, %v872
    %v885 = vmul.f32 %v862, %v878
    %v886 = vmul.f32 %v866, %v876
    %v887 = vadd.f32 %v852, %v883
    %v888 = vadd.f32 %v853, %v884
    %v889 = vadd.f32 %v854, %v885
    %v890 = vadd.f32 %v855, %v886
    %v891 = vld [vmem:[%s220] sm:$0xff]
    %v892 = vld [vmem:[%s220 + $0x8] sm:$0xff]
    %v893 = vld [vmem:[%s220 + $0x10] sm:$0xff]
    %v894 = vld [vmem:[%s220 + $0x18] sm:$0xff]
    %s895 = scalar_lea.vmem %s1, 17
    %v896 = vld [vmem:[%s895] ss:$8 sm:$0x3]
    %v898 = vlaneseq
    %v899 = vshrl.u32 %v898, 7
    %v900 = vsub.s32 0, %v899
    %v901 = vrot.slane %v896, %v900
    %v902 = vlaneseq
    %v903 = vshrl.u32 %v902, 7
    %v904 = vsub.s32 1, %v903
    %v905 = vrot.slane %v896, %v904
    %v908 = vmul.f32 %v901, %v891
    %v909 = vmul.f32 %v905, %v892
    %v910 = vmul.f32 %v901, %v893
    %v911 = vmul.f32 %v905, %v894
    %v912 = vadd.f32 %v887, %v908
    %v913 = vadd.f32 %v888, %v909
    %v914 = vadd.f32 %v889, %v910
    %v915 = vadd.f32 %v890, %v911
    %s916 = scalar_lea.vmem %s1, 18
    %v917 = vld [vmem:[%s916] ss:$8 sm:$0x3]
    %v919 = vlaneseq
    %v920 = vshrl.u32 %v919, 7
    %v921 = vsub.s32 0, %v920
    %v922 = vrot.slane %v917, %v921
    %v923 = vlaneseq
    %v924 = vshrl.u32 %v923, 7
    %v925 = vsub.s32 1, %v924
    %v926 = vrot.slane %v917, %v925
    %933 = vrot.lane.b32.xlu0 %v891, 127
    %v934 = vpop.permute.xlu0 %933
    %935 = vrot.lane.b32.xlu0 %v892, 127
    %v936 = vpop.permute.xlu0 %935
    %937 = vrot.lane.b32.xlu0 %v893, 127
    %v938 = vpop.permute.xlu0 %937
    %939 = vrot.lane.b32.xlu0 %v894, 127
    %v940 = vpop.permute.xlu0 %939
    %v941 = vsel %vm576, %v934, %v936
    %v942 = vsel %vm576, %v938, %v940
    %v947 = vmul.f32 %v922, %v941
    %v948 = vmul.f32 %v926, %v936
    %v949 = vmul.f32 %v922, %v942
    %v950 = vmul.f32 %v926, %v940
    %v951 = vadd.f32 %v912, %v947
    %v952 = vadd.f32 %v913, %v948
    %v953 = vadd.f32 %v914, %v949
    %v954 = vadd.f32 %v915, %v950
    %s955 = scalar_lea.vmem %s1, 19
    %v956 = vld [vmem:[%s955] ss:$8 sm:$0x3]
    %v958 = vlaneseq
    %v959 = vshrl.u32 %v958, 7
    %v960 = vsub.s32 0, %v959
    %v961 = vrot.slane %v956, %v960
    %v962 = vlaneseq
    %v963 = vshrl.u32 %v962, 7
    %v964 = vsub.s32 1, %v963
    %v965 = vrot.slane %v956, %v964
    %968 = vrot.lane.b32.xlu0 %v891, 126
    %v969 = vpop.permute.xlu0 %968
    %970 = vrot.lane.b32.xlu0 %v892, 126
    %v971 = vpop.permute.xlu0 %970
    %972 = vrot.lane.b32.xlu0 %v893, 126
    %v973 = vpop.permute.xlu0 %972
    %974 = vrot.lane.b32.xlu0 %v894, 126
    %v975 = vpop.permute.xlu0 %974
    %v976 = vsel %vm612, %v969, %v971
    %v977 = vsel %vm612, %v973, %v975
    %v982 = vmul.f32 %v961, %v976
    %v983 = vmul.f32 %v965, %v971
    %v984 = vmul.f32 %v961, %v977
    %v985 = vmul.f32 %v965, %v975
    %v986 = vadd.f32 %v951, %v982
    %v987 = vadd.f32 %v952, %v983
    %v988 = vadd.f32 %v953, %v984
    %v989 = vadd.f32 %v954, %v985
    %v990 = vld [vmem:[%s220] sm:$0xfe]
    %v991 = vld [vmem:[%s220 + $0x8] sm:$0xfe]
    %v992 = vld [vmem:[%s220 + $0x20] sm:$0x1]
    %v993 = vld [vmem:[%s220 + $0x28] sm:$0x1]
    %s994 = scalar_lea.vmem %s1, 20
    %v995 = vld [vmem:[%s994] ss:$8 sm:$0x3]
    %v997 = vlaneseq
    %v998 = vshrl.u32 %v997, 7
    %v999 = vsub.s32 0, %v998
    %v1000 = vrot.slane %v995, %v999
    %v1001 = vlaneseq
    %v1002 = vshrl.u32 %v1001, 7
    %v1003 = vsub.s32 1, %v1002
    %v1004 = vrot.slane %v995, %v1003
    %v1007 = vmul.f32 %v1000, %v990
    %v1008 = vmul.f32 %v1004, %v991
    %v1009 = vmul.f32 %v1000, %v893
    %v1010 = vmul.f32 %v1004, %v894
    %v1011 = vmul.f32 %v1000, %v992
    %v1012 = vmul.f32 %v1004, %v993
    %v1019 = vrot.slane %v1007, 1
    %v1020 = vrot.slane %v1009, 1
    %v1021 = vsel %vm656, %v1019, %v1020
    %v1022 = vrot.slane %v1008, 1
    %v1023 = vrot.slane %v1010, 1
    %v1024 = vsel %vm656, %v1022, %v1023
    %v1025 = vrot.slane %v1011, 1
    %v1026 = vsel %vm656, %v1020, %v1025
    %v1027 = vrot.slane %v1012, 1
    %v1028 = vsel %vm656, %v1023, %v1027
    %v1033 = vadd.f32 %v986, %v1021
    %v1034 = vadd.f32 %v987, %v1024
    %v1035 = vadd.f32 %v988, %v1026
    %v1036 = vadd.f32 %v989, %v1028
    %s1037 = scalar_lea.vmem %s1, 21
    %v1038 = vld [vmem:[%s1037] ss:$8 sm:$0x3]
    %v1040 = vlaneseq
    %v1041 = vshrl.u32 %v1040, 7
    %v1042 = vsub.s32 0, %v1041
    %v1043 = vrot.slane %v1038, %v1042
    %v1044 = vlaneseq
    %v1045 = vshrl.u32 %v1044, 7
    %v1046 = vsub.s32 1, %v1045
    %v1047 = vrot.slane %v1038, %v1046
    %v1054 = vrot.slane %v990, 1
    %v1055 = vrot.slane %v893, 1
    %v1056 = vsel %vm656, %v1054, %v1055
    %v1057 = vrot.slane %v991, 1
    %v1058 = vrot.slane %v894, 1
    %v1059 = vsel %vm656, %v1057, %v1058
    %v1060 = vrot.slane %v992, 1
    %v1061 = vsel %vm656, %v1055, %v1060
    %v1062 = vrot.slane %v993, 1
    %v1063 = vsel %vm656, %v1058, %v1062
    %1064 = vrot.lane.b32.xlu0 %v1056, 127
    %v1065 = vpop.permute.xlu0 %1064
    %1066 = vrot.lane.b32.xlu0 %v1059, 127
    %v1067 = vpop.permute.xlu0 %1066
    %1068 = vrot.lane.b32.xlu0 %v1061, 127
    %v1069 = vpop.permute.xlu0 %1068
    %1070 = vrot.lane.b32.xlu0 %v1063, 127
    %v1071 = vpop.permute.xlu0 %1070
    %v1072 = vsel %vm576, %v1065, %v1067
    %v1073 = vsel %vm576, %v1069, %v1071
    %v1078 = vmul.f32 %v1043, %v1072
    %v1079 = vmul.f32 %v1047, %v1067
    %v1080 = vmul.f32 %v1043, %v1073
    %v1081 = vmul.f32 %v1047, %v1071
    %v1082 = vadd.f32 %v1033, %v1078
    %v1083 = vadd.f32 %v1034, %v1079
    %v1084 = vadd.f32 %v1035, %v1080
    %v1085 = vadd.f32 %v1036, %v1081
    %s1086 = scalar_lea.vmem %s1, 22
    %v1087 = vld [vmem:[%s1086] ss:$8 sm:$0x3]
    %v1089 = vlaneseq
    %v1090 = vshrl.u32 %v1089, 7
    %v1091 = vsub.s32 0, %v1090
    %v1092 = vrot.slane %v1087, %v1091
    %v1093 = vlaneseq
    %v1094 = vshrl.u32 %v1093, 7
    %v1095 = vsub.s32 1, %v1094
    %v1096 = vrot.slane %v1087, %v1095
    %1099 = vrot.lane.b32.xlu0 %v1056, 126
    %v1100 = vpop.permute.xlu0 %1099
    %1101 = vrot.lane.b32.xlu0 %v1059, 126
    %v1102 = vpop.permute.xlu0 %1101
    %1103 = vrot.lane.b32.xlu0 %v1061, 126
    %v1104 = vpop.permute.xlu0 %1103
    %1105 = vrot.lane.b32.xlu0 %v1063, 126
    %v1106 = vpop.permute.xlu0 %1105
    %v1107 = vsel %vm612, %v1100, %v1102
    %v1108 = vsel %vm612, %v1104, %v1106
    %v1113 = vmul.f32 %v1092, %v1107
    %v1114 = vmul.f32 %v1096, %v1102
    %v1115 = vmul.f32 %v1092, %v1108
    %v1116 = vmul.f32 %v1096, %v1106
    %v1117 = vadd.f32 %v1082, %v1113
    %v1118 = vadd.f32 %v1083, %v1114
    %v1119 = vadd.f32 %v1084, %v1115
    %v1120 = vadd.f32 %v1085, %v1116
    %v1121 = vld [vmem:[%s220] sm:$0xfc]
    %v1122 = vld [vmem:[%s220 + $0x8] sm:$0xfc]
    %v1123 = vld [vmem:[%s220 + $0x20] sm:$0x3]
    %v1124 = vld [vmem:[%s220 + $0x28] sm:$0x3]
    %s1125 = scalar_lea.vmem %s1, 23
    %v1126 = vld [vmem:[%s1125] ss:$8 sm:$0x3]
    %v1128 = vlaneseq
    %v1129 = vshrl.u32 %v1128, 7
    %v1130 = vsub.s32 0, %v1129
    %v1131 = vrot.slane %v1126, %v1130
    %v1132 = vlaneseq
    %v1133 = vshrl.u32 %v1132, 7
    %v1134 = vsub.s32 1, %v1133
    %v1135 = vrot.slane %v1126, %v1134
    %v1138 = vmul.f32 %v1131, %v1121
    %v1139 = vmul.f32 %v1135, %v1122
    %v1140 = vmul.f32 %v1131, %v893
    %v1141 = vmul.f32 %v1135, %v894
    %v1142 = vmul.f32 %v1131, %v1123
    %v1143 = vmul.f32 %v1135, %v1124
    %v1150 = vrot.slane %v1138, 2
    %v1151 = vrot.slane %v1140, 2
    %v1152 = vsel %vm788, %v1150, %v1151
    %v1153 = vrot.slane %v1139, 2
    %v1154 = vrot.slane %v1141, 2
    %v1155 = vsel %vm788, %v1153, %v1154
    %v1156 = vrot.slane %v1142, 2
    %v1157 = vsel %vm788, %v1151, %v1156
    %v1158 = vrot.slane %v1143, 2
    %v1159 = vsel %vm788, %v1154, %v1158
    %v1164 = vadd.f32 %v1117, %v1152
    %v1165 = vadd.f32 %v1118, %v1155
    %v1166 = vadd.f32 %v1119, %v1157
    %v1167 = vadd.f32 %v1120, %v1159
    %s1168 = scalar_lea.vmem %s1, 32
    %v1169 = vld [vmem:[%s1168] ss:$8 sm:$0x3]
    %v1171 = vlaneseq
    %v1172 = vshrl.u32 %v1171, 7
    %v1173 = vsub.s32 0, %v1172
    %v1174 = vrot.slane %v1169, %v1173
    %v1175 = vlaneseq
    %v1176 = vshrl.u32 %v1175, 7
    %v1177 = vsub.s32 1, %v1176
    %v1178 = vrot.slane %v1169, %v1177
    %v1185 = vrot.slane %v1121, 2
    %v1186 = vrot.slane %v893, 2
    %v1187 = vsel %vm788, %v1185, %v1186
    %v1188 = vrot.slane %v1122, 2
    %v1189 = vrot.slane %v894, 2
    %v1190 = vsel %vm788, %v1188, %v1189
    %v1191 = vrot.slane %v1123, 2
    %v1192 = vsel %vm788, %v1186, %v1191
    %v1193 = vrot.slane %v1124, 2
    %v1194 = vsel %vm788, %v1189, %v1193
    %1195 = vrot.lane.b32.xlu0 %v1187, 127
    %v1196 = vpop.permute.xlu0 %1195
    %1197 = vrot.lane.b32.xlu0 %v1190, 127
    %v1198 = vpop.permute.xlu0 %1197
    %1199 = vrot.lane.b32.xlu0 %v1192, 127
    %v1200 = vpop.permute.xlu0 %1199
    %1201 = vrot.lane.b32.xlu0 %v1194, 127
    %v1202 = vpop.permute.xlu0 %1201
    %v1203 = vsel %vm576, %v1196, %v1198
    %v1204 = vsel %vm576, %v1200, %v1202
    %v1209 = vmul.f32 %v1174, %v1203
    %v1210 = vmul.f32 %v1178, %v1198
    %v1211 = vmul.f32 %v1174, %v1204
    %v1212 = vmul.f32 %v1178, %v1202
    %v1213 = vadd.f32 %v1164, %v1209
    %v1214 = vadd.f32 %v1165, %v1210
    %v1215 = vadd.f32 %v1166, %v1211
    %v1216 = vadd.f32 %v1167, %v1212
    %s1217 = scalar_lea.vmem %s1, 33
    %v1218 = vld [vmem:[%s1217] ss:$8 sm:$0x3]
    %v1220 = vlaneseq
    %v1221 = vshrl.u32 %v1220, 7
    %v1222 = vsub.s32 0, %v1221
    %v1223 = vrot.slane %v1218, %v1222
    %v1224 = vlaneseq
    %v1225 = vshrl.u32 %v1224, 7
    %v1226 = vsub.s32 1, %v1225
    %v1227 = vrot.slane %v1218, %v1226
    %1230 = vrot.lane.b32.xlu0 %v1187, 126
    %v1231 = vpop.permute.xlu0 %1230
    %1232 = vrot.lane.b32.xlu0 %v1190, 126
    %v1233 = vpop.permute.xlu0 %1232
    %1234 = vrot.lane.b32.xlu0 %v1192, 126
    %v1235 = vpop.permute.xlu0 %1234
    %1236 = vrot.lane.b32.xlu0 %v1194, 126
    %v1237 = vpop.permute.xlu0 %1236
    %v1238 = vsel %vm612, %v1231, %v1233
    %v1239 = vsel %vm612, %v1235, %v1237
    %v1244 = vmul.f32 %v1223, %v1238
    %v1245 = vmul.f32 %v1227, %v1233
    %v1246 = vmul.f32 %v1223, %v1239
    %v1247 = vmul.f32 %v1227, %v1237
    %v1248 = vadd.f32 %v1213, %v1244
    %v1249 = vadd.f32 %v1214, %v1245
    %v1250 = vadd.f32 %v1215, %v1246
    %v1251 = vadd.f32 %v1216, %v1247
    %v1252 = vld [vmem:[%s328] sm:$0xff]
    %v1253 = vld [vmem:[%s328 + $0x8] sm:$0xff]
    %v1254 = vld [vmem:[%s328 + $0x10] sm:$0xff]
    %v1255 = vld [vmem:[%s328 + $0x18] sm:$0xff]
    %s1256 = scalar_lea.vmem %s1, 34
    %v1257 = vld [vmem:[%s1256] ss:$8 sm:$0x3]
    %v1259 = vlaneseq
    %v1260 = vshrl.u32 %v1259, 7
    %v1261 = vsub.s32 0, %v1260
    %v1262 = vrot.slane %v1257, %v1261
    %v1263 = vlaneseq
    %v1264 = vshrl.u32 %v1263, 7
    %v1265 = vsub.s32 1, %v1264
    %v1266 = vrot.slane %v1257, %v1265
    %v1269 = vmul.f32 %v1262, %v1252
    %v1270 = vmul.f32 %v1266, %v1253
    %v1271 = vmul.f32 %v1262, %v1254
    %v1272 = vmul.f32 %v1266, %v1255
    %v1273 = vadd.f32 %v1248, %v1269
    %v1274 = vadd.f32 %v1249, %v1270
    %v1275 = vadd.f32 %v1250, %v1271
    %v1276 = vadd.f32 %v1251, %v1272
    %s1277 = scalar_lea.vmem %s1, 35
    %v1278 = vld [vmem:[%s1277] ss:$8 sm:$0x3]
    %v1280 = vlaneseq
    %v1281 = vshrl.u32 %v1280, 7
    %v1282 = vsub.s32 0, %v1281
    %v1283 = vrot.slane %v1278, %v1282
    %v1284 = vlaneseq
    %v1285 = vshrl.u32 %v1284, 7
    %v1286 = vsub.s32 1, %v1285
    %v1287 = vrot.slane %v1278, %v1286
    %1294 = vrot.lane.b32.xlu0 %v1252, 127
    %v1295 = vpop.permute.xlu0 %1294
    %1296 = vrot.lane.b32.xlu0 %v1253, 127
    %v1297 = vpop.permute.xlu0 %1296
    %1298 = vrot.lane.b32.xlu0 %v1254, 127
    %v1299 = vpop.permute.xlu0 %1298
    %1300 = vrot.lane.b32.xlu0 %v1255, 127
    %v1301 = vpop.permute.xlu0 %1300
    %v1302 = vsel %vm576, %v1295, %v1297
    %v1303 = vsel %vm576, %v1299, %v1301
    %v1308 = vmul.f32 %v1283, %v1302
    %v1309 = vmul.f32 %v1287, %v1297
    %v1310 = vmul.f32 %v1283, %v1303
    %v1311 = vmul.f32 %v1287, %v1301
    %v1312 = vadd.f32 %v1273, %v1308
    %v1313 = vadd.f32 %v1274, %v1309
    %v1314 = vadd.f32 %v1275, %v1310
    %v1315 = vadd.f32 %v1276, %v1311
    %s1316 = scalar_lea.vmem %s1, 36
    %v1317 = vld [vmem:[%s1316] ss:$8 sm:$0x3]
    %v1319 = vlaneseq
    %v1320 = vshrl.u32 %v1319, 7
    %v1321 = vsub.s32 0, %v1320
    %v1322 = vrot.slane %v1317, %v1321
    %v1323 = vlaneseq
    %v1324 = vshrl.u32 %v1323, 7
    %v1325 = vsub.s32 1, %v1324
    %v1326 = vrot.slane %v1317, %v1325
    %1329 = vrot.lane.b32.xlu0 %v1252, 126
    %v1330 = vpop.permute.xlu0 %1329
    %1331 = vrot.lane.b32.xlu0 %v1253, 126
    %v1332 = vpop.permute.xlu0 %1331
    %1333 = vrot.lane.b32.xlu0 %v1254, 126
    %v1334 = vpop.permute.xlu0 %1333
    %1335 = vrot.lane.b32.xlu0 %v1255, 126
    %v1336 = vpop.permute.xlu0 %1335
    %v1337 = vsel %vm612, %v1330, %v1332
    %v1338 = vsel %vm612, %v1334, %v1336
    %v1343 = vmul.f32 %v1322, %v1337
    %v1344 = vmul.f32 %v1326, %v1332
    %v1345 = vmul.f32 %v1322, %v1338
    %v1346 = vmul.f32 %v1326, %v1336
    %v1347 = vadd.f32 %v1312, %v1343
    %v1348 = vadd.f32 %v1313, %v1344
    %v1349 = vadd.f32 %v1314, %v1345
    %v1350 = vadd.f32 %v1315, %v1346
    %v1351 = vld [vmem:[%s328] sm:$0xfe]
    %v1352 = vld [vmem:[%s328 + $0x8] sm:$0xfe]
    %v1353 = vld [vmem:[%s328 + $0x20] sm:$0x1]
    %v1354 = vld [vmem:[%s328 + $0x28] sm:$0x1]
    %s1355 = scalar_lea.vmem %s1, 37
    %v1356 = vld [vmem:[%s1355] ss:$8 sm:$0x3]
    %v1358 = vlaneseq
    %v1359 = vshrl.u32 %v1358, 7
    %v1360 = vsub.s32 0, %v1359
    %v1361 = vrot.slane %v1356, %v1360
    %v1362 = vlaneseq
    %v1363 = vshrl.u32 %v1362, 7
    %v1364 = vsub.s32 1, %v1363
    %v1365 = vrot.slane %v1356, %v1364
    %v1368 = vmul.f32 %v1361, %v1351
    %v1369 = vmul.f32 %v1365, %v1352
    %v1370 = vmul.f32 %v1361, %v1254
    %v1371 = vmul.f32 %v1365, %v1255
    %v1372 = vmul.f32 %v1361, %v1353
    %v1373 = vmul.f32 %v1365, %v1354
    %v1380 = vrot.slane %v1368, 1
    %v1381 = vrot.slane %v1370, 1
    %v1382 = vsel %vm656, %v1380, %v1381
    %v1383 = vrot.slane %v1369, 1
    %v1384 = vrot.slane %v1371, 1
    %v1385 = vsel %vm656, %v1383, %v1384
    %v1386 = vrot.slane %v1372, 1
    %v1387 = vsel %vm656, %v1381, %v1386
    %v1388 = vrot.slane %v1373, 1
    %v1389 = vsel %vm656, %v1384, %v1388
    %v1394 = vadd.f32 %v1347, %v1382
    %v1395 = vadd.f32 %v1348, %v1385
    %v1396 = vadd.f32 %v1349, %v1387
    %v1397 = vadd.f32 %v1350, %v1389
    %s1398 = scalar_lea.vmem %s1, 38
    %v1399 = vld [vmem:[%s1398] ss:$8 sm:$0x3]
    %v1401 = vlaneseq
    %v1402 = vshrl.u32 %v1401, 7
    %v1403 = vsub.s32 0, %v1402
    %v1404 = vrot.slane %v1399, %v1403
    %v1405 = vlaneseq
    %v1406 = vshrl.u32 %v1405, 7
    %v1407 = vsub.s32 1, %v1406
    %v1408 = vrot.slane %v1399, %v1407
    %v1415 = vrot.slane %v1351, 1
    %v1416 = vrot.slane %v1254, 1
    %v1417 = vsel %vm656, %v1415, %v1416
    %v1418 = vrot.slane %v1352, 1
    %v1419 = vrot.slane %v1255, 1
    %v1420 = vsel %vm656, %v1418, %v1419
    %v1421 = vrot.slane %v1353, 1
    %v1422 = vsel %vm656, %v1416, %v1421
    %v1423 = vrot.slane %v1354, 1
    %v1424 = vsel %vm656, %v1419, %v1423
    %1425 = vrot.lane.b32.xlu0 %v1417, 127
    %v1426 = vpop.permute.xlu0 %1425
    %1427 = vrot.lane.b32.xlu0 %v1420, 127
    %v1428 = vpop.permute.xlu0 %1427
    %1429 = vrot.lane.b32.xlu0 %v1422, 127
    %v1430 = vpop.permute.xlu0 %1429
    %1431 = vrot.lane.b32.xlu0 %v1424, 127
    %v1432 = vpop.permute.xlu0 %1431
    %v1433 = vsel %vm576, %v1426, %v1428
    %v1434 = vsel %vm576, %v1430, %v1432
    %v1439 = vmul.f32 %v1404, %v1433
    %v1440 = vmul.f32 %v1408, %v1428
    %v1441 = vmul.f32 %v1404, %v1434
    %v1442 = vmul.f32 %v1408, %v1432
    %v1443 = vadd.f32 %v1394, %v1439
    %v1444 = vadd.f32 %v1395, %v1440
    %v1445 = vadd.f32 %v1396, %v1441
    %v1446 = vadd.f32 %v1397, %v1442
    %s1447 = scalar_lea.vmem %s1, 39
    %v1448 = vld [vmem:[%s1447] ss:$8 sm:$0x3]
    %v1450 = vlaneseq
    %v1451 = vshrl.u32 %v1450, 7
    %v1452 = vsub.s32 0, %v1451
    %v1453 = vrot.slane %v1448, %v1452
    %v1454 = vlaneseq
    %v1455 = vshrl.u32 %v1454, 7
    %v1456 = vsub.s32 1, %v1455
    %v1457 = vrot.slane %v1448, %v1456
    %1460 = vrot.lane.b32.xlu0 %v1417, 126
    %v1461 = vpop.permute.xlu0 %1460
    %1462 = vrot.lane.b32.xlu0 %v1420, 126
    %v1463 = vpop.permute.xlu0 %1462
    %1464 = vrot.lane.b32.xlu0 %v1422, 126
    %v1465 = vpop.permute.xlu0 %1464
    %1466 = vrot.lane.b32.xlu0 %v1424, 126
    %v1467 = vpop.permute.xlu0 %1466
    %v1468 = vsel %vm612, %v1461, %v1463
    %v1469 = vsel %vm612, %v1465, %v1467
    %v1474 = vmul.f32 %v1453, %v1468
    %v1475 = vmul.f32 %v1457, %v1463
    %v1476 = vmul.f32 %v1453, %v1469
    %v1477 = vmul.f32 %v1457, %v1467
    %v1478 = vadd.f32 %v1443, %v1474
    %v1479 = vadd.f32 %v1444, %v1475
    %v1480 = vadd.f32 %v1445, %v1476
    %v1481 = vadd.f32 %v1446, %v1477
    %v1482 = vld [vmem:[%s328] sm:$0xfc]
    %v1483 = vld [vmem:[%s328 + $0x8] sm:$0xfc]
    %v1484 = vld [vmem:[%s328 + $0x20] sm:$0x3]
    %v1485 = vld [vmem:[%s328 + $0x28] sm:$0x3]
    %s1486 = scalar_lea.vmem %s1, 48
    %v1487 = vld [vmem:[%s1486] ss:$8 sm:$0x3]
    %v1489 = vlaneseq
    %v1490 = vshrl.u32 %v1489, 7
    %v1491 = vsub.s32 0, %v1490
    %v1492 = vrot.slane %v1487, %v1491
    %v1493 = vlaneseq
    %v1494 = vshrl.u32 %v1493, 7
    %v1495 = vsub.s32 1, %v1494
    %v1496 = vrot.slane %v1487, %v1495
    %v1499 = vmul.f32 %v1492, %v1482
    %v1500 = vmul.f32 %v1496, %v1483
    %v1501 = vmul.f32 %v1492, %v1254
    %v1502 = vmul.f32 %v1496, %v1255
    %v1503 = vmul.f32 %v1492, %v1484
    %v1504 = vmul.f32 %v1496, %v1485
    %v1511 = vrot.slane %v1499, 2
    %v1512 = vrot.slane %v1501, 2
    %v1513 = vsel %vm788, %v1511, %v1512
    %v1514 = vrot.slane %v1500, 2
    %v1515 = vrot.slane %v1502, 2
    %v1516 = vsel %vm788, %v1514, %v1515
    %v1517 = vrot.slane %v1503, 2
    %v1518 = vsel %vm788, %v1512, %v1517
    %v1519 = vrot.slane %v1504, 2
    %v1520 = vsel %vm788, %v1515, %v1519
    %v1525 = vadd.f32 %v1478, %v1513
    %v1526 = vadd.f32 %v1479, %v1516
    %v1527 = vadd.f32 %v1480, %v1518
    %v1528 = vadd.f32 %v1481, %v1520
    %s1529 = scalar_lea.vmem %s1, 49
    %v1530 = vld [vmem:[%s1529] ss:$8 sm:$0x3]
    %v1532 = vlaneseq
    %v1533 = vshrl.u32 %v1532, 7
    %v1534 = vsub.s32 0, %v1533
    %v1535 = vrot.slane %v1530, %v1534
    %v1536 = vlaneseq
    %v1537 = vshrl.u32 %v1536, 7
    %v1538 = vsub.s32 1, %v1537
    %v1539 = vrot.slane %v1530, %v1538
    %v1546 = vrot.slane %v1482, 2
    %v1547 = vrot.slane %v1254, 2
    %v1548 = vsel %vm788, %v1546, %v1547
    %v1549 = vrot.slane %v1483, 2
    %v1550 = vrot.slane %v1255, 2
    %v1551 = vsel %vm788, %v1549, %v1550
    %v1552 = vrot.slane %v1484, 2
    %v1553 = vsel %vm788, %v1547, %v1552
    %v1554 = vrot.slane %v1485, 2
    %v1555 = vsel %vm788, %v1550, %v1554
    %1556 = vrot.lane.b32.xlu0 %v1548, 127
    %v1557 = vpop.permute.xlu0 %1556
    %1558 = vrot.lane.b32.xlu0 %v1551, 127
    %v1559 = vpop.permute.xlu0 %1558
    %1560 = vrot.lane.b32.xlu0 %v1553, 127
    %v1561 = vpop.permute.xlu0 %1560
    %1562 = vrot.lane.b32.xlu0 %v1555, 127
    %v1563 = vpop.permute.xlu0 %1562
    %v1564 = vsel %vm576, %v1557, %v1559
    %v1565 = vsel %vm576, %v1561, %v1563
    %v1570 = vmul.f32 %v1535, %v1564
    %v1571 = vmul.f32 %v1539, %v1559
    %v1572 = vmul.f32 %v1535, %v1565
    %v1573 = vmul.f32 %v1539, %v1563
    %v1574 = vadd.f32 %v1525, %v1570
    %v1575 = vadd.f32 %v1526, %v1571
    %v1576 = vadd.f32 %v1527, %v1572
    %v1577 = vadd.f32 %v1528, %v1573
    %s1578 = scalar_lea.vmem %s1, 50
    %v1579 = vld [vmem:[%s1578] ss:$8 sm:$0x3]
    %v1581 = vlaneseq
    %v1582 = vshrl.u32 %v1581, 7
    %v1583 = vsub.s32 0, %v1582
    %v1584 = vrot.slane %v1579, %v1583
    %v1585 = vlaneseq
    %v1586 = vshrl.u32 %v1585, 7
    %v1587 = vsub.s32 1, %v1586
    %v1588 = vrot.slane %v1579, %v1587
    %1591 = vrot.lane.b32.xlu0 %v1548, 126
    %v1592 = vpop.permute.xlu0 %1591
    %1593 = vrot.lane.b32.xlu0 %v1551, 126
    %v1594 = vpop.permute.xlu0 %1593
    %1595 = vrot.lane.b32.xlu0 %v1553, 126
    %v1596 = vpop.permute.xlu0 %1595
    %1597 = vrot.lane.b32.xlu0 %v1555, 126
    %v1598 = vpop.permute.xlu0 %1597
    %v1599 = vsel %vm612, %v1592, %v1594
    %v1600 = vsel %vm612, %v1596, %v1598
    %v1605 = vmul.f32 %v1584, %v1599
    %v1606 = vmul.f32 %v1588, %v1594
    %v1607 = vmul.f32 %v1584, %v1600
    %v1608 = vmul.f32 %v1588, %v1598
    %v1609 = vadd.f32 %v1574, %v1605
    %v1610 = vadd.f32 %v1575, %v1606
    %v1611 = vadd.f32 %v1576, %v1607
    %v1612 = vadd.f32 %v1577, %v1608
    %v1613 = vld [vmem:[%s436] sm:$0xff]
    %v1614 = vld [vmem:[%s436 + $0x8] sm:$0xff]
    %v1615 = vld [vmem:[%s436 + $0x10] sm:$0xff]
    %v1616 = vld [vmem:[%s436 + $0x18] sm:$0xff]
    %s1617 = scalar_lea.vmem %s1, 51
    %v1618 = vld [vmem:[%s1617] ss:$8 sm:$0x3]
    %v1620 = vlaneseq
    %v1621 = vshrl.u32 %v1620, 7
    %v1622 = vsub.s32 0, %v1621
    %v1623 = vrot.slane %v1618, %v1622
    %v1624 = vlaneseq
    %v1625 = vshrl.u32 %v1624, 7
    %v1626 = vsub.s32 1, %v1625
    %v1627 = vrot.slane %v1618, %v1626
    %v1630 = vmul.f32 %v1623, %v1613
    %v1631 = vmul.f32 %v1627, %v1614
    %v1632 = vmul.f32 %v1623, %v1615
    %v1633 = vmul.f32 %v1627, %v1616
    %v1634 = vadd.f32 %v1609, %v1630
    %v1635 = vadd.f32 %v1610, %v1631
    %v1636 = vadd.f32 %v1611, %v1632
    %v1637 = vadd.f32 %v1612, %v1633
    %s1638 = scalar_lea.vmem %s1, 52
    %v1639 = vld [vmem:[%s1638] ss:$8 sm:$0x3]
    %v1641 = vlaneseq
    %v1642 = vshrl.u32 %v1641, 7
    %v1643 = vsub.s32 0, %v1642
    %v1644 = vrot.slane %v1639, %v1643
    %v1645 = vlaneseq
    %v1646 = vshrl.u32 %v1645, 7
    %v1647 = vsub.s32 1, %v1646
    %v1648 = vrot.slane %v1639, %v1647
    %1655 = vrot.lane.b32.xlu0 %v1613, 127
    %v1656 = vpop.permute.xlu0 %1655
    %1657 = vrot.lane.b32.xlu0 %v1614, 127
    %v1658 = vpop.permute.xlu0 %1657
    %1659 = vrot.lane.b32.xlu0 %v1615, 127
    %v1660 = vpop.permute.xlu0 %1659
    %1661 = vrot.lane.b32.xlu0 %v1616, 127
    %v1662 = vpop.permute.xlu0 %1661
    %v1663 = vsel %vm576, %v1656, %v1658
    %v1664 = vsel %vm576, %v1660, %v1662
    %v1669 = vmul.f32 %v1644, %v1663
    %v1670 = vmul.f32 %v1648, %v1658
    %v1671 = vmul.f32 %v1644, %v1664
    %v1672 = vmul.f32 %v1648, %v1662
    %v1673 = vadd.f32 %v1634, %v1669
    %v1674 = vadd.f32 %v1635, %v1670
    %v1675 = vadd.f32 %v1636, %v1671
    %v1676 = vadd.f32 %v1637, %v1672
    %s1677 = scalar_lea.vmem %s1, 53
    %v1678 = vld [vmem:[%s1677] ss:$8 sm:$0x3]
    %v1680 = vlaneseq
    %v1681 = vshrl.u32 %v1680, 7
    %v1682 = vsub.s32 0, %v1681
    %v1683 = vrot.slane %v1678, %v1682
    %v1684 = vlaneseq
    %v1685 = vshrl.u32 %v1684, 7
    %v1686 = vsub.s32 1, %v1685
    %v1687 = vrot.slane %v1678, %v1686
    %1690 = vrot.lane.b32.xlu0 %v1613, 126
    %v1691 = vpop.permute.xlu0 %1690
    %1692 = vrot.lane.b32.xlu0 %v1614, 126
    %v1693 = vpop.permute.xlu0 %1692
    %1694 = vrot.lane.b32.xlu0 %v1615, 126
    %v1695 = vpop.permute.xlu0 %1694
    %1696 = vrot.lane.b32.xlu0 %v1616, 126
    %v1697 = vpop.permute.xlu0 %1696
    %v1698 = vsel %vm612, %v1691, %v1693
    %v1699 = vsel %vm612, %v1695, %v1697
    %v1704 = vmul.f32 %v1683, %v1698
    %v1705 = vmul.f32 %v1687, %v1693
    %v1706 = vmul.f32 %v1683, %v1699
    %v1707 = vmul.f32 %v1687, %v1697
    %v1708 = vadd.f32 %v1673, %v1704
    %v1709 = vadd.f32 %v1674, %v1705
    %v1710 = vadd.f32 %v1675, %v1706
    %v1711 = vadd.f32 %v1676, %v1707
    %v1712 = vld [vmem:[%s436] sm:$0xfe]
    %v1713 = vld [vmem:[%s436 + $0x8] sm:$0xfe]
    %v1714 = vld [vmem:[%s436 + $0x20] sm:$0x1]
    %v1715 = vld [vmem:[%s436 + $0x28] sm:$0x1]
    %s1716 = scalar_lea.vmem %s1, 54
    %v1717 = vld [vmem:[%s1716] ss:$8 sm:$0x3]
    %v1719 = vlaneseq
    %v1720 = vshrl.u32 %v1719, 7
    %v1721 = vsub.s32 0, %v1720
    %v1722 = vrot.slane %v1717, %v1721
    %v1723 = vlaneseq
    %v1724 = vshrl.u32 %v1723, 7
    %v1725 = vsub.s32 1, %v1724
    %v1726 = vrot.slane %v1717, %v1725
    %v1729 = vmul.f32 %v1722, %v1712
    %v1730 = vmul.f32 %v1726, %v1713
    %v1731 = vmul.f32 %v1722, %v1615
    %v1732 = vmul.f32 %v1726, %v1616
    %v1733 = vmul.f32 %v1722, %v1714
    %v1734 = vmul.f32 %v1726, %v1715
    %v1741 = vrot.slane %v1729, 1
    %v1742 = vrot.slane %v1731, 1
    %v1743 = vsel %vm656, %v1741, %v1742
    %v1744 = vrot.slane %v1730, 1
    %v1745 = vrot.slane %v1732, 1
    %v1746 = vsel %vm656, %v1744, %v1745
    %v1747 = vrot.slane %v1733, 1
    %v1748 = vsel %vm656, %v1742, %v1747
    %v1749 = vrot.slane %v1734, 1
    %v1750 = vsel %vm656, %v1745, %v1749
    %v1755 = vadd.f32 %v1708, %v1743
    %v1756 = vadd.f32 %v1709, %v1746
    %v1757 = vadd.f32 %v1710, %v1748
    %v1758 = vadd.f32 %v1711, %v1750
    %s1759 = scalar_lea.vmem %s1, 55
    %v1760 = vld [vmem:[%s1759] ss:$8 sm:$0x3]
    %v1762 = vlaneseq
    %v1763 = vshrl.u32 %v1762, 7
    %v1764 = vsub.s32 0, %v1763
    %v1765 = vrot.slane %v1760, %v1764
    %v1766 = vlaneseq
    %v1767 = vshrl.u32 %v1766, 7
    %v1768 = vsub.s32 1, %v1767
    %v1769 = vrot.slane %v1760, %v1768
    %v1776 = vrot.slane %v1712, 1
    %v1777 = vrot.slane %v1615, 1
    %v1778 = vsel %vm656, %v1776, %v1777
    %v1779 = vrot.slane %v1713, 1
    %v1780 = vrot.slane %v1616, 1
    %v1781 = vsel %vm656, %v1779, %v1780
    %v1782 = vrot.slane %v1714, 1
    %v1783 = vsel %vm656, %v1777, %v1782
    %v1784 = vrot.slane %v1715, 1
    %v1785 = vsel %vm656, %v1780, %v1784
    %1786 = vrot.lane.b32.xlu0 %v1778, 127
    %v1787 = vpop.permute.xlu0 %1786
    %1788 = vrot.lane.b32.xlu0 %v1781, 127
    %v1789 = vpop.permute.xlu0 %1788
    %1790 = vrot.lane.b32.xlu0 %v1783, 127
    %v1791 = vpop.permute.xlu0 %1790
    %1792 = vrot.lane.b32.xlu0 %v1785, 127
    %v1793 = vpop.permute.xlu0 %1792
    %v1794 = vsel %vm576, %v1787, %v1789
    %v1795 = vsel %vm576, %v1791, %v1793
    %v1800 = vmul.f32 %v1765, %v1794
    %v1801 = vmul.f32 %v1769, %v1789
    %v1802 = vmul.f32 %v1765, %v1795
    %v1803 = vmul.f32 %v1769, %v1793
    %v1804 = vadd.f32 %v1755, %v1800
    %v1805 = vadd.f32 %v1756, %v1801
    %v1806 = vadd.f32 %v1757, %v1802
    %v1807 = vadd.f32 %v1758, %v1803
    %s1808 = scalar_lea.vmem %s1, 64
    %v1809 = vld [vmem:[%s1808] ss:$8 sm:$0x3]
    %v1811 = vlaneseq
    %v1812 = vshrl.u32 %v1811, 7
    %v1813 = vsub.s32 0, %v1812
    %v1814 = vrot.slane %v1809, %v1813
    %v1815 = vlaneseq
    %v1816 = vshrl.u32 %v1815, 7
    %v1817 = vsub.s32 1, %v1816
    %v1818 = vrot.slane %v1809, %v1817
    %1821 = vrot.lane.b32.xlu0 %v1778, 126
    %v1822 = vpop.permute.xlu0 %1821
    %1823 = vrot.lane.b32.xlu0 %v1781, 126
    %v1824 = vpop.permute.xlu0 %1823
    %1825 = vrot.lane.b32.xlu0 %v1783, 126
    %v1826 = vpop.permute.xlu0 %1825
    %1827 = vrot.lane.b32.xlu0 %v1785, 126
    %v1828 = vpop.permute.xlu0 %1827
    %v1829 = vsel %vm612, %v1822, %v1824
    %v1830 = vsel %vm612, %v1826, %v1828
    %v1835 = vmul.f32 %v1814, %v1829
    %v1836 = vmul.f32 %v1818, %v1824
    %v1837 = vmul.f32 %v1814, %v1830
    %v1838 = vmul.f32 %v1818, %v1828
    %v1839 = vadd.f32 %v1804, %v1835
    %v1840 = vadd.f32 %v1805, %v1836
    %v1841 = vadd.f32 %v1806, %v1837
    %v1842 = vadd.f32 %v1807, %v1838
    %v1843 = vld [vmem:[%s436] sm:$0xfc]
    %v1844 = vld [vmem:[%s436 + $0x8] sm:$0xfc]
    %v1845 = vld [vmem:[%s436 + $0x20] sm:$0x3]
    %v1846 = vld [vmem:[%s436 + $0x28] sm:$0x3]
    %s1847 = scalar_lea.vmem %s1, 65
    %v1848 = vld [vmem:[%s1847] ss:$8 sm:$0x3]
    %v1850 = vlaneseq
    %v1851 = vshrl.u32 %v1850, 7
    %v1852 = vsub.s32 0, %v1851
    %v1853 = vrot.slane %v1848, %v1852
    %v1854 = vlaneseq
    %v1855 = vshrl.u32 %v1854, 7
    %v1856 = vsub.s32 1, %v1855
    %v1857 = vrot.slane %v1848, %v1856
    %v1860 = vmul.f32 %v1853, %v1843
    %v1861 = vmul.f32 %v1857, %v1844
    %v1862 = vmul.f32 %v1853, %v1615
    %v1863 = vmul.f32 %v1857, %v1616
    %v1864 = vmul.f32 %v1853, %v1845
    %v1865 = vmul.f32 %v1857, %v1846
    %v1872 = vrot.slane %v1860, 2
    %v1873 = vrot.slane %v1862, 2
    %v1874 = vsel %vm788, %v1872, %v1873
    %v1875 = vrot.slane %v1861, 2
    %v1876 = vrot.slane %v1863, 2
    %v1877 = vsel %vm788, %v1875, %v1876
    %v1878 = vrot.slane %v1864, 2
    %v1879 = vsel %vm788, %v1873, %v1878
    %v1880 = vrot.slane %v1865, 2
    %v1881 = vsel %vm788, %v1876, %v1880
    %v1886 = vadd.f32 %v1839, %v1874
    %v1887 = vadd.f32 %v1840, %v1877
    %v1888 = vadd.f32 %v1841, %v1879
    %v1889 = vadd.f32 %v1842, %v1881
    %s1890 = scalar_lea.vmem %s1, 66
    %v1891 = vld [vmem:[%s1890] ss:$8 sm:$0x3]
    %v1893 = vlaneseq
    %v1894 = vshrl.u32 %v1893, 7
    %v1895 = vsub.s32 0, %v1894
    %v1896 = vrot.slane %v1891, %v1895
    %v1897 = vlaneseq
    %v1898 = vshrl.u32 %v1897, 7
    %v1899 = vsub.s32 1, %v1898
    %v1900 = vrot.slane %v1891, %v1899
    %v1907 = vrot.slane %v1843, 2
    %v1908 = vrot.slane %v1615, 2
    %v1909 = vsel %vm788, %v1907, %v1908
    %v1910 = vrot.slane %v1844, 2
    %v1911 = vrot.slane %v1616, 2
    %v1912 = vsel %vm788, %v1910, %v1911
    %v1913 = vrot.slane %v1845, 2
    %v1914 = vsel %vm788, %v1908, %v1913
    %v1915 = vrot.slane %v1846, 2
    %v1916 = vsel %vm788, %v1911, %v1915
    %1917 = vrot.lane.b32.xlu0 %v1909, 127
    %v1918 = vpop.permute.xlu0 %1917
    %1919 = vrot.lane.b32.xlu0 %v1912, 127
    %v1920 = vpop.permute.xlu0 %1919
    %1921 = vrot.lane.b32.xlu0 %v1914, 127
    %v1922 = vpop.permute.xlu0 %1921
    %1923 = vrot.lane.b32.xlu0 %v1916, 127
    %v1924 = vpop.permute.xlu0 %1923
    %v1925 = vsel %vm576, %v1918, %v1920
    %v1926 = vsel %vm576, %v1922, %v1924
    %v1931 = vmul.f32 %v1896, %v1925
    %v1932 = vmul.f32 %v1900, %v1920
    %v1933 = vmul.f32 %v1896, %v1926
    %v1934 = vmul.f32 %v1900, %v1924
    %v1935 = vadd.f32 %v1886, %v1931
    %v1936 = vadd.f32 %v1887, %v1932
    %v1937 = vadd.f32 %v1888, %v1933
    %v1938 = vadd.f32 %v1889, %v1934
    %s1939 = scalar_lea.vmem %s1, 67
    %v1940 = vld [vmem:[%s1939] ss:$8 sm:$0x3]
    %v1942 = vlaneseq
    %v1943 = vshrl.u32 %v1942, 7
    %v1944 = vsub.s32 0, %v1943
    %v1945 = vrot.slane %v1940, %v1944
    %v1946 = vlaneseq
    %v1947 = vshrl.u32 %v1946, 7
    %v1948 = vsub.s32 1, %v1947
    %v1949 = vrot.slane %v1940, %v1948
    %1952 = vrot.lane.b32.xlu0 %v1909, 126
    %v1953 = vpop.permute.xlu0 %1952
    %1954 = vrot.lane.b32.xlu0 %v1912, 126
    %v1955 = vpop.permute.xlu0 %1954
    %1956 = vrot.lane.b32.xlu0 %v1914, 126
    %v1957 = vpop.permute.xlu0 %1956
    %1958 = vrot.lane.b32.xlu0 %v1916, 126
    %v1959 = vpop.permute.xlu0 %1958
    %v1960 = vsel %vm612, %v1953, %v1955
    %v1961 = vsel %vm612, %v1957, %v1959
    %v1966 = vmul.f32 %v1945, %v1960
    %v1967 = vmul.f32 %v1949, %v1955
    %v1968 = vmul.f32 %v1945, %v1961
    %v1969 = vmul.f32 %v1949, %v1959
    %v1970 = vadd.f32 %v1935, %v1966
    %v1971 = vadd.f32 %v1936, %v1967
    %v1972 = vadd.f32 %v1937, %v1968
    %v1973 = vadd.f32 %v1938, %v1969
    %1974 = vst [vmem:[#allocation3] sm:$0xff] %v1970
    %vm1975 = vcmask 130048
    %1976 = vst.msk [vmem:[#allocation3 + $0x8] sm:$0xff] %vm1975, %v1971
    %1977 = vst [vmem:[#allocation3 + $0x10] sm:$0xff] %v1972
    %1978 = vst.msk [vmem:[#allocation3 + $0x18] sm:$0xff] %vm1975, %v1973
    %s1979 = scalar_lea.vmem %s0, 64
    %v1980 = vld [vmem:[%s1979] sm:$0xff]
    %v1981 = vld [vmem:[%s1979 + $0x8] sm:$0xff]
    %v1984 = vrot.slane %v1980, 7
    %v1985 = vrot.slane %v1981, 7
    %v1986 = vsel %vm73, %v1984, %v1985
    %1987 = vrot.lane.b32.xlu0 %v1984, 1
    %v1988 = vpop.permute.xlu0 %1987
    %1989 = vrot.lane.b32.xlu0 %v1986, 1
    %v1990 = vpop.permute.xlu0 %1989
    %1991 = vrot.lane.b32.xlu0 %v1985, 1
    %v1992 = vpop.permute.xlu0 %1991
    %1996 = vst.msk [vmem:[#allocation2] sm:$0xfe] %vm86, %v1988
    %1997 = vst.msk [vmem:[#allocation2 + $0x10] sm:$0xff] %vm88, %v1990
    %1998 = vst.msk [vmem:[#allocation2 + $0x20] sm:$0x1] %vm90, %v1992
    %1999 = vrot.lane.b32.xlu0 %v1984, 19
    %v2000 = vpop.permute.xlu0 %1999
    %2001 = vrot.lane.b32.xlu0 %v1986, 19
    %v2002 = vpop.permute.xlu0 %2001
    %2003 = vrot.lane.b32.xlu0 %v1985, 19
    %v2004 = vpop.permute.xlu0 %2003
    %2008 = vst.msk [vmem:[#allocation2] sm:$0xfe] %vm101, %v2000
    %2009 = vst.msk [vmem:[#allocation2 + $0x10] sm:$0xff] %vm103, %v2002
    %2010 = vst.msk [vmem:[#allocation2 + $0x20] sm:$0x1] %vm105, %v2004
    %2011 = vrot.lane.b32.xlu0 %v1984, 37
    %v2012 = vpop.permute.xlu0 %2011
    %2013 = vrot.lane.b32.xlu0 %v1986, 37
    %v2014 = vpop.permute.xlu0 %2013
    %2015 = vrot.lane.b32.xlu0 %v1985, 37
    %v2016 = vpop.permute.xlu0 %2015
    %2020 = vst.msk [vmem:[#allocation2] sm:$0xfe] %vm116, %v2012
    %2021 = vst.msk [vmem:[#allocation2 + $0x10] sm:$0xff] %vm118, %v2014
    %2022 = vst.msk [vmem:[#allocation2 + $0x20] sm:$0x1] %vm120, %v2016
    %2023 = vrot.lane.b32.xlu0 %v1984, 55
    %v2024 = vpop.permute.xlu0 %2023
    %2025 = vrot.lane.b32.xlu0 %v1986, 55
    %v2026 = vpop.permute.xlu0 %2025
    %2027 = vrot.lane.b32.xlu0 %v1985, 55
    %v2028 = vpop.permute.xlu0 %2027
    %2032 = vst.msk [vmem:[#allocation2] sm:$0xfe] %vm131, %v2024
    %2033 = vst.msk [vmem:[#allocation2 + $0x10] sm:$0xff] %vm133, %v2026
    %2034 = vst.msk [vmem:[#allocation2 + $0x20] sm:$0x1] %vm135, %v2028
    %2035 = vrot.lane.b32.xlu0 %v1984, 73
    %v2036 = vpop.permute.xlu0 %2035
    %2037 = vrot.lane.b32.xlu0 %v1986, 73
    %v2038 = vpop.permute.xlu0 %2037
    %2039 = vrot.lane.b32.xlu0 %v1985, 73
    %v2040 = vpop.permute.xlu0 %2039
    %2044 = vst.msk [vmem:[#allocation2] sm:$0xfe] %vm146, %v2036
    %2045 = vst.msk [vmem:[#allocation2 + $0x10] sm:$0xff] %vm148, %v2038
    %2046 = vst.msk [vmem:[#allocation2 + $0x20] sm:$0x1] %vm150, %v2040
    %2047 = vrot.lane.b32.xlu0 %v1984, 91
    %v2048 = vpop.permute.xlu0 %2047
    %2049 = vrot.lane.b32.xlu0 %v1986, 91
    %v2050 = vpop.permute.xlu0 %2049
    %2051 = vrot.lane.b32.xlu0 %v1985, 91
    %v2052 = vpop.permute.xlu0 %2051
    %2056 = vst.msk [vmem:[#allocation2] sm:$0xfe] %vm161, %v2048
    %2057 = vst.msk [vmem:[#allocation2 + $0x10] sm:$0xff] %vm163, %v2050
    %2058 = vst.msk [vmem:[#allocation2 + $0x20] sm:$0x1] %vm165, %v2052
    %2059 = vrot.lane.b32.xlu0 %v1984, 109
    %v2060 = vpop.permute.xlu0 %2059
    %2061 = vrot.lane.b32.xlu0 %v1986, 109
    %v2062 = vpop.permute.xlu0 %2061
    %2063 = vrot.lane.b32.xlu0 %v1985, 109
    %v2064 = vpop.permute.xlu0 %2063
    %2068 = vst.msk [vmem:[#allocation2] sm:$0xfe] %vm176, %v2060
    %2069 = vst.msk [vmem:[#allocation2 + $0x10] sm:$0xff] %vm178, %v2062
    %2070 = vst.msk [vmem:[#allocation2 + $0x20] sm:$0x1] %vm180, %v2064
    %2071 = vrot.lane.b32.xlu0 %v1984, 127
    %v2072 = vpop.permute.xlu0 %2071
    %2073 = vrot.lane.b32.xlu0 %v1986, 127
    %v2074 = vpop.permute.xlu0 %2073
    %2075 = vrot.lane.b32.xlu0 %v1985, 127
    %v2076 = vpop.permute.xlu0 %2075
    %2080 = vst.msk [vmem:[#allocation2] sm:$0xfe] %vm191, %v2072
    %2081 = vst.msk [vmem:[#allocation2 + $0x8] sm:$0xfe] %vm193, %v2072
    %2082 = vst.msk [vmem:[#allocation2 + $0x10] sm:$0xff] %vm195, %v2074
    %2083 = vst.msk [vmem:[#allocation2 + $0x18] sm:$0xff] %vm197, %v2074
    %2084 = vst.msk [vmem:[#allocation2 + $0x20] sm:$0x1] %vm199, %v2076
    %2085 = vst.msk [vmem:[#allocation2 + $0x28] sm:$0x1] %vm201, %v2076
    %s2086 = scalar_lea.vmem %s0, 80
    %v2087 = vld [vmem:[%s2086] sm:$0xff]
    %v2088 = vld [vmem:[%s2086 + $0x8] sm:$0xff]
    %v2091 = vrot.slane %v2087, 7
    %v2092 = vrot.slane %v2088, 7
    %v2093 = vsel %vm73, %v2091, %v2092
    %2094 = vrot.lane.b32.xlu0 %v2091, 1
    %v2095 = vpop.permute.xlu0 %2094
    %2096 = vrot.lane.b32.xlu0 %v2093, 1
    %v2097 = vpop.permute.xlu0 %2096
    %2098 = vrot.lane.b32.xlu0 %v2092, 1
    %v2099 = vpop.permute.xlu0 %2098
    %2103 = vst.msk [vmem:[%s220] sm:$0xfe] %vm86, %v2095
    %2104 = vst.msk [vmem:[%s220 + $0x10] sm:$0xff] %vm88, %v2097
    %2105 = vst.msk [vmem:[%s220 + $0x20] sm:$0x1] %vm90, %v2099
    %2106 = vrot.lane.b32.xlu0 %v2091, 19
    %v2107 = vpop.permute.xlu0 %2106
    %2108 = vrot.lane.b32.xlu0 %v2093, 19
    %v2109 = vpop.permute.xlu0 %2108
    %2110 = vrot.lane.b32.xlu0 %v2092, 19
    %v2111 = vpop.permute.xlu0 %2110
    %2115 = vst.msk [vmem:[%s220] sm:$0xfe] %vm101, %v2107
    %2116 = vst.msk [vmem:[%s220 + $0x10] sm:$0xff] %vm103, %v2109
    %2117 = vst.msk [vmem:[%s220 + $0x20] sm:$0x1] %vm105, %v2111
    %2118 = vrot.lane.b32.xlu0 %v2091, 37
    %v2119 = vpop.permute.xlu0 %2118
    %2120 = vrot.lane.b32.xlu0 %v2093, 37
    %v2121 = vpop.permute.xlu0 %2120
    %2122 = vrot.lane.b32.xlu0 %v2092, 37
    %v2123 = vpop.permute.xlu0 %2122
    %2127 = vst.msk [vmem:[%s220] sm:$0xfe] %vm116, %v2119
    %2128 = vst.msk [vmem:[%s220 + $0x10] sm:$0xff] %vm118, %v2121
    %2129 = vst.msk [vmem:[%s220 + $0x20] sm:$0x1] %vm120, %v2123
    %2130 = vrot.lane.b32.xlu0 %v2091, 55
    %v2131 = vpop.permute.xlu0 %2130
    %2132 = vrot.lane.b32.xlu0 %v2093, 55
    %v2133 = vpop.permute.xlu0 %2132
    %2134 = vrot.lane.b32.xlu0 %v2092, 55
    %v2135 = vpop.permute.xlu0 %2134
    %2139 = vst.msk [vmem:[%s220] sm:$0xfe] %vm131, %v2131
    %2140 = vst.msk [vmem:[%s220 + $0x10] sm:$0xff] %vm133, %v2133
    %2141 = vst.msk [vmem:[%s220 + $0x20] sm:$0x1] %vm135, %v2135
    %2142 = vrot.lane.b32.xlu0 %v2091, 73
    %v2143 = vpop.permute.xlu0 %2142
    %2144 = vrot.lane.b32.xlu0 %v2093, 73
    %v2145 = vpop.permute.xlu0 %2144
    %2146 = vrot.lane.b32.xlu0 %v2092, 73
    %v2147 = vpop.permute.xlu0 %2146
    %2151 = vst.msk [vmem:[%s220] sm:$0xfe] %vm146, %v2143
    %2152 = vst.msk [vmem:[%s220 + $0x10] sm:$0xff] %vm148, %v2145
    %2153 = vst.msk [vmem:[%s220 + $0x20] sm:$0x1] %vm150, %v2147
    %2154 = vrot.lane.b32.xlu0 %v2091, 91
    %v2155 = vpop.permute.xlu0 %2154
    %2156 = vrot.lane.b32.xlu0 %v2093, 91
    %v2157 = vpop.permute.xlu0 %2156
    %2158 = vrot.lane.b32.xlu0 %v2092, 91
    %v2159 = vpop.permute.xlu0 %2158
    %2163 = vst.msk [vmem:[%s220] sm:$0xfe] %vm161, %v2155
    %2164 = vst.msk [vmem:[%s220 + $0x10] sm:$0xff] %vm163, %v2157
    %2165 = vst.msk [vmem:[%s220 + $0x20] sm:$0x1] %vm165, %v2159
    %2166 = vrot.lane.b32.xlu0 %v2091, 109
    %v2167 = vpop.permute.xlu0 %2166
    %2168 = vrot.lane.b32.xlu0 %v2093, 109
    %v2169 = vpop.permute.xlu0 %2168
    %2170 = vrot.lane.b32.xlu0 %v2092, 109
    %v2171 = vpop.permute.xlu0 %2170
    %2175 = vst.msk [vmem:[%s220] sm:$0xfe] %vm176, %v2167
    %2176 = vst.msk [vmem:[%s220 + $0x10] sm:$0xff] %vm178, %v2169
    %2177 = vst.msk [vmem:[%s220 + $0x20] sm:$0x1] %vm180, %v2171
    %2178 = vrot.lane.b32.xlu0 %v2091, 127
    %v2179 = vpop.permute.xlu0 %2178
    %2180 = vrot.lane.b32.xlu0 %v2093, 127
    %v2181 = vpop.permute.xlu0 %2180
    %2182 = vrot.lane.b32.xlu0 %v2092, 127
    %v2183 = vpop.permute.xlu0 %2182
    %2187 = vst.msk [vmem:[%s220] sm:$0xfe] %vm191, %v2179
    %2188 = vst.msk [vmem:[%s220 + $0x8] sm:$0xfe] %vm193, %v2179
    %2189 = vst.msk [vmem:[%s220 + $0x10] sm:$0xff] %vm195, %v2181
    %2190 = vst.msk [vmem:[%s220 + $0x18] sm:$0xff] %vm197, %v2181
    %2191 = vst.msk [vmem:[%s220 + $0x20] sm:$0x1] %vm199, %v2183
    %2192 = vst.msk [vmem:[%s220 + $0x28] sm:$0x1] %vm201, %v2183
    %s2193 = scalar_lea.vmem %s0, 96
    %v2194 = vld [vmem:[%s2193] sm:$0xff]
    %v2195 = vld [vmem:[%s2193 + $0x8] sm:$0xff]
    %v2198 = vrot.slane %v2194, 7
    %v2199 = vrot.slane %v2195, 7
    %v2200 = vsel %vm73, %v2198, %v2199
    %2201 = vrot.lane.b32.xlu0 %v2198, 1
    %v2202 = vpop.permute.xlu0 %2201
    %2203 = vrot.lane.b32.xlu0 %v2200, 1
    %v2204 = vpop.permute.xlu0 %2203
    %2205 = vrot.lane.b32.xlu0 %v2199, 1
    %v2206 = vpop.permute.xlu0 %2205
    %2210 = vst.msk [vmem:[%s328] sm:$0xfe] %vm86, %v2202
    %2211 = vst.msk [vmem:[%s328 + $0x10] sm:$0xff] %vm88, %v2204
    %2212 = vst.msk [vmem:[%s328 + $0x20] sm:$0x1] %vm90, %v2206
    %2213 = vrot.lane.b32.xlu0 %v2198, 19
    %v2214 = vpop.permute.xlu0 %2213
    %2215 = vrot.lane.b32.xlu0 %v2200, 19
    %v2216 = vpop.permute.xlu0 %2215
    %2217 = vrot.lane.b32.xlu0 %v2199, 19
    %v2218 = vpop.permute.xlu0 %2217
    %2222 = vst.msk [vmem:[%s328] sm:$0xfe] %vm101, %v2214
    %2223 = vst.msk [vmem:[%s328 + $0x10] sm:$0xff] %vm103, %v2216
    %2224 = vst.msk [vmem:[%s328 + $0x20] sm:$0x1] %vm105, %v2218
    %2225 = vrot.lane.b32.xlu0 %v2198, 37
    %v2226 = vpop.permute.xlu0 %2225
    %2227 = vrot.lane.b32.xlu0 %v2200, 37
    %v2228 = vpop.permute.xlu0 %2227
    %2229 = vrot.lane.b32.xlu0 %v2199, 37
    %v2230 = vpop.permute.xlu0 %2229
    %2234 = vst.msk [vmem:[%s328] sm:$0xfe] %vm116, %v2226
    %2235 = vst.msk [vmem:[%s328 + $0x10] sm:$0xff] %vm118, %v2228
    %2236 = vst.msk [vmem:[%s328 + $0x20] sm:$0x1] %vm120, %v2230
    %2237 = vrot.lane.b32.xlu0 %v2198, 55
    %v2238 = vpop.permute.xlu0 %2237
    %2239 = vrot.lane.b32.xlu0 %v2200, 55
    %v2240 = vpop.permute.xlu0 %2239
    %2241 = vrot.lane.b32.xlu0 %v2199, 55
    %v2242 = vpop.permute.xlu0 %2241
    %2246 = vst.msk [vmem:[%s328] sm:$0xfe] %vm131, %v2238
    %2247 = vst.msk [vmem:[%s328 + $0x10] sm:$0xff] %vm133, %v2240
    %2248 = vst.msk [vmem:[%s328 + $0x20] sm:$0x1] %vm135, %v2242
    %2249 = vrot.lane.b32.xlu0 %v2198, 73
    %v2250 = vpop.permute.xlu0 %2249
    %2251 = vrot.lane.b32.xlu0 %v2200, 73
    %v2252 = vpop.permute.xlu0 %2251
    %2253 = vrot.lane.b32.xlu0 %v2199, 73
    %v2254 = vpop.permute.xlu0 %2253
    %2258 = vst.msk [vmem:[%s328] sm:$0xfe] %vm146, %v2250
    %2259 = vst.msk [vmem:[%s328 + $0x10] sm:$0xff] %vm148, %v2252
    %2260 = vst.msk [vmem:[%s328 + $0x20] sm:$0x1] %vm150, %v2254
    %2261 = vrot.lane.b32.xlu0 %v2198, 91
    %v2262 = vpop.permute.xlu0 %2261
    %2263 = vrot.lane.b32.xlu0 %v2200, 91
    %v2264 = vpop.permute.xlu0 %2263
    %2265 = vrot.lane.b32.xlu0 %v2199, 91
    %v2266 = vpop.permute.xlu0 %2265
    %2270 = vst.msk [vmem:[%s328] sm:$0xfe] %vm161, %v2262
    %2271 = vst.msk [vmem:[%s328 + $0x10] sm:$0xff] %vm163, %v2264
    %2272 = vst.msk [vmem:[%s328 + $0x20] sm:$0x1] %vm165, %v2266
    %2273 = vrot.lane.b32.xlu0 %v2198, 109
    %v2274 = vpop.permute.xlu0 %2273
    %2275 = vrot.lane.b32.xlu0 %v2200, 109
    %v2276 = vpop.permute.xlu0 %2275
    %2277 = vrot.lane.b32.xlu0 %v2199, 109
    %v2278 = vpop.permute.xlu0 %2277
    %2282 = vst.msk [vmem:[%s328] sm:$0xfe] %vm176, %v2274
    %2283 = vst.msk [vmem:[%s328 + $0x10] sm:$0xff] %vm178, %v2276
    %2284 = vst.msk [vmem:[%s328 + $0x20] sm:$0x1] %vm180, %v2278
    %2285 = vrot.lane.b32.xlu0 %v2198, 127
    %v2286 = vpop.permute.xlu0 %2285
    %2287 = vrot.lane.b32.xlu0 %v2200, 127
    %v2288 = vpop.permute.xlu0 %2287
    %2289 = vrot.lane.b32.xlu0 %v2199, 127
    %v2290 = vpop.permute.xlu0 %2289
    %2294 = vst.msk [vmem:[%s328] sm:$0xfe] %vm191, %v2286
    %2295 = vst.msk [vmem:[%s328 + $0x8] sm:$0xfe] %vm193, %v2286
    %2296 = vst.msk [vmem:[%s328 + $0x10] sm:$0xff] %vm195, %v2288
    %2297 = vst.msk [vmem:[%s328 + $0x18] sm:$0xff] %vm197, %v2288
    %2298 = vst.msk [vmem:[%s328 + $0x20] sm:$0x1] %vm199, %v2290
    %2299 = vst.msk [vmem:[%s328 + $0x28] sm:$0x1] %vm201, %v2290
    %s2300 = scalar_lea.vmem %s0, 112
    %v2301 = vld [vmem:[%s2300] sm:$0xff]
    %v2302 = vld [vmem:[%s2300 + $0x8] sm:$0xff]
    %v2305 = vrot.slane %v2301, 7
    %v2306 = vrot.slane %v2302, 7
    %v2307 = vsel %vm73, %v2305, %v2306
    %2308 = vrot.lane.b32.xlu0 %v2305, 1
    %v2309 = vpop.permute.xlu0 %2308
    %2310 = vrot.lane.b32.xlu0 %v2307, 1
    %v2311 = vpop.permute.xlu0 %2310
    %2312 = vrot.lane.b32.xlu0 %v2306, 1
    %v2313 = vpop.permute.xlu0 %2312
    %2317 = vst.msk [vmem:[%s436] sm:$0xfe] %vm86, %v2309
    %2318 = vst.msk [vmem:[%s436 + $0x10] sm:$0xff] %vm88, %v2311
    %2319 = vst.msk [vmem:[%s436 + $0x20] sm:$0x1] %vm90, %v2313
    %2320 = vrot.lane.b32.xlu0 %v2305, 19
    %v2321 = vpop.permute.xlu0 %2320
    %2322 = vrot.lane.b32.xlu0 %v2307, 19
    %v2323 = vpop.permute.xlu0 %2322
    %2324 = vrot.lane.b32.xlu0 %v2306, 19
    %v2325 = vpop.permute.xlu0 %2324
    %2329 = vst.msk [vmem:[%s436] sm:$0xfe] %vm101, %v2321
    %2330 = vst.msk [vmem:[%s436 + $0x10] sm:$0xff] %vm103, %v2323
    %2331 = vst.msk [vmem:[%s436 + $0x20] sm:$0x1] %vm105, %v2325
    %2332 = vrot.lane.b32.xlu0 %v2305, 37
    %v2333 = vpop.permute.xlu0 %2332
    %2334 = vrot.lane.b32.xlu0 %v2307, 37
    %v2335 = vpop.permute.xlu0 %2334
    %2336 = vrot.lane.b32.xlu0 %v2306, 37
    %v2337 = vpop.permute.xlu0 %2336
    %2341 = vst.msk [vmem:[%s436] sm:$0xfe] %vm116, %v2333
    %2342 = vst.msk [vmem:[%s436 + $0x10] sm:$0xff] %vm118, %v2335
    %2343 = vst.msk [vmem:[%s436 + $0x20] sm:$0x1] %vm120, %v2337
    %2344 = vrot.lane.b32.xlu0 %v2305, 55
    %v2345 = vpop.permute.xlu0 %2344
    %2346 = vrot.lane.b32.xlu0 %v2307, 55
    %v2347 = vpop.permute.xlu0 %2346
    %2348 = vrot.lane.b32.xlu0 %v2306, 55
    %v2349 = vpop.permute.xlu0 %2348
    %2353 = vst.msk [vmem:[%s436] sm:$0xfe] %vm131, %v2345
    %2354 = vst.msk [vmem:[%s436 + $0x10] sm:$0xff] %vm133, %v2347
    %2355 = vst.msk [vmem:[%s436 + $0x20] sm:$0x1] %vm135, %v2349
    %2356 = vrot.lane.b32.xlu0 %v2305, 73
    %v2357 = vpop.permute.xlu0 %2356
    %2358 = vrot.lane.b32.xlu0 %v2307, 73
    %v2359 = vpop.permute.xlu0 %2358
    %2360 = vrot.lane.b32.xlu0 %v2306, 73
    %v2361 = vpop.permute.xlu0 %2360
    %2365 = vst.msk [vmem:[%s436] sm:$0xfe] %vm146, %v2357
    %2366 = vst.msk [vmem:[%s436 + $0x10] sm:$0xff] %vm148, %v2359
    %2367 = vst.msk [vmem:[%s436 + $0x20] sm:$0x1] %vm150, %v2361
    %2368 = vrot.lane.b32.xlu0 %v2305, 91
    %v2369 = vpop.permute.xlu0 %2368
    %2370 = vrot.lane.b32.xlu0 %v2307, 91
    %v2371 = vpop.permute.xlu0 %2370
    %2372 = vrot.lane.b32.xlu0 %v2306, 91
    %v2373 = vpop.permute.xlu0 %2372
    %2377 = vst.msk [vmem:[%s436] sm:$0xfe] %vm161, %v2369
    %2378 = vst.msk [vmem:[%s436 + $0x10] sm:$0xff] %vm163, %v2371
    %2379 = vst.msk [vmem:[%s436 + $0x20] sm:$0x1] %vm165, %v2373
    %2380 = vrot.lane.b32.xlu0 %v2305, 109
    %v2381 = vpop.permute.xlu0 %2380
    %2382 = vrot.lane.b32.xlu0 %v2307, 109
    %v2383 = vpop.permute.xlu0 %2382
    %2384 = vrot.lane.b32.xlu0 %v2306, 109
    %v2385 = vpop.permute.xlu0 %2384
    %2389 = vst.msk [vmem:[%s436] sm:$0xfe] %vm176, %v2381
    %2390 = vst.msk [vmem:[%s436 + $0x10] sm:$0xff] %vm178, %v2383
    %2391 = vst.msk [vmem:[%s436 + $0x20] sm:$0x1] %vm180, %v2385
    %2392 = vrot.lane.b32.xlu0 %v2305, 127
    %v2393 = vpop.permute.xlu0 %2392
    %2394 = vrot.lane.b32.xlu0 %v2307, 127
    %v2395 = vpop.permute.xlu0 %2394
    %2396 = vrot.lane.b32.xlu0 %v2306, 127
    %v2397 = vpop.permute.xlu0 %2396
    %2401 = vst.msk [vmem:[%s436] sm:$0xfe] %vm191, %v2393
    %2402 = vst.msk [vmem:[%s436 + $0x8] sm:$0xfe] %vm193, %v2393
    %2403 = vst.msk [vmem:[%s436 + $0x10] sm:$0xff] %vm195, %v2395
    %2404 = vst.msk [vmem:[%s436 + $0x18] sm:$0xff] %vm197, %v2395
    %2405 = vst.msk [vmem:[%s436 + $0x20] sm:$0x1] %vm199, %v2397
    %2406 = vst.msk [vmem:[%s436 + $0x28] sm:$0x1] %vm201, %v2397
    %v2407 = vld [vmem:[#allocation2] sm:$0xff]
    %v2408 = vld [vmem:[#allocation2 + $0x8] sm:$0xff]
    %v2409 = vld [vmem:[#allocation2 + $0x10] sm:$0xff]
    %v2410 = vld [vmem:[#allocation2 + $0x18] sm:$0xff]
    %v2411 = vld [vmem:[%s1] ss:$8 sm:$0x3]
    %v2413 = vlaneseq
    %v2414 = vshrl.u32 %v2413, 7
    %v2415 = vsub.s32 0, %v2414
    %v2416 = vrot.slane %v2411, %v2415
    %v2417 = vlaneseq
    %v2418 = vshrl.u32 %v2417, 7
    %v2419 = vsub.s32 1, %v2418
    %v2420 = vrot.slane %v2411, %v2419
    %v2423 = vmul.f32 %v2416, %v2407
    %v2424 = vmul.f32 %v2420, %v2408
    %v2425 = vmul.f32 %v2416, %v2409
    %v2426 = vmul.f32 %v2420, %v2410
    %v2427 = vadd.f32 %v2423, 0.0
    %v2428 = vadd.f32 %v2424, 0.0
    %v2429 = vadd.f32 %v2425, 0.0
    %v2430 = vadd.f32 %v2426, 0.0
    %v2431 = vld [vmem:[%s551] ss:$8 sm:$0x3]
    %v2433 = vlaneseq
    %v2434 = vshrl.u32 %v2433, 7
    %v2435 = vsub.s32 0, %v2434
    %v2436 = vrot.slane %v2431, %v2435
    %v2437 = vlaneseq
    %v2438 = vshrl.u32 %v2437, 7
    %v2439 = vsub.s32 1, %v2438
    %v2440 = vrot.slane %v2431, %v2439
    %2447 = vrot.lane.b32.xlu0 %v2407, 127
    %v2448 = vpop.permute.xlu0 %2447
    %2449 = vrot.lane.b32.xlu0 %v2408, 127
    %v2450 = vpop.permute.xlu0 %2449
    %2451 = vrot.lane.b32.xlu0 %v2409, 127
    %v2452 = vpop.permute.xlu0 %2451
    %2453 = vrot.lane.b32.xlu0 %v2410, 127
    %v2454 = vpop.permute.xlu0 %2453
    %v2455 = vsel %vm576, %v2448, %v2450
    %v2456 = vsel %vm576, %v2452, %v2454
    %v2461 = vmul.f32 %v2436, %v2455
    %v2462 = vmul.f32 %v2440, %v2450
    %v2463 = vmul.f32 %v2436, %v2456
    %v2464 = vmul.f32 %v2440, %v2454
    %v2465 = vadd.f32 %v2427, %v2461
    %v2466 = vadd.f32 %v2428, %v2462
    %v2467 = vadd.f32 %v2429, %v2463
    %v2468 = vadd.f32 %v2430, %v2464
    %v2469 = vld [vmem:[%s591] ss:$8 sm:$0x3]
    %v2471 = vlaneseq
    %v2472 = vshrl.u32 %v2471, 7
    %v2473 = vsub.s32 0, %v2472
    %v2474 = vrot.slane %v2469, %v2473
    %v2475 = vlaneseq
    %v2476 = vshrl.u32 %v2475, 7
    %v2477 = vsub.s32 1, %v2476
    %v2478 = vrot.slane %v2469, %v2477
    %2481 = vrot.lane.b32.xlu0 %v2407, 126
    %v2482 = vpop.permute.xlu0 %2481
    %2483 = vrot.lane.b32.xlu0 %v2408, 126
    %v2484 = vpop.permute.xlu0 %2483
    %2485 = vrot.lane.b32.xlu0 %v2409, 126
    %v2486 = vpop.permute.xlu0 %2485
    %2487 = vrot.lane.b32.xlu0 %v2410, 126
    %v2488 = vpop.permute.xlu0 %2487
    %v2489 = vsel %vm612, %v2482, %v2484
    %v2490 = vsel %vm612, %v2486, %v2488
    %v2495 = vmul.f32 %v2474, %v2489
    %v2496 = vmul.f32 %v2478, %v2484
    %v2497 = vmul.f32 %v2474, %v2490
    %v2498 = vmul.f32 %v2478, %v2488
    %v2499 = vadd.f32 %v2465, %v2495
    %v2500 = vadd.f32 %v2466, %v2496
    %v2501 = vadd.f32 %v2467, %v2497
    %v2502 = vadd.f32 %v2468, %v2498
    %v2503 = vld [vmem:[#allocation2] sm:$0xfe]
    %v2504 = vld [vmem:[#allocation2 + $0x8] sm:$0xfe]
    %v2505 = vld [vmem:[#allocation2 + $0x20] sm:$0x1]
    %v2506 = vld [vmem:[#allocation2 + $0x28] sm:$0x1]
    %v2507 = vld [vmem:[%s631] ss:$8 sm:$0x3]
    %v2509 = vlaneseq
    %v2510 = vshrl.u32 %v2509, 7
    %v2511 = vsub.s32 0, %v2510
    %v2512 = vrot.slane %v2507, %v2511
    %v2513 = vlaneseq
    %v2514 = vshrl.u32 %v2513, 7
    %v2515 = vsub.s32 1, %v2514
    %v2516 = vrot.slane %v2507, %v2515
    %v2519 = vmul.f32 %v2512, %v2503
    %v2520 = vmul.f32 %v2516, %v2504
    %v2521 = vmul.f32 %v2512, %v2409
    %v2522 = vmul.f32 %v2516, %v2410
    %v2523 = vmul.f32 %v2512, %v2505
    %v2524 = vmul.f32 %v2516, %v2506
    %v2531 = vrot.slane %v2519, 1
    %v2532 = vrot.slane %v2521, 1
    %v2533 = vsel %vm656, %v2531, %v2532
    %v2534 = vrot.slane %v2520, 1
    %v2535 = vrot.slane %v2522, 1
    %v2536 = vsel %vm656, %v2534, %v2535
    %v2537 = vrot.slane %v2523, 1
    %v2538 = vsel %vm656, %v2532, %v2537
    %v2539 = vrot.slane %v2524, 1
    %v2540 = vsel %vm656, %v2535, %v2539
    %v2545 = vadd.f32 %v2499, %v2533
    %v2546 = vadd.f32 %v2500, %v2536
    %v2547 = vadd.f32 %v2501, %v2538
    %v2548 = vadd.f32 %v2502, %v2540
    %v2549 = vld [vmem:[%s675] ss:$8 sm:$0x3]
    %v2551 = vlaneseq
    %v2552 = vshrl.u32 %v2551, 7
    %v2553 = vsub.s32 0, %v2552
    %v2554 = vrot.slane %v2549, %v2553
    %v2555 = vlaneseq
    %v2556 = vshrl.u32 %v2555, 7
    %v2557 = vsub.s32 1, %v2556
    %v2558 = vrot.slane %v2549, %v2557
    %v2565 = vrot.slane %v2503, 1
    %v2566 = vrot.slane %v2409, 1
    %v2567 = vsel %vm656, %v2565, %v2566
    %v2568 = vrot.slane %v2504, 1
    %v2569 = vrot.slane %v2410, 1
    %v2570 = vsel %vm656, %v2568, %v2569
    %v2571 = vrot.slane %v2505, 1
    %v2572 = vsel %vm656, %v2566, %v2571
    %v2573 = vrot.slane %v2506, 1
    %v2574 = vsel %vm656, %v2569, %v2573
    %2575 = vrot.lane.b32.xlu0 %v2567, 127
    %v2576 = vpop.permute.xlu0 %2575
    %2577 = vrot.lane.b32.xlu0 %v2570, 127
    %v2578 = vpop.permute.xlu0 %2577
    %2579 = vrot.lane.b32.xlu0 %v2572, 127
    %v2580 = vpop.permute.xlu0 %2579
    %2581 = vrot.lane.b32.xlu0 %v2574, 127
    %v2582 = vpop.permute.xlu0 %2581
    %v2583 = vsel %vm576, %v2576, %v2578
    %v2584 = vsel %vm576, %v2580, %v2582
    %v2589 = vmul.f32 %v2554, %v2583
    %v2590 = vmul.f32 %v2558, %v2578
    %v2591 = vmul.f32 %v2554, %v2584
    %v2592 = vmul.f32 %v2558, %v2582
    %v2593 = vadd.f32 %v2545, %v2589
    %v2594 = vadd.f32 %v2546, %v2590
    %v2595 = vadd.f32 %v2547, %v2591
    %v2596 = vadd.f32 %v2548, %v2592
    %v2597 = vld [vmem:[%s724] ss:$8 sm:$0x3]
    %v2599 = vlaneseq
    %v2600 = vshrl.u32 %v2599, 7
    %v2601 = vsub.s32 0, %v2600
    %v2602 = vrot.slane %v2597, %v2601
    %v2603 = vlaneseq
    %v2604 = vshrl.u32 %v2603, 7
    %v2605 = vsub.s32 1, %v2604
    %v2606 = vrot.slane %v2597, %v2605
    %2609 = vrot.lane.b32.xlu0 %v2567, 126
    %v2610 = vpop.permute.xlu0 %2609
    %2611 = vrot.lane.b32.xlu0 %v2570, 126
    %v2612 = vpop.permute.xlu0 %2611
    %2613 = vrot.lane.b32.xlu0 %v2572, 126
    %v2614 = vpop.permute.xlu0 %2613
    %2615 = vrot.lane.b32.xlu0 %v2574, 126
    %v2616 = vpop.permute.xlu0 %2615
    %v2617 = vsel %vm612, %v2610, %v2612
    %v2618 = vsel %vm612, %v2614, %v2616
    %v2623 = vmul.f32 %v2602, %v2617
    %v2624 = vmul.f32 %v2606, %v2612
    %v2625 = vmul.f32 %v2602, %v2618
    %v2626 = vmul.f32 %v2606, %v2616
    %v2627 = vadd.f32 %v2593, %v2623
    %v2628 = vadd.f32 %v2594, %v2624
    %v2629 = vadd.f32 %v2595, %v2625
    %v2630 = vadd.f32 %v2596, %v2626
    %v2631 = vld [vmem:[#allocation2] sm:$0xfc]
    %v2632 = vld [vmem:[#allocation2 + $0x8] sm:$0xfc]
    %v2633 = vld [vmem:[#allocation2 + $0x20] sm:$0x3]
    %v2634 = vld [vmem:[#allocation2 + $0x28] sm:$0x3]
    %v2635 = vld [vmem:[%s763] ss:$8 sm:$0x3]
    %v2637 = vlaneseq
    %v2638 = vshrl.u32 %v2637, 7
    %v2639 = vsub.s32 0, %v2638
    %v2640 = vrot.slane %v2635, %v2639
    %v2641 = vlaneseq
    %v2642 = vshrl.u32 %v2641, 7
    %v2643 = vsub.s32 1, %v2642
    %v2644 = vrot.slane %v2635, %v2643
    %v2647 = vmul.f32 %v2640, %v2631
    %v2648 = vmul.f32 %v2644, %v2632
    %v2649 = vmul.f32 %v2640, %v2409
    %v2650 = vmul.f32 %v2644, %v2410
    %v2651 = vmul.f32 %v2640, %v2633
    %v2652 = vmul.f32 %v2644, %v2634
    %v2659 = vrot.slane %v2647, 2
    %v2660 = vrot.slane %v2649, 2
    %v2661 = vsel %vm788, %v2659, %v2660
    %v2662 = vrot.slane %v2648, 2
    %v2663 = vrot.slane %v2650, 2
    %v2664 = vsel %vm788, %v2662, %v2663
    %v2665 = vrot.slane %v2651, 2
    %v2666 = vsel %vm788, %v2660, %v2665
    %v2667 = vrot.slane %v2652, 2
    %v2668 = vsel %vm788, %v2663, %v2667
    %v2673 = vadd.f32 %v2627, %v2661
    %v2674 = vadd.f32 %v2628, %v2664
    %v2675 = vadd.f32 %v2629, %v2666
    %v2676 = vadd.f32 %v2630, %v2668
    %v2677 = vld [vmem:[%s807] ss:$8 sm:$0x3]
    %v2679 = vlaneseq
    %v2680 = vshrl.u32 %v2679, 7
    %v2681 = vsub.s32 0, %v2680
    %v2682 = vrot.slane %v2677, %v2681
    %v2683 = vlaneseq
    %v2684 = vshrl.u32 %v2683, 7
    %v2685 = vsub.s32 1, %v2684
    %v2686 = vrot.slane %v2677, %v2685
    %v2693 = vrot.slane %v2631, 2
    %v2694 = vrot.slane %v2409, 2
    %v2695 = vsel %vm788, %v2693, %v2694
    %v2696 = vrot.slane %v2632, 2
    %v2697 = vrot.slane %v2410, 2
    %v2698 = vsel %vm788, %v2696, %v2697
    %v2699 = vrot.slane %v2633, 2
    %v2700 = vsel %vm788, %v2694, %v2699
    %v2701 = vrot.slane %v2634, 2
    %v2702 = vsel %vm788, %v2697, %v2701
    %2703 = vrot.lane.b32.xlu0 %v2695, 127
    %v2704 = vpop.permute.xlu0 %2703
    %2705 = vrot.lane.b32.xlu0 %v2698, 127
    %v2706 = vpop.permute.xlu0 %2705
    %2707 = vrot.lane.b32.xlu0 %v2700, 127
    %v2708 = vpop.permute.xlu0 %2707
    %2709 = vrot.lane.b32.xlu0 %v2702, 127
    %v2710 = vpop.permute.xlu0 %2709
    %v2711 = vsel %vm576, %v2704, %v2706
    %v2712 = vsel %vm576, %v2708, %v2710
    %v2717 = vmul.f32 %v2682, %v2711
    %v2718 = vmul.f32 %v2686, %v2706
    %v2719 = vmul.f32 %v2682, %v2712
    %v2720 = vmul.f32 %v2686, %v2710
    %v2721 = vadd.f32 %v2673, %v2717
    %v2722 = vadd.f32 %v2674, %v2718
    %v2723 = vadd.f32 %v2675, %v2719
    %v2724 = vadd.f32 %v2676, %v2720
    %v2725 = vld [vmem:[%s856] ss:$8 sm:$0x3]
    %v2727 = vlaneseq
    %v2728 = vshrl.u32 %v2727, 7
    %v2729 = vsub.s32 0, %v2728
    %v2730 = vrot.slane %v2725, %v2729
    %v2731 = vlaneseq
    %v2732 = vshrl.u32 %v2731, 7
    %v2733 = vsub.s32 1, %v2732
    %v2734 = vrot.slane %v2725, %v2733
    %2737 = vrot.lane.b32.xlu0 %v2695, 126
    %v2738 = vpop.permute.xlu0 %2737
    %2739 = vrot.lane.b32.xlu0 %v2698, 126
    %v2740 = vpop.permute.xlu0 %2739
    %2741 = vrot.lane.b32.xlu0 %v2700, 126
    %v2742 = vpop.permute.xlu0 %2741
    %2743 = vrot.lane.b32.xlu0 %v2702, 126
    %v2744 = vpop.permute.xlu0 %2743
    %v2745 = vsel %vm612, %v2738, %v2740
    %v2746 = vsel %vm612, %v2742, %v2744
    %v2751 = vmul.f32 %v2730, %v2745
    %v2752 = vmul.f32 %v2734, %v2740
    %v2753 = vmul.f32 %v2730, %v2746
    %v2754 = vmul.f32 %v2734, %v2744
    %v2755 = vadd.f32 %v2721, %v2751
    %v2756 = vadd.f32 %v2722, %v2752
    %v2757 = vadd.f32 %v2723, %v2753
    %v2758 = vadd.f32 %v2724, %v2754
    %v2759 = vld [vmem:[%s220] sm:$0xff]
    %v2760 = vld [vmem:[%s220 + $0x8] sm:$0xff]
    %v2761 = vld [vmem:[%s220 + $0x10] sm:$0xff]
    %v2762 = vld [vmem:[%s220 + $0x18] sm:$0xff]
    %v2763 = vld [vmem:[%s895] ss:$8 sm:$0x3]
    %v2765 = vlaneseq
    %v2766 = vshrl.u32 %v2765, 7
    %v2767 = vsub.s32 0, %v2766
    %v2768 = vrot.slane %v2763, %v2767
    %v2769 = vlaneseq
    %v2770 = vshrl.u32 %v2769, 7
    %v2771 = vsub.s32 1, %v2770
    %v2772 = vrot.slane %v2763, %v2771
    %v2775 = vmul.f32 %v2768, %v2759
    %v2776 = vmul.f32 %v2772, %v2760
    %v2777 = vmul.f32 %v2768, %v2761
    %v2778 = vmul.f32 %v2772, %v2762
    %v2779 = vadd.f32 %v2755, %v2775
    %v2780 = vadd.f32 %v2756, %v2776
    %v2781 = vadd.f32 %v2757, %v2777
    %v2782 = vadd.f32 %v2758, %v2778
    %v2783 = vld [vmem:[%s916] ss:$8 sm:$0x3]
    %v2785 = vlaneseq
    %v2786 = vshrl.u32 %v2785, 7
    %v2787 = vsub.s32 0, %v2786
    %v2788 = vrot.slane %v2783, %v2787
    %v2789 = vlaneseq
    %v2790 = vshrl.u32 %v2789, 7
    %v2791 = vsub.s32 1, %v2790
    %v2792 = vrot.slane %v2783, %v2791
    %2799 = vrot.lane.b32.xlu0 %v2759, 127
    %v2800 = vpop.permute.xlu0 %2799
    %2801 = vrot.lane.b32.xlu0 %v2760, 127
    %v2802 = vpop.permute.xlu0 %2801
    %2803 = vrot.lane.b32.xlu0 %v2761, 127
    %v2804 = vpop.permute.xlu0 %2803
    %2805 = vrot.lane.b32.xlu0 %v2762, 127
    %v2806 = vpop.permute.xlu0 %2805
    %v2807 = vsel %vm576, %v2800, %v2802
    %v2808 = vsel %vm576, %v2804, %v2806
    %v2813 = vmul.f32 %v2788, %v2807
    %v2814 = vmul.f32 %v2792, %v2802
    %v2815 = vmul.f32 %v2788, %v2808
    %v2816 = vmul.f32 %v2792, %v2806
    %v2817 = vadd.f32 %v2779, %v2813
    %v2818 = vadd.f32 %v2780, %v2814
    %v2819 = vadd.f32 %v2781, %v2815
    %v2820 = vadd.f32 %v2782, %v2816
    %v2821 = vld [vmem:[%s955] ss:$8 sm:$0x3]
    %v2823 = vlaneseq
    %v2824 = vshrl.u32 %v2823, 7
    %v2825 = vsub.s32 0, %v2824
    %v2826 = vrot.slane %v2821, %v2825
    %v2827 = vlaneseq
    %v2828 = vshrl.u32 %v2827, 7
    %v2829 = vsub.s32 1, %v2828
    %v2830 = vrot.slane %v2821, %v2829
    %2833 = vrot.lane.b32.xlu0 %v2759, 126
    %v2834 = vpop.permute.xlu0 %2833
    %2835 = vrot.lane.b32.xlu0 %v2760, 126
    %v2836 = vpop.permute.xlu0 %2835
    %2837 = vrot.lane.b32.xlu0 %v2761, 126
    %v2838 = vpop.permute.xlu0 %2837
    %2839 = vrot.lane.b32.xlu0 %v2762, 126
    %v2840 = vpop.permute.xlu0 %2839
    %v2841 = vsel %vm612, %v2834, %v2836
    %v2842 = vsel %vm612, %v2838, %v2840
    %v2847 = vmul.f32 %v2826, %v2841
    %v2848 = vmul.f32 %v2830, %v2836
    %v2849 = vmul.f32 %v2826, %v2842
    %v2850 = vmul.f32 %v2830, %v2840
    %v2851 = vadd.f32 %v2817, %v2847
    %v2852 = vadd.f32 %v2818, %v2848
    %v2853 = vadd.f32 %v2819, %v2849
    %v2854 = vadd.f32 %v2820, %v2850
    %v2855 = vld [vmem:[%s220] sm:$0xfe]
    %v2856 = vld [vmem:[%s220 + $0x8] sm:$0xfe]
    %v2857 = vld [vmem:[%s220 + $0x20] sm:$0x1]
    %v2858 = vld [vmem:[%s220 + $0x28] sm:$0x1]
    %v2859 = vld [vmem:[%s994] ss:$8 sm:$0x3]
    %v2861 = vlaneseq
    %v2862 = vshrl.u32 %v2861, 7
    %v2863 = vsub.s32 0, %v2862
    %v2864 = vrot.slane %v2859, %v2863
    %v2865 = vlaneseq
    %v2866 = vshrl.u32 %v2865, 7
    %v2867 = vsub.s32 1, %v2866
    %v2868 = vrot.slane %v2859, %v2867
    %v2871 = vmul.f32 %v2864, %v2855
    %v2872 = vmul.f32 %v2868, %v2856
    %v2873 = vmul.f32 %v2864, %v2761
    %v2874 = vmul.f32 %v2868, %v2762
    %v2875 = vmul.f32 %v2864, %v2857
    %v2876 = vmul.f32 %v2868, %v2858
    %v2883 = vrot.slane %v2871, 1
    %v2884 = vrot.slane %v2873, 1
    %v2885 = vsel %vm656, %v2883, %v2884
    %v2886 = vrot.slane %v2872, 1
    %v2887 = vrot.slane %v2874, 1
    %v2888 = vsel %vm656, %v2886, %v2887
    %v2889 = vrot.slane %v2875, 1
    %v2890 = vsel %vm656, %v2884, %v2889
    %v2891 = vrot.slane %v2876, 1
    %v2892 = vsel %vm656, %v2887, %v2891
    %v2897 = vadd.f32 %v2851, %v2885
    %v2898 = vadd.f32 %v2852, %v2888
    %v2899 = vadd.f32 %v2853, %v2890
    %v2900 = vadd.f32 %v2854, %v2892
    %v2901 = vld [vmem:[%s1037] ss:$8 sm:$0x3]
    %v2903 = vlaneseq
    %v2904 = vshrl.u32 %v2903, 7
    %v2905 = vsub.s32 0, %v2904
    %v2906 = vrot.slane %v2901, %v2905
    %v2907 = vlaneseq
    %v2908 = vshrl.u32 %v2907, 7
    %v2909 = vsub.s32 1, %v2908
    %v2910 = vrot.slane %v2901, %v2909
    %v2917 = vrot.slane %v2855, 1
    %v2918 = vrot.slane %v2761, 1
    %v2919 = vsel %vm656, %v2917, %v2918
    %v2920 = vrot.slane %v2856, 1
    %v2921 = vrot.slane %v2762, 1
    %v2922 = vsel %vm656, %v2920, %v2921
    %v2923 = vrot.slane %v2857, 1
    %v2924 = vsel %vm656, %v2918, %v2923
    %v2925 = vrot.slane %v2858, 1
    %v2926 = vsel %vm656, %v2921, %v2925
    %2927 = vrot.lane.b32.xlu0 %v2919, 127
    %v2928 = vpop.permute.xlu0 %2927
    %2929 = vrot.lane.b32.xlu0 %v2922, 127
    %v2930 = vpop.permute.xlu0 %2929
    %2931 = vrot.lane.b32.xlu0 %v2924, 127
    %v2932 = vpop.permute.xlu0 %2931
    %2933 = vrot.lane.b32.xlu0 %v2926, 127
    %v2934 = vpop.permute.xlu0 %2933
    %v2935 = vsel %vm576, %v2928, %v2930
    %v2936 = vsel %vm576, %v2932, %v2934
    %v2941 = vmul.f32 %v2906, %v2935
    %v2942 = vmul.f32 %v2910, %v2930
    %v2943 = vmul.f32 %v2906, %v2936
    %v2944 = vmul.f32 %v2910, %v2934
    %v2945 = vadd.f32 %v2897, %v2941
    %v2946 = vadd.f32 %v2898, %v2942
    %v2947 = vadd.f32 %v2899, %v2943
    %v2948 = vadd.f32 %v2900, %v2944
    %v2949 = vld [vmem:[%s1086] ss:$8 sm:$0x3]
    %v2951 = vlaneseq
    %v2952 = vshrl.u32 %v2951, 7
    %v2953 = vsub.s32 0, %v2952
    %v2954 = vrot.slane %v2949, %v2953
    %v2955 = vlaneseq
    %v2956 = vshrl.u32 %v2955, 7
    %v2957 = vsub.s32 1, %v2956
    %v2958 = vrot.slane %v2949, %v2957
    %2961 = vrot.lane.b32.xlu0 %v2919, 126
    %v2962 = vpop.permute.xlu0 %2961
    %2963 = vrot.lane.b32.xlu0 %v2922, 126
    %v2964 = vpop.permute.xlu0 %2963
    %2965 = vrot.lane.b32.xlu0 %v2924, 126
    %v2966 = vpop.permute.xlu0 %2965
    %2967 = vrot.lane.b32.xlu0 %v2926, 126
    %v2968 = vpop.permute.xlu0 %2967
    %v2969 = vsel %vm612, %v2962, %v2964
    %v2970 = vsel %vm612, %v2966, %v2968
    %v2975 = vmul.f32 %v2954, %v2969
    %v2976 = vmul.f32 %v2958, %v2964
    %v2977 = vmul.f32 %v2954, %v2970
    %v2978 = vmul.f32 %v2958, %v2968
    %v2979 = vadd.f32 %v2945, %v2975
    %v2980 = vadd.f32 %v2946, %v2976
    %v2981 = vadd.f32 %v2947, %v2977
    %v2982 = vadd.f32 %v2948, %v2978
    %v2983 = vld [vmem:[%s220] sm:$0xfc]
    %v2984 = vld [vmem:[%s220 + $0x8] sm:$0xfc]
    %v2985 = vld [vmem:[%s220 + $0x20] sm:$0x3]
    %v2986 = vld [vmem:[%s220 + $0x28] sm:$0x3]
    %v2987 = vld [vmem:[%s1125] ss:$8 sm:$0x3]
    %v2989 = vlaneseq
    %v2990 = vshrl.u32 %v2989, 7
    %v2991 = vsub.s32 0, %v2990
    %v2992 = vrot.slane %v2987, %v2991
    %v2993 = vlaneseq
    %v2994 = vshrl.u32 %v2993, 7
    %v2995 = vsub.s32 1, %v2994
    %v2996 = vrot.slane %v2987, %v2995
    %v2999 = vmul.f32 %v2992, %v2983
    %v3000 = vmul.f32 %v2996, %v2984
    %v3001 = vmul.f32 %v2992, %v2761
    %v3002 = vmul.f32 %v2996, %v2762
    %v3003 = vmul.f32 %v2992, %v2985
    %v3004 = vmul.f32 %v2996, %v2986
    %v3011 = vrot.slane %v2999, 2
    %v3012 = vrot.slane %v3001, 2
    %v3013 = vsel %vm788, %v3011, %v3012
    %v3014 = vrot.slane %v3000, 2
    %v3015 = vrot.slane %v3002, 2
    %v3016 = vsel %vm788, %v3014, %v3015
    %v3017 = vrot.slane %v3003, 2
    %v3018 = vsel %vm788, %v3012, %v3017
    %v3019 = vrot.slane %v3004, 2
    %v3020 = vsel %vm788, %v3015, %v3019
    %v3025 = vadd.f32 %v2979, %v3013
    %v3026 = vadd.f32 %v2980, %v3016
    %v3027 = vadd.f32 %v2981, %v3018
    %v3028 = vadd.f32 %v2982, %v3020
    %v3029 = vld [vmem:[%s1168] ss:$8 sm:$0x3]
    %v3031 = vlaneseq
    %v3032 = vshrl.u32 %v3031, 7
    %v3033 = vsub.s32 0, %v3032
    %v3034 = vrot.slane %v3029, %v3033
    %v3035 = vlaneseq
    %v3036 = vshrl.u32 %v3035, 7
    %v3037 = vsub.s32 1, %v3036
    %v3038 = vrot.slane %v3029, %v3037
    %v3045 = vrot.slane %v2983, 2
    %v3046 = vrot.slane %v2761, 2
    %v3047 = vsel %vm788, %v3045, %v3046
    %v3048 = vrot.slane %v2984, 2
    %v3049 = vrot.slane %v2762, 2
    %v3050 = vsel %vm788, %v3048, %v3049
    %v3051 = vrot.slane %v2985, 2
    %v3052 = vsel %vm788, %v3046, %v3051
    %v3053 = vrot.slane %v2986, 2
    %v3054 = vsel %vm788, %v3049, %v3053
    %3055 = vrot.lane.b32.xlu0 %v3047, 127
    %v3056 = vpop.permute.xlu0 %3055
    %3057 = vrot.lane.b32.xlu0 %v3050, 127
    %v3058 = vpop.permute.xlu0 %3057
    %3059 = vrot.lane.b32.xlu0 %v3052, 127
    %v3060 = vpop.permute.xlu0 %3059
    %3061 = vrot.lane.b32.xlu0 %v3054, 127
    %v3062 = vpop.permute.xlu0 %3061
    %v3063 = vsel %vm576, %v3056, %v3058
    %v3064 = vsel %vm576, %v3060, %v3062
    %v3069 = vmul.f32 %v3034, %v3063
    %v3070 = vmul.f32 %v3038, %v3058
    %v3071 = vmul.f32 %v3034, %v3064
    %v3072 = vmul.f32 %v3038, %v3062
    %v3073 = vadd.f32 %v3025, %v3069
    %v3074 = vadd.f32 %v3026, %v3070
    %v3075 = vadd.f32 %v3027, %v3071
    %v3076 = vadd.f32 %v3028, %v3072
    %v3077 = vld [vmem:[%s1217] ss:$8 sm:$0x3]
    %v3079 = vlaneseq
    %v3080 = vshrl.u32 %v3079, 7
    %v3081 = vsub.s32 0, %v3080
    %v3082 = vrot.slane %v3077, %v3081
    %v3083 = vlaneseq
    %v3084 = vshrl.u32 %v3083, 7
    %v3085 = vsub.s32 1, %v3084
    %v3086 = vrot.slane %v3077, %v3085
    %3089 = vrot.lane.b32.xlu0 %v3047, 126
    %v3090 = vpop.permute.xlu0 %3089
    %3091 = vrot.lane.b32.xlu0 %v3050, 126
    %v3092 = vpop.permute.xlu0 %3091
    %3093 = vrot.lane.b32.xlu0 %v3052, 126
    %v3094 = vpop.permute.xlu0 %3093
    %3095 = vrot.lane.b32.xlu0 %v3054, 126
    %v3096 = vpop.permute.xlu0 %3095
    %v3097 = vsel %vm612, %v3090, %v3092
    %v3098 = vsel %vm612, %v3094, %v3096
    %v3103 = vmul.f32 %v3082, %v3097
    %v3104 = vmul.f32 %v3086, %v3092
    %v3105 = vmul.f32 %v3082, %v3098
    %v3106 = vmul.f32 %v3086, %v3096
    %v3107 = vadd.f32 %v3073, %v3103
    %v3108 = vadd.f32 %v3074, %v3104
    %v3109 = vadd.f32 %v3075, %v3105
    %v3110 = vadd.f32 %v3076, %v3106
    %v3111 = vld [vmem:[%s328] sm:$0xff]
    %v3112 = vld [vmem:[%s328 + $0x8] sm:$0xff]
    %v3113 = vld [vmem:[%s328 + $0x10] sm:$0xff]
    %v3114 = vld [vmem:[%s328 + $0x18] sm:$0xff]
    %v3115 = vld [vmem:[%s1256] ss:$8 sm:$0x3]
    %v3117 = vlaneseq
    %v3118 = vshrl.u32 %v3117, 7
    %v3119 = vsub.s32 0, %v3118
    %v3120 = vrot.slane %v3115, %v3119
    %v3121 = vlaneseq
    %v3122 = vshrl.u32 %v3121, 7
    %v3123 = vsub.s32 1, %v3122
    %v3124 = vrot.slane %v3115, %v3123
    %v3127 = vmul.f32 %v3120, %v3111
    %v3128 = vmul.f32 %v3124, %v3112
    %v3129 = vmul.f32 %v3120, %v3113
    %v3130 = vmul.f32 %v3124, %v3114
    %v3131 = vadd.f32 %v3107, %v3127
    %v3132 = vadd.f32 %v3108, %v3128
    %v3133 = vadd.f32 %v3109, %v3129
    %v3134 = vadd.f32 %v3110, %v3130
    %v3135 = vld [vmem:[%s1277] ss:$8 sm:$0x3]
    %v3137 = vlaneseq
    %v3138 = vshrl.u32 %v3137, 7
    %v3139 = vsub.s32 0, %v3138
    %v3140 = vrot.slane %v3135, %v3139
    %v3141 = vlaneseq
    %v3142 = vshrl.u32 %v3141, 7
    %v3143 = vsub.s32 1, %v3142
    %v3144 = vrot.slane %v3135, %v3143
    %3151 = vrot.lane.b32.xlu0 %v3111, 127
    %v3152 = vpop.permute.xlu0 %3151
    %3153 = vrot.lane.b32.xlu0 %v3112, 127
    %v3154 = vpop.permute.xlu0 %3153
    %3155 = vrot.lane.b32.xlu0 %v3113, 127
    %v3156 = vpop.permute.xlu0 %3155
    %3157 = vrot.lane.b32.xlu0 %v3114, 127
    %v3158 = vpop.permute.xlu0 %3157
    %v3159 = vsel %vm576, %v3152, %v3154
    %v3160 = vsel %vm576, %v3156, %v3158
    %v3165 = vmul.f32 %v3140, %v3159
    %v3166 = vmul.f32 %v3144, %v3154
    %v3167 = vmul.f32 %v3140, %v3160
    %v3168 = vmul.f32 %v3144, %v3158
    %v3169 = vadd.f32 %v3131, %v3165
    %v3170 = vadd.f32 %v3132, %v3166
    %v3171 = vadd.f32 %v3133, %v3167
    %v3172 = vadd.f32 %v3134, %v3168
    %v3173 = vld [vmem:[%s1316] ss:$8 sm:$0x3]
    %v3175 = vlaneseq
    %v3176 = vshrl.u32 %v3175, 7
    %v3177 = vsub.s32 0, %v3176
    %v3178 = vrot.slane %v3173, %v3177
    %v3179 = vlaneseq
    %v3180 = vshrl.u32 %v3179, 7
    %v3181 = vsub.s32 1, %v3180
    %v3182 = vrot.slane %v3173, %v3181
    %3185 = vrot.lane.b32.xlu0 %v3111, 126
    %v3186 = vpop.permute.xlu0 %3185
    %3187 = vrot.lane.b32.xlu0 %v3112, 126
    %v3188 = vpop.permute.xlu0 %3187
    %3189 = vrot.lane.b32.xlu0 %v3113, 126
    %v3190 = vpop.permute.xlu0 %3189
    %3191 = vrot.lane.b32.xlu0 %v3114, 126
    %v3192 = vpop.permute.xlu0 %3191
    %v3193 = vsel %vm612, %v3186, %v3188
    %v3194 = vsel %vm612, %v3190, %v3192
    %v3199 = vmul.f32 %v3178, %v3193
    %v3200 = vmul.f32 %v3182, %v3188
    %v3201 = vmul.f32 %v3178, %v3194
    %v3202 = vmul.f32 %v3182, %v3192
    %v3203 = vadd.f32 %v3169, %v3199
    %v3204 = vadd.f32 %v3170, %v3200
    %v3205 = vadd.f32 %v3171, %v3201
    %v3206 = vadd.f32 %v3172, %v3202
    %v3207 = vld [vmem:[%s328] sm:$0xfe]
    %v3208 = vld [vmem:[%s328 + $0x8] sm:$0xfe]
    %v3209 = vld [vmem:[%s328 + $0x20] sm:$0x1]
    %v3210 = vld [vmem:[%s328 + $0x28] sm:$0x1]
    %v3211 = vld [vmem:[%s1355] ss:$8 sm:$0x3]
    %v3213 = vlaneseq
    %v3214 = vshrl.u32 %v3213, 7
    %v3215 = vsub.s32 0, %v3214
    %v3216 = vrot.slane %v3211, %v3215
    %v3217 = vlaneseq
    %v3218 = vshrl.u32 %v3217, 7
    %v3219 = vsub.s32 1, %v3218
    %v3220 = vrot.slane %v3211, %v3219
    %v3223 = vmul.f32 %v3216, %v3207
    %v3224 = vmul.f32 %v3220, %v3208
    %v3225 = vmul.f32 %v3216, %v3113
    %v3226 = vmul.f32 %v3220, %v3114
    %v3227 = vmul.f32 %v3216, %v3209
    %v3228 = vmul.f32 %v3220, %v3210
    %v3235 = vrot.slane %v3223, 1
    %v3236 = vrot.slane %v3225, 1
    %v3237 = vsel %vm656, %v3235, %v3236
    %v3238 = vrot.slane %v3224, 1
    %v3239 = vrot.slane %v3226, 1
    %v3240 = vsel %vm656, %v3238, %v3239
    %v3241 = vrot.slane %v3227, 1
    %v3242 = vsel %vm656, %v3236, %v3241
    %v3243 = vrot.slane %v3228, 1
    %v3244 = vsel %vm656, %v3239, %v3243
    %v3249 = vadd.f32 %v3203, %v3237
    %v3250 = vadd.f32 %v3204, %v3240
    %v3251 = vadd.f32 %v3205, %v3242
    %v3252 = vadd.f32 %v3206, %v3244
    %v3253 = vld [vmem:[%s1398] ss:$8 sm:$0x3]
    %v3255 = vlaneseq
    %v3256 = vshrl.u32 %v3255, 7
    %v3257 = vsub.s32 0, %v3256
    %v3258 = vrot.slane %v3253, %v3257
    %v3259 = vlaneseq
    %v3260 = vshrl.u32 %v3259, 7
    %v3261 = vsub.s32 1, %v3260
    %v3262 = vrot.slane %v3253, %v3261
    %v3269 = vrot.slane %v3207, 1
    %v3270 = vrot.slane %v3113, 1
    %v3271 = vsel %vm656, %v3269, %v3270
    %v3272 = vrot.slane %v3208, 1
    %v3273 = vrot.slane %v3114, 1
    %v3274 = vsel %vm656, %v3272, %v3273
    %v3275 = vrot.slane %v3209, 1
    %v3276 = vsel %vm656, %v3270, %v3275
    %v3277 = vrot.slane %v3210, 1
    %v3278 = vsel %vm656, %v3273, %v3277
    %3279 = vrot.lane.b32.xlu0 %v3271, 127
    %v3280 = vpop.permute.xlu0 %3279
    %3281 = vrot.lane.b32.xlu0 %v3274, 127
    %v3282 = vpop.permute.xlu0 %3281
    %3283 = vrot.lane.b32.xlu0 %v3276, 127
    %v3284 = vpop.permute.xlu0 %3283
    %3285 = vrot.lane.b32.xlu0 %v3278, 127
    %v3286 = vpop.permute.xlu0 %3285
    %v3287 = vsel %vm576, %v3280, %v3282
    %v3288 = vsel %vm576, %v3284, %v3286
    %v3293 = vmul.f32 %v3258, %v3287
    %v3294 = vmul.f32 %v3262, %v3282
    %v3295 = vmul.f32 %v3258, %v3288
    %v3296 = vmul.f32 %v3262, %v3286
    %v3297 = vadd.f32 %v3249, %v3293
    %v3298 = vadd.f32 %v3250, %v3294
    %v3299 = vadd.f32 %v3251, %v3295
    %v3300 = vadd.f32 %v3252, %v3296
    %v3301 = vld [vmem:[%s1447] ss:$8 sm:$0x3]
    %v3303 = vlaneseq
    %v3304 = vshrl.u32 %v3303, 7
    %v3305 = vsub.s32 0, %v3304
    %v3306 = vrot.slane %v3301, %v3305
    %v3307 = vlaneseq
    %v3308 = vshrl.u32 %v3307, 7
    %v3309 = vsub.s32 1, %v3308
    %v3310 = vrot.slane %v3301, %v3309
    %3313 = vrot.lane.b32.xlu0 %v3271, 126
    %v3314 = vpop.permute.xlu0 %3313
    %3315 = vrot.lane.b32.xlu0 %v3274, 126
    %v3316 = vpop.permute.xlu0 %3315
    %3317 = vrot.lane.b32.xlu0 %v3276, 126
    %v3318 = vpop.permute.xlu0 %3317
    %3319 = vrot.lane.b32.xlu0 %v3278, 126
    %v3320 = vpop.permute.xlu0 %3319
    %v3321 = vsel %vm612, %v3314, %v3316
    %v3322 = vsel %vm612, %v3318, %v3320
    %v3327 = vmul.f32 %v3306, %v3321
    %v3328 = vmul.f32 %v3310, %v3316
    %v3329 = vmul.f32 %v3306, %v3322
    %v3330 = vmul.f32 %v3310, %v3320
    %v3331 = vadd.f32 %v3297, %v3327
    %v3332 = vadd.f32 %v3298, %v3328
    %v3333 = vadd.f32 %v3299, %v3329
    %v3334 = vadd.f32 %v3300, %v3330
    %v3335 = vld [vmem:[%s328] sm:$0xfc]
    %v3336 = vld [vmem:[%s328 + $0x8] sm:$0xfc]
    %v3337 = vld [vmem:[%s328 + $0x20] sm:$0x3]
    %v3338 = vld [vmem:[%s328 + $0x28] sm:$0x3]
    %v3339 = vld [vmem:[%s1486] ss:$8 sm:$0x3]
    %v3341 = vlaneseq
    %v3342 = vshrl.u32 %v3341, 7
    %v3343 = vsub.s32 0, %v3342
    %v3344 = vrot.slane %v3339, %v3343
    %v3345 = vlaneseq
    %v3346 = vshrl.u32 %v3345, 7
    %v3347 = vsub.s32 1, %v3346
    %v3348 = vrot.slane %v3339, %v3347
    %v3351 = vmul.f32 %v3344, %v3335
    %v3352 = vmul.f32 %v3348, %v3336
    %v3353 = vmul.f32 %v3344, %v3113
    %v3354 = vmul.f32 %v3348, %v3114
    %v3355 = vmul.f32 %v3344, %v3337
    %v3356 = vmul.f32 %v3348, %v3338
    %v3363 = vrot.slane %v3351, 2
    %v3364 = vrot.slane %v3353, 2
    %v3365 = vsel %vm788, %v3363, %v3364
    %v3366 = vrot.slane %v3352, 2
    %v3367 = vrot.slane %v3354, 2
    %v3368 = vsel %vm788, %v3366, %v3367
    %v3369 = vrot.slane %v3355, 2
    %v3370 = vsel %vm788, %v3364, %v3369
    %v3371 = vrot.slane %v3356, 2
    %v3372 = vsel %vm788, %v3367, %v3371
    %v3377 = vadd.f32 %v3331, %v3365
    %v3378 = vadd.f32 %v3332, %v3368
    %v3379 = vadd.f32 %v3333, %v3370
    %v3380 = vadd.f32 %v3334, %v3372
    %v3381 = vld [vmem:[%s1529] ss:$8 sm:$0x3]
    %v3383 = vlaneseq
    %v3384 = vshrl.u32 %v3383, 7
    %v3385 = vsub.s32 0, %v3384
    %v3386 = vrot.slane %v3381, %v3385
    %v3387 = vlaneseq
    %v3388 = vshrl.u32 %v3387, 7
    %v3389 = vsub.s32 1, %v3388
    %v3390 = vrot.slane %v3381, %v3389
    %v3397 = vrot.slane %v3335, 2
    %v3398 = vrot.slane %v3113, 2
    %v3399 = vsel %vm788, %v3397, %v3398
    %v3400 = vrot.slane %v3336, 2
    %v3401 = vrot.slane %v3114, 2
    %v3402 = vsel %vm788, %v3400, %v3401
    %v3403 = vrot.slane %v3337, 2
    %v3404 = vsel %vm788, %v3398, %v3403
    %v3405 = vrot.slane %v3338, 2
    %v3406 = vsel %vm788, %v3401, %v3405
    %3407 = vrot.lane.b32.xlu0 %v3399, 127
    %v3408 = vpop.permute.xlu0 %3407
    %3409 = vrot.lane.b32.xlu0 %v3402, 127
    %v3410 = vpop.permute.xlu0 %3409
    %3411 = vrot.lane.b32.xlu0 %v3404, 127
    %v3412 = vpop.permute.xlu0 %3411
    %3413 = vrot.lane.b32.xlu0 %v3406, 127
    %v3414 = vpop.permute.xlu0 %3413
    %v3415 = vsel %vm576, %v3408, %v3410
    %v3416 = vsel %vm576, %v3412, %v3414
    %v3421 = vmul.f32 %v3386, %v3415
    %v3422 = vmul.f32 %v3390, %v3410
    %v3423 = vmul.f32 %v3386, %v3416
    %v3424 = vmul.f32 %v3390, %v3414
    %v3425 = vadd.f32 %v3377, %v3421
    %v3426 = vadd.f32 %v3378, %v3422
    %v3427 = vadd.f32 %v3379, %v3423
    %v3428 = vadd.f32 %v3380, %v3424
    %v3429 = vld [vmem:[%s1578] ss:$8 sm:$0x3]
    %v3431 = vlaneseq
    %v3432 = vshrl.u32 %v3431, 7
    %v3433 = vsub.s32 0, %v3432
    %v3434 = vrot.slane %v3429, %v3433
    %v3435 = vlaneseq
    %v3436 = vshrl.u32 %v3435, 7
    %v3437 = vsub.s32 1, %v3436
    %v3438 = vrot.slane %v3429, %v3437
    %3441 = vrot.lane.b32.xlu0 %v3399, 126
    %v3442 = vpop.permute.xlu0 %3441
    %3443 = vrot.lane.b32.xlu0 %v3402, 126
    %v3444 = vpop.permute.xlu0 %3443
    %3445 = vrot.lane.b32.xlu0 %v3404, 126
    %v3446 = vpop.permute.xlu0 %3445
    %3447 = vrot.lane.b32.xlu0 %v3406, 126
    %v3448 = vpop.permute.xlu0 %3447
    %v3449 = vsel %vm612, %v3442, %v3444
    %v3450 = vsel %vm612, %v3446, %v3448
    %v3455 = vmul.f32 %v3434, %v3449
    %v3456 = vmul.f32 %v3438, %v3444
    %v3457 = vmul.f32 %v3434, %v3450
    %v3458 = vmul.f32 %v3438, %v3448
    %v3459 = vadd.f32 %v3425, %v3455
    %v3460 = vadd.f32 %v3426, %v3456
    %v3461 = vadd.f32 %v3427, %v3457
    %v3462 = vadd.f32 %v3428, %v3458
    %v3463 = vld [vmem:[%s436] sm:$0xff]
    %v3464 = vld [vmem:[%s436 + $0x8] sm:$0xff]
    %v3465 = vld [vmem:[%s436 + $0x10] sm:$0xff]
    %v3466 = vld [vmem:[%s436 + $0x18] sm:$0xff]
    %v3467 = vld [vmem:[%s1617] ss:$8 sm:$0x3]
    %v3469 = vlaneseq
    %v3470 = vshrl.u32 %v3469, 7
    %v3471 = vsub.s32 0, %v3470
    %v3472 = vrot.slane %v3467, %v3471
    %v3473 = vlaneseq
    %v3474 = vshrl.u32 %v3473, 7
    %v3475 = vsub.s32 1, %v3474
    %v3476 = vrot.slane %v3467, %v3475
    %v3479 = vmul.f32 %v3472, %v3463
    %v3480 = vmul.f32 %v3476, %v3464
    %v3481 = vmul.f32 %v3472, %v3465
    %v3482 = vmul.f32 %v3476, %v3466
    %v3483 = vadd.f32 %v3459, %v3479
    %v3484 = vadd.f32 %v3460, %v3480
    %v3485 = vadd.f32 %v3461, %v3481
    %v3486 = vadd.f32 %v3462, %v3482
    %v3487 = vld [vmem:[%s1638] ss:$8 sm:$0x3]
    %v3489 = vlaneseq
    %v3490 = vshrl.u32 %v3489, 7
    %v3491 = vsub.s32 0, %v3490
    %v3492 = vrot.slane %v3487, %v3491
    %v3493 = vlaneseq
    %v3494 = vshrl.u32 %v3493, 7
    %v3495 = vsub.s32 1, %v3494
    %v3496 = vrot.slane %v3487, %v3495
    %3503 = vrot.lane.b32.xlu0 %v3463, 127
    %v3504 = vpop.permute.xlu0 %3503
    %3505 = vrot.lane.b32.xlu0 %v3464, 127
    %v3506 = vpop.permute.xlu0 %3505
    %3507 = vrot.lane.b32.xlu0 %v3465, 127
    %v3508 = vpop.permute.xlu0 %3507
    %3509 = vrot.lane.b32.xlu0 %v3466, 127
    %v3510 = vpop.permute.xlu0 %3509
    %v3511 = vsel %vm576, %v3504, %v3506
    %v3512 = vsel %vm576, %v3508, %v3510
    %v3517 = vmul.f32 %v3492, %v3511
    %v3518 = vmul.f32 %v3496, %v3506
    %v3519 = vmul.f32 %v3492, %v3512
    %v3520 = vmul.f32 %v3496, %v3510
    %v3521 = vadd.f32 %v3483, %v3517
    %v3522 = vadd.f32 %v3484, %v3518
    %v3523 = vadd.f32 %v3485, %v3519
    %v3524 = vadd.f32 %v3486, %v3520
    %v3525 = vld [vmem:[%s1677] ss:$8 sm:$0x3]
    %v3527 = vlaneseq
    %v3528 = vshrl.u32 %v3527, 7
    %v3529 = vsub.s32 0, %v3528
    %v3530 = vrot.slane %v3525, %v3529
    %v3531 = vlaneseq
    %v3532 = vshrl.u32 %v3531, 7
    %v3533 = vsub.s32 1, %v3532
    %v3534 = vrot.slane %v3525, %v3533
    %3537 = vrot.lane.b32.xlu0 %v3463, 126
    %v3538 = vpop.permute.xlu0 %3537
    %3539 = vrot.lane.b32.xlu0 %v3464, 126
    %v3540 = vpop.permute.xlu0 %3539
    %3541 = vrot.lane.b32.xlu0 %v3465, 126
    %v3542 = vpop.permute.xlu0 %3541
    %3543 = vrot.lane.b32.xlu0 %v3466, 126
    %v3544 = vpop.permute.xlu0 %3543
    %v3545 = vsel %vm612, %v3538, %v3540
    %v3546 = vsel %vm612, %v3542, %v3544
    %v3551 = vmul.f32 %v3530, %v3545
    %v3552 = vmul.f32 %v3534, %v3540
    %v3553 = vmul.f32 %v3530, %v3546
    %v3554 = vmul.f32 %v3534, %v3544
    %v3555 = vadd.f32 %v3521, %v3551
    %v3556 = vadd.f32 %v3522, %v3552
    %v3557 = vadd.f32 %v3523, %v3553
    %v3558 = vadd.f32 %v3524, %v3554
    %v3559 = vld [vmem:[%s436] sm:$0xfe]
    %v3560 = vld [vmem:[%s436 + $0x8] sm:$0xfe]
    %v3561 = vld [vmem:[%s436 + $0x20] sm:$0x1]
    %v3562 = vld [vmem:[%s436 + $0x28] sm:$0x1]
    %v3563 = vld [vmem:[%s1716] ss:$8 sm:$0x3]
    %v3565 = vlaneseq
    %v3566 = vshrl.u32 %v3565, 7
    %v3567 = vsub.s32 0, %v3566
    %v3568 = vrot.slane %v3563, %v3567
    %v3569 = vlaneseq
    %v3570 = vshrl.u32 %v3569, 7
    %v3571 = vsub.s32 1, %v3570
    %v3572 = vrot.slane %v3563, %v3571
    %v3575 = vmul.f32 %v3568, %v3559
    %v3576 = vmul.f32 %v3572, %v3560
    %v3577 = vmul.f32 %v3568, %v3465
    %v3578 = vmul.f32 %v3572, %v3466
    %v3579 = vmul.f32 %v3568, %v3561
    %v3580 = vmul.f32 %v3572, %v3562
    %v3587 = vrot.slane %v3575, 1
    %v3588 = vrot.slane %v3577, 1
    %v3589 = vsel %vm656, %v3587, %v3588
    %v3590 = vrot.slane %v3576, 1
    %v3591 = vrot.slane %v3578, 1
    %v3592 = vsel %vm656, %v3590, %v3591
    %v3593 = vrot.slane %v3579, 1
    %v3594 = vsel %vm656, %v3588, %v3593
    %v3595 = vrot.slane %v3580, 1
    %v3596 = vsel %vm656, %v3591, %v3595
    %v3601 = vadd.f32 %v3555, %v3589
    %v3602 = vadd.f32 %v3556, %v3592
    %v3603 = vadd.f32 %v3557, %v3594
    %v3604 = vadd.f32 %v3558, %v3596
    %v3605 = vld [vmem:[%s1759] ss:$8 sm:$0x3]
    %v3607 = vlaneseq
    %v3608 = vshrl.u32 %v3607, 7
    %v3609 = vsub.s32 0, %v3608
    %v3610 = vrot.slane %v3605, %v3609
    %v3611 = vlaneseq
    %v3612 = vshrl.u32 %v3611, 7
    %v3613 = vsub.s32 1, %v3612
    %v3614 = vrot.slane %v3605, %v3613
    %v3621 = vrot.slane %v3559, 1
    %v3622 = vrot.slane %v3465, 1
    %v3623 = vsel %vm656, %v3621, %v3622
    %v3624 = vrot.slane %v3560, 1
    %v3625 = vrot.slane %v3466, 1
    %v3626 = vsel %vm656, %v3624, %v3625
    %v3627 = vrot.slane %v3561, 1
    %v3628 = vsel %vm656, %v3622, %v3627
    %v3629 = vrot.slane %v3562, 1
    %v3630 = vsel %vm656, %v3625, %v3629
    %3631 = vrot.lane.b32.xlu0 %v3623, 127
    %v3632 = vpop.permute.xlu0 %3631
    %3633 = vrot.lane.b32.xlu0 %v3626, 127
    %v3634 = vpop.permute.xlu0 %3633
    %3635 = vrot.lane.b32.xlu0 %v3628, 127
    %v3636 = vpop.permute.xlu0 %3635
    %3637 = vrot.lane.b32.xlu0 %v3630, 127
    %v3638 = vpop.permute.xlu0 %3637
    %v3639 = vsel %vm576, %v3632, %v3634
    %v3640 = vsel %vm576, %v3636, %v3638
    %v3645 = vmul.f32 %v3610, %v3639
    %v3646 = vmul.f32 %v3614, %v3634
    %v3647 = vmul.f32 %v3610, %v3640
    %v3648 = vmul.f32 %v3614, %v3638
    %v3649 = vadd.f32 %v3601, %v3645
    %v3650 = vadd.f32 %v3602, %v3646
    %v3651 = vadd.f32 %v3603, %v3647
    %v3652 = vadd.f32 %v3604, %v3648
    %v3653 = vld [vmem:[%s1808] ss:$8 sm:$0x3]
    %v3655 = vlaneseq
    %v3656 = vshrl.u32 %v3655, 7
    %v3657 = vsub.s32 0, %v3656
    %v3658 = vrot.slane %v3653, %v3657
    %v3659 = vlaneseq
    %v3660 = vshrl.u32 %v3659, 7
    %v3661 = vsub.s32 1, %v3660
    %v3662 = vrot.slane %v3653, %v3661
    %3665 = vrot.lane.b32.xlu0 %v3623, 126
    %v3666 = vpop.permute.xlu0 %3665
    %3667 = vrot.lane.b32.xlu0 %v3626, 126
    %v3668 = vpop.permute.xlu0 %3667
    %3669 = vrot.lane.b32.xlu0 %v3628, 126
    %v3670 = vpop.permute.xlu0 %3669
    %3671 = vrot.lane.b32.xlu0 %v3630, 126
    %v3672 = vpop.permute.xlu0 %3671
    %v3673 = vsel %vm612, %v3666, %v3668
    %v3674 = vsel %vm612, %v3670, %v3672
    %v3679 = vmul.f32 %v3658, %v3673
    %v3680 = vmul.f32 %v3662, %v3668
    %v3681 = vmul.f32 %v3658, %v3674
    %v3682 = vmul.f32 %v3662, %v3672
    %v3683 = vadd.f32 %v3649, %v3679
    %v3684 = vadd.f32 %v3650, %v3680
    %v3685 = vadd.f32 %v3651, %v3681
    %v3686 = vadd.f32 %v3652, %v3682
    %v3687 = vld [vmem:[%s436] sm:$0xfc]
    %v3688 = vld [vmem:[%s436 + $0x8] sm:$0xfc]
    %v3689 = vld [vmem:[%s436 + $0x20] sm:$0x3]
    %v3690 = vld [vmem:[%s436 + $0x28] sm:$0x3]
    %v3691 = vld [vmem:[%s1847] ss:$8 sm:$0x3]
    %v3693 = vlaneseq
    %v3694 = vshrl.u32 %v3693, 7
    %v3695 = vsub.s32 0, %v3694
    %v3696 = vrot.slane %v3691, %v3695
    %v3697 = vlaneseq
    %v3698 = vshrl.u32 %v3697, 7
    %v3699 = vsub.s32 1, %v3698
    %v3700 = vrot.slane %v3691, %v3699
    %v3703 = vmul.f32 %v3696, %v3687
    %v3704 = vmul.f32 %v3700, %v3688
    %v3705 = vmul.f32 %v3696, %v3465
    %v3706 = vmul.f32 %v3700, %v3466
    %v3707 = vmul.f32 %v3696, %v3689
    %v3708 = vmul.f32 %v3700, %v3690
    %v3715 = vrot.slane %v3703, 2
    %v3716 = vrot.slane %v3705, 2
    %v3717 = vsel %vm788, %v3715, %v3716
    %v3718 = vrot.slane %v3704, 2
    %v3719 = vrot.slane %v3706, 2
    %v3720 = vsel %vm788, %v3718, %v3719
    %v3721 = vrot.slane %v3707, 2
    %v3722 = vsel %vm788, %v3716, %v3721
    %v3723 = vrot.slane %v3708, 2
    %v3724 = vsel %vm788, %v3719, %v3723
    %v3729 = vadd.f32 %v3683, %v3717
    %v3730 = vadd.f32 %v3684, %v3720
    %v3731 = vadd.f32 %v3685, %v3722
    %v3732 = vadd.f32 %v3686, %v3724
    %v3733 = vld [vmem:[%s1890] ss:$8 sm:$0x3]
    %v3735 = vlaneseq
    %v3736 = vshrl.u32 %v3735, 7
    %v3737 = vsub.s32 0, %v3736
    %v3738 = vrot.slane %v3733, %v3737
    %v3739 = vlaneseq
    %v3740 = vshrl.u32 %v3739, 7
    %v3741 = vsub.s32 1, %v3740
    %v3742 = vrot.slane %v3733, %v3741
    %v3749 = vrot.slane %v3687, 2
    %v3750 = vrot.slane %v3465, 2
    %v3751 = vsel %vm788, %v3749, %v3750
    %v3752 = vrot.slane %v3688, 2
    %v3753 = vrot.slane %v3466, 2
    %v3754 = vsel %vm788, %v3752, %v3753
    %v3755 = vrot.slane %v3689, 2
    %v3756 = vsel %vm788, %v3750, %v3755
    %v3757 = vrot.slane %v3690, 2
    %v3758 = vsel %vm788, %v3753, %v3757
    %3759 = vrot.lane.b32.xlu0 %v3751, 127
    %v3760 = vpop.permute.xlu0 %3759
    %3761 = vrot.lane.b32.xlu0 %v3754, 127
    %v3762 = vpop.permute.xlu0 %3761
    %3763 = vrot.lane.b32.xlu0 %v3756, 127
    %v3764 = vpop.permute.xlu0 %3763
    %3765 = vrot.lane.b32.xlu0 %v3758, 127
    %v3766 = vpop.permute.xlu0 %3765
    %v3767 = vsel %vm576, %v3760, %v3762
    %v3768 = vsel %vm576, %v3764, %v3766
    %v3773 = vmul.f32 %v3738, %v3767
    %v3774 = vmul.f32 %v3742, %v3762
    %v3775 = vmul.f32 %v3738, %v3768
    %v3776 = vmul.f32 %v3742, %v3766
    %v3777 = vadd.f32 %v3729, %v3773
    %v3778 = vadd.f32 %v3730, %v3774
    %v3779 = vadd.f32 %v3731, %v3775
    %v3780 = vadd.f32 %v3732, %v3776
    %v3781 = vld [vmem:[%s1939] ss:$8 sm:$0x3]
    %v3783 = vlaneseq
    %v3784 = vshrl.u32 %v3783, 7
    %v3785 = vsub.s32 0, %v3784
    %v3786 = vrot.slane %v3781, %v3785
    %v3787 = vlaneseq
    %v3788 = vshrl.u32 %v3787, 7
    %v3789 = vsub.s32 1, %v3788
    %v3790 = vrot.slane %v3781, %v3789
    %3793 = vrot.lane.b32.xlu0 %v3751, 126
    %v3794 = vpop.permute.xlu0 %3793
    %3795 = vrot.lane.b32.xlu0 %v3754, 126
    %v3796 = vpop.permute.xlu0 %3795
    %3797 = vrot.lane.b32.xlu0 %v3756, 126
    %v3798 = vpop.permute.xlu0 %3797
    %3799 = vrot.lane.b32.xlu0 %v3758, 126
    %v3800 = vpop.permute.xlu0 %3799
    %v3801 = vsel %vm612, %v3794, %v3796
    %v3802 = vsel %vm612, %v3798, %v3800
    %v3807 = vmul.f32 %v3786, %v3801
    %v3808 = vmul.f32 %v3790, %v3796
    %v3809 = vmul.f32 %v3786, %v3802
    %v3810 = vmul.f32 %v3790, %v3800
    %v3811 = vadd.f32 %v3777, %v3807
    %v3812 = vadd.f32 %v3778, %v3808
    %v3813 = vadd.f32 %v3779, %v3809
    %v3814 = vadd.f32 %v3780, %v3810
    %s3815 = scalar_lea.vmem [#allocation3], 32
    %3816 = vst [vmem:[%s3815] sm:$0xff] %v3811
    %3817 = vst.msk [vmem:[%s3815 + $0x8] sm:$0xff] %vm1975, %v3812
    %3818 = vst [vmem:[%s3815 + $0x10] sm:$0xff] %v3813
    %3819 = vst.msk [vmem:[%s3815 + $0x18] sm:$0xff] %vm1975, %v3814
    %v3820 = vld [vmem:[#allocation3] sm:$0xff]
    %v3821 = vld [vmem:[#allocation3 + $0x10] sm:$0xff]
    %v3822 = vld [vmem:[%s3815] sm:$0xff]
    %v3823 = vld [vmem:[%s3815 + $0x10] sm:$0xff]
    %v3824 = vsel %vm1975, %v3820, 0.0
    %3825 = vadd.xlane.f32.xlu0 %v3824
    %v3826 = vpop.xlane.xlu0 %3825
    %v3827 = vsel %vm1975, %v3821, 0.0
    %3828 = vadd.xlane.f32.xlu0 %v3827
    %v3829 = vpop.xlane.xlu0 %3828
    %v3830 = vadd.f32 %v3826, %v3829
    %v3831 = vrot.slane %v3830, 4
    %v3832 = vadd.f32 %v3830, %v3831
    %v3833 = vrot.slane %v3832, 2
    %v3834 = vadd.f32 %v3832, %v3833
    %v3835 = vrot.slane %v3834, 1
    %v3836 = vadd.f32 %v3834, %v3835
    %v3837 = vadd.f32 %v3836, 0.0
    %v3838 = vsel %vm1975, %v3822, 0.0
    %3839 = vadd.xlane.f32.xlu0 %v3838
    %v3840 = vpop.xlane.xlu0 %3839
    %v3841 = vsel %vm1975, %v3823, 0.0
    %3842 = vadd.xlane.f32.xlu0 %v3841
    %v3843 = vpop.xlane.xlu0 %3842
    %v3844 = vadd.f32 %v3840, %v3843
    %v3845 = vrot.slane %v3844, 4
    %v3846 = vadd.f32 %v3844, %v3845
    %v3847 = vrot.slane %v3846, 2
    %v3848 = vadd.f32 %v3846, %v3847
    %v3849 = vrot.slane %v3848, 1
    %v3850 = vadd.f32 %v3848, %v3849
    %v3851 = vadd.f32 %v3837, %v3850
    %v3852 = vmul.f32 %v3851, 0.001953125
    %v3853 = vsub.f32 %v3820, %v3852
    %v3854 = vsub.f32 %v3821, %v3852
    %v3855 = vmul.f32 %v3853, %v3853
    %v3856 = vmul.f32 %v3854, %v3854
    %v3857 = vsel %vm1975, %v3855, 0.0
    %3858 = vadd.xlane.f32.xlu0 %v3857
    %v3859 = vpop.xlane.xlu0 %3858
    %v3860 = vsel %vm1975, %v3856, 0.0
    %3861 = vadd.xlane.f32.xlu0 %v3860
    %v3862 = vpop.xlane.xlu0 %3861
    %v3863 = vadd.f32 %v3859, %v3862
    %v3864 = vrot.slane %v3863, 4
    %v3865 = vadd.f32 %v3863, %v3864
    %v3866 = vrot.slane %v3865, 2
    %v3867 = vadd.f32 %v3865, %v3866
    %v3868 = vrot.slane %v3867, 1
    %v3869 = vadd.f32 %v3867, %v3868
    %v3870 = vadd.f32 %v3869, 0.0
    %v3871 = vsub.f32 %v3822, %v3852
    %v3872 = vsub.f32 %v3823, %v3852
    %v3873 = vmul.f32 %v3871, %v3871
    %v3874 = vmul.f32 %v3872, %v3872
    %v3875 = vsel %vm1975, %v3873, 0.0
    %3876 = vadd.xlane.f32.xlu0 %v3875
    %v3877 = vpop.xlane.xlu0 %3876
    %v3878 = vsel %vm1975, %v3874, 0.0
    %3879 = vadd.xlane.f32.xlu0 %v3878
    %v3880 = vpop.xlane.xlu0 %3879
    %v3881 = vadd.f32 %v3877, %v3880
    %v3882 = vrot.slane %v3881, 4
    %v3883 = vadd.f32 %v3881, %v3882
    %v3884 = vrot.slane %v3883, 2
    %v3885 = vadd.f32 %v3883, %v3884
    %v3886 = vrot.slane %v3885, 1
    %v3887 = vadd.f32 %v3885, %v3886
    %v3888 = vadd.f32 %v3870, %v3887
    %v3889 = vmul.f32 %v3888, 0.001953125
    %s3890 = sld [smem:[#allocation4]]
    %v3891 = vadd.f32 %v3889, 1e-05
    %v3892 = vrsqrt.pop %v3891
    %v3893 = vstv %s3890
    %v3894 = vmul.f32 %v3893, %v3892
    %s3895 = sld [smem:[#allocation7]]
    %v3896 = vmul.f32 %v3852, %v3894
    %v3897 = vstv %s3895
    %v3898 = vsub.f32 %v3897, %v3896
    %v3899 = vmul.f32 %v3820, %v3894
    %v3900 = vmul.f32 %v3821, %v3894
    %v3901 = vadd.f32 %v3899, %v3898
    %v3902 = vadd.f32 %v3900, %v3898
    %vm3903 = vcmp.ge.f32.partialorder %v3901, 0.0
    %vm3904 = vcmp.ge.f32.partialorder %v3902, 0.0
    %v3905 = vmul.f32 %v3901, 0.01
    %v3906 = vmul.f32 %v3902, 0.01
    %v3907 = vsel %vm3903, %v3901, %v3905
    %v3908 = vsel %vm3904, %v3902, %v3906
    %3909 = vst.msk [vmem:[#allocation9] sm:$0xff] %vm1975, %v3907
    %3910 = vst.msk [vmem:[#allocation9 + $0x8] sm:$0xff] %vm1975, %v3908
    %v3911 = vmul.f32 %v3822, %v3894
    %v3912 = vmul.f32 %v3823, %v3894
    %v3913 = vadd.f32 %v3911, %v3898
    %v3914 = vadd.f32 %v3912, %v3898
    %vm3915 = vcmp.ge.f32.partialorder %v3913, 0.0
    %vm3916 = vcmp.ge.f32.partialorder %v3914, 0.0
    %v3917 = vmul.f32 %v3913, 0.01
    %v3918 = vmul.f32 %v3914, 0.01
    %v3919 = vsel %vm3915, %v3913, %v3917
    %v3920 = vsel %vm3916, %v3914, %v3918
    %s3921 = scalar_lea.vmem [#allocation9], 128
    %3922 = vst.msk [vmem:[%s3921] sm:$0xff] %vm1975, %v3919
    %3923 = vst.msk [vmem:[%s3921 + $0x8] sm:$0xff] %vm1975, %v3920
    %v3924 = vld [vmem:[#allocation3] sm:$0xff]
    %v3925 = vld [vmem:[#allocation3 + $0x10] sm:$0xff]
    %v3926 = vld [vmem:[%s3815] sm:$0xff]
    %v3927 = vld [vmem:[%s3815 + $0x10] sm:$0xff]
    %3930 = vrot.lane.b32.xlu0 %v3924, 110
    %v3931 = vpop.permute.xlu0 %3930
    %3932 = vrot.lane.b32.xlu0 %v3925, 110
    %v3933 = vpop.permute.xlu0 %3932
    %v3936 = vsel %vm1975, %v3931, 0.0
    %3937 = vadd.xlane.f32.xlu0 %v3936
    %v3938 = vpop.xlane.xlu0 %3937
    %v3939 = vsel %vm1975, %v3933, 0.0
    %3940 = vadd.xlane.f32.xlu0 %v3939
    %v3941 = vpop.xlane.xlu0 %3940
    %v3942 = vadd.f32 %v3938, %v3941
    %v3943 = vrot.slane %v3942, 4
    %v3944 = vadd.f32 %v3942, %v3943
    %v3945 = vrot.slane %v3944, 2
    %v3946 = vadd.f32 %v3944, %v3945
    %v3947 = vrot.slane %v3946, 1
    %v3948 = vadd.f32 %v3946, %v3947
    %v3949 = vadd.f32 %v3948, 0.0
    %3952 = vrot.lane.b32.xlu0 %v3926, 110
    %v3953 = vpop.permute.xlu0 %3952
    %3954 = vrot.lane.b32.xlu0 %v3927, 110
    %v3955 = vpop.permute.xlu0 %3954
    %v3958 = vsel %vm1975, %v3953, 0.0
    %3959 = vadd.xlane.f32.xlu0 %v3958
    %v3960 = vpop.xlane.xlu0 %3959
    %v3961 = vsel %vm1975, %v3955, 0.0
    %3962 = vadd.xlane.f32.xlu0 %v3961
    %v3963 = vpop.xlane.xlu0 %3962
    %v3964 = vadd.f32 %v3960, %v3963
    %v3965 = vrot.slane %v3964, 4
    %v3966 = vadd.f32 %v3964, %v3965
    %v3967 = vrot.slane %v3966, 2
    %v3968 = vadd.f32 %v3966, %v3967
    %v3969 = vrot.slane %v3968, 1
    %v3970 = vadd.f32 %v3968, %v3969
    %v3971 = vadd.f32 %v3949, %v3970
    %v3972 = vmul.f32 %v3971, 0.001953125
    %v3973 = vsub.f32 %v3924, %v3972
    %v3974 = vsub.f32 %v3925, %v3972
    %v3975 = vmul.f32 %v3973, %v3973
    %v3976 = vmul.f32 %v3974, %v3974
    %3979 = vrot.lane.b32.xlu0 %v3975, 110
    %v3980 = vpop.permute.xlu0 %3979
    %3981 = vrot.lane.b32.xlu0 %v3976, 110
    %v3982 = vpop.permute.xlu0 %3981
    %v3985 = vsel %vm1975, %v3980, 0.0
    %3986 = vadd.xlane.f32.xlu0 %v3985
    %v3987 = vpop.xlane.xlu0 %3986
    %v3988 = vsel %vm1975, %v3982, 0.0
    %3989 = vadd.xlane.f32.xlu0 %v3988
    %v3990 = vpop.xlane.xlu0 %3989
    %v3991 = vadd.f32 %v3987, %v3990
    %v3992 = vrot.slane %v3991, 4
    %v3993 = vadd.f32 %v3991, %v3992
    %v3994 = vrot.slane %v3993, 2
    %v3995 = vadd.f32 %v3993, %v3994
    %v3996 = vrot.slane %v3995, 1
    %v3997 = vadd.f32 %v3995, %v3996
    %v3998 = vadd.f32 %v3997, 0.0
    %v3999 = vsub.f32 %v3926, %v3972
    %v4000 = vsub.f32 %v3927, %v3972
    %v4001 = vmul.f32 %v3999, %v3999
    %v4002 = vmul.f32 %v4000, %v4000
    %4005 = vrot.lane.b32.xlu0 %v4001, 110
    %v4006 = vpop.permute.xlu0 %4005
    %4007 = vrot.lane.b32.xlu0 %v4002, 110
    %v4008 = vpop.permute.xlu0 %4007
    %v4011 = vsel %vm1975, %v4006, 0.0
    %4012 = vadd.xlane.f32.xlu0 %v4011
    %v4013 = vpop.xlane.xlu0 %4012
    %v4014 = vsel %vm1975, %v4008, 0.0
    %4015 = vadd.xlane.f32.xlu0 %v4014
    %v4016 = vpop.xlane.xlu0 %4015
    %v4017 = vadd.f32 %v4013, %v4016
    %v4018 = vrot.slane %v4017, 4
    %v4019 = vadd.f32 %v4017, %v4018
    %v4020 = vrot.slane %v4019, 2
    %v4021 = vadd.f32 %v4019, %v4020
    %v4022 = vrot.slane %v4021, 1
    %v4023 = vadd.f32 %v4021, %v4022
    %v4024 = vadd.f32 %v3998, %v4023
    %v4025 = vmul.f32 %v4024, 0.001953125
    %s4026 = sld [smem:[#allocation4 + $0x1]]
    %v4027 = vadd.f32 %v4025, 1e-05
    %v4028 = vrsqrt.pop %v4027
    %v4029 = vstv %s4026
    %v4030 = vmul.f32 %v4029, %v4028
    %s4031 = sld [smem:[#allocation7 + $0x1]]
    %v4032 = vmul.f32 %v3972, %v4030
    %v4033 = vstv %s4031
    %v4034 = vsub.f32 %v4033, %v4032
    %v4035 = vmul.f32 %v3924, %v4030
    %v4036 = vmul.f32 %v3925, %v4030
    %v4037 = vadd.f32 %v4035, %v4034
    %v4038 = vadd.f32 %v4036, %v4034
    %vm4039 = vcmp.ge.f32.partialorder %v4037, 0.0
    %vm4040 = vcmp.ge.f32.partialorder %v4038, 0.0
    %v4041 = vmul.f32 %v4037, 0.01
    %v4042 = vmul.f32 %v4038, 0.01
    %v4043 = vsel %vm4039, %v4037, %v4041
    %v4044 = vsel %vm4040, %v4038, %v4042
    %4047 = vrot.lane.b32.xlu0 %v4043, 110
    %v4048 = vpop.permute.xlu0 %4047
    %4049 = vrot.lane.b32.xlu0 %v4044, 110
    %v4050 = vpop.permute.xlu0 %4049
    %s4053 = scalar_lea.vmem [#allocation9], 16
    %4054 = vst.msk [vmem:[%s4053] sm:$0xff] %vm1975, %v4048
    %4055 = vst.msk [vmem:[%s4053 + $0x8] sm:$0xff] %vm1975, %v4050
    %v4056 = vmul.f32 %v3926, %v4030
    %v4057 = vmul.f32 %v3927, %v4030
    %v4058 = vadd.f32 %v4056, %v4034
    %v4059 = vadd.f32 %v4057, %v4034
    %vm4060 = vcmp.ge.f32.partialorder %v4058, 0.0
    %vm4061 = vcmp.ge.f32.partialorder %v4059, 0.0
    %v4062 = vmul.f32 %v4058, 0.01
    %v4063 = vmul.f32 %v4059, 0.01
    %v4064 = vsel %vm4060, %v4058, %v4062
    %v4065 = vsel %vm4061, %v4059, %v4063
    %4068 = vrot.lane.b32.xlu0 %v4064, 110
    %v4069 = vpop.permute.xlu0 %4068
    %4070 = vrot.lane.b32.xlu0 %v4065, 110
    %v4071 = vpop.permute.xlu0 %4070
    %s4074 = scalar_lea.vmem [#allocation9], 144
    %4075 = vst.msk [vmem:[%s4074] sm:$0xff] %vm1975, %v4069
    %4076 = vst.msk [vmem:[%s4074 + $0x8] sm:$0xff] %vm1975, %v4071
    %v4077 = vld [vmem:[#allocation3] sm:$0xff]
    %v4078 = vld [vmem:[#allocation3 + $0x10] sm:$0xff]
    %v4079 = vld [vmem:[%s3815] sm:$0xff]
    %v4080 = vld [vmem:[%s3815 + $0x10] sm:$0xff]
    %4083 = vrot.lane.b32.xlu0 %v4077, 92
    %v4084 = vpop.permute.xlu0 %4083
    %4085 = vrot.lane.b32.xlu0 %v4078, 92
    %v4086 = vpop.permute.xlu0 %4085
    %v4089 = vsel %vm1975, %v4084, 0.0
    %4090 = vadd.xlane.f32.xlu0 %v4089
    %v4091 = vpop.xlane.xlu0 %4090
    %v4092 = vsel %vm1975, %v4086, 0.0
    %4093 = vadd.xlane.f32.xlu0 %v4092
    %v4094 = vpop.xlane.xlu0 %4093
    %v4095 = vadd.f32 %v4091, %v4094
    %v4096 = vrot.slane %v4095, 4
    %v4097 = vadd.f32 %v4095, %v4096
    %v4098 = vrot.slane %v4097, 2
    %v4099 = vadd.f32 %v4097, %v4098
    %v4100 = vrot.slane %v4099, 1
    %v4101 = vadd.f32 %v4099, %v4100
    %v4102 = vadd.f32 %v4101, 0.0
    %4105 = vrot.lane.b32.xlu0 %v4079, 92
    %v4106 = vpop.permute.xlu0 %4105
    %4107 = vrot.lane.b32.xlu0 %v4080, 92
    %v4108 = vpop.permute.xlu0 %4107
    %v4111 = vsel %vm1975, %v4106, 0.0
    %4112 = vadd.xlane.f32.xlu0 %v4111
    %v4113 = vpop.xlane.xlu0 %4112
    %v4114 = vsel %vm1975, %v4108, 0.0
    %4115 = vadd.xlane.f32.xlu0 %v4114
    %v4116 = vpop.xlane.xlu0 %4115
    %v4117 = vadd.f32 %v4113, %v4116
    %v4118 = vrot.slane %v4117, 4
    %v4119 = vadd.f32 %v4117, %v4118
    %v4120 = vrot.slane %v4119, 2
    %v4121 = vadd.f32 %v4119, %v4120
    %v4122 = vrot.slane %v4121, 1
    %v4123 = vadd.f32 %v4121, %v4122
    %v4124 = vadd.f32 %v4102, %v4123
    %v4125 = vmul.f32 %v4124, 0.001953125
    %v4126 = vsub.f32 %v4077, %v4125
    %v4127 = vsub.f32 %v4078, %v4125
    %v4128 = vmul.f32 %v4126, %v4126
    %v4129 = vmul.f32 %v4127, %v4127
    %4132 = vrot.lane.b32.xlu0 %v4128, 92
    %v4133 = vpop.permute.xlu0 %4132
    %4134 = vrot.lane.b32.xlu0 %v4129, 92
    %v4135 = vpop.permute.xlu0 %4134
    %v4138 = vsel %vm1975, %v4133, 0.0
    %4139 = vadd.xlane.f32.xlu0 %v4138
    %v4140 = vpop.xlane.xlu0 %4139
    %v4141 = vsel %vm1975, %v4135, 0.0
    %4142 = vadd.xlane.f32.xlu0 %v4141
    %v4143 = vpop.xlane.xlu0 %4142
    %v4144 = vadd.f32 %v4140, %v4143
    %v4145 = vrot.slane %v4144, 4
    %v4146 = vadd.f32 %v4144, %v4145
    %v4147 = vrot.slane %v4146, 2
    %v4148 = vadd.f32 %v4146, %v4147
    %v4149 = vrot.slane %v4148, 1
    %v4150 = vadd.f32 %v4148, %v4149
    %v4151 = vadd.f32 %v4150, 0.0
    %v4152 = vsub.f32 %v4079, %v4125
    %v4153 = vsub.f32 %v4080, %v4125
    %v4154 = vmul.f32 %v4152, %v4152
    %v4155 = vmul.f32 %v4153, %v4153
    %4158 = vrot.lane.b32.xlu0 %v4154, 92
    %v4159 = vpop.permute.xlu0 %4158
    %4160 = vrot.lane.b32.xlu0 %v4155, 92
    %v4161 = vpop.permute.xlu0 %4160
    %v4164 = vsel %vm1975, %v4159, 0.0
    %4165 = vadd.xlane.f32.xlu0 %v4164
    %v4166 = vpop.xlane.xlu0 %4165
    %v4167 = vsel %vm1975, %v4161, 0.0
    %4168 = vadd.xlane.f32.xlu0 %v4167
    %v4169 = vpop.xlane.xlu0 %4168
    %v4170 = vadd.f32 %v4166, %v4169
    %v4171 = vrot.slane %v4170, 4
    %v4172 = vadd.f32 %v4170, %v4171
    %v4173 = vrot.slane %v4172, 2
    %v4174 = vadd.f32 %v4172, %v4173
    %v4175 = vrot.slane %v4174, 1
    %v4176 = vadd.f32 %v4174, %v4175
    %v4177 = vadd.f32 %v4151, %v4176
    %v4178 = vmul.f32 %v4177, 0.001953125
    %s4179 = sld [smem:[#allocation4 + $0x2]]
    %v4180 = vadd.f32 %v4178, 1e-05
    %v4181 = vrsqrt.pop %v4180
    %v4182 = vstv %s4179
    %v4183 = vmul.f32 %v4182, %v4181
    %s4184 = sld [smem:[#allocation7 + $0x2]]
    %v4185 = vmul.f32 %v4125, %v4183
    %v4186 = vstv %s4184
    %v4187 = vsub.f32 %v4186, %v4185
    %v4188 = vmul.f32 %v4077, %v4183
    %v4189 = vmul.f32 %v4078, %v4183
    %v4190 = vadd.f32 %v4188, %v4187
    %v4191 = vadd.f32 %v4189, %v4187
    %vm4192 = vcmp.ge.f32.partialorder %v4190, 0.0
    %vm4193 = vcmp.ge.f32.partialorder %v4191, 0.0
    %v4194 = vmul.f32 %v4190, 0.01
    %v4195 = vmul.f32 %v4191, 0.01
    %v4196 = vsel %vm4192, %v4190, %v4194
    %v4197 = vsel %vm4193, %v4191, %v4195
    %4200 = vrot.lane.b32.xlu0 %v4196, 92
    %v4201 = vpop.permute.xlu0 %4200
    %4202 = vrot.lane.b32.xlu0 %v4197, 92
    %v4203 = vpop.permute.xlu0 %4202
    %s4206 = scalar_lea.vmem [#allocation9], 32
    %4207 = vst.msk [vmem:[%s4206] sm:$0xff] %vm1975, %v4201
    %4208 = vst.msk [vmem:[%s4206 + $0x8] sm:$0xff] %vm1975, %v4203
    %v4209 = vmul.f32 %v4079, %v4183
    %v4210 = vmul.f32 %v4080, %v4183
    %v4211 = vadd.f32 %v4209, %v4187
    %v4212 = vadd.f32 %v4210, %v4187
    %vm4213 = vcmp.ge.f32.partialorder %v4211, 0.0
    %vm4214 = vcmp.ge.f32.partialorder %v4212, 0.0
    %v4215 = vmul.f32 %v4211, 0.01
    %v4216 = vmul.f32 %v4212, 0.01
    %v4217 = vsel %vm4213, %v4211, %v4215
    %v4218 = vsel %vm4214, %v4212, %v4216
    %4221 = vrot.lane.b32.xlu0 %v4217, 92
    %v4222 = vpop.permute.xlu0 %4221
    %4223 = vrot.lane.b32.xlu0 %v4218, 92
    %v4224 = vpop.permute.xlu0 %4223
    %s4227 = scalar_lea.vmem [#allocation9], 160
    %4228 = vst.msk [vmem:[%s4227] sm:$0xff] %vm1975, %v4222
    %4229 = vst.msk [vmem:[%s4227 + $0x8] sm:$0xff] %vm1975, %v4224
    %v4230 = vld [vmem:[#allocation3] sm:$0xff]
    %v4231 = vld [vmem:[#allocation3 + $0x10] sm:$0xff]
    %v4232 = vld [vmem:[%s3815] sm:$0xff]
    %v4233 = vld [vmem:[%s3815 + $0x10] sm:$0xff]
    %4236 = vrot.lane.b32.xlu0 %v4230, 74
    %v4237 = vpop.permute.xlu0 %4236
    %4238 = vrot.lane.b32.xlu0 %v4231, 74
    %v4239 = vpop.permute.xlu0 %4238
    %v4242 = vsel %vm1975, %v4237, 0.0
    %4243 = vadd.xlane.f32.xlu0 %v4242
    %v4244 = vpop.xlane.xlu0 %4243
    %v4245 = vsel %vm1975, %v4239, 0.0
    %4246 = vadd.xlane.f32.xlu0 %v4245
    %v4247 = vpop.xlane.xlu0 %4246
    %v4248 = vadd.f32 %v4244, %v4247
    %v4249 = vrot.slane %v4248, 4
    %v4250 = vadd.f32 %v4248, %v4249
    %v4251 = vrot.slane %v4250, 2
    %v4252 = vadd.f32 %v4250, %v4251
    %v4253 = vrot.slane %v4252, 1
    %v4254 = vadd.f32 %v4252, %v4253
    %v4255 = vadd.f32 %v4254, 0.0
    %4258 = vrot.lane.b32.xlu0 %v4232, 74
    %v4259 = vpop.permute.xlu0 %4258
    %4260 = vrot.lane.b32.xlu0 %v4233, 74
    %v4261 = vpop.permute.xlu0 %4260
    %v4264 = vsel %vm1975, %v4259, 0.0
    %4265 = vadd.xlane.f32.xlu0 %v4264
    %v4266 = vpop.xlane.xlu0 %4265
    %v4267 = vsel %vm1975, %v4261, 0.0
    %4268 = vadd.xlane.f32.xlu0 %v4267
    %v4269 = vpop.xlane.xlu0 %4268
    %v4270 = vadd.f32 %v4266, %v4269
    %v4271 = vrot.slane %v4270, 4
    %v4272 = vadd.f32 %v4270, %v4271
    %v4273 = vrot.slane %v4272, 2
    %v4274 = vadd.f32 %v4272, %v4273
    %v4275 = vrot.slane %v4274, 1
    %v4276 = vadd.f32 %v4274, %v4275
    %v4277 = vadd.f32 %v4255, %v4276
    %v4278 = vmul.f32 %v4277, 0.001953125
    %v4279 = vsub.f32 %v4230, %v4278
    %v4280 = vsub.f32 %v4231, %v4278
    %v4281 = vmul.f32 %v4279, %v4279
    %v4282 = vmul.f32 %v4280, %v4280
    %4285 = vrot.lane.b32.xlu0 %v4281, 74
    %v4286 = vpop.permute.xlu0 %4285
    %4287 = vrot.lane.b32.xlu0 %v4282, 74
    %v4288 = vpop.permute.xlu0 %4287
    %v4291 = vsel %vm1975, %v4286, 0.0
    %4292 = vadd.xlane.f32.xlu0 %v4291
    %v4293 = vpop.xlane.xlu0 %4292
    %v4294 = vsel %vm1975, %v4288, 0.0
    %4295 = vadd.xlane.f32.xlu0 %v4294
    %v4296 = vpop.xlane.xlu0 %4295
    %v4297 = vadd.f32 %v4293, %v4296
    %v4298 = vrot.slane %v4297, 4
    %v4299 = vadd.f32 %v4297, %v4298
    %v4300 = vrot.slane %v4299, 2
    %v4301 = vadd.f32 %v4299, %v4300
    %v4302 = vrot.slane %v4301, 1
    %v4303 = vadd.f32 %v4301, %v4302
    %v4304 = vadd.f32 %v4303, 0.0
    %v4305 = vsub.f32 %v4232, %v4278
    %v4306 = vsub.f32 %v4233, %v4278
    %v4307 = vmul.f32 %v4305, %v4305
    %v4308 = vmul.f32 %v4306, %v4306
    %4311 = vrot.lane.b32.xlu0 %v4307, 74
    %v4312 = vpop.permute.xlu0 %4311
    %4313 = vrot.lane.b32.xlu0 %v4308, 74
    %v4314 = vpop.permute.xlu0 %4313
    %v4317 = vsel %vm1975, %v4312, 0.0
    %4318 = vadd.xlane.f32.xlu0 %v4317
    %v4319 = vpop.xlane.xlu0 %4318
    %v4320 = vsel %vm1975, %v4314, 0.0
    %4321 = vadd.xlane.f32.xlu0 %v4320
    %v4322 = vpop.xlane.xlu0 %4321
    %v4323 = vadd.f32 %v4319, %v4322
    %v4324 = vrot.slane %v4323, 4
    %v4325 = vadd.f32 %v4323, %v4324
    %v4326 = vrot.slane %v4325, 2
    %v4327 = vadd.f32 %v4325, %v4326
    %v4328 = vrot.slane %v4327, 1
    %v4329 = vadd.f32 %v4327, %v4328
    %v4330 = vadd.f32 %v4304, %v4329
    %v4331 = vmul.f32 %v4330, 0.001953125
    %s4332 = sld [smem:[#allocation4 + $0x3]]
    %v4333 = vadd.f32 %v4331, 1e-05
    %v4334 = vrsqrt.pop %v4333
    %v4335 = vstv %s4332
    %v4336 = vmul.f32 %v4335, %v4334
    %s4337 = sld [smem:[#allocation7 + $0x3]]
    %v4338 = vmul.f32 %v4278, %v4336
    %v4339 = vstv %s4337
    %v4340 = vsub.f32 %v4339, %v4338
    %v4341 = vmul.f32 %v4230, %v4336
    %v4342 = vmul.f32 %v4231, %v4336
    %v4343 = vadd.f32 %v4341, %v4340
    %v4344 = vadd.f32 %v4342, %v4340
    %vm4345 = vcmp.ge.f32.partialorder %v4343, 0.0
    %vm4346 = vcmp.ge.f32.partialorder %v4344, 0.0
    %v4347 = vmul.f32 %v4343, 0.01
    %v4348 = vmul.f32 %v4344, 0.01
    %v4349 = vsel %vm4345, %v4343, %v4347
    %v4350 = vsel %vm4346, %v4344, %v4348
    %4353 = vrot.lane.b32.xlu0 %v4349, 74
    %v4354 = vpop.permute.xlu0 %4353
    %4355 = vrot.lane.b32.xlu0 %v4350, 74
    %v4356 = vpop.permute.xlu0 %4355
    %s4359 = scalar_lea.vmem [#allocation9], 48
    %4360 = vst.msk [vmem:[%s4359] sm:$0xff] %vm1975, %v4354
    %4361 = vst.msk [vmem:[%s4359 + $0x8] sm:$0xff] %vm1975, %v4356
    %v4362 = vmul.f32 %v4232, %v4336
    %v4363 = vmul.f32 %v4233, %v4336
    %v4364 = vadd.f32 %v4362, %v4340
    %v4365 = vadd.f32 %v4363, %v4340
    %vm4366 = vcmp.ge.f32.partialorder %v4364, 0.0
    %vm4367 = vcmp.ge.f32.partialorder %v4365, 0.0
    %v4368 = vmul.f32 %v4364, 0.01
    %v4369 = vmul.f32 %v4365, 0.01
    %v4370 = vsel %vm4366, %v4364, %v4368
    %v4371 = vsel %vm4367, %v4365, %v4369
    %4374 = vrot.lane.b32.xlu0 %v4370, 74
    %v4375 = vpop.permute.xlu0 %4374
    %4376 = vrot.lane.b32.xlu0 %v4371, 74
    %v4377 = vpop.permute.xlu0 %4376
    %s4380 = scalar_lea.vmem [#allocation9], 176
    %4381 = vst.msk [vmem:[%s4380] sm:$0xff] %vm1975, %v4375
    %4382 = vst.msk [vmem:[%s4380 + $0x8] sm:$0xff] %vm1975, %v4377
    %v4383 = vld [vmem:[#allocation3] sm:$0xff]
    %v4384 = vld [vmem:[#allocation3 + $0x10] sm:$0xff]
    %v4385 = vld [vmem:[%s3815] sm:$0xff]
    %v4386 = vld [vmem:[%s3815 + $0x10] sm:$0xff]
    %4389 = vrot.lane.b32.xlu0 %v4383, 56
    %v4390 = vpop.permute.xlu0 %4389
    %4391 = vrot.lane.b32.xlu0 %v4384, 56
    %v4392 = vpop.permute.xlu0 %4391
    %v4395 = vsel %vm1975, %v4390, 0.0
    %4396 = vadd.xlane.f32.xlu0 %v4395
    %v4397 = vpop.xlane.xlu0 %4396
    %v4398 = vsel %vm1975, %v4392, 0.0
    %4399 = vadd.xlane.f32.xlu0 %v4398
    %v4400 = vpop.xlane.xlu0 %4399
    %v4401 = vadd.f32 %v4397, %v4400
    %v4402 = vrot.slane %v4401, 4
    %v4403 = vadd.f32 %v4401, %v4402
    %v4404 = vrot.slane %v4403, 2
    %v4405 = vadd.f32 %v4403, %v4404
    %v4406 = vrot.slane %v4405, 1
    %v4407 = vadd.f32 %v4405, %v4406
    %v4408 = vadd.f32 %v4407, 0.0
    %4411 = vrot.lane.b32.xlu0 %v4385, 56
    %v4412 = vpop.permute.xlu0 %4411
    %4413 = vrot.lane.b32.xlu0 %v4386, 56
    %v4414 = vpop.permute.xlu0 %4413
    %v4417 = vsel %vm1975, %v4412, 0.0
    %4418 = vadd.xlane.f32.xlu0 %v4417
    %v4419 = vpop.xlane.xlu0 %4418
    %v4420 = vsel %vm1975, %v4414, 0.0
    %4421 = vadd.xlane.f32.xlu0 %v4420
    %v4422 = vpop.xlane.xlu0 %4421
    %v4423 = vadd.f32 %v4419, %v4422
    %v4424 = vrot.slane %v4423, 4
    %v4425 = vadd.f32 %v4423, %v4424
    %v4426 = vrot.slane %v4425, 2
    %v4427 = vadd.f32 %v4425, %v4426
    %v4428 = vrot.slane %v4427, 1
    %v4429 = vadd.f32 %v4427, %v4428
    %v4430 = vadd.f32 %v4408, %v4429
    %v4431 = vmul.f32 %v4430, 0.001953125
    %v4432 = vsub.f32 %v4383, %v4431
    %v4433 = vsub.f32 %v4384, %v4431
    %v4434 = vmul.f32 %v4432, %v4432
    %v4435 = vmul.f32 %v4433, %v4433
    %4438 = vrot.lane.b32.xlu0 %v4434, 56
    %v4439 = vpop.permute.xlu0 %4438
    %4440 = vrot.lane.b32.xlu0 %v4435, 56
    %v4441 = vpop.permute.xlu0 %4440
    %v4444 = vsel %vm1975, %v4439, 0.0
    %4445 = vadd.xlane.f32.xlu0 %v4444
    %v4446 = vpop.xlane.xlu0 %4445
    %v4447 = vsel %vm1975, %v4441, 0.0
    %4448 = vadd.xlane.f32.xlu0 %v4447
    %v4449 = vpop.xlane.xlu0 %4448
    %v4450 = vadd.f32 %v4446, %v4449
    %v4451 = vrot.slane %v4450, 4
    %v4452 = vadd.f32 %v4450, %v4451
    %v4453 = vrot.slane %v4452, 2
    %v4454 = vadd.f32 %v4452, %v4453
    %v4455 = vrot.slane %v4454, 1
    %v4456 = vadd.f32 %v4454, %v4455
    %v4457 = vadd.f32 %v4456, 0.0
    %v4458 = vsub.f32 %v4385, %v4431
    %v4459 = vsub.f32 %v4386, %v4431
    %v4460 = vmul.f32 %v4458, %v4458
    %v4461 = vmul.f32 %v4459, %v4459
    %4464 = vrot.lane.b32.xlu0 %v4460, 56
    %v4465 = vpop.permute.xlu0 %4464
    %4466 = vrot.lane.b32.xlu0 %v4461, 56
    %v4467 = vpop.permute.xlu0 %4466
    %v4470 = vsel %vm1975, %v4465, 0.0
    %4471 = vadd.xlane.f32.xlu0 %v4470
    %v4472 = vpop.xlane.xlu0 %4471
    %v4473 = vsel %vm1975, %v4467, 0.0
    %4474 = vadd.xlane.f32.xlu0 %v4473
    %v4475 = vpop.xlane.xlu0 %4474
    %v4476 = vadd.f32 %v4472, %v4475
    %v4477 = vrot.slane %v4476, 4
    %v4478 = vadd.f32 %v4476, %v4477
    %v4479 = vrot.slane %v4478, 2
    %v4480 = vadd.f32 %v4478, %v4479
    %v4481 = vrot.slane %v4480, 1
    %v4482 = vadd.f32 %v4480, %v4481
    %v4483 = vadd.f32 %v4457, %v4482
    %v4484 = vmul.f32 %v4483, 0.001953125
    %s4485 = sld [smem:[#allocation4 + $0x4]]
    %v4486 = vadd.f32 %v4484, 1e-05
    %v4487 = vrsqrt.pop %v4486
    %v4488 = vstv %s4485
    %v4489 = vmul.f32 %v4488, %v4487
    %s4490 = sld [smem:[#allocation7 + $0x4]]
    %v4491 = vmul.f32 %v4431, %v4489
    %v4492 = vstv %s4490
    %v4493 = vsub.f32 %v4492, %v4491
    %v4494 = vmul.f32 %v4383, %v4489
    %v4495 = vmul.f32 %v4384, %v4489
    %v4496 = vadd.f32 %v4494, %v4493
    %v4497 = vadd.f32 %v4495, %v4493
    %vm4498 = vcmp.ge.f32.partialorder %v4496, 0.0
    %vm4499 = vcmp.ge.f32.partialorder %v4497, 0.0
    %v4500 = vmul.f32 %v4496, 0.01
    %v4501 = vmul.f32 %v4497, 0.01
    %v4502 = vsel %vm4498, %v4496, %v4500
    %v4503 = vsel %vm4499, %v4497, %v4501
    %4506 = vrot.lane.b32.xlu0 %v4502, 56
    %v4507 = vpop.permute.xlu0 %4506
    %4508 = vrot.lane.b32.xlu0 %v4503, 56
    %v4509 = vpop.permute.xlu0 %4508
    %s4512 = scalar_lea.vmem [#allocation9], 64
    %4513 = vst.msk [vmem:[%s4512] sm:$0xff] %vm1975, %v4507
    %4514 = vst.msk [vmem:[%s4512 + $0x8] sm:$0xff] %vm1975, %v4509
    %v4515 = vmul.f32 %v4385, %v4489
    %v4516 = vmul.f32 %v4386, %v4489
    %v4517 = vadd.f32 %v4515, %v4493
    %v4518 = vadd.f32 %v4516, %v4493
    %vm4519 = vcmp.ge.f32.partialorder %v4517, 0.0
    %vm4520 = vcmp.ge.f32.partialorder %v4518, 0.0
    %v4521 = vmul.f32 %v4517, 0.01
    %v4522 = vmul.f32 %v4518, 0.01
    %v4523 = vsel %vm4519, %v4517, %v4521
    %v4524 = vsel %vm4520, %v4518, %v4522
    %4527 = vrot.lane.b32.xlu0 %v4523, 56
    %v4528 = vpop.permute.xlu0 %4527
    %4529 = vrot.lane.b32.xlu0 %v4524, 56
    %v4530 = vpop.permute.xlu0 %4529
    %s4533 = scalar_lea.vmem [#allocation9], 192
    %4534 = vst.msk [vmem:[%s4533] sm:$0xff] %vm1975, %v4528
    %4535 = vst.msk [vmem:[%s4533 + $0x8] sm:$0xff] %vm1975, %v4530
    %v4536 = vld [vmem:[#allocation3] sm:$0xff]
    %v4537 = vld [vmem:[#allocation3 + $0x10] sm:$0xff]
    %v4538 = vld [vmem:[%s3815] sm:$0xff]
    %v4539 = vld [vmem:[%s3815 + $0x10] sm:$0xff]
    %4542 = vrot.lane.b32.xlu0 %v4536, 38
    %v4543 = vpop.permute.xlu0 %4542
    %4544 = vrot.lane.b32.xlu0 %v4537, 38
    %v4545 = vpop.permute.xlu0 %4544
    %v4548 = vsel %vm1975, %v4543, 0.0
    %4549 = vadd.xlane.f32.xlu0 %v4548
    %v4550 = vpop.xlane.xlu0 %4549
    %v4551 = vsel %vm1975, %v4545, 0.0
    %4552 = vadd.xlane.f32.xlu0 %v4551
    %v4553 = vpop.xlane.xlu0 %4552
    %v4554 = vadd.f32 %v4550, %v4553
    %v4555 = vrot.slane %v4554, 4
    %v4556 = vadd.f32 %v4554, %v4555
    %v4557 = vrot.slane %v4556, 2
    %v4558 = vadd.f32 %v4556, %v4557
    %v4559 = vrot.slane %v4558, 1
    %v4560 = vadd.f32 %v4558, %v4559
    %v4561 = vadd.f32 %v4560, 0.0
    %4564 = vrot.lane.b32.xlu0 %v4538, 38
    %v4565 = vpop.permute.xlu0 %4564
    %4566 = vrot.lane.b32.xlu0 %v4539, 38
    %v4567 = vpop.permute.xlu0 %4566
    %v4570 = vsel %vm1975, %v4565, 0.0
    %4571 = vadd.xlane.f32.xlu0 %v4570
    %v4572 = vpop.xlane.xlu0 %4571
    %v4573 = vsel %vm1975, %v4567, 0.0
    %4574 = vadd.xlane.f32.xlu0 %v4573
    %v4575 = vpop.xlane.xlu0 %4574
    %v4576 = vadd.f32 %v4572, %v4575
    %v4577 = vrot.slane %v4576, 4
    %v4578 = vadd.f32 %v4576, %v4577
    %v4579 = vrot.slane %v4578, 2
    %v4580 = vadd.f32 %v4578, %v4579
    %v4581 = vrot.slane %v4580, 1
    %v4582 = vadd.f32 %v4580, %v4581
    %v4583 = vadd.f32 %v4561, %v4582
    %v4584 = vmul.f32 %v4583, 0.001953125
    %v4585 = vsub.f32 %v4536, %v4584
    %v4586 = vsub.f32 %v4537, %v4584
    %v4587 = vmul.f32 %v4585, %v4585
    %v4588 = vmul.f32 %v4586, %v4586
    %4591 = vrot.lane.b32.xlu0 %v4587, 38
    %v4592 = vpop.permute.xlu0 %4591
    %4593 = vrot.lane.b32.xlu0 %v4588, 38
    %v4594 = vpop.permute.xlu0 %4593
    %v4597 = vsel %vm1975, %v4592, 0.0
    %4598 = vadd.xlane.f32.xlu0 %v4597
    %v4599 = vpop.xlane.xlu0 %4598
    %v4600 = vsel %vm1975, %v4594, 0.0
    %4601 = vadd.xlane.f32.xlu0 %v4600
    %v4602 = vpop.xlane.xlu0 %4601
    %v4603 = vadd.f32 %v4599, %v4602
    %v4604 = vrot.slane %v4603, 4
    %v4605 = vadd.f32 %v4603, %v4604
    %v4606 = vrot.slane %v4605, 2
    %v4607 = vadd.f32 %v4605, %v4606
    %v4608 = vrot.slane %v4607, 1
    %v4609 = vadd.f32 %v4607, %v4608
    %v4610 = vadd.f32 %v4609, 0.0
    %v4611 = vsub.f32 %v4538, %v4584
    %v4612 = vsub.f32 %v4539, %v4584
    %v4613 = vmul.f32 %v4611, %v4611
    %v4614 = vmul.f32 %v4612, %v4612
    %4617 = vrot.lane.b32.xlu0 %v4613, 38
    %v4618 = vpop.permute.xlu0 %4617
    %4619 = vrot.lane.b32.xlu0 %v4614, 38
    %v4620 = vpop.permute.xlu0 %4619
    %v4623 = vsel %vm1975, %v4618, 0.0
    %4624 = vadd.xlane.f32.xlu0 %v4623
    %v4625 = vpop.xlane.xlu0 %4624
    %v4626 = vsel %vm1975, %v4620, 0.0
    %4627 = vadd.xlane.f32.xlu0 %v4626
    %v4628 = vpop.xlane.xlu0 %4627
    %v4629 = vadd.f32 %v4625, %v4628
    %v4630 = vrot.slane %v4629, 4
    %v4631 = vadd.f32 %v4629, %v4630
    %v4632 = vrot.slane %v4631, 2
    %v4633 = vadd.f32 %v4631, %v4632
    %v4634 = vrot.slane %v4633, 1
    %v4635 = vadd.f32 %v4633, %v4634
    %v4636 = vadd.f32 %v4610, %v4635
    %v4637 = vmul.f32 %v4636, 0.001953125
    %s4638 = sld [smem:[#allocation4 + $0x5]]
    %v4639 = vadd.f32 %v4637, 1e-05
    %v4640 = vrsqrt.pop %v4639
    %v4641 = vstv %s4638
    %v4642 = vmul.f32 %v4641, %v4640
    %s4643 = sld [smem:[#allocation7 + $0x5]]
    %v4644 = vmul.f32 %v4584, %v4642
    %v4645 = vstv %s4643
    %v4646 = vsub.f32 %v4645, %v4644
    %v4647 = vmul.f32 %v4536, %v4642
    %v4648 = vmul.f32 %v4537, %v4642
    %v4649 = vadd.f32 %v4647, %v4646
    %v4650 = vadd.f32 %v4648, %v4646
    %vm4651 = vcmp.ge.f32.partialorder %v4649, 0.0
    %vm4652 = vcmp.ge.f32.partialorder %v4650, 0.0
    %v4653 = vmul.f32 %v4649, 0.01
    %v4654 = vmul.f32 %v4650, 0.01
    %v4655 = vsel %vm4651, %v4649, %v4653
    %v4656 = vsel %vm4652, %v4650, %v4654
    %4659 = vrot.lane.b32.xlu0 %v4655, 38
    %v4660 = vpop.permute.xlu0 %4659
    %4661 = vrot.lane.b32.xlu0 %v4656, 38
    %v4662 = vpop.permute.xlu0 %4661
    %s4665 = scalar_lea.vmem [#allocation9], 80
    %4666 = vst.msk [vmem:[%s4665] sm:$0xff] %vm1975, %v4660
    %4667 = vst.msk [vmem:[%s4665 + $0x8] sm:$0xff] %vm1975, %v4662
    %v4668 = vmul.f32 %v4538, %v4642
    %v4669 = vmul.f32 %v4539, %v4642
    %v4670 = vadd.f32 %v4668, %v4646
    %v4671 = vadd.f32 %v4669, %v4646
    %vm4672 = vcmp.ge.f32.partialorder %v4670, 0.0
    %vm4673 = vcmp.ge.f32.partialorder %v4671, 0.0
    %v4674 = vmul.f32 %v4670, 0.01
    %v4675 = vmul.f32 %v4671, 0.01
    %v4676 = vsel %vm4672, %v4670, %v4674
    %v4677 = vsel %vm4673, %v4671, %v4675
    %4680 = vrot.lane.b32.xlu0 %v4676, 38
    %v4681 = vpop.permute.xlu0 %4680
    %4682 = vrot.lane.b32.xlu0 %v4677, 38
    %v4683 = vpop.permute.xlu0 %4682
    %s4686 = scalar_lea.vmem [#allocation9], 208
    %4687 = vst.msk [vmem:[%s4686] sm:$0xff] %vm1975, %v4681
    %4688 = vst.msk [vmem:[%s4686 + $0x8] sm:$0xff] %vm1975, %v4683
    %v4689 = vld [vmem:[#allocation3] sm:$0xff]
    %v4690 = vld [vmem:[#allocation3 + $0x10] sm:$0xff]
    %v4691 = vld [vmem:[%s3815] sm:$0xff]
    %v4692 = vld [vmem:[%s3815 + $0x10] sm:$0xff]
    %4695 = vrot.lane.b32.xlu0 %v4689, 20
    %v4696 = vpop.permute.xlu0 %4695
    %4697 = vrot.lane.b32.xlu0 %v4690, 20
    %v4698 = vpop.permute.xlu0 %4697
    %v4701 = vsel %vm1975, %v4696, 0.0
    %4702 = vadd.xlane.f32.xlu0 %v4701
    %v4703 = vpop.xlane.xlu0 %4702
    %v4704 = vsel %vm1975, %v4698, 0.0
    %4705 = vadd.xlane.f32.xlu0 %v4704
    %v4706 = vpop.xlane.xlu0 %4705
    %v4707 = vadd.f32 %v4703, %v4706
    %v4708 = vrot.slane %v4707, 4
    %v4709 = vadd.f32 %v4707, %v4708
    %v4710 = vrot.slane %v4709, 2
    %v4711 = vadd.f32 %v4709, %v4710
    %v4712 = vrot.slane %v4711, 1
    %v4713 = vadd.f32 %v4711, %v4712
    %v4714 = vadd.f32 %v4713, 0.0
    %4717 = vrot.lane.b32.xlu0 %v4691, 20
    %v4718 = vpop.permute.xlu0 %4717
    %4719 = vrot.lane.b32.xlu0 %v4692, 20
    %v4720 = vpop.permute.xlu0 %4719
    %v4723 = vsel %vm1975, %v4718, 0.0
    %4724 = vadd.xlane.f32.xlu0 %v4723
    %v4725 = vpop.xlane.xlu0 %4724
    %v4726 = vsel %vm1975, %v4720, 0.0
    %4727 = vadd.xlane.f32.xlu0 %v4726
    %v4728 = vpop.xlane.xlu0 %4727
    %v4729 = vadd.f32 %v4725, %v4728
    %v4730 = vrot.slane %v4729, 4
    %v4731 = vadd.f32 %v4729, %v4730
    %v4732 = vrot.slane %v4731, 2
    %v4733 = vadd.f32 %v4731, %v4732
    %v4734 = vrot.slane %v4733, 1
    %v4735 = vadd.f32 %v4733, %v4734
    %v4736 = vadd.f32 %v4714, %v4735
    %v4737 = vmul.f32 %v4736, 0.001953125
    %v4738 = vsub.f32 %v4689, %v4737
    %v4739 = vsub.f32 %v4690, %v4737
    %v4740 = vmul.f32 %v4738, %v4738
    %v4741 = vmul.f32 %v4739, %v4739
    %4744 = vrot.lane.b32.xlu0 %v4740, 20
    %v4745 = vpop.permute.xlu0 %4744
    %4746 = vrot.lane.b32.xlu0 %v4741, 20
    %v4747 = vpop.permute.xlu0 %4746
    %v4750 = vsel %vm1975, %v4745, 0.0
    %4751 = vadd.xlane.f32.xlu0 %v4750
    %v4752 = vpop.xlane.xlu0 %4751
    %v4753 = vsel %vm1975, %v4747, 0.0
    %4754 = vadd.xlane.f32.xlu0 %v4753
    %v4755 = vpop.xlane.xlu0 %4754
    %v4756 = vadd.f32 %v4752, %v4755
    %v4757 = vrot.slane %v4756, 4
    %v4758 = vadd.f32 %v4756, %v4757
    %v4759 = vrot.slane %v4758, 2
    %v4760 = vadd.f32 %v4758, %v4759
    %v4761 = vrot.slane %v4760, 1
    %v4762 = vadd.f32 %v4760, %v4761
    %v4763 = vadd.f32 %v4762, 0.0
    %v4764 = vsub.f32 %v4691, %v4737
    %v4765 = vsub.f32 %v4692, %v4737
    %v4766 = vmul.f32 %v4764, %v4764
    %v4767 = vmul.f32 %v4765, %v4765
    %4770 = vrot.lane.b32.xlu0 %v4766, 20
    %v4771 = vpop.permute.xlu0 %4770
    %4772 = vrot.lane.b32.xlu0 %v4767, 20
    %v4773 = vpop.permute.xlu0 %4772
    %v4776 = vsel %vm1975, %v4771, 0.0
    %4777 = vadd.xlane.f32.xlu0 %v4776
    %v4778 = vpop.xlane.xlu0 %4777
    %v4779 = vsel %vm1975, %v4773, 0.0
    %4780 = vadd.xlane.f32.xlu0 %v4779
    %v4781 = vpop.xlane.xlu0 %4780
    %v4782 = vadd.f32 %v4778, %v4781
    %v4783 = vrot.slane %v4782, 4
    %v4784 = vadd.f32 %v4782, %v4783
    %v4785 = vrot.slane %v4784, 2
    %v4786 = vadd.f32 %v4784, %v4785
    %v4787 = vrot.slane %v4786, 1
    %v4788 = vadd.f32 %v4786, %v4787
    %v4789 = vadd.f32 %v4763, %v4788
    %v4790 = vmul.f32 %v4789, 0.001953125
    %s4791 = sld [smem:[#allocation4 + $0x6]]
    %v4792 = vadd.f32 %v4790, 1e-05
    %v4793 = vrsqrt.pop %v4792
    %v4794 = vstv %s4791
    %v4795 = vmul.f32 %v4794, %v4793
    %s4796 = sld [smem:[#allocation7 + $0x6]]
    %v4797 = vmul.f32 %v4737, %v4795
    %v4798 = vstv %s4796
    %v4799 = vsub.f32 %v4798, %v4797
    %v4800 = vmul.f32 %v4689, %v4795
    %v4801 = vmul.f32 %v4690, %v4795
    %v4802 = vadd.f32 %v4800, %v4799
    %v4803 = vadd.f32 %v4801, %v4799
    %vm4804 = vcmp.ge.f32.partialorder %v4802, 0.0
    %vm4805 = vcmp.ge.f32.partialorder %v4803, 0.0
    %v4806 = vmul.f32 %v4802, 0.01
    %v4807 = vmul.f32 %v4803, 0.01
    %v4808 = vsel %vm4804, %v4802, %v4806
    %v4809 = vsel %vm4805, %v4803, %v4807
    %4812 = vrot.lane.b32.xlu0 %v4808, 20
    %v4813 = vpop.permute.xlu0 %4812
    %4814 = vrot.lane.b32.xlu0 %v4809, 20
    %v4815 = vpop.permute.xlu0 %4814
    %s4818 = scalar_lea.vmem [#allocation9], 96
    %4819 = vst.msk [vmem:[%s4818] sm:$0xff] %vm1975, %v4813
    %4820 = vst.msk [vmem:[%s4818 + $0x8] sm:$0xff] %vm1975, %v4815
    %v4821 = vmul.f32 %v4691, %v4795
    %v4822 = vmul.f32 %v4692, %v4795
    %v4823 = vadd.f32 %v4821, %v4799
    %v4824 = vadd.f32 %v4822, %v4799
    %vm4825 = vcmp.ge.f32.partialorder %v4823, 0.0
    %vm4826 = vcmp.ge.f32.partialorder %v4824, 0.0
    %v4827 = vmul.f32 %v4823, 0.01
    %v4828 = vmul.f32 %v4824, 0.01
    %v4829 = vsel %vm4825, %v4823, %v4827
    %v4830 = vsel %vm4826, %v4824, %v4828
    %4833 = vrot.lane.b32.xlu0 %v4829, 20
    %v4834 = vpop.permute.xlu0 %4833
    %4835 = vrot.lane.b32.xlu0 %v4830, 20
    %v4836 = vpop.permute.xlu0 %4835
    %s4839 = scalar_lea.vmem [#allocation9], 224
    %4840 = vst.msk [vmem:[%s4839] sm:$0xff] %vm1975, %v4834
    %4841 = vst.msk [vmem:[%s4839 + $0x8] sm:$0xff] %vm1975, %v4836
    %v4842 = vld [vmem:[#allocation3] sm:$0xff]
    %v4843 = vld [vmem:[#allocation3 + $0x8] sm:$0xff]
    %v4844 = vld [vmem:[#allocation3 + $0x10] sm:$0xff]
    %v4845 = vld [vmem:[#allocation3 + $0x18] sm:$0xff]
    %v4846 = vld [vmem:[%s3815] sm:$0xff]
    %v4847 = vld [vmem:[%s3815 + $0x8] sm:$0xff]
    %v4848 = vld [vmem:[%s3815 + $0x10] sm:$0xff]
    %v4849 = vld [vmem:[%s3815 + $0x18] sm:$0xff]
    %4854 = vrot.lane.b32.xlu0 %v4842, 2
    %v4855 = vpop.permute.xlu0 %4854
    %4856 = vrot.lane.b32.xlu0 %v4843, 2
    %v4857 = vpop.permute.xlu0 %4856
    %4858 = vrot.lane.b32.xlu0 %v4844, 2
    %v4859 = vpop.permute.xlu0 %4858
    %4860 = vrot.lane.b32.xlu0 %v4845, 2
    %v4861 = vpop.permute.xlu0 %4860
    %vm4862 = vcmask 15360
    %v4863 = vsel %vm4862, %v4855, %v4857
    %v4864 = vsel %vm4862, %v4859, %v4861
    %v4867 = vsel %vm1975, %v4863, 0.0
    %4868 = vadd.xlane.f32.xlu0 %v4867
    %v4869 = vpop.xlane.xlu0 %4868
    %v4870 = vsel %vm1975, %v4864, 0.0
    %4871 = vadd.xlane.f32.xlu0 %v4870
    %v4872 = vpop.xlane.xlu0 %4871
    %v4873 = vadd.f32 %v4869, %v4872
    %v4874 = vrot.slane %v4873, 4
    %v4875 = vadd.f32 %v4873, %v4874
    %v4876 = vrot.slane %v4875, 2
    %v4877 = vadd.f32 %v4875, %v4876
    %v4878 = vrot.slane %v4877, 1
    %v4879 = vadd.f32 %v4877, %v4878
    %v4880 = vadd.f32 %v4879, 0.0
    %4885 = vrot.lane.b32.xlu0 %v4846, 2
    %v4886 = vpop.permute.xlu0 %4885
    %4887 = vrot.lane.b32.xlu0 %v4847, 2
    %v4888 = vpop.permute.xlu0 %4887
    %4889 = vrot.lane.b32.xlu0 %v4848, 2
    %v4890 = vpop.permute.xlu0 %4889
    %4891 = vrot.lane.b32.xlu0 %v4849, 2
    %v4892 = vpop.permute.xlu0 %4891
    %v4893 = vsel %vm4862, %v4886, %v4888
    %v4894 = vsel %vm4862, %v4890, %v4892
    %v4897 = vsel %vm1975, %v4893, 0.0
    %4898 = vadd.xlane.f32.xlu0 %v4897
    %v4899 = vpop.xlane.xlu0 %4898
    %v4900 = vsel %vm1975, %v4894, 0.0
    %4901 = vadd.xlane.f32.xlu0 %v4900
    %v4902 = vpop.xlane.xlu0 %4901
    %v4903 = vadd.f32 %v4899, %v4902
    %v4904 = vrot.slane %v4903, 4
    %v4905 = vadd.f32 %v4903, %v4904
    %v4906 = vrot.slane %v4905, 2
    %v4907 = vadd.f32 %v4905, %v4906
    %v4908 = vrot.slane %v4907, 1
    %v4909 = vadd.f32 %v4907, %v4908
    %v4910 = vadd.f32 %v4880, %v4909
    %v4911 = vmul.f32 %v4910, 0.001953125
    %v4912 = vsub.f32 %v4842, %v4911
    %v4913 = vsub.f32 %v4843, %v4911
    %v4914 = vsub.f32 %v4844, %v4911
    %v4915 = vsub.f32 %v4845, %v4911
    %v4916 = vmul.f32 %v4912, %v4912
    %v4917 = vmul.f32 %v4913, %v4913
    %v4918 = vmul.f32 %v4914, %v4914
    %v4919 = vmul.f32 %v4915, %v4915
    %4924 = vrot.lane.b32.xlu0 %v4916, 2
    %v4925 = vpop.permute.xlu0 %4924
    %4926 = vrot.lane.b32.xlu0 %v4917, 2
    %v4927 = vpop.permute.xlu0 %4926
    %4928 = vrot.lane.b32.xlu0 %v4918, 2
    %v4929 = vpop.permute.xlu0 %4928
    %4930 = vrot.lane.b32.xlu0 %v4919, 2
    %v4931 = vpop.permute.xlu0 %4930
    %v4932 = vsel %vm4862, %v4925, %v4927
    %v4933 = vsel %vm4862, %v4929, %v4931
    %v4936 = vsel %vm1975, %v4932, 0.0
    %4937 = vadd.xlane.f32.xlu0 %v4936
    %v4938 = vpop.xlane.xlu0 %4937
    %v4939 = vsel %vm1975, %v4933, 0.0
    %4940 = vadd.xlane.f32.xlu0 %v4939
    %v4941 = vpop.xlane.xlu0 %4940
    %v4942 = vadd.f32 %v4938, %v4941
    %v4943 = vrot.slane %v4942, 4
    %v4944 = vadd.f32 %v4942, %v4943
    %v4945 = vrot.slane %v4944, 2
    %v4946 = vadd.f32 %v4944, %v4945
    %v4947 = vrot.slane %v4946, 1
    %v4948 = vadd.f32 %v4946, %v4947
    %v4949 = vadd.f32 %v4948, 0.0
    %v4950 = vsub.f32 %v4846, %v4911
    %v4951 = vsub.f32 %v4847, %v4911
    %v4952 = vsub.f32 %v4848, %v4911
    %v4953 = vsub.f32 %v4849, %v4911
    %v4954 = vmul.f32 %v4950, %v4950
    %v4955 = vmul.f32 %v4951, %v4951
    %v4956 = vmul.f32 %v4952, %v4952
    %v4957 = vmul.f32 %v4953, %v4953
    %4962 = vrot.lane.b32.xlu0 %v4954, 2
    %v4963 = vpop.permute.xlu0 %4962
    %4964 = vrot.lane.b32.xlu0 %v4955, 2
    %v4965 = vpop.permute.xlu0 %4964
    %4966 = vrot.lane.b32.xlu0 %v4956, 2
    %v4967 = vpop.permute.xlu0 %4966
    %4968 = vrot.lane.b32.xlu0 %v4957, 2
    %v4969 = vpop.permute.xlu0 %4968
    %v4970 = vsel %vm4862, %v4963, %v4965
    %v4971 = vsel %vm4862, %v4967, %v4969
    %v4974 = vsel %vm1975, %v4970, 0.0
    %4975 = vadd.xlane.f32.xlu0 %v4974
    %v4976 = vpop.xlane.xlu0 %4975
    %v4977 = vsel %vm1975, %v4971, 0.0
    %4978 = vadd.xlane.f32.xlu0 %v4977
    %v4979 = vpop.xlane.xlu0 %4978
    %v4980 = vadd.f32 %v4976, %v4979
    %v4981 = vrot.slane %v4980, 4
    %v4982 = vadd.f32 %v4980, %v4981
    %v4983 = vrot.slane %v4982, 2
    %v4984 = vadd.f32 %v4982, %v4983
    %v4985 = vrot.slane %v4984, 1
    %v4986 = vadd.f32 %v4984, %v4985
    %v4987 = vadd.f32 %v4949, %v4986
    %v4988 = vmul.f32 %v4987, 0.001953125
    %s4989 = sld [smem:[#allocation4 + $0x7]]
    %v4990 = vadd.f32 %v4988, 1e-05
    %v4991 = vrsqrt.pop %v4990
    %v4992 = vstv %s4989
    %v4993 = vmul.f32 %v4992, %v4991
    %s4994 = sld [smem:[#allocation7 + $0x7]]
    %v4995 = vmul.f32 %v4911, %v4993
    %v4996 = vstv %s4994
    %v4997 = vsub.f32 %v4996, %v4995
    %v4998 = vmul.f32 %v4842, %v4993
    %v4999 = vmul.f32 %v4843, %v4993
    %v5000 = vmul.f32 %v4844, %v4993
    %v5001 = vmul.f32 %v4845, %v4993
    %v5002 = vadd.f32 %v4998, %v4997
    %v5003 = vadd.f32 %v4999, %v4997
    %v5004 = vadd.f32 %v5000, %v4997
    %v5005 = vadd.f32 %v5001, %v4997
    %vm5006 = vcmp.ge.f32.partialorder %v5002, 0.0
    %vm5007 = vcmp.ge.f32.partialorder %v5003, 0.0
    %vm5008 = vcmp.ge.f32.partialorder %v5004, 0.0
    %vm5009 = vcmp.ge.f32.partialorder %v5005, 0.0
    %v5010 = vmul.f32 %v5002, 0.01
    %v5011 = vmul.f32 %v5003, 0.01
    %v5012 = vmul.f32 %v5004, 0.01
    %v5013 = vmul.f32 %v5005, 0.01
    %v5014 = vsel %vm5006, %v5002, %v5010
    %v5015 = vsel %vm5007, %v5003, %v5011
    %v5016 = vsel %vm5008, %v5004, %v5012
    %v5017 = vsel %vm5009, %v5005, %v5013
    %5022 = vrot.lane.b32.xlu0 %v5014, 2
    %v5023 = vpop.permute.xlu0 %5022
    %5024 = vrot.lane.b32.xlu0 %v5015, 2
    %v5025 = vpop.permute.xlu0 %5024
    %5026 = vrot.lane.b32.xlu0 %v5016, 2
    %v5027 = vpop.permute.xlu0 %5026
    %5028 = vrot.lane.b32.xlu0 %v5017, 2
    %v5029 = vpop.permute.xlu0 %5028
    %v5030 = vsel %vm4862, %v5023, %v5025
    %v5031 = vsel %vm4862, %v5027, %v5029
    %s5034 = scalar_lea.vmem [#allocation9], 112
    %5035 = vst.msk [vmem:[%s5034] sm:$0xff] %vm1975, %v5030
    %5036 = vst.msk [vmem:[%s5034 + $0x8] sm:$0xff] %vm1975, %v5031
    %v5037 = vmul.f32 %v4846, %v4993
    %v5038 = vmul.f32 %v4847, %v4993
    %v5039 = vmul.f32 %v4848, %v4993
    %v5040 = vmul.f32 %v4849, %v4993
    %v5041 = vadd.f32 %v5037, %v4997
    %v5042 = vadd.f32 %v5038, %v4997
    %v5043 = vadd.f32 %v5039, %v4997
    %v5044 = vadd.f32 %v5040, %v4997
    %vm5045 = vcmp.ge.f32.partialorder %v5041, 0.0
    %vm5046 = vcmp.ge.f32.partialorder %v5042, 0.0
    %vm5047 = vcmp.ge.f32.partialorder %v5043, 0.0
    %vm5048 = vcmp.ge.f32.partialorder %v5044, 0.0
    %v5049 = vmul.f32 %v5041, 0.01
    %v5050 = vmul.f32 %v5042, 0.01
    %v5051 = vmul.f32 %v5043, 0.01
    %v5052 = vmul.f32 %v5044, 0.01
    %v5053 = vsel %vm5045, %v5041, %v5049
    %v5054 = vsel %vm5046, %v5042, %v5050
    %v5055 = vsel %vm5047, %v5043, %v5051
    %v5056 = vsel %vm5048, %v5044, %v5052
    %5061 = vrot.lane.b32.xlu0 %v5053, 2
    %v5062 = vpop.permute.xlu0 %5061
    %5063 = vrot.lane.b32.xlu0 %v5054, 2
    %v5064 = vpop.permute.xlu0 %5063
    %5065 = vrot.lane.b32.xlu0 %v5055, 2
    %v5066 = vpop.permute.xlu0 %5065
    %5067 = vrot.lane.b32.xlu0 %v5056, 2
    %v5068 = vpop.permute.xlu0 %5067
    %v5069 = vsel %vm4862, %v5062, %v5064
    %v5070 = vsel %vm4862, %v5066, %v5068
    %s5073 = scalar_lea.vmem [#allocation9], 240
    %5074 = vst.msk [vmem:[%s5073] sm:$0xff] %vm1975, %v5069
    %5075 = vst.msk [vmem:[%s5073 + $0x8] sm:$0xff] %vm1975, %v5070
    // Predicated region
    $region26: #{convz_forward.1} parent=1 // pred_check
      _
    $region27: #{convz_forward.1} parent=1 // pred_check_branch
      %5077 = sbr.rel (0) target = $region29
    $region28: #{convz_forward.1} parent=1 // pred_region
      %s5079 = ssub.s32 4096, 4096
      %5080 = vsyncadd [#allocation5], %s5079
      %s5081 = sshll.u32 [#allocation9], 4
      %s5082 = int_to_ptr.vmem [resolvable:$true] %s5081
      %5087 = dma.vmem_to_hbm [thread:$0]  %s5082, 4096, %s4, [#allocation5], 128, 128, 8
    $region29: #{convz_forward.1} parent=1 // pred_fallthru
      _
    // Predicated region
    $region30: #{convz_forward.1} parent=1 // pred_check
      _
    $region31: #{convz_forward.1} parent=1 // pred_check_branch
      %5089 = sbr.rel (0) target = $region33
    $region32: #{convz_forward.1} parent=1 // pred_region
      %5090 = dma.done [#allocation5], 4096
    $region33: #{convz_forward.1} parent=1 // pred_fallthru
      _
    %5091 = vsyncpa [#allocation5], 1
    %5092 = vsyncpa [#allocation6], 1
    %5093 = vsyncpa [#allocation8], 1

</llo_original>
